<compile_context>
chip_gen: v7x
topology: tpu7x:2x2x1
jax: 0.10.0
libtpu: 0.0.40
codegen_flags: <defaults>
</compile_context>

<pallas_src>
from collections import OrderedDict

import jax
import jax.numpy as jnp
from jax.experimental import pallas as pl
from jax.experimental.pallas import tpu as pltpu


def _round_up(x, m):
    return ((x + m - 1) // m) * m


# ----------------------------------------------------------------------------
# The single fused forward kernel
# ----------------------------------------------------------------------------

def fused_variational_forward(x_nhwc, conv_params, lin_params, drop_u,
                              conv_cfg, lin_cfg, use_dropout, drop_p):
    """Whole VariationalNet forward in ONE pallas_call, gridded over the batch.

    x_nhwc      : (N, H, W, Cin) f32
    conv_params : per conv layer (mean, logvar, eps), each (KKC_pad, Cout)
                  (flattened-HWIO, row = (kh*K + kw)*Cin + cin; rows >= K*K*Cin are inert pad)
    lin_params  : per USED linear layer (mean, logvar, eps), each (Din, Dout)
    drop_u      : (N, 1, sum(Din)) uniform(0,1) randomness for dropout, or None
    """
    N, H, W, C = x_nhwc.shape
    nconv, nlin = len(conv_cfg), len(lin_cfg)
    ho_l, wo_l, c_l = conv_cfg[-1]["ho"], conv_cfg[-1]["wo"], conv_cfg[-1]["cout"]
    flat_dim = ho_l * wo_l * c_l
    assert lin_cfg[0][0] == flat_dim
    nclasses = lin_cfg[-1][1]
    dins = [d for d, _ in lin_cfg]
    uoff = [sum(dins[:i]) for i in range(nlin)]
    keep_scale = 1.0 / (1.0 - drop_p)

    def kernel(*refs):
        pos = 0
        x_ref = refs[pos]; pos += 1
        cparams = refs[pos:pos + 3 * nconv]; pos += 3 * nconv
        lparams = refs[pos:pos + 3 * nlin]; pos += 3 * nlin
        u_ref = None
        if use_dropout:
            u_ref = refs[pos]; pos += 1
        o_ref = refs[pos]; pos += 1
        col_refs = refs[pos:pos + nconv]; pos += nconv            # im2col buffers (VMEM)
        act_refs = refs[pos:pos + nconv - 1]; pos += nconv - 1    # intermediate activations
        flat_ref = refs[pos]                                      # lane-dense flatten row

        # ---- conv stack: reparam -> im2col -> batched bf16 matmul -> ReLU (all VMEM) ----
        act_val = None
        for li, cfg in enumerate(conv_cfg):
            k, cin, cout = cfg["k"], cfg["cin"], cfg["cout"]
            ho, wo, kkc, kkcp = cfg["ho"], cfg["wo"], cfg["kkc"], cfg["kkc_pad"]
            m_ref, lv_ref, e_ref = cparams[3 * li:3 * li + 3]
            # variational reparameterization  w = mean + eps * exp(0.5 * logvar)   (f32, EUP)
            wmat = m_ref[...] + e_ref[...] * jnp.exp(0.5 * lv_ref[...])
            # hoisted once per layer; cast to bf16 only at the MXU operand
            w_b = jnp.broadcast_to(wmat.astype(jnp.bfloat16), (ho,) + wmat.shape)
            cols = col_refs[li]
            if kkcp > kkc:                       # keep padded K columns at exactly 0 so the
                cols[:, :, kkc:] = jnp.zeros((ho, wo, kkcp - kkc), jnp.float32)  # pad rows
            t = 0                                # of the weight are inert
            for kh in range(k):
                for kw in range(k):
                    if li == 0:
                        slab = x_ref[0, kh:kh + ho, kw:kw + wo, :]
                    else:
                        slab = act_refs[li - 1][kh:kh + ho, kw:kw + wo, :]
                    cols[:, :, t * cin:(t + 1) * cin] = slab
                    t += 1
            acc = jnp.einsum("hwk,hkf->hwf", cols[...].astype(jnp.bfloat16), w_b,
                             preferred_element_type=jnp.float32)
            act_val = jnp.maximum(acc, 0.0)      # fused ReLU, f32
            if li < nconv - 1:
                act_refs[li][...] = act_val

        # ---- in-kernel flatten into a lane-dense (1, flat_dim) row ----------------------
        # 64 small aligned lane stores replace an HBM round trip + XLA transpose + relaunch.
        for h in range(ho_l):
            for w in range(wo_l):
                off = (h * wo_l + w) * c_l
                flat_ref[:, off:off + c_l] = act_val[h, w:w + 1, :]

        # ---- linear stack: dropout -> reparam -> bf16 matmul (f32 accumulate) -----------
        hvec = flat_ref[...]                     # (1, flat_dim) f32, lane-dense
        for li, (din, dout) in enumerate(lin_cfg):
            m_ref, lv_ref, e_ref = lparams[3 * li:3 * li + 3]
            wmat = m_ref[...] + e_ref[...] * jnp.exp(0.5 * lv_ref[...])
            if use_dropout:
                keep = u_ref[0, :, uoff[li]:uoff[li] + din] >= drop_p      # P(keep) = 1 - p
                hvec = jnp.where(keep, hvec * keep_scale, 0.0)             # inverted dropout
            hvec = jnp.dot(hvec.astype(jnp.bfloat16), wmat.astype(jnp.bfloat16),
                           preferred_element_type=jnp.float32)
        o_ref[0] = hvec.astype(o_ref.dtype)

    # ---- inputs / specs (grid over the batch; weights as constant full blocks) ----------
    inputs = [x_nhwc]
    in_specs = [pl.BlockSpec((1, H, W, C), lambda n: (n, 0, 0, 0))]
    for (m, lv, e) in list(conv_params) + list(lin_params):
        for arr in (m, lv, e):
            inputs.append(arr)
            in_specs.append(pl.BlockSpec(arr.shape, lambda n: (0, 0)))
    if use_dropout:
        inputs.append(drop_u)
        in_specs.append(pl.BlockSpec((1, 1, drop_u.shape[-1]), lambda n: (n, 0, 0)))

    scratch = (
        [pltpu.VMEM((c["ho"], c["wo"], c["kkc_pad"]), jnp.float32) for c in conv_cfg]
        + [pltpu.VMEM((c["ho"], c["wo"], c["cout"]), jnp.float32) for c in conv_cfg[:-1]]
        + [pltpu.VMEM((1, flat_dim), jnp.float32)]
    )

    out = pl.pallas_call(
        kernel,
        out_shape=jax.ShapeDtypeStruct((N, 1, nclasses), x_nhwc.dtype),
        grid=(N,),
        in_specs=in_specs,
        out_specs=pl.BlockSpec((1, 1, nclasses), lambda n: (n, 0, 0)),
        scratch_shapes=scratch,
        compiler_params=pltpu.CompilerParams(dimension_semantics=("parallel",)),
    )(*inputs)
    return out.reshape(N, nclasses)


# ----------------------------------------------------------------------------
# Model wrapper (parameter bookkeeping / glue in plain JAX)
# ----------------------------------------------------------------------------

class VariationalNetPallas:
    def __init__(self, in_size, nclasses, channels, units, kernels=None,
                 strides=None, use_bias=False, use_dropout=True,
                 use_pooling=False, use_batch_norm=False, *, key, drop_p=0.5):
        if use_batch_norm:
            raise NotImplementedError
        # TODO(synk): use_bias / use_pooling (max_pool2d) / stride>1 paths are not implemented;
        # all are off under the module defaults exercised here.
        assert not use_bias and not use_pooling
        nin, h, w = in_size
        kernels = [5 for _ in channels] if kernels is None else kernels
        strides = [1 for _ in channels] if strides is None else strides
        assert all(s == 1 for s in strides)

        self.nclasses = nclasses
        self.nconv = len(channels)
        self.nlinear = len(units)          # recorded BEFORE appending nclasses (torch quirk)
        self.use_dropout = use_dropout
        self.drop_p = drop_p               # F.dropout default p = 0.5
        self.params = OrderedDict()
        self._key = key

        self.conv_cfg = []
        for idx, (nout, k) in enumerate(zip(channels, kernels)):
            kkc = k * k * nin
            kkcp = _round_up(kkc, 128)
            # torch (nout, nin, k, k) -> matmul-ready (K*K*Cin, Cout), zero-padded K dim.
            self._add_param(f"c{idx:d}_weight", (kkc, nout), pad_rows=kkcp - kkc)
            self.conv_cfg.append(dict(k=k, cin=nin, cout=nout,
                                      ho=h - k + 1, wo=w - k + 1, kkc=kkc, kkc_pad=kkcp))
            nin, h, w = nout, h - k + 1, w - k + 1
        self.flat_dim = nin * h * w

        self.lin_cfg = []
        nin_l = self.flat_dim
        units = list(units) + [nclasses]
        for idx, nout in enumerate(units):
            # torch (nout, nin) -> matmul-ready (Din, Dout); l0 rows are in the NHWC flatten
            # order of the conv activation (equivalent i.i.d. parameterization).
            self._add_param(f"l{idx:d}_weight", (nin_l, nout))
            if idx < self.nlinear:
                self.lin_cfg.append((nin_l, nout))
            nin_l = nout

    def _add_param(self, name, size, pad_rows=0):
        self._key, k1, k2 = jax.random.split(self._key, 3)
        mean = jax.random.normal(k1, size, jnp.float32)            # ~ torch.randn
        logvar = jax.random.normal(k2, size, jnp.float32) * 0.001
        if pad_rows:
            mean = jnp.pad(mean, ((0, pad_rows), (0, 0)))
            logvar = jnp.pad(logvar, ((0, pad_rows), (0, 0)))
        self.params[name] = (mean, logvar)

    def forward(self, x, *, key):
        # x: (N, C, H, W) float32 (PyTorch NCHW convention)
        n = x.shape[0]
        x = jnp.transpose(x, (0, 2, 3, 1))                         # NCHW -> NHWC

        conv_params, lin_params = [], []
        for idx in range(self.nconv):
            key, ke = jax.random.split(key)
            mean, logvar = self.params[f"c{idx:d}_weight"]
            # eps at the padded shape; padded-row eps is inert (its col columns are zero).
            conv_params.append((mean, logvar,
                                jax.random.normal(ke, mean.shape, mean.dtype)))
        # NOTE: matches reference exactly — only the first `nlinear` linear layers run.
        for idx in range(self.nlinear):
            key, ke = jax.random.split(key)
            mean, logvar = self.params[f"l{idx:d}_weight"]
            lin_params.append((mean, logvar,
                               jax.random.normal(ke, mean.shape, mean.dtype)))

        drop_u = None
        if self.use_dropout:
            key, ku = jax.random.split(key)
            drop_u = jax.random.uniform(
                ku, (n, 1, sum(d for d, _ in self.lin_cfg)), jnp.float32)

        return fused_variational_forward(
            x, conv_params, lin_params, drop_u,
            self.conv_cfg, self.lin_cfg, self.use_dropout, self.drop_p)


# ----------------------------------------------------------------------------
# Demo
# ----------------------------------------------------------------------------

if __name__ == "__main__":
    root = jax.random.PRNGKey(0)
    k_params, k_input, k_fwd = jax.random.split(root, 3)

    in_size = (4, 16, 16)                        # (C, H, W)
    model = VariationalNetPallas(
        in_size=in_size, nclasses=10, channels=[6, 8], units=[32, 10],
        use_bias=False, use_dropout=True, use_pooling=False, key=k_params)

    x = jax.random.normal(k_input, (2, *in_size), jnp.float32)   # (N, C, H, W)

    fwd = jax.jit(model.forward)
    out = jax.block_until_ready(fwd(x, key=k_fwd))

    assert out.shape == (2, 10), out.shape
    assert out.dtype == jnp.float32
    assert bool(jnp.all(jnp.isfinite(out)))
    print("KERNEL_OK")
</pallas_src>

<mosaic_0001>
module attributes {stable_mosaic.version = 11 : i64} {
  func.func @kernel(%arg0: i32, %arg1: memref<1x16x16x4xf32, #tpu.memory_space<vmem>>, %arg2: memref<128x6xf32, #tpu.memory_space<vmem>>, %arg3: memref<128x6xf32, #tpu.memory_space<vmem>>, %arg4: memref<128x6xf32, #tpu.memory_space<vmem>>, %arg5: memref<256x8xf32, #tpu.memory_space<vmem>>, %arg6: memref<256x8xf32, #tpu.memory_space<vmem>>, %arg7: memref<256x8xf32, #tpu.memory_space<vmem>>, %arg8: memref<512x32xf32, #tpu.memory_space<vmem>>, %arg9: memref<512x32xf32, #tpu.memory_space<vmem>>, %arg10: memref<512x32xf32, #tpu.memory_space<vmem>>, %arg11: memref<32x10xf32, #tpu.memory_space<vmem>>, %arg12: memref<32x10xf32, #tpu.memory_space<vmem>>, %arg13: memref<32x10xf32, #tpu.memory_space<vmem>>, %arg14: memref<1x1x544xf32, #tpu.memory_space<vmem>>, %arg15: memref<1x1x10xf32, #tpu.memory_space<vmem>>, %arg16: memref<12x12x128xf32, #tpu.memory_space<vmem>>, %arg17: memref<8x8x256xf32, #tpu.memory_space<vmem>>, %arg18: memref<12x12x6xf32, #tpu.memory_space<vmem>>, %arg19: memref<1x512xf32, #tpu.memory_space<vmem>>) attributes {dimension_semantics = [#tpu.dimension_semantics<parallel>], iteration_bounds = array<i64: 2>, scalar_prefetch = 0 : i64, scratch_operands = 4 : i64, tpu.core_type = #tpu.core_type<tc>, window_params = [{transform_indices = @transform_0, window_bounds = array<i64: 1, 16, 16, 4>}, {pipeline_mode = #tpu.pipeline_mode<synchronous>, transform_indices = @transform_1, window_bounds = array<i64: 128, 6>}, {pipeline_mode = #tpu.pipeline_mode<synchronous>, transform_indices = @transform_2, window_bounds = array<i64: 128, 6>}, {pipeline_mode = #tpu.pipeline_mode<synchronous>, transform_indices = @transform_3, window_bounds = array<i64: 128, 6>}, {pipeline_mode = #tpu.pipeline_mode<synchronous>, transform_indices = @transform_4, window_bounds = array<i64: 256, 8>}, {pipeline_mode = #tpu.pipeline_mode<synchronous>, transform_indices = @transform_5, window_bounds = array<i64: 256, 8>}, {pipeline_mode = #tpu.pipeline_mode<synchronous>, transform_indices = @transform_6, window_bounds = array<i64: 256, 8>}, {pipeline_mode = #tpu.pipeline_mode<synchronous>, transform_indices = @transform_7, window_bounds = array<i64: 512, 32>}, {pipeline_mode = #tpu.pipeline_mode<synchronous>, transform_indices = @transform_8, window_bounds = array<i64: 512, 32>}, {pipeline_mode = #tpu.pipeline_mode<synchronous>, transform_indices = @transform_9, window_bounds = array<i64: 512, 32>}, {pipeline_mode = #tpu.pipeline_mode<synchronous>, transform_indices = @transform_10, window_bounds = array<i64: 32, 10>}, {pipeline_mode = #tpu.pipeline_mode<synchronous>, transform_indices = @transform_11, window_bounds = array<i64: 32, 10>}, {pipeline_mode = #tpu.pipeline_mode<synchronous>, transform_indices = @transform_12, window_bounds = array<i64: 32, 10>}, {transform_indices = @transform_13, window_bounds = array<i64: 1, 1, 544>}, {transform_indices = @transform_14, window_bounds = array<i64: 1, 1, 10>}]} {
    %c0 = arith.constant 0 : index
    %c0_0 = arith.constant 0 : index
    %0 = vector.load %arg2[%c0, %c0_0] : memref<128x6xf32, #tpu.memory_space<vmem>>, vector<128x6xf32>
    %c0_1 = arith.constant 0 : index
    %c0_2 = arith.constant 0 : index
    %1 = vector.load %arg4[%c0_1, %c0_2] : memref<128x6xf32, #tpu.memory_space<vmem>>, vector<128x6xf32>
    %c0_3 = arith.constant 0 : index
    %c0_4 = arith.constant 0 : index
    %2 = vector.load %arg3[%c0_3, %c0_4] : memref<128x6xf32, #tpu.memory_space<vmem>>, vector<128x6xf32>
    %cst = arith.constant 5.000000e-01 : f32
    %3 = vector.broadcast %cst : f32 to vector<128x6xf32>
    %4 = arith.mulf %3, %2 : vector<128x6xf32>
    %5 = math.exp %4 : vector<128x6xf32>
    %6 = arith.mulf %1, %5 : vector<128x6xf32>
    %7 = arith.addf %0, %6 : vector<128x6xf32>
    %8 = arith.truncf %7 : vector<128x6xf32> to vector<128x6xbf16>
    %9 = vector.shape_cast %8 : vector<128x6xbf16> to vector<1x128x6xbf16>
    %10 = vector.broadcast %9 : vector<1x128x6xbf16> to vector<12x128x6xbf16>
    %cst_5 = arith.constant 0.000000e+00 : f32
    %11 = vector.broadcast %cst_5 : f32 to vector<12x12x28xf32>
    %c0_6 = arith.constant 0 : index
    %c0_7 = arith.constant 0 : index
    %c100 = arith.constant 100 : index
    %12 = vector.load %arg16[%c0_6, %c0_7, %c100] : memref<12x12x128xf32, #tpu.memory_space<vmem>>, vector<12x12x28xf32>
    tpu.vector_store %arg16[%c0_6, %c0_7, %c100], %11 {strides = array<i32>} : memref<12x12x128xf32, #tpu.memory_space<vmem>>, vector<12x12x28xf32>,
    %c0_8 = arith.constant 0 : index
    %c0_9 = arith.constant 0 : index
    %c0_10 = arith.constant 0 : index
    %c0_11 = arith.constant 0 : index
    %13 = vector.load %arg1[%c0_8, %c0_9, %c0_10, %c0_11] : memref<1x16x16x4xf32, #tpu.memory_space<vmem>>, vector<1x12x12x4xf32>
    %14 = vector.shape_cast %13 : vector<1x12x12x4xf32> to vector<12x12x4xf32>
    %c0_12 = arith.constant 0 : index
    %c0_13 = arith.constant 0 : index
    %c0_14 = arith.constant 0 : index
    %15 = vector.load %arg16[%c0_12, %c0_13, %c0_14] : memref<12x12x128xf32, #tpu.memory_space<vmem>>, vector<12x12x4xf32>
    tpu.vector_store %arg16[%c0_12, %c0_13, %c0_14], %14 {strides = array<i32>} : memref<12x12x128xf32, #tpu.memory_space<vmem>>, vector<12x12x4xf32>,
    %c0_15 = arith.constant 0 : index
    %c0_16 = arith.constant 0 : index
    %c1 = arith.constant 1 : index
    %c0_17 = arith.constant 0 : index
    %16 = vector.load %arg1[%c0_15, %c0_16, %c1, %c0_17] : memref<1x16x16x4xf32, #tpu.memory_space<vmem>>, vector<1x12x12x4xf32>
    %17 = vector.shape_cast %16 : vector<1x12x12x4xf32> to vector<12x12x4xf32>
    %c0_18 = arith.constant 0 : index
    %c0_19 = arith.constant 0 : index
    %c4 = arith.constant 4 : index
    %18 = vector.load %arg16[%c0_18, %c0_19, %c4] : memref<12x12x128xf32, #tpu.memory_space<vmem>>, vector<12x12x4xf32>
    tpu.vector_store %arg16[%c0_18, %c0_19, %c4], %17 {strides = array<i32>} : memref<12x12x128xf32, #tpu.memory_space<vmem>>, vector<12x12x4xf32>,
    %c0_20 = arith.constant 0 : index
    %c0_21 = arith.constant 0 : index
    %c2 = arith.constant 2 : index
    %c0_22 = arith.constant 0 : index
    %19 = vector.load %arg1[%c0_20, %c0_21, %c2, %c0_22] : memref<1x16x16x4xf32, #tpu.memory_space<vmem>>, vector<1x12x12x4xf32>
    %20 = vector.shape_cast %19 : vector<1x12x12x4xf32> to vector<12x12x4xf32>
    %c0_23 = arith.constant 0 : index
    %c0_24 = arith.constant 0 : index
    %c8 = arith.constant 8 : index
    %21 = vector.load %arg16[%c0_23, %c0_24, %c8] : memref<12x12x128xf32, #tpu.memory_space<vmem>>, vector<12x12x4xf32>
    tpu.vector_store %arg16[%c0_23, %c0_24, %c8], %20 {strides = array<i32>} : memref<12x12x128xf32, #tpu.memory_space<vmem>>, vector<12x12x4xf32>,
    %c0_25 = arith.constant 0 : index
    %c0_26 = arith.constant 0 : index
    %c3 = arith.constant 3 : index
    %c0_27 = arith.constant 0 : index
    %22 = vector.load %arg1[%c0_25, %c0_26, %c3, %c0_27] : memref<1x16x16x4xf32, #tpu.memory_space<vmem>>, vector<1x12x12x4xf32>
    %23 = vector.shape_cast %22 : vector<1x12x12x4xf32> to vector<12x12x4xf32>
    %c0_28 = arith.constant 0 : index
    %c0_29 = arith.constant 0 : index
    %c12 = arith.constant 12 : index
    %24 = vector.load %arg16[%c0_28, %c0_29, %c12] : memref<12x12x128xf32, #tpu.memory_space<vmem>>, vector<12x12x4xf32>
    tpu.vector_store %arg16[%c0_28, %c0_29, %c12], %23 {strides = array<i32>} : memref<12x12x128xf32, #tpu.memory_space<vmem>>, vector<12x12x4xf32>,
    %c0_30 = arith.constant 0 : index
    %c0_31 = arith.constant 0 : index
    %c4_32 = arith.constant 4 : index
    %c0_33 = arith.constant 0 : index
    %25 = vector.load %arg1[%c0_30, %c0_31, %c4_32, %c0_33] : memref<1x16x16x4xf32, #tpu.memory_space<vmem>>, vector<1x12x12x4xf32>
    %26 = vector.shape_cast %25 : vector<1x12x12x4xf32> to vector<12x12x4xf32>
    %c0_34 = arith.constant 0 : index
    %c0_35 = arith.constant 0 : index
    %c16 = arith.constant 16 : index
    %27 = vector.load %arg16[%c0_34, %c0_35, %c16] : memref<12x12x128xf32, #tpu.memory_space<vmem>>, vector<12x12x4xf32>
    tpu.vector_store %arg16[%c0_34, %c0_35, %c16], %26 {strides = array<i32>} : memref<12x12x128xf32, #tpu.memory_space<vmem>>, vector<12x12x4xf32>,
    %c0_36 = arith.constant 0 : index
    %c1_37 = arith.constant 1 : index
    %c0_38 = arith.constant 0 : index
    %c0_39 = arith.constant 0 : index
    %28 = vector.load %arg1[%c0_36, %c1_37, %c0_38, %c0_39] : memref<1x16x16x4xf32, #tpu.memory_space<vmem>>, vector<1x12x12x4xf32>
    %29 = vector.shape_cast %28 : vector<1x12x12x4xf32> to vector<12x12x4xf32>
    %c0_40 = arith.constant 0 : index
    %c0_41 = arith.constant 0 : index
    %c20 = arith.constant 20 : index
    %30 = vector.load %arg16[%c0_40, %c0_41, %c20] : memref<12x12x128xf32, #tpu.memory_space<vmem>>, vector<12x12x4xf32>
    tpu.vector_store %arg16[%c0_40, %c0_41, %c20], %29 {strides = array<i32>} : memref<12x12x128xf32, #tpu.memory_space<vmem>>, vector<12x12x4xf32>,
    %c0_42 = arith.constant 0 : index
    %c1_43 = arith.constant 1 : index
    %c1_44 = arith.constant 1 : index
    %c0_45 = arith.constant 0 : index
    %31 = vector.load %arg1[%c0_42, %c1_43, %c1_44, %c0_45] : memref<1x16x16x4xf32, #tpu.memory_space<vmem>>, vector<1x12x12x4xf32>
    %32 = vector.shape_cast %31 : vector<1x12x12x4xf32> to vector<12x12x4xf32>
    %c0_46 = arith.constant 0 : index
    %c0_47 = arith.constant 0 : index
    %c24 = arith.constant 24 : index
    %33 = vector.load %arg16[%c0_46, %c0_47, %c24] : memref<12x12x128xf32, #tpu.memory_space<vmem>>, vector<12x12x4xf32>
    tpu.vector_store %arg16[%c0_46, %c0_47, %c24], %32 {strides = array<i32>} : memref<12x12x128xf32, #tpu.memory_space<vmem>>, vector<12x12x4xf32>,
    %c0_48 = arith.constant 0 : index
    %c1_49 = arith.constant 1 : index
    %c2_50 = arith.constant 2 : index
    %c0_51 = arith.constant 0 : index
    %34 = vector.load %arg1[%c0_48, %c1_49, %c2_50, %c0_51] : memref<1x16x16x4xf32, #tpu.memory_space<vmem>>, vector<1x12x12x4xf32>
    %35 = vector.shape_cast %34 : vector<1x12x12x4xf32> to vector<12x12x4xf32>
    %c0_52 = arith.constant 0 : index
    %c0_53 = arith.constant 0 : index
    %c28 = arith.constant 28 : index
    %36 = vector.load %arg16[%c0_52, %c0_53, %c28] : memref<12x12x128xf32, #tpu.memory_space<vmem>>, vector<12x12x4xf32>
    tpu.vector_store %arg16[%c0_52, %c0_53, %c28], %35 {strides = array<i32>} : memref<12x12x128xf32, #tpu.memory_space<vmem>>, vector<12x12x4xf32>,
    %c0_54 = arith.constant 0 : index
    %c1_55 = arith.constant 1 : index
    %c3_56 = arith.constant 3 : index
    %c0_57 = arith.constant 0 : index
    %37 = vector.load %arg1[%c0_54, %c1_55, %c3_56, %c0_57] : memref<1x16x16x4xf32, #tpu.memory_space<vmem>>, vector<1x12x12x4xf32>
    %38 = vector.shape_cast %37 : vector<1x12x12x4xf32> to vector<12x12x4xf32>
    %c0_58 = arith.constant 0 : index
    %c0_59 = arith.constant 0 : index
    %c32 = arith.constant 32 : index
    %39 = vector.load %arg16[%c0_58, %c0_59, %c32] : memref<12x12x128xf32, #tpu.memory_space<vmem>>, vector<12x12x4xf32>
    tpu.vector_store %arg16[%c0_58, %c0_59, %c32], %38 {strides = array<i32>} : memref<12x12x128xf32, #tpu.memory_space<vmem>>, vector<12x12x4xf32>,
    %c0_60 = arith.constant 0 : index
    %c1_61 = arith.constant 1 : index
    %c4_62 = arith.constant 4 : index
    %c0_63 = arith.constant 0 : index
    %40 = vector.load %arg1[%c0_60, %c1_61, %c4_62, %c0_63] : memref<1x16x16x4xf32, #tpu.memory_space<vmem>>, vector<1x12x12x4xf32>
    %41 = vector.shape_cast %40 : vector<1x12x12x4xf32> to vector<12x12x4xf32>
    %c0_64 = arith.constant 0 : index
    %c0_65 = arith.constant 0 : index
    %c36 = arith.constant 36 : index
    %42 = vector.load %arg16[%c0_64, %c0_65, %c36] : memref<12x12x128xf32, #tpu.memory_space<vmem>>, vector<12x12x4xf32>
    tpu.vector_store %arg16[%c0_64, %c0_65, %c36], %41 {strides = array<i32>} : memref<12x12x128xf32, #tpu.memory_space<vmem>>, vector<12x12x4xf32>,
    %c0_66 = arith.constant 0 : index
    %c2_67 = arith.constant 2 : index
    %c0_68 = arith.constant 0 : index
    %c0_69 = arith.constant 0 : index
    %43 = vector.load %arg1[%c0_66, %c2_67, %c0_68, %c0_69] : memref<1x16x16x4xf32, #tpu.memory_space<vmem>>, vector<1x12x12x4xf32>
    %44 = vector.shape_cast %43 : vector<1x12x12x4xf32> to vector<12x12x4xf32>
    %c0_70 = arith.constant 0 : index
    %c0_71 = arith.constant 0 : index
    %c40 = arith.constant 40 : index
    %45 = vector.load %arg16[%c0_70, %c0_71, %c40] : memref<12x12x128xf32, #tpu.memory_space<vmem>>, vector<12x12x4xf32>
    tpu.vector_store %arg16[%c0_70, %c0_71, %c40], %44 {strides = array<i32>} : memref<12x12x128xf32, #tpu.memory_space<vmem>>, vector<12x12x4xf32>,
    %c0_72 = arith.constant 0 : index
    %c2_73 = arith.constant 2 : index
    %c1_74 = arith.constant 1 : index
    %c0_75 = arith.constant 0 : index
    %46 = vector.load %arg1[%c0_72, %c2_73, %c1_74, %c0_75] : memref<1x16x16x4xf32, #tpu.memory_space<vmem>>, vector<1x12x12x4xf32>
    %47 = vector.shape_cast %46 : vector<1x12x12x4xf32> to vector<12x12x4xf32>
    %c0_76 = arith.constant 0 : index
    %c0_77 = arith.constant 0 : index
    %c44 = arith.constant 44 : index
    %48 = vector.load %arg16[%c0_76, %c0_77, %c44] : memref<12x12x128xf32, #tpu.memory_space<vmem>>, vector<12x12x4xf32>
    tpu.vector_store %arg16[%c0_76, %c0_77, %c44], %47 {strides = array<i32>} : memref<12x12x128xf32, #tpu.memory_space<vmem>>, vector<12x12x4xf32>,
    %c0_78 = arith.constant 0 : index
    %c2_79 = arith.constant 2 : index
    %c2_80 = arith.constant 2 : index
    %c0_81 = arith.constant 0 : index
    %49 = vector.load %arg1[%c0_78, %c2_79, %c2_80, %c0_81] : memref<1x16x16x4xf32, #tpu.memory_space<vmem>>, vector<1x12x12x4xf32>
    %50 = vector.shape_cast %49 : vector<1x12x12x4xf32> to vector<12x12x4xf32>
    %c0_82 = arith.constant 0 : index
    %c0_83 = arith.constant 0 : index
    %c48 = arith.constant 48 : index
    %51 = vector.load %arg16[%c0_82, %c0_83, %c48] : memref<12x12x128xf32, #tpu.memory_space<vmem>>, vector<12x12x4xf32>
    tpu.vector_store %arg16[%c0_82, %c0_83, %c48], %50 {strides = array<i32>} : memref<12x12x128xf32, #tpu.memory_space<vmem>>, vector<12x12x4xf32>,
    %c0_84 = arith.constant 0 : index
    %c2_85 = arith.constant 2 : index
    %c3_86 = arith.constant 3 : index
    %c0_87 = arith.constant 0 : index
    %52 = vector.load %arg1[%c0_84, %c2_85, %c3_86, %c0_87] : memref<1x16x16x4xf32, #tpu.memory_space<vmem>>, vector<1x12x12x4xf32>
    %53 = vector.shape_cast %52 : vector<1x12x12x4xf32> to vector<12x12x4xf32>
    %c0_88 = arith.constant 0 : index
    %c0_89 = arith.constant 0 : index
    %c52 = arith.constant 52 : index
    %54 = vector.load %arg16[%c0_88, %c0_89, %c52] : memref<12x12x128xf32, #tpu.memory_space<vmem>>, vector<12x12x4xf32>
    tpu.vector_store %arg16[%c0_88, %c0_89, %c52], %53 {strides = array<i32>} : memref<12x12x128xf32, #tpu.memory_space<vmem>>, vector<12x12x4xf32>,
    %c0_90 = arith.constant 0 : index
    %c2_91 = arith.constant 2 : index
    %c4_92 = arith.constant 4 : index
    %c0_93 = arith.constant 0 : index
    %55 = vector.load %arg1[%c0_90, %c2_91, %c4_92, %c0_93] : memref<1x16x16x4xf32, #tpu.memory_space<vmem>>, vector<1x12x12x4xf32>
    %56 = vector.shape_cast %55 : vector<1x12x12x4xf32> to vector<12x12x4xf32>
    %c0_94 = arith.constant 0 : index
    %c0_95 = arith.constant 0 : index
    %c56 = arith.constant 56 : index
    %57 = vector.load %arg16[%c0_94, %c0_95, %c56] : memref<12x12x128xf32, #tpu.memory_space<vmem>>, vector<12x12x4xf32>
    tpu.vector_store %arg16[%c0_94, %c0_95, %c56], %56 {strides = array<i32>} : memref<12x12x128xf32, #tpu.memory_space<vmem>>, vector<12x12x4xf32>,
    %c0_96 = arith.constant 0 : index
    %c3_97 = arith.constant 3 : index
    %c0_98 = arith.constant 0 : index
    %c0_99 = arith.constant 0 : index
    %58 = vector.load %arg1[%c0_96, %c3_97, %c0_98, %c0_99] : memref<1x16x16x4xf32, #tpu.memory_space<vmem>>, vector<1x12x12x4xf32>
    %59 = vector.shape_cast %58 : vector<1x12x12x4xf32> to vector<12x12x4xf32>
    %c0_100 = arith.constant 0 : index
    %c0_101 = arith.constant 0 : index
    %c60 = arith.constant 60 : index
    %60 = vector.load %arg16[%c0_100, %c0_101, %c60] : memref<12x12x128xf32, #tpu.memory_space<vmem>>, vector<12x12x4xf32>
    tpu.vector_store %arg16[%c0_100, %c0_101, %c60], %59 {strides = array<i32>} : memref<12x12x128xf32, #tpu.memory_space<vmem>>, vector<12x12x4xf32>,
    %c0_102 = arith.constant 0 : index
    %c3_103 = arith.constant 3 : index
    %c1_104 = arith.constant 1 : index
    %c0_105 = arith.constant 0 : index
    %61 = vector.load %arg1[%c0_102, %c3_103, %c1_104, %c0_105] : memref<1x16x16x4xf32, #tpu.memory_space<vmem>>, vector<1x12x12x4xf32>
    %62 = vector.shape_cast %61 : vector<1x12x12x4xf32> to vector<12x12x4xf32>
    %c0_106 = arith.constant 0 : index
    %c0_107 = arith.constant 0 : index
    %c64 = arith.constant 64 : index
    %63 = vector.load %arg16[%c0_106, %c0_107, %c64] : memref<12x12x128xf32, #tpu.memory_space<vmem>>, vector<12x12x4xf32>
    tpu.vector_store %arg16[%c0_106, %c0_107, %c64], %62 {strides = array<i32>} : memref<12x12x128xf32, #tpu.memory_space<vmem>>, vector<12x12x4xf32>,
    %c0_108 = arith.constant 0 : index
    %c3_109 = arith.constant 3 : index
    %c2_110 = arith.constant 2 : index
    %c0_111 = arith.constant 0 : index
    %64 = vector.load %arg1[%c0_108, %c3_109, %c2_110, %c0_111] : memref<1x16x16x4xf32, #tpu.memory_space<vmem>>, vector<1x12x12x4xf32>
    %65 = vector.shape_cast %64 : vector<1x12x12x4xf32> to vector<12x12x4xf32>
    %c0_112 = arith.constant 0 : index
    %c0_113 = arith.constant 0 : index
    %c68 = arith.constant 68 : index
    %66 = vector.load %arg16[%c0_112, %c0_113, %c68] : memref<12x12x128xf32, #tpu.memory_space<vmem>>, vector<12x12x4xf32>
    tpu.vector_store %arg16[%c0_112, %c0_113, %c68], %65 {strides = array<i32>} : memref<12x12x128xf32, #tpu.memory_space<vmem>>, vector<12x12x4xf32>,
    %c0_114 = arith.constant 0 : index
    %c3_115 = arith.constant 3 : index
    %c3_116 = arith.constant 3 : index
    %c0_117 = arith.constant 0 : index
    %67 = vector.load %arg1[%c0_114, %c3_115, %c3_116, %c0_117] : memref<1x16x16x4xf32, #tpu.memory_space<vmem>>, vector<1x12x12x4xf32>
    %68 = vector.shape_cast %67 : vector<1x12x12x4xf32> to vector<12x12x4xf32>
    %c0_118 = arith.constant 0 : index
    %c0_119 = arith.constant 0 : index
    %c72 = arith.constant 72 : index
    %69 = vector.load %arg16[%c0_118, %c0_119, %c72] : memref<12x12x128xf32, #tpu.memory_space<vmem>>, vector<12x12x4xf32>
    tpu.vector_store %arg16[%c0_118, %c0_119, %c72], %68 {strides = array<i32>} : memref<12x12x128xf32, #tpu.memory_space<vmem>>, vector<12x12x4xf32>,
    %c0_120 = arith.constant 0 : index
    %c3_121 = arith.constant 3 : index
    %c4_122 = arith.constant 4 : index
    %c0_123 = arith.constant 0 : index
    %70 = vector.load %arg1[%c0_120, %c3_121, %c4_122, %c0_123] : memref<1x16x16x4xf32, #tpu.memory_space<vmem>>, vector<1x12x12x4xf32>
    %71 = vector.shape_cast %70 : vector<1x12x12x4xf32> to vector<12x12x4xf32>
    %c0_124 = arith.constant 0 : index
    %c0_125 = arith.constant 0 : index
    %c76 = arith.constant 76 : index
    %72 = vector.load %arg16[%c0_124, %c0_125, %c76] : memref<12x12x128xf32, #tpu.memory_space<vmem>>, vector<12x12x4xf32>
    tpu.vector_store %arg16[%c0_124, %c0_125, %c76], %71 {strides = array<i32>} : memref<12x12x128xf32, #tpu.memory_space<vmem>>, vector<12x12x4xf32>,
    %c0_126 = arith.constant 0 : index
    %c4_127 = arith.constant 4 : index
    %c0_128 = arith.constant 0 : index
    %c0_129 = arith.constant 0 : index
    %73 = vector.load %arg1[%c0_126, %c4_127, %c0_128, %c0_129] : memref<1x16x16x4xf32, #tpu.memory_space<vmem>>, vector<1x12x12x4xf32>
    %74 = vector.shape_cast %73 : vector<1x12x12x4xf32> to vector<12x12x4xf32>
    %c0_130 = arith.constant 0 : index
    %c0_131 = arith.constant 0 : index
    %c80 = arith.constant 80 : index
    %75 = vector.load %arg16[%c0_130, %c0_131, %c80] : memref<12x12x128xf32, #tpu.memory_space<vmem>>, vector<12x12x4xf32>
    tpu.vector_store %arg16[%c0_130, %c0_131, %c80], %74 {strides = array<i32>} : memref<12x12x128xf32, #tpu.memory_space<vmem>>, vector<12x12x4xf32>,
    %c0_132 = arith.constant 0 : index
    %c4_133 = arith.constant 4 : index
    %c1_134 = arith.constant 1 : index
    %c0_135 = arith.constant 0 : index
    %76 = vector.load %arg1[%c0_132, %c4_133, %c1_134, %c0_135] : memref<1x16x16x4xf32, #tpu.memory_space<vmem>>, vector<1x12x12x4xf32>
    %77 = vector.shape_cast %76 : vector<1x12x12x4xf32> to vector<12x12x4xf32>
    %c0_136 = arith.constant 0 : index
    %c0_137 = arith.constant 0 : index
    %c84 = arith.constant 84 : index
    %78 = vector.load %arg16[%c0_136, %c0_137, %c84] : memref<12x12x128xf32, #tpu.memory_space<vmem>>, vector<12x12x4xf32>
    tpu.vector_store %arg16[%c0_136, %c0_137, %c84], %77 {strides = array<i32>} : memref<12x12x128xf32, #tpu.memory_space<vmem>>, vector<12x12x4xf32>,
    %c0_138 = arith.constant 0 : index
    %c4_139 = arith.constant 4 : index
    %c2_140 = arith.constant 2 : index
    %c0_141 = arith.constant 0 : index
    %79 = vector.load %arg1[%c0_138, %c4_139, %c2_140, %c0_141] : memref<1x16x16x4xf32, #tpu.memory_space<vmem>>, vector<1x12x12x4xf32>
    %80 = vector.shape_cast %79 : vector<1x12x12x4xf32> to vector<12x12x4xf32>
    %c0_142 = arith.constant 0 : index
    %c0_143 = arith.constant 0 : index
    %c88 = arith.constant 88 : index
    %81 = vector.load %arg16[%c0_142, %c0_143, %c88] : memref<12x12x128xf32, #tpu.memory_space<vmem>>, vector<12x12x4xf32>
    tpu.vector_store %arg16[%c0_142, %c0_143, %c88], %80 {strides = array<i32>} : memref<12x12x128xf32, #tpu.memory_space<vmem>>, vector<12x12x4xf32>,
    %c0_144 = arith.constant 0 : index
    %c4_145 = arith.constant 4 : index
    %c3_146 = arith.constant 3 : index
    %c0_147 = arith.constant 0 : index
    %82 = vector.load %arg1[%c0_144, %c4_145, %c3_146, %c0_147] : memref<1x16x16x4xf32, #tpu.memory_space<vmem>>, vector<1x12x12x4xf32>
    %83 = vector.shape_cast %82 : vector<1x12x12x4xf32> to vector<12x12x4xf32>
    %c0_148 = arith.constant 0 : index
    %c0_149 = arith.constant 0 : index
    %c92 = arith.constant 92 : index
    %84 = vector.load %arg16[%c0_148, %c0_149, %c92] : memref<12x12x128xf32, #tpu.memory_space<vmem>>, vector<12x12x4xf32>
    tpu.vector_store %arg16[%c0_148, %c0_149, %c92], %83 {strides = array<i32>} : memref<12x12x128xf32, #tpu.memory_space<vmem>>, vector<12x12x4xf32>,
    %c0_150 = arith.constant 0 : index
    %c4_151 = arith.constant 4 : index
    %c4_152 = arith.constant 4 : index
    %c0_153 = arith.constant 0 : index
    %85 = vector.load %arg1[%c0_150, %c4_151, %c4_152, %c0_153] : memref<1x16x16x4xf32, #tpu.memory_space<vmem>>, vector<1x12x12x4xf32>
    %86 = vector.shape_cast %85 : vector<1x12x12x4xf32> to vector<12x12x4xf32>
    %c0_154 = arith.constant 0 : index
    %c0_155 = arith.constant 0 : index
    %c96 = arith.constant 96 : index
    %87 = vector.load %arg16[%c0_154, %c0_155, %c96] : memref<12x12x128xf32, #tpu.memory_space<vmem>>, vector<12x12x4xf32>
    tpu.vector_store %arg16[%c0_154, %c0_155, %c96], %86 {strides = array<i32>} : memref<12x12x128xf32, #tpu.memory_space<vmem>>, vector<12x12x4xf32>,
    %c0_156 = arith.constant 0 : index
    %c0_157 = arith.constant 0 : index
    %c0_158 = arith.constant 0 : index
    %88 = vector.load %arg16[%c0_156, %c0_157, %c0_158] : memref<12x12x128xf32, #tpu.memory_space<vmem>>, vector<12x12x128xf32>
    %89 = arith.truncf %88 : vector<12x12x128xf32> to vector<12x12x128xbf16>
    "tpu.trace_start"() <{level = 10 : i32, message = "hwk,hkf->hwf"}> : () -> ()
    %cst_159 = arith.constant dense<0.000000e+00> : vector<12x12x6xf32>
    %90 = tpu.matmul %89, %10, %cst_159 {dimension_numbers = #tpu.dot_dimension_numbers<[2], [1], [1], [2], [0, 0, 0, 1, 1, 2], [0], [0]>} : vector<12x12x128xbf16>, vector<12x128x6xbf16>, vector<12x12x6xf32> -> vector<12x12x6xf32>
    "tpu.trace_stop"() : () -> ()
    %cst_160 = arith.constant 0.000000e+00 : f32
    %91 = vector.broadcast %cst_160 : f32 to vector<12x12x6xf32>
    %92 = arith.maximumf %90, %91 : vector<12x12x6xf32>
    %c0_161 = arith.constant 0 : index
    %c0_162 = arith.constant 0 : index
    %c0_163 = arith.constant 0 : index
    %93 = vector.load %arg18[%c0_161, %c0_162, %c0_163] : memref<12x12x6xf32, #tpu.memory_space<vmem>>, vector<12x12x6xf32>
    tpu.vector_store %arg18[%c0_161, %c0_162, %c0_163], %92 {strides = array<i32>} : memref<12x12x6xf32, #tpu.memory_space<vmem>>, vector<12x12x6xf32>,
    %c0_164 = arith.constant 0 : index
    %c0_165 = arith.constant 0 : index
    %94 = vector.load %arg5[%c0_164, %c0_165] : memref<256x8xf32, #tpu.memory_space<vmem>>, vector<256x8xf32>
    %c0_166 = arith.constant 0 : index
    %c0_167 = arith.constant 0 : index
    %95 = vector.load %arg7[%c0_166, %c0_167] : memref<256x8xf32, #tpu.memory_space<vmem>>, vector<256x8xf32>
    %c0_168 = arith.constant 0 : index
    %c0_169 = arith.constant 0 : index
    %96 = vector.load %arg6[%c0_168, %c0_169] : memref<256x8xf32, #tpu.memory_space<vmem>>, vector<256x8xf32>
    %cst_170 = arith.constant 5.000000e-01 : f32
    %97 = vector.broadcast %cst_170 : f32 to vector<256x8xf32>
    %98 = arith.mulf %97, %96 : vector<256x8xf32>
    %99 = math.exp %98 : vector<256x8xf32>
    %100 = arith.mulf %95, %99 : vector<256x8xf32>
    %101 = arith.addf %94, %100 : vector<256x8xf32>
    %102 = arith.truncf %101 : vector<256x8xf32> to vector<256x8xbf16>
    %103 = vector.shape_cast %102 : vector<256x8xbf16> to vector<1x256x8xbf16>
    %104 = vector.broadcast %103 : vector<1x256x8xbf16> to vector<8x256x8xbf16>
    %cst_171 = arith.constant 0.000000e+00 : f32
    %105 = vector.broadcast %cst_171 : f32 to vector<8x8x106xf32>
    %c0_172 = arith.constant 0 : index
    %c0_173 = arith.constant 0 : index
    %c150 = arith.constant 150 : index
    %106 = vector.load %arg17[%c0_172, %c0_173, %c150] : memref<8x8x256xf32, #tpu.memory_space<vmem>>, vector<8x8x106xf32>
    tpu.vector_store %arg17[%c0_172, %c0_173, %c150], %105 {strides = array<i32>} : memref<8x8x256xf32, #tpu.memory_space<vmem>>, vector<8x8x106xf32>,
    %c0_174 = arith.constant 0 : index
    %c0_175 = arith.constant 0 : index
    %c0_176 = arith.constant 0 : index
    %107 = vector.load %arg18[%c0_174, %c0_175, %c0_176] : memref<12x12x6xf32, #tpu.memory_space<vmem>>, vector<8x8x6xf32>
    %c0_177 = arith.constant 0 : index
    %c0_178 = arith.constant 0 : index
    %c0_179 = arith.constant 0 : index
    %108 = vector.load %arg17[%c0_177, %c0_178, %c0_179] : memref<8x8x256xf32, #tpu.memory_space<vmem>>, vector<8x8x6xf32>
    tpu.vector_store %arg17[%c0_177, %c0_178, %c0_179], %107 {strides = array<i32>} : memref<8x8x256xf32, #tpu.memory_space<vmem>>, vector<8x8x6xf32>,
    %c0_180 = arith.constant 0 : index
    %c1_181 = arith.constant 1 : index
    %c0_182 = arith.constant 0 : index
    %109 = vector.load %arg18[%c0_180, %c1_181, %c0_182] : memref<12x12x6xf32, #tpu.memory_space<vmem>>, vector<8x8x6xf32>
    %c0_183 = arith.constant 0 : index
    %c0_184 = arith.constant 0 : index
    %c6 = arith.constant 6 : index
    %110 = vector.load %arg17[%c0_183, %c0_184, %c6] : memref<8x8x256xf32, #tpu.memory_space<vmem>>, vector<8x8x6xf32>
    tpu.vector_store %arg17[%c0_183, %c0_184, %c6], %109 {strides = array<i32>} : memref<8x8x256xf32, #tpu.memory_space<vmem>>, vector<8x8x6xf32>,
    %c0_185 = arith.constant 0 : index
    %c2_186 = arith.constant 2 : index
    %c0_187 = arith.constant 0 : index
    %111 = vector.load %arg18[%c0_185, %c2_186, %c0_187] : memref<12x12x6xf32, #tpu.memory_space<vmem>>, vector<8x8x6xf32>
    %c0_188 = arith.constant 0 : index
    %c0_189 = arith.constant 0 : index
    %c12_190 = arith.constant 12 : index
    %112 = vector.load %arg17[%c0_188, %c0_189, %c12_190] : memref<8x8x256xf32, #tpu.memory_space<vmem>>, vector<8x8x6xf32>
    tpu.vector_store %arg17[%c0_188, %c0_189, %c12_190], %111 {strides = array<i32>} : memref<8x8x256xf32, #tpu.memory_space<vmem>>, vector<8x8x6xf32>,
    %c0_191 = arith.constant 0 : index
    %c3_192 = arith.constant 3 : index
    %c0_193 = arith.constant 0 : index
    %113 = vector.load %arg18[%c0_191, %c3_192, %c0_193] : memref<12x12x6xf32, #tpu.memory_space<vmem>>, vector<8x8x6xf32>
    %c0_194 = arith.constant 0 : index
    %c0_195 = arith.constant 0 : index
    %c18 = arith.constant 18 : index
    %114 = vector.load %arg17[%c0_194, %c0_195, %c18] : memref<8x8x256xf32, #tpu.memory_space<vmem>>, vector<8x8x6xf32>
    tpu.vector_store %arg17[%c0_194, %c0_195, %c18], %113 {strides = array<i32>} : memref<8x8x256xf32, #tpu.memory_space<vmem>>, vector<8x8x6xf32>,
    %c0_196 = arith.constant 0 : index
    %c4_197 = arith.constant 4 : index
    %c0_198 = arith.constant 0 : index
    %115 = vector.load %arg18[%c0_196, %c4_197, %c0_198] : memref<12x12x6xf32, #tpu.memory_space<vmem>>, vector<8x8x6xf32>
    %c0_199 = arith.constant 0 : index
    %c0_200 = arith.constant 0 : index
    %c24_201 = arith.constant 24 : index
    %116 = vector.load %arg17[%c0_199, %c0_200, %c24_201] : memref<8x8x256xf32, #tpu.memory_space<vmem>>, vector<8x8x6xf32>
    tpu.vector_store %arg17[%c0_199, %c0_200, %c24_201], %115 {strides = array<i32>} : memref<8x8x256xf32, #tpu.memory_space<vmem>>, vector<8x8x6xf32>,
    %c1_202 = arith.constant 1 : index
    %c0_203 = arith.constant 0 : index
    %c0_204 = arith.constant 0 : index
    %117 = vector.load %arg18[%c1_202, %c0_203, %c0_204] : memref<12x12x6xf32, #tpu.memory_space<vmem>>, vector<8x8x6xf32>
    %c0_205 = arith.constant 0 : index
    %c0_206 = arith.constant 0 : index
    %c30 = arith.constant 30 : index
    %118 = vector.load %arg17[%c0_205, %c0_206, %c30] : memref<8x8x256xf32, #tpu.memory_space<vmem>>, vector<8x8x6xf32>
    tpu.vector_store %arg17[%c0_205, %c0_206, %c30], %117 {strides = array<i32>} : memref<8x8x256xf32, #tpu.memory_space<vmem>>, vector<8x8x6xf32>,
    %c1_207 = arith.constant 1 : index
    %c1_208 = arith.constant 1 : index
    %c0_209 = arith.constant 0 : index
    %119 = vector.load %arg18[%c1_207, %c1_208, %c0_209] : memref<12x12x6xf32, #tpu.memory_space<vmem>>, vector<8x8x6xf32>
    %c0_210 = arith.constant 0 : index
    %c0_211 = arith.constant 0 : index
    %c36_212 = arith.constant 36 : index
    %120 = vector.load %arg17[%c0_210, %c0_211, %c36_212] : memref<8x8x256xf32, #tpu.memory_space<vmem>>, vector<8x8x6xf32>
    tpu.vector_store %arg17[%c0_210, %c0_211, %c36_212], %119 {strides = array<i32>} : memref<8x8x256xf32, #tpu.memory_space<vmem>>, vector<8x8x6xf32>,
    %c1_213 = arith.constant 1 : index
    %c2_214 = arith.constant 2 : index
    %c0_215 = arith.constant 0 : index
    %121 = vector.load %arg18[%c1_213, %c2_214, %c0_215] : memref<12x12x6xf32, #tpu.memory_space<vmem>>, vector<8x8x6xf32>
    %c0_216 = arith.constant 0 : index
    %c0_217 = arith.constant 0 : index
    %c42 = arith.constant 42 : index
    %122 = vector.load %arg17[%c0_216, %c0_217, %c42] : memref<8x8x256xf32, #tpu.memory_space<vmem>>, vector<8x8x6xf32>
    tpu.vector_store %arg17[%c0_216, %c0_217, %c42], %121 {strides = array<i32>} : memref<8x8x256xf32, #tpu.memory_space<vmem>>, vector<8x8x6xf32>,
    %c1_218 = arith.constant 1 : index
    %c3_219 = arith.constant 3 : index
    %c0_220 = arith.constant 0 : index
    %123 = vector.load %arg18[%c1_218, %c3_219, %c0_220] : memref<12x12x6xf32, #tpu.memory_space<vmem>>, vector<8x8x6xf32>
    %c0_221 = arith.constant 0 : index
    %c0_222 = arith.constant 0 : index
    %c48_223 = arith.constant 48 : index
    %124 = vector.load %arg17[%c0_221, %c0_222, %c48_223] : memref<8x8x256xf32, #tpu.memory_space<vmem>>, vector<8x8x6xf32>
    tpu.vector_store %arg17[%c0_221, %c0_222, %c48_223], %123 {strides = array<i32>} : memref<8x8x256xf32, #tpu.memory_space<vmem>>, vector<8x8x6xf32>,
    %c1_224 = arith.constant 1 : index
    %c4_225 = arith.constant 4 : index
    %c0_226 = arith.constant 0 : index
    %125 = vector.load %arg18[%c1_224, %c4_225, %c0_226] : memref<12x12x6xf32, #tpu.memory_space<vmem>>, vector<8x8x6xf32>
    %c0_227 = arith.constant 0 : index
    %c0_228 = arith.constant 0 : index
    %c54 = arith.constant 54 : index
    %126 = vector.load %arg17[%c0_227, %c0_228, %c54] : memref<8x8x256xf32, #tpu.memory_space<vmem>>, vector<8x8x6xf32>
    tpu.vector_store %arg17[%c0_227, %c0_228, %c54], %125 {strides = array<i32>} : memref<8x8x256xf32, #tpu.memory_space<vmem>>, vector<8x8x6xf32>,
    %c2_229 = arith.constant 2 : index
    %c0_230 = arith.constant 0 : index
    %c0_231 = arith.constant 0 : index
    %127 = vector.load %arg18[%c2_229, %c0_230, %c0_231] : memref<12x12x6xf32, #tpu.memory_space<vmem>>, vector<8x8x6xf32>
    %c0_232 = arith.constant 0 : index
    %c0_233 = arith.constant 0 : index
    %c60_234 = arith.constant 60 : index
    %128 = vector.load %arg17[%c0_232, %c0_233, %c60_234] : memref<8x8x256xf32, #tpu.memory_space<vmem>>, vector<8x8x6xf32>
    tpu.vector_store %arg17[%c0_232, %c0_233, %c60_234], %127 {strides = array<i32>} : memref<8x8x256xf32, #tpu.memory_space<vmem>>, vector<8x8x6xf32>,
    %c2_235 = arith.constant 2 : index
    %c1_236 = arith.constant 1 : index
    %c0_237 = arith.constant 0 : index
    %129 = vector.load %arg18[%c2_235, %c1_236, %c0_237] : memref<12x12x6xf32, #tpu.memory_space<vmem>>, vector<8x8x6xf32>
    %c0_238 = arith.constant 0 : index
    %c0_239 = arith.constant 0 : index
    %c66 = arith.constant 66 : index
    %130 = vector.load %arg17[%c0_238, %c0_239, %c66] : memref<8x8x256xf32, #tpu.memory_space<vmem>>, vector<8x8x6xf32>
    tpu.vector_store %arg17[%c0_238, %c0_239, %c66], %129 {strides = array<i32>} : memref<8x8x256xf32, #tpu.memory_space<vmem>>, vector<8x8x6xf32>,
    %c2_240 = arith.constant 2 : index
    %c2_241 = arith.constant 2 : index
    %c0_242 = arith.constant 0 : index
    %131 = vector.load %arg18[%c2_240, %c2_241, %c0_242] : memref<12x12x6xf32, #tpu.memory_space<vmem>>, vector<8x8x6xf32>
    %c0_243 = arith.constant 0 : index
    %c0_244 = arith.constant 0 : index
    %c72_245 = arith.constant 72 : index
    %132 = vector.load %arg17[%c0_243, %c0_244, %c72_245] : memref<8x8x256xf32, #tpu.memory_space<vmem>>, vector<8x8x6xf32>
    tpu.vector_store %arg17[%c0_243, %c0_244, %c72_245], %131 {strides = array<i32>} : memref<8x8x256xf32, #tpu.memory_space<vmem>>, vector<8x8x6xf32>,
    %c2_246 = arith.constant 2 : index
    %c3_247 = arith.constant 3 : index
    %c0_248 = arith.constant 0 : index
    %133 = vector.load %arg18[%c2_246, %c3_247, %c0_248] : memref<12x12x6xf32, #tpu.memory_space<vmem>>, vector<8x8x6xf32>
    %c0_249 = arith.constant 0 : index
    %c0_250 = arith.constant 0 : index
    %c78 = arith.constant 78 : index
    %134 = vector.load %arg17[%c0_249, %c0_250, %c78] : memref<8x8x256xf32, #tpu.memory_space<vmem>>, vector<8x8x6xf32>
    tpu.vector_store %arg17[%c0_249, %c0_250, %c78], %133 {strides = array<i32>} : memref<8x8x256xf32, #tpu.memory_space<vmem>>, vector<8x8x6xf32>,
    %c2_251 = arith.constant 2 : index
    %c4_252 = arith.constant 4 : index
    %c0_253 = arith.constant 0 : index
    %135 = vector.load %arg18[%c2_251, %c4_252, %c0_253] : memref<12x12x6xf32, #tpu.memory_space<vmem>>, vector<8x8x6xf32>
    %c0_254 = arith.constant 0 : index
    %c0_255 = arith.constant 0 : index
    %c84_256 = arith.constant 84 : index
    %136 = vector.load %arg17[%c0_254, %c0_255, %c84_256] : memref<8x8x256xf32, #tpu.memory_space<vmem>>, vector<8x8x6xf32>
    tpu.vector_store %arg17[%c0_254, %c0_255, %c84_256], %135 {strides = array<i32>} : memref<8x8x256xf32, #tpu.memory_space<vmem>>, vector<8x8x6xf32>,
    %c3_257 = arith.constant 3 : index
    %c0_258 = arith.constant 0 : index
    %c0_259 = arith.constant 0 : index
    %137 = vector.load %arg18[%c3_257, %c0_258, %c0_259] : memref<12x12x6xf32, #tpu.memory_space<vmem>>, vector<8x8x6xf32>
    %c0_260 = arith.constant 0 : index
    %c0_261 = arith.constant 0 : index
    %c90 = arith.constant 90 : index
    %138 = vector.load %arg17[%c0_260, %c0_261, %c90] : memref<8x8x256xf32, #tpu.memory_space<vmem>>, vector<8x8x6xf32>
    tpu.vector_store %arg17[%c0_260, %c0_261, %c90], %137 {strides = array<i32>} : memref<8x8x256xf32, #tpu.memory_space<vmem>>, vector<8x8x6xf32>,
    %c3_262 = arith.constant 3 : index
    %c1_263 = arith.constant 1 : index
    %c0_264 = arith.constant 0 : index
    %139 = vector.load %arg18[%c3_262, %c1_263, %c0_264] : memref<12x12x6xf32, #tpu.memory_space<vmem>>, vector<8x8x6xf32>
    %c0_265 = arith.constant 0 : index
    %c0_266 = arith.constant 0 : index
    %c96_267 = arith.constant 96 : index
    %140 = vector.load %arg17[%c0_265, %c0_266, %c96_267] : memref<8x8x256xf32, #tpu.memory_space<vmem>>, vector<8x8x6xf32>
    tpu.vector_store %arg17[%c0_265, %c0_266, %c96_267], %139 {strides = array<i32>} : memref<8x8x256xf32, #tpu.memory_space<vmem>>, vector<8x8x6xf32>,
    %c3_268 = arith.constant 3 : index
    %c2_269 = arith.constant 2 : index
    %c0_270 = arith.constant 0 : index
    %141 = vector.load %arg18[%c3_268, %c2_269, %c0_270] : memref<12x12x6xf32, #tpu.memory_space<vmem>>, vector<8x8x6xf32>
    %c0_271 = arith.constant 0 : index
    %c0_272 = arith.constant 0 : index
    %c102 = arith.constant 102 : index
    %142 = vector.load %arg17[%c0_271, %c0_272, %c102] : memref<8x8x256xf32, #tpu.memory_space<vmem>>, vector<8x8x6xf32>
    tpu.vector_store %arg17[%c0_271, %c0_272, %c102], %141 {strides = array<i32>} : memref<8x8x256xf32, #tpu.memory_space<vmem>>, vector<8x8x6xf32>,
    %c3_273 = arith.constant 3 : index
    %c3_274 = arith.constant 3 : index
    %c0_275 = arith.constant 0 : index
    %143 = vector.load %arg18[%c3_273, %c3_274, %c0_275] : memref<12x12x6xf32, #tpu.memory_space<vmem>>, vector<8x8x6xf32>
    %c0_276 = arith.constant 0 : index
    %c0_277 = arith.constant 0 : index
    %c108 = arith.constant 108 : index
    %144 = vector.load %arg17[%c0_276, %c0_277, %c108] : memref<8x8x256xf32, #tpu.memory_space<vmem>>, vector<8x8x6xf32>
    tpu.vector_store %arg17[%c0_276, %c0_277, %c108], %143 {strides = array<i32>} : memref<8x8x256xf32, #tpu.memory_space<vmem>>, vector<8x8x6xf32>,
    %c3_278 = arith.constant 3 : index
    %c4_279 = arith.constant 4 : index
    %c0_280 = arith.constant 0 : index
    %145 = vector.load %arg18[%c3_278, %c4_279, %c0_280] : memref<12x12x6xf32, #tpu.memory_space<vmem>>, vector<8x8x6xf32>
    %c0_281 = arith.constant 0 : index
    %c0_282 = arith.constant 0 : index
    %c114 = arith.constant 114 : index
    %146 = vector.load %arg17[%c0_281, %c0_282, %c114] : memref<8x8x256xf32, #tpu.memory_space<vmem>>, vector<8x8x6xf32>
    tpu.vector_store %arg17[%c0_281, %c0_282, %c114], %145 {strides = array<i32>} : memref<8x8x256xf32, #tpu.memory_space<vmem>>, vector<8x8x6xf32>,
    %c4_283 = arith.constant 4 : index
    %c0_284 = arith.constant 0 : index
    %c0_285 = arith.constant 0 : index
    %147 = vector.load %arg18[%c4_283, %c0_284, %c0_285] : memref<12x12x6xf32, #tpu.memory_space<vmem>>, vector<8x8x6xf32>
    %c0_286 = arith.constant 0 : index
    %c0_287 = arith.constant 0 : index
    %c120 = arith.constant 120 : index
    %148 = vector.load %arg17[%c0_286, %c0_287, %c120] : memref<8x8x256xf32, #tpu.memory_space<vmem>>, vector<8x8x6xf32>
    tpu.vector_store %arg17[%c0_286, %c0_287, %c120], %147 {strides = array<i32>} : memref<8x8x256xf32, #tpu.memory_space<vmem>>, vector<8x8x6xf32>,
    %c4_288 = arith.constant 4 : index
    %c1_289 = arith.constant 1 : index
    %c0_290 = arith.constant 0 : index
    %149 = vector.load %arg18[%c4_288, %c1_289, %c0_290] : memref<12x12x6xf32, #tpu.memory_space<vmem>>, vector<8x8x6xf32>
    %c0_291 = arith.constant 0 : index
    %c0_292 = arith.constant 0 : index
    %c126 = arith.constant 126 : index
    %150 = vector.load %arg17[%c0_291, %c0_292, %c126] : memref<8x8x256xf32, #tpu.memory_space<vmem>>, vector<8x8x6xf32>
    tpu.vector_store %arg17[%c0_291, %c0_292, %c126], %149 {strides = array<i32>} : memref<8x8x256xf32, #tpu.memory_space<vmem>>, vector<8x8x6xf32>,
    %c4_293 = arith.constant 4 : index
    %c2_294 = arith.constant 2 : index
    %c0_295 = arith.constant 0 : index
    %151 = vector.load %arg18[%c4_293, %c2_294, %c0_295] : memref<12x12x6xf32, #tpu.memory_space<vmem>>, vector<8x8x6xf32>
    %c0_296 = arith.constant 0 : index
    %c0_297 = arith.constant 0 : index
    %c132 = arith.constant 132 : index
    %152 = vector.load %arg17[%c0_296, %c0_297, %c132] : memref<8x8x256xf32, #tpu.memory_space<vmem>>, vector<8x8x6xf32>
    tpu.vector_store %arg17[%c0_296, %c0_297, %c132], %151 {strides = array<i32>} : memref<8x8x256xf32, #tpu.memory_space<vmem>>, vector<8x8x6xf32>,
    %c4_298 = arith.constant 4 : index
    %c3_299 = arith.constant 3 : index
    %c0_300 = arith.constant 0 : index
    %153 = vector.load %arg18[%c4_298, %c3_299, %c0_300] : memref<12x12x6xf32, #tpu.memory_space<vmem>>, vector<8x8x6xf32>
    %c0_301 = arith.constant 0 : index
    %c0_302 = arith.constant 0 : index
    %c138 = arith.constant 138 : index
    %154 = vector.load %arg17[%c0_301, %c0_302, %c138] : memref<8x8x256xf32, #tpu.memory_space<vmem>>, vector<8x8x6xf32>
    tpu.vector_store %arg17[%c0_301, %c0_302, %c138], %153 {strides = array<i32>} : memref<8x8x256xf32, #tpu.memory_space<vmem>>, vector<8x8x6xf32>,
    %c4_303 = arith.constant 4 : index
    %c4_304 = arith.constant 4 : index
    %c0_305 = arith.constant 0 : index
    %155 = vector.load %arg18[%c4_303, %c4_304, %c0_305] : memref<12x12x6xf32, #tpu.memory_space<vmem>>, vector<8x8x6xf32>
    %c0_306 = arith.constant 0 : index
    %c0_307 = arith.constant 0 : index
    %c144 = arith.constant 144 : index
    %156 = vector.load %arg17[%c0_306, %c0_307, %c144] : memref<8x8x256xf32, #tpu.memory_space<vmem>>, vector<8x8x6xf32>
    tpu.vector_store %arg17[%c0_306, %c0_307, %c144], %155 {strides = array<i32>} : memref<8x8x256xf32, #tpu.memory_space<vmem>>, vector<8x8x6xf32>,
    %c0_308 = arith.constant 0 : index
    %c0_309 = arith.constant 0 : index
    %c0_310 = arith.constant 0 : index
    %157 = vector.load %arg17[%c0_308, %c0_309, %c0_310] : memref<8x8x256xf32, #tpu.memory_space<vmem>>, vector<8x8x256xf32>
    %158 = arith.truncf %157 : vector<8x8x256xf32> to vector<8x8x256xbf16>
    "tpu.trace_start"() <{level = 10 : i32, message = "hwk,hkf->hwf"}> : () -> ()
    %cst_311 = arith.constant dense<0.000000e+00> : vector<8x8x8xf32>
    %159 = tpu.matmul %158, %104, %cst_311 {dimension_numbers = #tpu.dot_dimension_numbers<[2], [1], [1], [2], [0, 0, 0, 1, 1, 2], [0], [0]>} : vector<8x8x256xbf16>, vector<8x256x8xbf16>, vector<8x8x8xf32> -> vector<8x8x8xf32>
    "tpu.trace_stop"() : () -> ()
    %cst_312 = arith.constant 0.000000e+00 : f32
    %160 = vector.broadcast %cst_312 : f32 to vector<8x8x8xf32>
    %161 = arith.maximumf %159, %160 : vector<8x8x8xf32>
    %162 = vector.extract_strided_slice %161 {offsets = [0, 0, 0], sizes = [1, 1, 8], strides = [1, 1, 1]} : vector<8x8x8xf32> to vector<1x1x8xf32>
    %163 = vector.shape_cast %162 : vector<1x1x8xf32> to vector<1x8xf32>
    %c0_313 = arith.constant 0 : index
    %c0_314 = arith.constant 0 : index
    %164 = vector.load %arg19[%c0_313, %c0_314] : memref<1x512xf32, #tpu.memory_space<vmem>>, vector<1x8xf32>
    tpu.vector_store %arg19[%c0_313, %c0_314], %163 {strides = array<i32>} : memref<1x512xf32, #tpu.memory_space<vmem>>, vector<1x8xf32>,
    %165 = vector.extract_strided_slice %161 {offsets = [0, 1, 0], sizes = [1, 1, 8], strides = [1, 1, 1]} : vector<8x8x8xf32> to vector<1x1x8xf32>
    %166 = vector.shape_cast %165 : vector<1x1x8xf32> to vector<1x8xf32>
    %c0_315 = arith.constant 0 : index
    %c8_316 = arith.constant 8 : index
    %167 = vector.load %arg19[%c0_315, %c8_316] : memref<1x512xf32, #tpu.memory_space<vmem>>, vector<1x8xf32>
    tpu.vector_store %arg19[%c0_315, %c8_316], %166 {strides = array<i32>} : memref<1x512xf32, #tpu.memory_space<vmem>>, vector<1x8xf32>,
    %168 = vector.extract_strided_slice %161 {offsets = [0, 2, 0], sizes = [1, 1, 8], strides = [1, 1, 1]} : vector<8x8x8xf32> to vector<1x1x8xf32>
    %169 = vector.shape_cast %168 : vector<1x1x8xf32> to vector<1x8xf32>
    %c0_317 = arith.constant 0 : index
    %c16_318 = arith.constant 16 : index
    %170 = vector.load %arg19[%c0_317, %c16_318] : memref<1x512xf32, #tpu.memory_space<vmem>>, vector<1x8xf32>
    tpu.vector_store %arg19[%c0_317, %c16_318], %169 {strides = array<i32>} : memref<1x512xf32, #tpu.memory_space<vmem>>, vector<1x8xf32>,
    %171 = vector.extract_strided_slice %161 {offsets = [0, 3, 0], sizes = [1, 1, 8], strides = [1, 1, 1]} : vector<8x8x8xf32> to vector<1x1x8xf32>
    %172 = vector.shape_cast %171 : vector<1x1x8xf32> to vector<1x8xf32>
    %c0_319 = arith.constant 0 : index
    %c24_320 = arith.constant 24 : index
    %173 = vector.load %arg19[%c0_319, %c24_320] : memref<1x512xf32, #tpu.memory_space<vmem>>, vector<1x8xf32>
    tpu.vector_store %arg19[%c0_319, %c24_320], %172 {strides = array<i32>} : memref<1x512xf32, #tpu.memory_space<vmem>>, vector<1x8xf32>,
    %174 = vector.extract_strided_slice %161 {offsets = [0, 4, 0], sizes = [1, 1, 8], strides = [1, 1, 1]} : vector<8x8x8xf32> to vector<1x1x8xf32>
    %175 = vector.shape_cast %174 : vector<1x1x8xf32> to vector<1x8xf32>
    %c0_321 = arith.constant 0 : index
    %c32_322 = arith.constant 32 : index
    %176 = vector.load %arg19[%c0_321, %c32_322] : memref<1x512xf32, #tpu.memory_space<vmem>>, vector<1x8xf32>
    tpu.vector_store %arg19[%c0_321, %c32_322], %175 {strides = array<i32>} : memref<1x512xf32, #tpu.memory_space<vmem>>, vector<1x8xf32>,
    %177 = vector.extract_strided_slice %161 {offsets = [0, 5, 0], sizes = [1, 1, 8], strides = [1, 1, 1]} : vector<8x8x8xf32> to vector<1x1x8xf32>
    %178 = vector.shape_cast %177 : vector<1x1x8xf32> to vector<1x8xf32>
    %c0_323 = arith.constant 0 : index
    %c40_324 = arith.constant 40 : index
    %179 = vector.load %arg19[%c0_323, %c40_324] : memref<1x512xf32, #tpu.memory_space<vmem>>, vector<1x8xf32>
    tpu.vector_store %arg19[%c0_323, %c40_324], %178 {strides = array<i32>} : memref<1x512xf32, #tpu.memory_space<vmem>>, vector<1x8xf32>,
    %180 = vector.extract_strided_slice %161 {offsets = [0, 6, 0], sizes = [1, 1, 8], strides = [1, 1, 1]} : vector<8x8x8xf32> to vector<1x1x8xf32>
    %181 = vector.shape_cast %180 : vector<1x1x8xf32> to vector<1x8xf32>
    %c0_325 = arith.constant 0 : index
    %c48_326 = arith.constant 48 : index
    %182 = vector.load %arg19[%c0_325, %c48_326] : memref<1x512xf32, #tpu.memory_space<vmem>>, vector<1x8xf32>
    tpu.vector_store %arg19[%c0_325, %c48_326], %181 {strides = array<i32>} : memref<1x512xf32, #tpu.memory_space<vmem>>, vector<1x8xf32>,
    %183 = vector.extract_strided_slice %161 {offsets = [0, 7, 0], sizes = [1, 1, 8], strides = [1, 1, 1]} : vector<8x8x8xf32> to vector<1x1x8xf32>
    %184 = vector.shape_cast %183 : vector<1x1x8xf32> to vector<1x8xf32>
    %c0_327 = arith.constant 0 : index
    %c56_328 = arith.constant 56 : index
    %185 = vector.load %arg19[%c0_327, %c56_328] : memref<1x512xf32, #tpu.memory_space<vmem>>, vector<1x8xf32>
    tpu.vector_store %arg19[%c0_327, %c56_328], %184 {strides = array<i32>} : memref<1x512xf32, #tpu.memory_space<vmem>>, vector<1x8xf32>,
    %186 = vector.extract_strided_slice %161 {offsets = [1, 0, 0], sizes = [1, 1, 8], strides = [1, 1, 1]} : vector<8x8x8xf32> to vector<1x1x8xf32>
    %187 = vector.shape_cast %186 : vector<1x1x8xf32> to vector<1x8xf32>
    %c0_329 = arith.constant 0 : index
    %c64_330 = arith.constant 64 : index
    %188 = vector.load %arg19[%c0_329, %c64_330] : memref<1x512xf32, #tpu.memory_space<vmem>>, vector<1x8xf32>
    tpu.vector_store %arg19[%c0_329, %c64_330], %187 {strides = array<i32>} : memref<1x512xf32, #tpu.memory_space<vmem>>, vector<1x8xf32>,
    %189 = vector.extract_strided_slice %161 {offsets = [1, 1, 0], sizes = [1, 1, 8], strides = [1, 1, 1]} : vector<8x8x8xf32> to vector<1x1x8xf32>
    %190 = vector.shape_cast %189 : vector<1x1x8xf32> to vector<1x8xf32>
    %c0_331 = arith.constant 0 : index
    %c72_332 = arith.constant 72 : index
    %191 = vector.load %arg19[%c0_331, %c72_332] : memref<1x512xf32, #tpu.memory_space<vmem>>, vector<1x8xf32>
    tpu.vector_store %arg19[%c0_331, %c72_332], %190 {strides = array<i32>} : memref<1x512xf32, #tpu.memory_space<vmem>>, vector<1x8xf32>,
    %192 = vector.extract_strided_slice %161 {offsets = [1, 2, 0], sizes = [1, 1, 8], strides = [1, 1, 1]} : vector<8x8x8xf32> to vector<1x1x8xf32>
    %193 = vector.shape_cast %192 : vector<1x1x8xf32> to vector<1x8xf32>
    %c0_333 = arith.constant 0 : index
    %c80_334 = arith.constant 80 : index
    %194 = vector.load %arg19[%c0_333, %c80_334] : memref<1x512xf32, #tpu.memory_space<vmem>>, vector<1x8xf32>
    tpu.vector_store %arg19[%c0_333, %c80_334], %193 {strides = array<i32>} : memref<1x512xf32, #tpu.memory_space<vmem>>, vector<1x8xf32>,
    %195 = vector.extract_strided_slice %161 {offsets = [1, 3, 0], sizes = [1, 1, 8], strides = [1, 1, 1]} : vector<8x8x8xf32> to vector<1x1x8xf32>
    %196 = vector.shape_cast %195 : vector<1x1x8xf32> to vector<1x8xf32>
    %c0_335 = arith.constant 0 : index
    %c88_336 = arith.constant 88 : index
    %197 = vector.load %arg19[%c0_335, %c88_336] : memref<1x512xf32, #tpu.memory_space<vmem>>, vector<1x8xf32>
    tpu.vector_store %arg19[%c0_335, %c88_336], %196 {strides = array<i32>} : memref<1x512xf32, #tpu.memory_space<vmem>>, vector<1x8xf32>,
    %198 = vector.extract_strided_slice %161 {offsets = [1, 4, 0], sizes = [1, 1, 8], strides = [1, 1, 1]} : vector<8x8x8xf32> to vector<1x1x8xf32>
    %199 = vector.shape_cast %198 : vector<1x1x8xf32> to vector<1x8xf32>
    %c0_337 = arith.constant 0 : index
    %c96_338 = arith.constant 96 : index
    %200 = vector.load %arg19[%c0_337, %c96_338] : memref<1x512xf32, #tpu.memory_space<vmem>>, vector<1x8xf32>
    tpu.vector_store %arg19[%c0_337, %c96_338], %199 {strides = array<i32>} : memref<1x512xf32, #tpu.memory_space<vmem>>, vector<1x8xf32>,
    %201 = vector.extract_strided_slice %161 {offsets = [1, 5, 0], sizes = [1, 1, 8], strides = [1, 1, 1]} : vector<8x8x8xf32> to vector<1x1x8xf32>
    %202 = vector.shape_cast %201 : vector<1x1x8xf32> to vector<1x8xf32>
    %c0_339 = arith.constant 0 : index
    %c104 = arith.constant 104 : index
    %203 = vector.load %arg19[%c0_339, %c104] : memref<1x512xf32, #tpu.memory_space<vmem>>, vector<1x8xf32>
    tpu.vector_store %arg19[%c0_339, %c104], %202 {strides = array<i32>} : memref<1x512xf32, #tpu.memory_space<vmem>>, vector<1x8xf32>,
    %204 = vector.extract_strided_slice %161 {offsets = [1, 6, 0], sizes = [1, 1, 8], strides = [1, 1, 1]} : vector<8x8x8xf32> to vector<1x1x8xf32>
    %205 = vector.shape_cast %204 : vector<1x1x8xf32> to vector<1x8xf32>
    %c0_340 = arith.constant 0 : index
    %c112 = arith.constant 112 : index
    %206 = vector.load %arg19[%c0_340, %c112] : memref<1x512xf32, #tpu.memory_space<vmem>>, vector<1x8xf32>
    tpu.vector_store %arg19[%c0_340, %c112], %205 {strides = array<i32>} : memref<1x512xf32, #tpu.memory_space<vmem>>, vector<1x8xf32>,
    %207 = vector.extract_strided_slice %161 {offsets = [1, 7, 0], sizes = [1, 1, 8], strides = [1, 1, 1]} : vector<8x8x8xf32> to vector<1x1x8xf32>
    %208 = vector.shape_cast %207 : vector<1x1x8xf32> to vector<1x8xf32>
    %c0_341 = arith.constant 0 : index
    %c120_342 = arith.constant 120 : index
    %209 = vector.load %arg19[%c0_341, %c120_342] : memref<1x512xf32, #tpu.memory_space<vmem>>, vector<1x8xf32>
    tpu.vector_store %arg19[%c0_341, %c120_342], %208 {strides = array<i32>} : memref<1x512xf32, #tpu.memory_space<vmem>>, vector<1x8xf32>,
    %210 = vector.extract_strided_slice %161 {offsets = [2, 0, 0], sizes = [1, 1, 8], strides = [1, 1, 1]} : vector<8x8x8xf32> to vector<1x1x8xf32>
    %211 = vector.shape_cast %210 : vector<1x1x8xf32> to vector<1x8xf32>
    %c0_343 = arith.constant 0 : index
    %c128 = arith.constant 128 : index
    %212 = vector.load %arg19[%c0_343, %c128] : memref<1x512xf32, #tpu.memory_space<vmem>>, vector<1x8xf32>
    tpu.vector_store %arg19[%c0_343, %c128], %211 {strides = array<i32>} : memref<1x512xf32, #tpu.memory_space<vmem>>, vector<1x8xf32>,
    %213 = vector.extract_strided_slice %161 {offsets = [2, 1, 0], sizes = [1, 1, 8], strides = [1, 1, 1]} : vector<8x8x8xf32> to vector<1x1x8xf32>
    %214 = vector.shape_cast %213 : vector<1x1x8xf32> to vector<1x8xf32>
    %c0_344 = arith.constant 0 : index
    %c136 = arith.constant 136 : index
    %215 = vector.load %arg19[%c0_344, %c136] : memref<1x512xf32, #tpu.memory_space<vmem>>, vector<1x8xf32>
    tpu.vector_store %arg19[%c0_344, %c136], %214 {strides = array<i32>} : memref<1x512xf32, #tpu.memory_space<vmem>>, vector<1x8xf32>,
    %216 = vector.extract_strided_slice %161 {offsets = [2, 2, 0], sizes = [1, 1, 8], strides = [1, 1, 1]} : vector<8x8x8xf32> to vector<1x1x8xf32>
    %217 = vector.shape_cast %216 : vector<1x1x8xf32> to vector<1x8xf32>
    %c0_345 = arith.constant 0 : index
    %c144_346 = arith.constant 144 : index
    %218 = vector.load %arg19[%c0_345, %c144_346] : memref<1x512xf32, #tpu.memory_space<vmem>>, vector<1x8xf32>
    tpu.vector_store %arg19[%c0_345, %c144_346], %217 {strides = array<i32>} : memref<1x512xf32, #tpu.memory_space<vmem>>, vector<1x8xf32>,
    %219 = vector.extract_strided_slice %161 {offsets = [2, 3, 0], sizes = [1, 1, 8], strides = [1, 1, 1]} : vector<8x8x8xf32> to vector<1x1x8xf32>
    %220 = vector.shape_cast %219 : vector<1x1x8xf32> to vector<1x8xf32>
    %c0_347 = arith.constant 0 : index
    %c152 = arith.constant 152 : index
    %221 = vector.load %arg19[%c0_347, %c152] : memref<1x512xf32, #tpu.memory_space<vmem>>, vector<1x8xf32>
    tpu.vector_store %arg19[%c0_347, %c152], %220 {strides = array<i32>} : memref<1x512xf32, #tpu.memory_space<vmem>>, vector<1x8xf32>,
    %222 = vector.extract_strided_slice %161 {offsets = [2, 4, 0], sizes = [1, 1, 8], strides = [1, 1, 1]} : vector<8x8x8xf32> to vector<1x1x8xf32>
    %223 = vector.shape_cast %222 : vector<1x1x8xf32> to vector<1x8xf32>
    %c0_348 = arith.constant 0 : index
    %c160 = arith.constant 160 : index
    %224 = vector.load %arg19[%c0_348, %c160] : memref<1x512xf32, #tpu.memory_space<vmem>>, vector<1x8xf32>
    tpu.vector_store %arg19[%c0_348, %c160], %223 {strides = array<i32>} : memref<1x512xf32, #tpu.memory_space<vmem>>, vector<1x8xf32>,
    %225 = vector.extract_strided_slice %161 {offsets = [2, 5, 0], sizes = [1, 1, 8], strides = [1, 1, 1]} : vector<8x8x8xf32> to vector<1x1x8xf32>
    %226 = vector.shape_cast %225 : vector<1x1x8xf32> to vector<1x8xf32>
    %c0_349 = arith.constant 0 : index
    %c168 = arith.constant 168 : index
    %227 = vector.load %arg19[%c0_349, %c168] : memref<1x512xf32, #tpu.memory_space<vmem>>, vector<1x8xf32>
    tpu.vector_store %arg19[%c0_349, %c168], %226 {strides = array<i32>} : memref<1x512xf32, #tpu.memory_space<vmem>>, vector<1x8xf32>,
    %228 = vector.extract_strided_slice %161 {offsets = [2, 6, 0], sizes = [1, 1, 8], strides = [1, 1, 1]} : vector<8x8x8xf32> to vector<1x1x8xf32>
    %229 = vector.shape_cast %228 : vector<1x1x8xf32> to vector<1x8xf32>
    %c0_350 = arith.constant 0 : index
    %c176 = arith.constant 176 : index
    %230 = vector.load %arg19[%c0_350, %c176] : memref<1x512xf32, #tpu.memory_space<vmem>>, vector<1x8xf32>
    tpu.vector_store %arg19[%c0_350, %c176], %229 {strides = array<i32>} : memref<1x512xf32, #tpu.memory_space<vmem>>, vector<1x8xf32>,
    %231 = vector.extract_strided_slice %161 {offsets = [2, 7, 0], sizes = [1, 1, 8], strides = [1, 1, 1]} : vector<8x8x8xf32> to vector<1x1x8xf32>
    %232 = vector.shape_cast %231 : vector<1x1x8xf32> to vector<1x8xf32>
    %c0_351 = arith.constant 0 : index
    %c184 = arith.constant 184 : index
    %233 = vector.load %arg19[%c0_351, %c184] : memref<1x512xf32, #tpu.memory_space<vmem>>, vector<1x8xf32>
    tpu.vector_store %arg19[%c0_351, %c184], %232 {strides = array<i32>} : memref<1x512xf32, #tpu.memory_space<vmem>>, vector<1x8xf32>,
    %234 = vector.extract_strided_slice %161 {offsets = [3, 0, 0], sizes = [1, 1, 8], strides = [1, 1, 1]} : vector<8x8x8xf32> to vector<1x1x8xf32>
    %235 = vector.shape_cast %234 : vector<1x1x8xf32> to vector<1x8xf32>
    %c0_352 = arith.constant 0 : index
    %c192 = arith.constant 192 : index
    %236 = vector.load %arg19[%c0_352, %c192] : memref<1x512xf32, #tpu.memory_space<vmem>>, vector<1x8xf32>
    tpu.vector_store %arg19[%c0_352, %c192], %235 {strides = array<i32>} : memref<1x512xf32, #tpu.memory_space<vmem>>, vector<1x8xf32>,
    %237 = vector.extract_strided_slice %161 {offsets = [3, 1, 0], sizes = [1, 1, 8], strides = [1, 1, 1]} : vector<8x8x8xf32> to vector<1x1x8xf32>
    %238 = vector.shape_cast %237 : vector<1x1x8xf32> to vector<1x8xf32>
    %c0_353 = arith.constant 0 : index
    %c200 = arith.constant 200 : index
    %239 = vector.load %arg19[%c0_353, %c200] : memref<1x512xf32, #tpu.memory_space<vmem>>, vector<1x8xf32>
    tpu.vector_store %arg19[%c0_353, %c200], %238 {strides = array<i32>} : memref<1x512xf32, #tpu.memory_space<vmem>>, vector<1x8xf32>,
    %240 = vector.extract_strided_slice %161 {offsets = [3, 2, 0], sizes = [1, 1, 8], strides = [1, 1, 1]} : vector<8x8x8xf32> to vector<1x1x8xf32>
    %241 = vector.shape_cast %240 : vector<1x1x8xf32> to vector<1x8xf32>
    %c0_354 = arith.constant 0 : index
    %c208 = arith.constant 208 : index
    %242 = vector.load %arg19[%c0_354, %c208] : memref<1x512xf32, #tpu.memory_space<vmem>>, vector<1x8xf32>
    tpu.vector_store %arg19[%c0_354, %c208], %241 {strides = array<i32>} : memref<1x512xf32, #tpu.memory_space<vmem>>, vector<1x8xf32>,
    %243 = vector.extract_strided_slice %161 {offsets = [3, 3, 0], sizes = [1, 1, 8], strides = [1, 1, 1]} : vector<8x8x8xf32> to vector<1x1x8xf32>
    %244 = vector.shape_cast %243 : vector<1x1x8xf32> to vector<1x8xf32>
    %c0_355 = arith.constant 0 : index
    %c216 = arith.constant 216 : index
    %245 = vector.load %arg19[%c0_355, %c216] : memref<1x512xf32, #tpu.memory_space<vmem>>, vector<1x8xf32>
    tpu.vector_store %arg19[%c0_355, %c216], %244 {strides = array<i32>} : memref<1x512xf32, #tpu.memory_space<vmem>>, vector<1x8xf32>,
    %246 = vector.extract_strided_slice %161 {offsets = [3, 4, 0], sizes = [1, 1, 8], strides = [1, 1, 1]} : vector<8x8x8xf32> to vector<1x1x8xf32>
    %247 = vector.shape_cast %246 : vector<1x1x8xf32> to vector<1x8xf32>
    %c0_356 = arith.constant 0 : index
    %c224 = arith.constant 224 : index
    %248 = vector.load %arg19[%c0_356, %c224] : memref<1x512xf32, #tpu.memory_space<vmem>>, vector<1x8xf32>
    tpu.vector_store %arg19[%c0_356, %c224], %247 {strides = array<i32>} : memref<1x512xf32, #tpu.memory_space<vmem>>, vector<1x8xf32>,
    %249 = vector.extract_strided_slice %161 {offsets = [3, 5, 0], sizes = [1, 1, 8], strides = [1, 1, 1]} : vector<8x8x8xf32> to vector<1x1x8xf32>
    %250 = vector.shape_cast %249 : vector<1x1x8xf32> to vector<1x8xf32>
    %c0_357 = arith.constant 0 : index
    %c232 = arith.constant 232 : index
    %251 = vector.load %arg19[%c0_357, %c232] : memref<1x512xf32, #tpu.memory_space<vmem>>, vector<1x8xf32>
    tpu.vector_store %arg19[%c0_357, %c232], %250 {strides = array<i32>} : memref<1x512xf32, #tpu.memory_space<vmem>>, vector<1x8xf32>,
    %252 = vector.extract_strided_slice %161 {offsets = [3, 6, 0], sizes = [1, 1, 8], strides = [1, 1, 1]} : vector<8x8x8xf32> to vector<1x1x8xf32>
    %253 = vector.shape_cast %252 : vector<1x1x8xf32> to vector<1x8xf32>
    %c0_358 = arith.constant 0 : index
    %c240 = arith.constant 240 : index
    %254 = vector.load %arg19[%c0_358, %c240] : memref<1x512xf32, #tpu.memory_space<vmem>>, vector<1x8xf32>
    tpu.vector_store %arg19[%c0_358, %c240], %253 {strides = array<i32>} : memref<1x512xf32, #tpu.memory_space<vmem>>, vector<1x8xf32>,
    %255 = vector.extract_strided_slice %161 {offsets = [3, 7, 0], sizes = [1, 1, 8], strides = [1, 1, 1]} : vector<8x8x8xf32> to vector<1x1x8xf32>
    %256 = vector.shape_cast %255 : vector<1x1x8xf32> to vector<1x8xf32>
    %c0_359 = arith.constant 0 : index
    %c248 = arith.constant 248 : index
    %257 = vector.load %arg19[%c0_359, %c248] : memref<1x512xf32, #tpu.memory_space<vmem>>, vector<1x8xf32>
    tpu.vector_store %arg19[%c0_359, %c248], %256 {strides = array<i32>} : memref<1x512xf32, #tpu.memory_space<vmem>>, vector<1x8xf32>,
    %258 = vector.extract_strided_slice %161 {offsets = [4, 0, 0], sizes = [1, 1, 8], strides = [1, 1, 1]} : vector<8x8x8xf32> to vector<1x1x8xf32>
    %259 = vector.shape_cast %258 : vector<1x1x8xf32> to vector<1x8xf32>
    %c0_360 = arith.constant 0 : index
    %c256 = arith.constant 256 : index
    %260 = vector.load %arg19[%c0_360, %c256] : memref<1x512xf32, #tpu.memory_space<vmem>>, vector<1x8xf32>
    tpu.vector_store %arg19[%c0_360, %c256], %259 {strides = array<i32>} : memref<1x512xf32, #tpu.memory_space<vmem>>, vector<1x8xf32>,
    %261 = vector.extract_strided_slice %161 {offsets = [4, 1, 0], sizes = [1, 1, 8], strides = [1, 1, 1]} : vector<8x8x8xf32> to vector<1x1x8xf32>
    %262 = vector.shape_cast %261 : vector<1x1x8xf32> to vector<1x8xf32>
    %c0_361 = arith.constant 0 : index
    %c264 = arith.constant 264 : index
    %263 = vector.load %arg19[%c0_361, %c264] : memref<1x512xf32, #tpu.memory_space<vmem>>, vector<1x8xf32>
    tpu.vector_store %arg19[%c0_361, %c264], %262 {strides = array<i32>} : memref<1x512xf32, #tpu.memory_space<vmem>>, vector<1x8xf32>,
    %264 = vector.extract_strided_slice %161 {offsets = [4, 2, 0], sizes = [1, 1, 8], strides = [1, 1, 1]} : vector<8x8x8xf32> to vector<1x1x8xf32>
    %265 = vector.shape_cast %264 : vector<1x1x8xf32> to vector<1x8xf32>
    %c0_362 = arith.constant 0 : index
    %c272 = arith.constant 272 : index
    %266 = vector.load %arg19[%c0_362, %c272] : memref<1x512xf32, #tpu.memory_space<vmem>>, vector<1x8xf32>
    tpu.vector_store %arg19[%c0_362, %c272], %265 {strides = array<i32>} : memref<1x512xf32, #tpu.memory_space<vmem>>, vector<1x8xf32>,
    %267 = vector.extract_strided_slice %161 {offsets = [4, 3, 0], sizes = [1, 1, 8], strides = [1, 1, 1]} : vector<8x8x8xf32> to vector<1x1x8xf32>
    %268 = vector.shape_cast %267 : vector<1x1x8xf32> to vector<1x8xf32>
    %c0_363 = arith.constant 0 : index
    %c280 = arith.constant 280 : index
    %269 = vector.load %arg19[%c0_363, %c280] : memref<1x512xf32, #tpu.memory_space<vmem>>, vector<1x8xf32>
    tpu.vector_store %arg19[%c0_363, %c280], %268 {strides = array<i32>} : memref<1x512xf32, #tpu.memory_space<vmem>>, vector<1x8xf32>,
    %270 = vector.extract_strided_slice %161 {offsets = [4, 4, 0], sizes = [1, 1, 8], strides = [1, 1, 1]} : vector<8x8x8xf32> to vector<1x1x8xf32>
    %271 = vector.shape_cast %270 : vector<1x1x8xf32> to vector<1x8xf32>
    %c0_364 = arith.constant 0 : index
    %c288 = arith.constant 288 : index
    %272 = vector.load %arg19[%c0_364, %c288] : memref<1x512xf32, #tpu.memory_space<vmem>>, vector<1x8xf32>
    tpu.vector_store %arg19[%c0_364, %c288], %271 {strides = array<i32>} : memref<1x512xf32, #tpu.memory_space<vmem>>, vector<1x8xf32>,
    %273 = vector.extract_strided_slice %161 {offsets = [4, 5, 0], sizes = [1, 1, 8], strides = [1, 1, 1]} : vector<8x8x8xf32> to vector<1x1x8xf32>
    %274 = vector.shape_cast %273 : vector<1x1x8xf32> to vector<1x8xf32>
    %c0_365 = arith.constant 0 : index
    %c296 = arith.constant 296 : index
    %275 = vector.load %arg19[%c0_365, %c296] : memref<1x512xf32, #tpu.memory_space<vmem>>, vector<1x8xf32>
    tpu.vector_store %arg19[%c0_365, %c296], %274 {strides = array<i32>} : memref<1x512xf32, #tpu.memory_space<vmem>>, vector<1x8xf32>,
    %276 = vector.extract_strided_slice %161 {offsets = [4, 6, 0], sizes = [1, 1, 8], strides = [1, 1, 1]} : vector<8x8x8xf32> to vector<1x1x8xf32>
    %277 = vector.shape_cast %276 : vector<1x1x8xf32> to vector<1x8xf32>
    %c0_366 = arith.constant 0 : index
    %c304 = arith.constant 304 : index
    %278 = vector.load %arg19[%c0_366, %c304] : memref<1x512xf32, #tpu.memory_space<vmem>>, vector<1x8xf32>
    tpu.vector_store %arg19[%c0_366, %c304], %277 {strides = array<i32>} : memref<1x512xf32, #tpu.memory_space<vmem>>, vector<1x8xf32>,
    %279 = vector.extract_strided_slice %161 {offsets = [4, 7, 0], sizes = [1, 1, 8], strides = [1, 1, 1]} : vector<8x8x8xf32> to vector<1x1x8xf32>
    %280 = vector.shape_cast %279 : vector<1x1x8xf32> to vector<1x8xf32>
    %c0_367 = arith.constant 0 : index
    %c312 = arith.constant 312 : index
    %281 = vector.load %arg19[%c0_367, %c312] : memref<1x512xf32, #tpu.memory_space<vmem>>, vector<1x8xf32>
    tpu.vector_store %arg19[%c0_367, %c312], %280 {strides = array<i32>} : memref<1x512xf32, #tpu.memory_space<vmem>>, vector<1x8xf32>,
    %282 = vector.extract_strided_slice %161 {offsets = [5, 0, 0], sizes = [1, 1, 8], strides = [1, 1, 1]} : vector<8x8x8xf32> to vector<1x1x8xf32>
    %283 = vector.shape_cast %282 : vector<1x1x8xf32> to vector<1x8xf32>
    %c0_368 = arith.constant 0 : index
    %c320 = arith.constant 320 : index
    %284 = vector.load %arg19[%c0_368, %c320] : memref<1x512xf32, #tpu.memory_space<vmem>>, vector<1x8xf32>
    tpu.vector_store %arg19[%c0_368, %c320], %283 {strides = array<i32>} : memref<1x512xf32, #tpu.memory_space<vmem>>, vector<1x8xf32>,
    %285 = vector.extract_strided_slice %161 {offsets = [5, 1, 0], sizes = [1, 1, 8], strides = [1, 1, 1]} : vector<8x8x8xf32> to vector<1x1x8xf32>
    %286 = vector.shape_cast %285 : vector<1x1x8xf32> to vector<1x8xf32>
    %c0_369 = arith.constant 0 : index
    %c328 = arith.constant 328 : index
    %287 = vector.load %arg19[%c0_369, %c328] : memref<1x512xf32, #tpu.memory_space<vmem>>, vector<1x8xf32>
    tpu.vector_store %arg19[%c0_369, %c328], %286 {strides = array<i32>} : memref<1x512xf32, #tpu.memory_space<vmem>>, vector<1x8xf32>,
    %288 = vector.extract_strided_slice %161 {offsets = [5, 2, 0], sizes = [1, 1, 8], strides = [1, 1, 1]} : vector<8x8x8xf32> to vector<1x1x8xf32>
    %289 = vector.shape_cast %288 : vector<1x1x8xf32> to vector<1x8xf32>
    %c0_370 = arith.constant 0 : index
    %c336 = arith.constant 336 : index
    %290 = vector.load %arg19[%c0_370, %c336] : memref<1x512xf32, #tpu.memory_space<vmem>>, vector<1x8xf32>
    tpu.vector_store %arg19[%c0_370, %c336], %289 {strides = array<i32>} : memref<1x512xf32, #tpu.memory_space<vmem>>, vector<1x8xf32>,
    %291 = vector.extract_strided_slice %161 {offsets = [5, 3, 0], sizes = [1, 1, 8], strides = [1, 1, 1]} : vector<8x8x8xf32> to vector<1x1x8xf32>
    %292 = vector.shape_cast %291 : vector<1x1x8xf32> to vector<1x8xf32>
    %c0_371 = arith.constant 0 : index
    %c344 = arith.constant 344 : index
    %293 = vector.load %arg19[%c0_371, %c344] : memref<1x512xf32, #tpu.memory_space<vmem>>, vector<1x8xf32>
    tpu.vector_store %arg19[%c0_371, %c344], %292 {strides = array<i32>} : memref<1x512xf32, #tpu.memory_space<vmem>>, vector<1x8xf32>,
    %294 = vector.extract_strided_slice %161 {offsets = [5, 4, 0], sizes = [1, 1, 8], strides = [1, 1, 1]} : vector<8x8x8xf32> to vector<1x1x8xf32>
    %295 = vector.shape_cast %294 : vector<1x1x8xf32> to vector<1x8xf32>
    %c0_372 = arith.constant 0 : index
    %c352 = arith.constant 352 : index
    %296 = vector.load %arg19[%c0_372, %c352] : memref<1x512xf32, #tpu.memory_space<vmem>>, vector<1x8xf32>
    tpu.vector_store %arg19[%c0_372, %c352], %295 {strides = array<i32>} : memref<1x512xf32, #tpu.memory_space<vmem>>, vector<1x8xf32>,
    %297 = vector.extract_strided_slice %161 {offsets = [5, 5, 0], sizes = [1, 1, 8], strides = [1, 1, 1]} : vector<8x8x8xf32> to vector<1x1x8xf32>
    %298 = vector.shape_cast %297 : vector<1x1x8xf32> to vector<1x8xf32>
    %c0_373 = arith.constant 0 : index
    %c360 = arith.constant 360 : index
    %299 = vector.load %arg19[%c0_373, %c360] : memref<1x512xf32, #tpu.memory_space<vmem>>, vector<1x8xf32>
    tpu.vector_store %arg19[%c0_373, %c360], %298 {strides = array<i32>} : memref<1x512xf32, #tpu.memory_space<vmem>>, vector<1x8xf32>,
    %300 = vector.extract_strided_slice %161 {offsets = [5, 6, 0], sizes = [1, 1, 8], strides = [1, 1, 1]} : vector<8x8x8xf32> to vector<1x1x8xf32>
    %301 = vector.shape_cast %300 : vector<1x1x8xf32> to vector<1x8xf32>
    %c0_374 = arith.constant 0 : index
    %c368 = arith.constant 368 : index
    %302 = vector.load %arg19[%c0_374, %c368] : memref<1x512xf32, #tpu.memory_space<vmem>>, vector<1x8xf32>
    tpu.vector_store %arg19[%c0_374, %c368], %301 {strides = array<i32>} : memref<1x512xf32, #tpu.memory_space<vmem>>, vector<1x8xf32>,
    %303 = vector.extract_strided_slice %161 {offsets = [5, 7, 0], sizes = [1, 1, 8], strides = [1, 1, 1]} : vector<8x8x8xf32> to vector<1x1x8xf32>
    %304 = vector.shape_cast %303 : vector<1x1x8xf32> to vector<1x8xf32>
    %c0_375 = arith.constant 0 : index
    %c376 = arith.constant 376 : index
    %305 = vector.load %arg19[%c0_375, %c376] : memref<1x512xf32, #tpu.memory_space<vmem>>, vector<1x8xf32>
    tpu.vector_store %arg19[%c0_375, %c376], %304 {strides = array<i32>} : memref<1x512xf32, #tpu.memory_space<vmem>>, vector<1x8xf32>,
    %306 = vector.extract_strided_slice %161 {offsets = [6, 0, 0], sizes = [1, 1, 8], strides = [1, 1, 1]} : vector<8x8x8xf32> to vector<1x1x8xf32>
    %307 = vector.shape_cast %306 : vector<1x1x8xf32> to vector<1x8xf32>
    %c0_376 = arith.constant 0 : index
    %c384 = arith.constant 384 : index
    %308 = vector.load %arg19[%c0_376, %c384] : memref<1x512xf32, #tpu.memory_space<vmem>>, vector<1x8xf32>
    tpu.vector_store %arg19[%c0_376, %c384], %307 {strides = array<i32>} : memref<1x512xf32, #tpu.memory_space<vmem>>, vector<1x8xf32>,
    %309 = vector.extract_strided_slice %161 {offsets = [6, 1, 0], sizes = [1, 1, 8], strides = [1, 1, 1]} : vector<8x8x8xf32> to vector<1x1x8xf32>
    %310 = vector.shape_cast %309 : vector<1x1x8xf32> to vector<1x8xf32>
    %c0_377 = arith.constant 0 : index
    %c392 = arith.constant 392 : index
    %311 = vector.load %arg19[%c0_377, %c392] : memref<1x512xf32, #tpu.memory_space<vmem>>, vector<1x8xf32>
    tpu.vector_store %arg19[%c0_377, %c392], %310 {strides = array<i32>} : memref<1x512xf32, #tpu.memory_space<vmem>>, vector<1x8xf32>,
    %312 = vector.extract_strided_slice %161 {offsets = [6, 2, 0], sizes = [1, 1, 8], strides = [1, 1, 1]} : vector<8x8x8xf32> to vector<1x1x8xf32>
    %313 = vector.shape_cast %312 : vector<1x1x8xf32> to vector<1x8xf32>
    %c0_378 = arith.constant 0 : index
    %c400 = arith.constant 400 : index
    %314 = vector.load %arg19[%c0_378, %c400] : memref<1x512xf32, #tpu.memory_space<vmem>>, vector<1x8xf32>
    tpu.vector_store %arg19[%c0_378, %c400], %313 {strides = array<i32>} : memref<1x512xf32, #tpu.memory_space<vmem>>, vector<1x8xf32>,
    %315 = vector.extract_strided_slice %161 {offsets = [6, 3, 0], sizes = [1, 1, 8], strides = [1, 1, 1]} : vector<8x8x8xf32> to vector<1x1x8xf32>
    %316 = vector.shape_cast %315 : vector<1x1x8xf32> to vector<1x8xf32>
    %c0_379 = arith.constant 0 : index
    %c408 = arith.constant 408 : index
    %317 = vector.load %arg19[%c0_379, %c408] : memref<1x512xf32, #tpu.memory_space<vmem>>, vector<1x8xf32>
    tpu.vector_store %arg19[%c0_379, %c408], %316 {strides = array<i32>} : memref<1x512xf32, #tpu.memory_space<vmem>>, vector<1x8xf32>,
    %318 = vector.extract_strided_slice %161 {offsets = [6, 4, 0], sizes = [1, 1, 8], strides = [1, 1, 1]} : vector<8x8x8xf32> to vector<1x1x8xf32>
    %319 = vector.shape_cast %318 : vector<1x1x8xf32> to vector<1x8xf32>
    %c0_380 = arith.constant 0 : index
    %c416 = arith.constant 416 : index
    %320 = vector.load %arg19[%c0_380, %c416] : memref<1x512xf32, #tpu.memory_space<vmem>>, vector<1x8xf32>
    tpu.vector_store %arg19[%c0_380, %c416], %319 {strides = array<i32>} : memref<1x512xf32, #tpu.memory_space<vmem>>, vector<1x8xf32>,
    %321 = vector.extract_strided_slice %161 {offsets = [6, 5, 0], sizes = [1, 1, 8], strides = [1, 1, 1]} : vector<8x8x8xf32> to vector<1x1x8xf32>
    %322 = vector.shape_cast %321 : vector<1x1x8xf32> to vector<1x8xf32>
    %c0_381 = arith.constant 0 : index
    %c424 = arith.constant 424 : index
    %323 = vector.load %arg19[%c0_381, %c424] : memref<1x512xf32, #tpu.memory_space<vmem>>, vector<1x8xf32>
    tpu.vector_store %arg19[%c0_381, %c424], %322 {strides = array<i32>} : memref<1x512xf32, #tpu.memory_space<vmem>>, vector<1x8xf32>,
    %324 = vector.extract_strided_slice %161 {offsets = [6, 6, 0], sizes = [1, 1, 8], strides = [1, 1, 1]} : vector<8x8x8xf32> to vector<1x1x8xf32>
    %325 = vector.shape_cast %324 : vector<1x1x8xf32> to vector<1x8xf32>
    %c0_382 = arith.constant 0 : index
    %c432 = arith.constant 432 : index
    %326 = vector.load %arg19[%c0_382, %c432] : memref<1x512xf32, #tpu.memory_space<vmem>>, vector<1x8xf32>
    tpu.vector_store %arg19[%c0_382, %c432], %325 {strides = array<i32>} : memref<1x512xf32, #tpu.memory_space<vmem>>, vector<1x8xf32>,
    %327 = vector.extract_strided_slice %161 {offsets = [6, 7, 0], sizes = [1, 1, 8], strides = [1, 1, 1]} : vector<8x8x8xf32> to vector<1x1x8xf32>
    %328 = vector.shape_cast %327 : vector<1x1x8xf32> to vector<1x8xf32>
    %c0_383 = arith.constant 0 : index
    %c440 = arith.constant 440 : index
    %329 = vector.load %arg19[%c0_383, %c440] : memref<1x512xf32, #tpu.memory_space<vmem>>, vector<1x8xf32>
    tpu.vector_store %arg19[%c0_383, %c440], %328 {strides = array<i32>} : memref<1x512xf32, #tpu.memory_space<vmem>>, vector<1x8xf32>,
    %330 = vector.extract_strided_slice %161 {offsets = [7, 0, 0], sizes = [1, 1, 8], strides = [1, 1, 1]} : vector<8x8x8xf32> to vector<1x1x8xf32>
    %331 = vector.shape_cast %330 : vector<1x1x8xf32> to vector<1x8xf32>
    %c0_384 = arith.constant 0 : index
    %c448 = arith.constant 448 : index
    %332 = vector.load %arg19[%c0_384, %c448] : memref<1x512xf32, #tpu.memory_space<vmem>>, vector<1x8xf32>
    tpu.vector_store %arg19[%c0_384, %c448], %331 {strides = array<i32>} : memref<1x512xf32, #tpu.memory_space<vmem>>, vector<1x8xf32>,
    %333 = vector.extract_strided_slice %161 {offsets = [7, 1, 0], sizes = [1, 1, 8], strides = [1, 1, 1]} : vector<8x8x8xf32> to vector<1x1x8xf32>
    %334 = vector.shape_cast %333 : vector<1x1x8xf32> to vector<1x8xf32>
    %c0_385 = arith.constant 0 : index
    %c456 = arith.constant 456 : index
    %335 = vector.load %arg19[%c0_385, %c456] : memref<1x512xf32, #tpu.memory_space<vmem>>, vector<1x8xf32>
    tpu.vector_store %arg19[%c0_385, %c456], %334 {strides = array<i32>} : memref<1x512xf32, #tpu.memory_space<vmem>>, vector<1x8xf32>,
    %336 = vector.extract_strided_slice %161 {offsets = [7, 2, 0], sizes = [1, 1, 8], strides = [1, 1, 1]} : vector<8x8x8xf32> to vector<1x1x8xf32>
    %337 = vector.shape_cast %336 : vector<1x1x8xf32> to vector<1x8xf32>
    %c0_386 = arith.constant 0 : index
    %c464 = arith.constant 464 : index
    %338 = vector.load %arg19[%c0_386, %c464] : memref<1x512xf32, #tpu.memory_space<vmem>>, vector<1x8xf32>
    tpu.vector_store %arg19[%c0_386, %c464], %337 {strides = array<i32>} : memref<1x512xf32, #tpu.memory_space<vmem>>, vector<1x8xf32>,
    %339 = vector.extract_strided_slice %161 {offsets = [7, 3, 0], sizes = [1, 1, 8], strides = [1, 1, 1]} : vector<8x8x8xf32> to vector<1x1x8xf32>
    %340 = vector.shape_cast %339 : vector<1x1x8xf32> to vector<1x8xf32>
    %c0_387 = arith.constant 0 : index
    %c472 = arith.constant 472 : index
    %341 = vector.load %arg19[%c0_387, %c472] : memref<1x512xf32, #tpu.memory_space<vmem>>, vector<1x8xf32>
    tpu.vector_store %arg19[%c0_387, %c472], %340 {strides = array<i32>} : memref<1x512xf32, #tpu.memory_space<vmem>>, vector<1x8xf32>,
    %342 = vector.extract_strided_slice %161 {offsets = [7, 4, 0], sizes = [1, 1, 8], strides = [1, 1, 1]} : vector<8x8x8xf32> to vector<1x1x8xf32>
    %343 = vector.shape_cast %342 : vector<1x1x8xf32> to vector<1x8xf32>
    %c0_388 = arith.constant 0 : index
    %c480 = arith.constant 480 : index
    %344 = vector.load %arg19[%c0_388, %c480] : memref<1x512xf32, #tpu.memory_space<vmem>>, vector<1x8xf32>
    tpu.vector_store %arg19[%c0_388, %c480], %343 {strides = array<i32>} : memref<1x512xf32, #tpu.memory_space<vmem>>, vector<1x8xf32>,
    %345 = vector.extract_strided_slice %161 {offsets = [7, 5, 0], sizes = [1, 1, 8], strides = [1, 1, 1]} : vector<8x8x8xf32> to vector<1x1x8xf32>
    %346 = vector.shape_cast %345 : vector<1x1x8xf32> to vector<1x8xf32>
    %c0_389 = arith.constant 0 : index
    %c488 = arith.constant 488 : index
    %347 = vector.load %arg19[%c0_389, %c488] : memref<1x512xf32, #tpu.memory_space<vmem>>, vector<1x8xf32>
    tpu.vector_store %arg19[%c0_389, %c488], %346 {strides = array<i32>} : memref<1x512xf32, #tpu.memory_space<vmem>>, vector<1x8xf32>,
    %348 = vector.extract_strided_slice %161 {offsets = [7, 6, 0], sizes = [1, 1, 8], strides = [1, 1, 1]} : vector<8x8x8xf32> to vector<1x1x8xf32>
    %349 = vector.shape_cast %348 : vector<1x1x8xf32> to vector<1x8xf32>
    %c0_390 = arith.constant 0 : index
    %c496 = arith.constant 496 : index
    %350 = vector.load %arg19[%c0_390, %c496] : memref<1x512xf32, #tpu.memory_space<vmem>>, vector<1x8xf32>
    tpu.vector_store %arg19[%c0_390, %c496], %349 {strides = array<i32>} : memref<1x512xf32, #tpu.memory_space<vmem>>, vector<1x8xf32>,
    %351 = vector.extract_strided_slice %161 {offsets = [7, 7, 0], sizes = [1, 1, 8], strides = [1, 1, 1]} : vector<8x8x8xf32> to vector<1x1x8xf32>
    %352 = vector.shape_cast %351 : vector<1x1x8xf32> to vector<1x8xf32>
    %c0_391 = arith.constant 0 : index
    %c504 = arith.constant 504 : index
    %353 = vector.load %arg19[%c0_391, %c504] : memref<1x512xf32, #tpu.memory_space<vmem>>, vector<1x8xf32>
    tpu.vector_store %arg19[%c0_391, %c504], %352 {strides = array<i32>} : memref<1x512xf32, #tpu.memory_space<vmem>>, vector<1x8xf32>,
    %c0_392 = arith.constant 0 : index
    %c0_393 = arith.constant 0 : index
    %354 = vector.load %arg19[%c0_392, %c0_393] : memref<1x512xf32, #tpu.memory_space<vmem>>, vector<1x512xf32>
    %c0_394 = arith.constant 0 : index
    %c0_395 = arith.constant 0 : index
    %355 = vector.load %arg8[%c0_394, %c0_395] : memref<512x32xf32, #tpu.memory_space<vmem>>, vector<512x32xf32>
    %c0_396 = arith.constant 0 : index
    %c0_397 = arith.constant 0 : index
    %356 = vector.load %arg10[%c0_396, %c0_397] : memref<512x32xf32, #tpu.memory_space<vmem>>, vector<512x32xf32>
    %c0_398 = arith.constant 0 : index
    %c0_399 = arith.constant 0 : index
    %357 = vector.load %arg9[%c0_398, %c0_399] : memref<512x32xf32, #tpu.memory_space<vmem>>, vector<512x32xf32>
    %cst_400 = arith.constant 5.000000e-01 : f32
    %358 = vector.broadcast %cst_400 : f32 to vector<512x32xf32>
    %359 = arith.mulf %358, %357 : vector<512x32xf32>
    %360 = math.exp %359 : vector<512x32xf32>
    %361 = arith.mulf %356, %360 : vector<512x32xf32>
    %362 = arith.addf %355, %361 : vector<512x32xf32>
    %c0_401 = arith.constant 0 : index
    %c0_402 = arith.constant 0 : index
    %c0_403 = arith.constant 0 : index
    %363 = vector.load %arg14[%c0_401, %c0_402, %c0_403] : memref<1x1x544xf32, #tpu.memory_space<vmem>>, vector<1x1x512xf32>
    %364 = vector.shape_cast %363 : vector<1x1x512xf32> to vector<1x512xf32>
    %cst_404 = arith.constant 5.000000e-01 : f32
    %365 = vector.broadcast %cst_404 : f32 to vector<1x512xf32>
    %366 = arith.cmpf oge, %364, %365 : vector<1x512xf32>
    %cst_405 = arith.constant 2.000000e+00 : f32
    %367 = vector.broadcast %cst_405 : f32 to vector<1x512xf32>
    %368 = arith.mulf %354, %367 : vector<1x512xf32>
    %cst_406 = arith.constant 0.000000e+00 : f32
    %369 = vector.broadcast %cst_406 : f32 to vector<1x512xf32>
    %370 = arith.select %366, %368, %369 : vector<1x512xi1>, vector<1x512xf32>
    %371 = arith.truncf %370 : vector<1x512xf32> to vector<1x512xbf16>
    %372 = arith.truncf %362 : vector<512x32xf32> to vector<512x32xbf16>
    %cst_407 = arith.constant dense<0.000000e+00> : vector<1x32xf32>
    %373 = tpu.matmul %371, %372, %cst_407 {dimension_numbers = #tpu.dot_dimension_numbers<[1], [0], [0], [1], [0, 0, 1, 1], [], []>} : vector<1x512xbf16>, vector<512x32xbf16>, vector<1x32xf32> -> vector<1x32xf32>
    %c0_408 = arith.constant 0 : index
    %c0_409 = arith.constant 0 : index
    %374 = vector.load %arg11[%c0_408, %c0_409] : memref<32x10xf32, #tpu.memory_space<vmem>>, vector<32x10xf32>
    %c0_410 = arith.constant 0 : index
    %c0_411 = arith.constant 0 : index
    %375 = vector.load %arg13[%c0_410, %c0_411] : memref<32x10xf32, #tpu.memory_space<vmem>>, vector<32x10xf32>
    %c0_412 = arith.constant 0 : index
    %c0_413 = arith.constant 0 : index
    %376 = vector.load %arg12[%c0_412, %c0_413] : memref<32x10xf32, #tpu.memory_space<vmem>>, vector<32x10xf32>
    %cst_414 = arith.constant 5.000000e-01 : f32
    %377 = vector.broadcast %cst_414 : f32 to vector<32x10xf32>
    %378 = arith.mulf %377, %376 : vector<32x10xf32>
    %379 = math.exp %378 : vector<32x10xf32>
    %380 = arith.mulf %375, %379 : vector<32x10xf32>
    %381 = arith.addf %374, %380 : vector<32x10xf32>
    %c0_415 = arith.constant 0 : index
    %c0_416 = arith.constant 0 : index
    %c512 = arith.constant 512 : index
    %382 = vector.load %arg14[%c0_415, %c0_416, %c512] : memref<1x1x544xf32, #tpu.memory_space<vmem>>, vector<1x1x32xf32>
    %383 = vector.shape_cast %382 : vector<1x1x32xf32> to vector<1x32xf32>
    %cst_417 = arith.constant 5.000000e-01 : f32
    %384 = vector.broadcast %cst_417 : f32 to vector<1x32xf32>
    %385 = arith.cmpf oge, %383, %384 : vector<1x32xf32>
    %cst_418 = arith.constant 2.000000e+00 : f32
    %386 = vector.broadcast %cst_418 : f32 to vector<1x32xf32>
    %387 = arith.mulf %373, %386 : vector<1x32xf32>
    %cst_419 = arith.constant 0.000000e+00 : f32
    %388 = vector.broadcast %cst_419 : f32 to vector<1x32xf32>
    %389 = arith.select %385, %387, %388 : vector<1x32xi1>, vector<1x32xf32>
    %390 = arith.truncf %389 : vector<1x32xf32> to vector<1x32xbf16>
    %391 = arith.truncf %381 : vector<32x10xf32> to vector<32x10xbf16>
    %cst_420 = arith.constant dense<0.000000e+00> : vector<1x10xf32>
    %392 = tpu.matmul %390, %391, %cst_420 {dimension_numbers = #tpu.dot_dimension_numbers<[1], [0], [0], [1], [0, 0, 1, 1], [], []>} : vector<1x32xbf16>, vector<32x10xbf16>, vector<1x10xf32> -> vector<1x10xf32>
    %c0_421 = arith.constant 0 : index
    %c0_422 = arith.constant 0 : index
    %c0_423 = arith.constant 0 : index
    %393 = vector.load %arg15[%c0_421, %c0_422, %c0_423] : memref<1x1x10xf32, #tpu.memory_space<vmem>>, vector<1x1x10xf32>
    %394 = vector.shape_cast %393 : vector<1x1x10xf32> to vector<1x10xf32>
    %395 = vector.shape_cast %392 : vector<1x10xf32> to vector<1x1x10xf32>
    tpu.vector_store %arg15[%c0_421, %c0_422, %c0_423], %395 {strides = array<i32>} : memref<1x1x10xf32, #tpu.memory_space<vmem>>, vector<1x1x10xf32>,
    return
  }
  func.func @transform_0(%arg0: i32) -> (i32, i32, i32, i32) {
    %c0_i32 = arith.constant 0 : i32
    %c0_i32_0 = arith.constant 0 : i32
    %c0_i32_1 = arith.constant 0 : i32
    %c0_i32_2 = arith.constant 0 : i32
    return %arg0, %c0_i32, %c0_i32_0, %c0_i32_1 : i32, i32, i32, i32
  }
  func.func @transform_1(%arg0: i32) -> (i32, i32) {
    %c0_i32 = arith.constant 0 : i32
    %c0_i32_0 = arith.constant 0 : i32
    %c0_i32_1 = arith.constant 0 : i32
    return %c0_i32, %c0_i32_0 : i32, i32
  }
  func.func @transform_2(%arg0: i32) -> (i32, i32) {
    %c0_i32 = arith.constant 0 : i32
    %c0_i32_0 = arith.constant 0 : i32
    %c0_i32_1 = arith.constant 0 : i32
    return %c0_i32, %c0_i32_0 : i32, i32
  }
  func.func @transform_3(%arg0: i32) -> (i32, i32) {
    %c0_i32 = arith.constant 0 : i32
    %c0_i32_0 = arith.constant 0 : i32
    %c0_i32_1 = arith.constant 0 : i32
    return %c0_i32, %c0_i32_0 : i32, i32
  }
  func.func @transform_4(%arg0: i32) -> (i32, i32) {
    %c0_i32 = arith.constant 0 : i32
    %c0_i32_0 = arith.constant 0 : i32
    %c0_i32_1 = arith.constant 0 : i32
    return %c0_i32, %c0_i32_0 : i32, i32
  }
  func.func @transform_5(%arg0: i32) -> (i32, i32) {
    %c0_i32 = arith.constant 0 : i32
    %c0_i32_0 = arith.constant 0 : i32
    %c0_i32_1 = arith.constant 0 : i32
    return %c0_i32, %c0_i32_0 : i32, i32
  }
  func.func @transform_6(%arg0: i32) -> (i32, i32) {
    %c0_i32 = arith.constant 0 : i32
    %c0_i32_0 = arith.constant 0 : i32
    %c0_i32_1 = arith.constant 0 : i32
    return %c0_i32, %c0_i32_0 : i32, i32
  }
  func.func @transform_7(%arg0: i32) -> (i32, i32) {
    %c0_i32 = arith.constant 0 : i32
    %c0_i32_0 = arith.constant 0 : i32
    %c0_i32_1 = arith.constant 0 : i32
    return %c0_i32, %c0_i32_0 : i32, i32
  }
  func.func @transform_8(%arg0: i32) -> (i32, i32) {
    %c0_i32 = arith.constant 0 : i32
    %c0_i32_0 = arith.constant 0 : i32
    %c0_i32_1 = arith.constant 0 : i32
    return %c0_i32, %c0_i32_0 : i32, i32
  }
  func.func @transform_9(%arg0: i32) -> (i32, i32) {
    %c0_i32 = arith.constant 0 : i32
    %c0_i32_0 = arith.constant 0 : i32
    %c0_i32_1 = arith.constant 0 : i32
    return %c0_i32, %c0_i32_0 : i32, i32
  }
  func.func @transform_10(%arg0: i32) -> (i32, i32) {
    %c0_i32 = arith.constant 0 : i32
    %c0_i32_0 = arith.constant 0 : i32
    %c0_i32_1 = arith.constant 0 : i32
    return %c0_i32, %c0_i32_0 : i32, i32
  }
  func.func @transform_11(%arg0: i32) -> (i32, i32) {
    %c0_i32 = arith.constant 0 : i32
    %c0_i32_0 = arith.constant 0 : i32
    %c0_i32_1 = arith.constant 0 : i32
    return %c0_i32, %c0_i32_0 : i32, i32
  }
  func.func @transform_12(%arg0: i32) -> (i32, i32) {
    %c0_i32 = arith.constant 0 : i32
    %c0_i32_0 = arith.constant 0 : i32
    %c0_i32_1 = arith.constant 0 : i32
    return %c0_i32, %c0_i32_0 : i32, i32
  }
  func.func @transform_13(%arg0: i32) -> (i32, i32, i32) {
    %c0_i32 = arith.constant 0 : i32
    %c0_i32_0 = arith.constant 0 : i32
    %c0_i32_1 = arith.constant 0 : i32
    return %arg0, %c0_i32, %c0_i32_0 : i32, i32, i32
  }
  func.func @transform_14(%arg0: i32) -> (i32, i32, i32) {
    %c0_i32 = arith.constant 0 : i32
    %c0_i32_0 = arith.constant 0 : i32
    %c0_i32_1 = arith.constant 0 : i32
    return %arg0, %c0_i32, %c0_i32_0 : i32, i32, i32
  }
}

</mosaic_0001>

<llo_original>
// kernel: forward.1
$region0: #{forward.1}
  #allocation0 [shape = 'u32[]', space=smem, size = 0x4, offset = 0x4, fixed_abs, tag = 'smem constant byte address 0x4 - core index']
  #allocation1 [shape = 'u32[144,128]{1,0:T(1,128)}', space=vmem, size = 0x12000, scoped, tag = 'internal scratch']
  #allocation2 [shape = 'f32[12,12,128]{2,1,0:T(8,128)}', space=vmem, size = 0x18000, scoped, tag = 'scratch operand']
  #allocation3 [shape = 'f32[8,8,256]{2,1,0:T(8,128)}', space=vmem, size = 0x10000, scoped, tag = 'scratch operand']
  #allocation4 [shape = 'f32[12,12,6]{2,1,0:T(8,128)}', space=vmem, size = 0x18000, scoped, tag = 'scratch operand']
  #allocation5 [shape = 'f32[1,512]{1,0:T(1,128)}', space=vmem, size = 0x800, scoped, tag = 'scratch operand']
  %s0 = inlined_call_operand.vmem [shape: f32[2,16,16,4], index: 0, kind: input, shape index: {}]
  %s1 = inlined_call_operand.vmem [shape: f32[128,6], index: 1, kind: input, shape index: {}]
  %s2 = inlined_call_operand.vmem [shape: f32[128,6], index: 2, kind: input, shape index: {}]
  %s3 = inlined_call_operand.vmem [shape: f32[128,6], index: 3, kind: input, shape index: {}]
  %s4 = inlined_call_operand.vmem [shape: f32[256,8], index: 4, kind: input, shape index: {}]
  %s5 = inlined_call_operand.vmem [shape: f32[256,8], index: 5, kind: input, shape index: {}]
  %s6 = inlined_call_operand.vmem [shape: f32[256,8], index: 6, kind: input, shape index: {}]
  %s7 = inlined_call_operand.vmem [shape: f32[512,32], index: 7, kind: input, shape index: {}]
  %s8 = inlined_call_operand.vmem [shape: f32[512,32], index: 8, kind: input, shape index: {}]
  %s9 = inlined_call_operand.vmem [shape: f32[512,32], index: 9, kind: input, shape index: {}]
  %s10 = inlined_call_operand.vmem [shape: f32[32,10], index: 10, kind: input, shape index: {}]
  %s11 = inlined_call_operand.vmem [shape: f32[32,10], index: 11, kind: input, shape index: {}]
  %s12 = inlined_call_operand.vmem [shape: f32[32,10], index: 12, kind: input, shape index: {}]
  %s13 = inlined_call_operand.vmem [shape: f32[2,1,544], index: 13, kind: input, shape index: {}]
  %s14 = inlined_call_operand.hbm [shape: f32[2,1,10], index: 14, kind: output, shape index: {}]
  %s15 = sld [smem:[#allocation0]]
  $region89: #{forward.1} parent=0
    _
  %s17 = ssub.s32 1, %s15
  %s18 = scalar_select 0, %s17, %s15
  $region1: #{forward.1} parent=0
    #allocation6 [shape = 'u8[1024]{0}', space=vmem, size = 0x400, scoped, tag = 'output window, operand 0']
    #allocation7 [shape = 's32[2]{0}', space=sflag, size = 0x8, scoped, tag = 'scoped memory for forward.1']
    %19 = vsyncpa [#allocation7], 0
    %s20 = scalar_lea.sflag [#allocation7], 1
    %21 = vsyncpa %s20, 0
    loop: start=0, step=1, limit=4
    $region2: #{forward.1} parent=1 // loop_pre_header
      _
    $region3: #{forward.1} parent=1 // loop_header
      %s23 = sphi 0, %s27
      %p24 = scmp.ge.s32.totalorder %s23, 4
      %s33 = sphi 0, %s35
      %s36 = sphi 0, %s33
      %s37 = sphi 0, %s36
      %s53 = sphi 0, %s37
      %s57 = sphi 0, %s57
      %s59 = sphi 0, %s57
      %s60 = sphi 0, %s59
      %s74 = sphi 0, %s60
      %s78 = sphi 0, %s78
      %s80 = sphi 0, %s78
      %s81 = sphi 0, %s80
      %s95 = sphi 0, %s81
      %s99 = sphi 0, %s99
      %s101 = sphi 0, %s99
      %s102 = sphi 0, %s101
      %s116 = sphi 0, %s102
      %s120 = sphi 0, %s120
      %s122 = sphi 0, %s120
      %s123 = sphi 0, %s122
      %s137 = sphi 0, %s123
      %s141 = sphi 0, %s141
      %s143 = sphi 0, %s141
      %s144 = sphi 0, %s143
      %s158 = sphi 0, %s144
      %s162 = sphi 0, %s162
      %s164 = sphi 0, %s162
      %s165 = sphi 0, %s164
      %s179 = sphi 0, %s165
      %s183 = sphi 0, %s183
      %s185 = sphi 0, %s183
      %s186 = sphi 0, %s185
      %s200 = sphi 0, %s186
      %s204 = sphi 0, %s204
      %s206 = sphi 0, %s204
      %s207 = sphi 0, %s206
      %s221 = sphi 0, %s207
      %s225 = sphi 0, %s225
      %s227 = sphi 0, %s225
      %s228 = sphi 0, %s227
      %s242 = sphi 0, %s228
      %s246 = sphi 0, %s246
      %s248 = sphi 0, %s246
      %s249 = sphi 0, %s248
      %s263 = sphi 0, %s249
      %s267 = sphi 0, %s267
      %s269 = sphi 0, %s267
      %s270 = sphi 0, %s269
      %s284 = sphi 0, %s270
      %s288 = sphi 0, %s288
      %s290 = sphi 0, %s288
      %s291 = sphi 0, %s290
      %s305 = sphi 0, %s291
      %s311 = sphi 0, %s313
      %s314 = sphi 0, %s311
      %s315 = sphi 0, %s314
      %s331 = sphi 0, %s315
      %s337 = sphi 0, %s339
      %s340 = sphi 0, %s337
      %s341 = sphi 0, %s340
      %s357 = sphi 0, %s341
    $region4: #{forward.1} parent=1 // loop_header_branch
      %26 = sbr.rel (%p24) target = $region8
    $region5: #{forward.1} parent=1 // loop_body
      %s28 = ssub.s32 %s23, 1
      %s29 = ssub.s32 %s23, 2
      %s30 = sadd.s32 %s23, 1
      %s31 = ssub.s32 %s23, %s30
      %p32 = scmp.eq.s32.totalorder %s31, 0
      %s34 = sadd.s32 %s33, 1
      %s35 = scalar_select %p32, %s33, %s34
      %p38 = pneg %p32
      %p39 = scmp.eq.s32.totalorder %s23, 1
      %p40 = por %p38, %p39
      %p41 = scmp.ne.s32.totalorder %s33, %s36
      %p42 = scmp.eq.s32.totalorder %s23, 0
      %p43 = por %p41, %p42
      %p44 = scmp.ne.s32.totalorder %s33, %s36
      %p45 = scmp.eq.s32.totalorder %s28, 1
      %p46 = por %p44, %p45
      %p47 = scmp.ne.s32.totalorder %s36, %s37
      %p48 = scmp.eq.s32.totalorder %s28, 0
      %p49 = por %p47, %p48
      %p50 = scmp.ne.s32.totalorder %s36, %s37
      %p51 = scmp.eq.s32.totalorder %s29, 1
      %p52 = por %p50, %p51
      %p54 = scmp.ne.s32.totalorder %s37, %s53
      %p55 = scmp.eq.s32.totalorder %s29, 0
      %p56 = por %p54, %p55
      %s58 = sadd.s32 %s57, 1
      %p61 = scmp.eq.s32.totalorder %s23, 1
      %p62 = scmp.ne.s32.totalorder %s57, %s59
      %p63 = scmp.eq.s32.totalorder %s23, 0
      %p64 = por %p62, %p63
      %p65 = scmp.ne.s32.totalorder %s57, %s59
      %p66 = scmp.eq.s32.totalorder %s28, 1
      %p67 = por %p65, %p66
      %p68 = scmp.ne.s32.totalorder %s59, %s60
      %p69 = scmp.eq.s32.totalorder %s28, 0
      %p70 = por %p68, %p69
      %p71 = scmp.ne.s32.totalorder %s59, %s60
      %p72 = scmp.eq.s32.totalorder %s29, 1
      %p73 = por %p71, %p72
      %p75 = scmp.ne.s32.totalorder %s60, %s74
      %p76 = scmp.eq.s32.totalorder %s29, 0
      %p77 = por %p75, %p76
      %s79 = sadd.s32 %s78, 1
      %p82 = scmp.eq.s32.totalorder %s23, 1
      %p83 = scmp.ne.s32.totalorder %s78, %s80
      %p84 = scmp.eq.s32.totalorder %s23, 0
      %p85 = por %p83, %p84
      %p86 = scmp.ne.s32.totalorder %s78, %s80
      %p87 = scmp.eq.s32.totalorder %s28, 1
      %p88 = por %p86, %p87
      %p89 = scmp.ne.s32.totalorder %s80, %s81
      %p90 = scmp.eq.s32.totalorder %s28, 0
      %p91 = por %p89, %p90
      %p92 = scmp.ne.s32.totalorder %s80, %s81
      %p93 = scmp.eq.s32.totalorder %s29, 1
      %p94 = por %p92, %p93
      %p96 = scmp.ne.s32.totalorder %s81, %s95
      %p97 = scmp.eq.s32.totalorder %s29, 0
      %p98 = por %p96, %p97
      %s100 = sadd.s32 %s99, 1
      %p103 = scmp.eq.s32.totalorder %s23, 1
      %p104 = scmp.ne.s32.totalorder %s99, %s101
      %p105 = scmp.eq.s32.totalorder %s23, 0
      %p106 = por %p104, %p105
      %p107 = scmp.ne.s32.totalorder %s99, %s101
      %p108 = scmp.eq.s32.totalorder %s28, 1
      %p109 = por %p107, %p108
      %p110 = scmp.ne.s32.totalorder %s101, %s102
      %p111 = scmp.eq.s32.totalorder %s28, 0
      %p112 = por %p110, %p111
      %p113 = scmp.ne.s32.totalorder %s101, %s102
      %p114 = scmp.eq.s32.totalorder %s29, 1
      %p115 = por %p113, %p114
      %p117 = scmp.ne.s32.totalorder %s102, %s116
      %p118 = scmp.eq.s32.totalorder %s29, 0
      %p119 = por %p117, %p118
      %s121 = sadd.s32 %s120, 1
      %p124 = scmp.eq.s32.totalorder %s23, 1
      %p125 = scmp.ne.s32.totalorder %s120, %s122
      %p126 = scmp.eq.s32.totalorder %s23, 0
      %p127 = por %p125, %p126
      %p128 = scmp.ne.s32.totalorder %s120, %s122
      %p129 = scmp.eq.s32.totalorder %s28, 1
      %p130 = por %p128, %p129
      %p131 = scmp.ne.s32.totalorder %s122, %s123
      %p132 = scmp.eq.s32.totalorder %s28, 0
      %p133 = por %p131, %p132
      %p134 = scmp.ne.s32.totalorder %s122, %s123
      %p135 = scmp.eq.s32.totalorder %s29, 1
      %p136 = por %p134, %p135
      %p138 = scmp.ne.s32.totalorder %s123, %s137
      %p139 = scmp.eq.s32.totalorder %s29, 0
      %p140 = por %p138, %p139
      %s142 = sadd.s32 %s141, 1
      %p145 = scmp.eq.s32.totalorder %s23, 1
      %p146 = scmp.ne.s32.totalorder %s141, %s143
      %p147 = scmp.eq.s32.totalorder %s23, 0
      %p148 = por %p146, %p147
      %p149 = scmp.ne.s32.totalorder %s141, %s143
      %p150 = scmp.eq.s32.totalorder %s28, 1
      %p151 = por %p149, %p150
      %p152 = scmp.ne.s32.totalorder %s143, %s144
      %p153 = scmp.eq.s32.totalorder %s28, 0
      %p154 = por %p152, %p153
      %p155 = scmp.ne.s32.totalorder %s143, %s144
      %p156 = scmp.eq.s32.totalorder %s29, 1
      %p157 = por %p155, %p156
      %p159 = scmp.ne.s32.totalorder %s144, %s158
      %p160 = scmp.eq.s32.totalorder %s29, 0
      %p161 = por %p159, %p160
      %s163 = sadd.s32 %s162, 1
      %p166 = scmp.eq.s32.totalorder %s23, 1
      %p167 = scmp.ne.s32.totalorder %s162, %s164
      %p168 = scmp.eq.s32.totalorder %s23, 0
      %p169 = por %p167, %p168
      %p170 = scmp.ne.s32.totalorder %s162, %s164
      %p171 = scmp.eq.s32.totalorder %s28, 1
      %p172 = por %p170, %p171
      %p173 = scmp.ne.s32.totalorder %s164, %s165
      %p174 = scmp.eq.s32.totalorder %s28, 0
      %p175 = por %p173, %p174
      %p176 = scmp.ne.s32.totalorder %s164, %s165
      %p177 = scmp.eq.s32.totalorder %s29, 1
      %p178 = por %p176, %p177
      %p180 = scmp.ne.s32.totalorder %s165, %s179
      %p181 = scmp.eq.s32.totalorder %s29, 0
      %p182 = por %p180, %p181
      %s184 = sadd.s32 %s183, 1
      %p187 = scmp.eq.s32.totalorder %s23, 1
      %p188 = scmp.ne.s32.totalorder %s183, %s185
      %p189 = scmp.eq.s32.totalorder %s23, 0
      %p190 = por %p188, %p189
      %p191 = scmp.ne.s32.totalorder %s183, %s185
      %p192 = scmp.eq.s32.totalorder %s28, 1
      %p193 = por %p191, %p192
      %p194 = scmp.ne.s32.totalorder %s185, %s186
      %p195 = scmp.eq.s32.totalorder %s28, 0
      %p196 = por %p194, %p195
      %p197 = scmp.ne.s32.totalorder %s185, %s186
      %p198 = scmp.eq.s32.totalorder %s29, 1
      %p199 = por %p197, %p198
      %p201 = scmp.ne.s32.totalorder %s186, %s200
      %p202 = scmp.eq.s32.totalorder %s29, 0
      %p203 = por %p201, %p202
      %s205 = sadd.s32 %s204, 1
      %p208 = scmp.eq.s32.totalorder %s23, 1
      %p209 = scmp.ne.s32.totalorder %s204, %s206
      %p210 = scmp.eq.s32.totalorder %s23, 0
      %p211 = por %p209, %p210
      %p212 = scmp.ne.s32.totalorder %s204, %s206
      %p213 = scmp.eq.s32.totalorder %s28, 1
      %p214 = por %p212, %p213
      %p215 = scmp.ne.s32.totalorder %s206, %s207
      %p216 = scmp.eq.s32.totalorder %s28, 0
      %p217 = por %p215, %p216
      %p218 = scmp.ne.s32.totalorder %s206, %s207
      %p219 = scmp.eq.s32.totalorder %s29, 1
      %p220 = por %p218, %p219
      %p222 = scmp.ne.s32.totalorder %s207, %s221
      %p223 = scmp.eq.s32.totalorder %s29, 0
      %p224 = por %p222, %p223
      %s226 = sadd.s32 %s225, 1
      %p229 = scmp.eq.s32.totalorder %s23, 1
      %p230 = scmp.ne.s32.totalorder %s225, %s227
      %p231 = scmp.eq.s32.totalorder %s23, 0
      %p232 = por %p230, %p231
      %p233 = scmp.ne.s32.totalorder %s225, %s227
      %p234 = scmp.eq.s32.totalorder %s28, 1
      %p235 = por %p233, %p234
      %p236 = scmp.ne.s32.totalorder %s227, %s228
      %p237 = scmp.eq.s32.totalorder %s28, 0
      %p238 = por %p236, %p237
      %p239 = scmp.ne.s32.totalorder %s227, %s228
      %p240 = scmp.eq.s32.totalorder %s29, 1
      %p241 = por %p239, %p240
      %p243 = scmp.ne.s32.totalorder %s228, %s242
      %p244 = scmp.eq.s32.totalorder %s29, 0
      %p245 = por %p243, %p244
      %s247 = sadd.s32 %s246, 1
      %p250 = scmp.eq.s32.totalorder %s23, 1
      %p251 = scmp.ne.s32.totalorder %s246, %s248
      %p252 = scmp.eq.s32.totalorder %s23, 0
      %p253 = por %p251, %p252
      %p254 = scmp.ne.s32.totalorder %s246, %s248
      %p255 = scmp.eq.s32.totalorder %s28, 1
      %p256 = por %p254, %p255
      %p257 = scmp.ne.s32.totalorder %s248, %s249
      %p258 = scmp.eq.s32.totalorder %s28, 0
      %p259 = por %p257, %p258
      %p260 = scmp.ne.s32.totalorder %s248, %s249
      %p261 = scmp.eq.s32.totalorder %s29, 1
      %p262 = por %p260, %p261
      %p264 = scmp.ne.s32.totalorder %s249, %s263
      %p265 = scmp.eq.s32.totalorder %s29, 0
      %p266 = por %p264, %p265
      %s268 = sadd.s32 %s267, 1
      %p271 = scmp.eq.s32.totalorder %s23, 1
      %p272 = scmp.ne.s32.totalorder %s267, %s269
      %p273 = scmp.eq.s32.totalorder %s23, 0
      %p274 = por %p272, %p273
      %p275 = scmp.ne.s32.totalorder %s267, %s269
      %p276 = scmp.eq.s32.totalorder %s28, 1
      %p277 = por %p275, %p276
      %p278 = scmp.ne.s32.totalorder %s269, %s270
      %p279 = scmp.eq.s32.totalorder %s28, 0
      %p280 = por %p278, %p279
      %p281 = scmp.ne.s32.totalorder %s269, %s270
      %p282 = scmp.eq.s32.totalorder %s29, 1
      %p283 = por %p281, %p282
      %p285 = scmp.ne.s32.totalorder %s270, %s284
      %p286 = scmp.eq.s32.totalorder %s29, 0
      %p287 = por %p285, %p286
      %s289 = sadd.s32 %s288, 1
      %p292 = scmp.eq.s32.totalorder %s23, 1
      %p293 = scmp.ne.s32.totalorder %s288, %s290
      %p294 = scmp.eq.s32.totalorder %s23, 0
      %p295 = por %p293, %p294
      %p296 = scmp.ne.s32.totalorder %s288, %s290
      %p297 = scmp.eq.s32.totalorder %s28, 1
      %p298 = por %p296, %p297
      %p299 = scmp.ne.s32.totalorder %s290, %s291
      %p300 = scmp.eq.s32.totalorder %s28, 0
      %p301 = por %p299, %p300
      %p302 = scmp.ne.s32.totalorder %s290, %s291
      %p303 = scmp.eq.s32.totalorder %s29, 1
      %p304 = por %p302, %p303
      %p306 = scmp.ne.s32.totalorder %s291, %s305
      %p307 = scmp.eq.s32.totalorder %s29, 0
      %p308 = por %p306, %p307
      %s309 = ssub.s32 %s23, %s30
      %p310 = scmp.eq.s32.totalorder %s309, 0
      %s312 = sadd.s32 %s311, 1
      %s313 = scalar_select %p310, %s311, %s312
      %p316 = pneg %p310
      %p317 = scmp.eq.s32.totalorder %s23, 1
      %p318 = por %p316, %p317
      %p319 = scmp.ne.s32.totalorder %s311, %s314
      %p320 = scmp.eq.s32.totalorder %s23, 0
      %p321 = por %p319, %p320
      %p322 = scmp.ne.s32.totalorder %s311, %s314
      %p323 = scmp.eq.s32.totalorder %s28, 1
      %p324 = por %p322, %p323
      %p325 = scmp.ne.s32.totalorder %s314, %s315
      %p326 = scmp.eq.s32.totalorder %s28, 0
      %p327 = por %p325, %p326
      %p328 = scmp.ne.s32.totalorder %s314, %s315
      %p329 = scmp.eq.s32.totalorder %s29, 1
      %p330 = por %p328, %p329
      %p332 = scmp.ne.s32.totalorder %s315, %s331
      %p333 = scmp.eq.s32.totalorder %s29, 0
      %p334 = por %p332, %p333
      %s335 = ssub.s32 %s23, %s30
      %p336 = scmp.eq.s32.totalorder %s335, 0
      %s338 = sadd.s32 %s337, 1
      %s339 = scalar_select %p336, %s337, %s338
      %p342 = pneg %p336
      %p343 = scmp.eq.s32.totalorder %s23, 1
      %p344 = por %p342, %p343
      %p345 = scmp.ne.s32.totalorder %s337, %s340
      %p346 = scmp.eq.s32.totalorder %s23, 0
      %p347 = por %p345, %p346
      %p348 = scmp.ne.s32.totalorder %s337, %s340
      %p349 = scmp.eq.s32.totalorder %s28, 1
      %p350 = por %p348, %p349
      %p351 = scmp.ne.s32.totalorder %s340, %s341
      %p352 = scmp.eq.s32.totalorder %s28, 0
      %p353 = por %p351, %p352
      %p354 = scmp.ne.s32.totalorder %s340, %s341
      %p355 = scmp.eq.s32.totalorder %s29, 1
      %p356 = por %p354, %p355
      %p358 = scmp.ne.s32.totalorder %s341, %s357
      %p359 = scmp.eq.s32.totalorder %s29, 0
      %p360 = por %p358, %p359
      %p361 = scmp.le.s32.totalorder 1, %s23
      %p362 = scmp.lt.s32.totalorder %s23, 3
      %p363 = pnand %p361, %p362
      %p364 = pneg %p363
      // Predicated region
      $region9: #{forward.1} parent=5 // pred_check
        _
      $region10: #{forward.1} parent=5 // pred_check_branch
        %366 = sbr.rel (%p363) target = $region12
      $region11: #{forward.1} parent=5 // pred_region
        %s367 = ssub.s32 %s23, 1
        // Predicated region
        $region13: #{forward.1} parent=11 // pred_check
          %p368 = pneg %p70
        $region14: #{forward.1} parent=11 // pred_check_branch
          %370 = sbr.rel (%p368) target = $region16
        $region15: #{forward.1} parent=11 // pred_region
          _
        $region16: #{forward.1} parent=11 // pred_fallthru
          _
        // Predicated region
        $region17: #{forward.1} parent=11 // pred_check
          %p371 = pneg %p91
        $region18: #{forward.1} parent=11 // pred_check_branch
          %373 = sbr.rel (%p371) target = $region20
        $region19: #{forward.1} parent=11 // pred_region
          _
        $region20: #{forward.1} parent=11 // pred_fallthru
          _
        // Predicated region
        $region21: #{forward.1} parent=11 // pred_check
          %p374 = pneg %p112
        $region22: #{forward.1} parent=11 // pred_check_branch
          %376 = sbr.rel (%p374) target = $region24
        $region23: #{forward.1} parent=11 // pred_region
          _
        $region24: #{forward.1} parent=11 // pred_fallthru
          _
        // Predicated region
        $region25: #{forward.1} parent=11 // pred_check
          %p377 = pneg %p133
        $region26: #{forward.1} parent=11 // pred_check_branch
          %379 = sbr.rel (%p377) target = $region28
        $region27: #{forward.1} parent=11 // pred_region
          _
        $region28: #{forward.1} parent=11 // pred_fallthru
          _
        // Predicated region
        $region29: #{forward.1} parent=11 // pred_check
          %p380 = pneg %p154
        $region30: #{forward.1} parent=11 // pred_check_branch
          %382 = sbr.rel (%p380) target = $region32
        $region31: #{forward.1} parent=11 // pred_region
          _
        $region32: #{forward.1} parent=11 // pred_fallthru
          _
        // Predicated region
        $region33: #{forward.1} parent=11 // pred_check
          %p383 = pneg %p175
        $region34: #{forward.1} parent=11 // pred_check_branch
          %385 = sbr.rel (%p383) target = $region36
        $region35: #{forward.1} parent=11 // pred_region
          _
        $region36: #{forward.1} parent=11 // pred_fallthru
          _
        // Predicated region
        $region37: #{forward.1} parent=11 // pred_check
          %p386 = pneg %p196
        $region38: #{forward.1} parent=11 // pred_check_branch
          %388 = sbr.rel (%p386) target = $region40
        $region39: #{forward.1} parent=11 // pred_region
          _
        $region40: #{forward.1} parent=11 // pred_fallthru
          _
        // Predicated region
        $region41: #{forward.1} parent=11 // pred_check
          %p389 = pneg %p217
        $region42: #{forward.1} parent=11 // pred_check_branch
          %391 = sbr.rel (%p389) target = $region44
        $region43: #{forward.1} parent=11 // pred_region
          _
        $region44: #{forward.1} parent=11 // pred_fallthru
          _
        // Predicated region
        $region45: #{forward.1} parent=11 // pred_check
          %p392 = pneg %p238
        $region46: #{forward.1} parent=11 // pred_check_branch
          %394 = sbr.rel (%p392) target = $region48
        $region47: #{forward.1} parent=11 // pred_region
          _
        $region48: #{forward.1} parent=11 // pred_fallthru
          _
        // Predicated region
        $region49: #{forward.1} parent=11 // pred_check
          %p395 = pneg %p259
        $region50: #{forward.1} parent=11 // pred_check_branch
          %397 = sbr.rel (%p395) target = $region52
        $region51: #{forward.1} parent=11 // pred_region
          _
        $region52: #{forward.1} parent=11 // pred_fallthru
          _
        // Predicated region
        $region53: #{forward.1} parent=11 // pred_check
          %p398 = pneg %p280
        $region54: #{forward.1} parent=11 // pred_check_branch
          %400 = sbr.rel (%p398) target = $region56
        $region55: #{forward.1} parent=11 // pred_region
          _
        $region56: #{forward.1} parent=11 // pred_fallthru
          _
        // Predicated region
        $region57: #{forward.1} parent=11 // pred_check
          %p401 = pneg %p301
        $region58: #{forward.1} parent=11 // pred_check_branch
          %403 = sbr.rel (%p401) target = $region60
        $region59: #{forward.1} parent=11 // pred_region
          _
        $region60: #{forward.1} parent=11 // pred_fallthru
          _
      $region12: #{forward.1} parent=5 // pred_fallthru
        _
      %p404 = scmp.lt.s32.totalorder %s23, 2
      // Predicated region
      $region61: #{forward.1} parent=5 // pred_check
        %p405 = pneg %p404
      $region62: #{forward.1} parent=5 // pred_check_branch
        %407 = sbr.rel (%p405) target = $region64
      $region63: #{forward.1} parent=5 // pred_region
        // Predicated region
        $region65: #{forward.1} parent=63 // pred_check
          %p408 = pneg %p43
        $region66: #{forward.1} parent=63 // pred_check_branch
          %410 = sbr.rel (%p408) target = $region68
        $region67: #{forward.1} parent=63 // pred_region
          %p411 = scmp.lt.s32.totalorder %s23, 1
          %s412 = scalar_select %p411, %s23, 1
          %s413 = smul.addr %s412, 32
          %s414 = smul.addr %s413, 8
          %s415 = scalar_lea.vmem %s0, %s414
        $region68: #{forward.1} parent=63 // pred_fallthru
          _
        // Predicated region
        $region69: #{forward.1} parent=63 // pred_check
          %p416 = pneg %p321
        $region70: #{forward.1} parent=63 // pred_check_branch
          %418 = sbr.rel (%p416) target = $region72
        $region71: #{forward.1} parent=63 // pred_region
          %p419 = scmp.lt.s32.totalorder %s23, 1
          %s420 = scalar_select %p419, %s23, 1
          %s421 = smul.addr %s420, 5
          %s422 = scalar_lea.vmem %s13, %s421
        $region72: #{forward.1} parent=63 // pred_fallthru
          _
      $region64: #{forward.1} parent=5 // pred_fallthru
        _
      %p423 = scmp.le.s32.totalorder 1, %s23
      %p424 = scmp.lt.s32.totalorder %s23, 3
      %p425 = pnand %p423, %p424
      %p426 = pneg %p425
      // Predicated region
      $region73: #{forward.1} parent=5 // pred_check
        _
      $region74: #{forward.1} parent=5 // pred_check_branch
        %428 = sbr.rel (%p425) target = $region76
      $region75: #{forward.1} parent=5 // pred_region
        %s429 = ssub.s32 %s23, 1
        %p430 = scmp.lt.s32.totalorder %s28, 1
        %s431 = scalar_select %p430, %s28, 1
        %s432 = smul.addr %s431, 32
        %s433 = smul.addr %s432, 8
        %s434 = scalar_lea.vmem %s0, %s433
        %p435 = pneg %p49
        %p436 = pneg %p46
        %p437 = pneg %p70
        %p438 = pneg %p67
        %p439 = pneg %p91
        %p440 = pneg %p88
        %p441 = pneg %p112
        %p442 = pneg %p109
        %p443 = pneg %p133
        %p444 = pneg %p130
        %p445 = pneg %p154
        %p446 = pneg %p151
        %p447 = pneg %p175
        %p448 = pneg %p172
        %p449 = pneg %p196
        %p450 = pneg %p193
        %p451 = pneg %p217
        %p452 = pneg %p214
        %p453 = pneg %p238
        %p454 = pneg %p235
        %p455 = pneg %p259
        %p456 = pneg %p256
        %p457 = pneg %p280
        %p458 = pneg %p277
        %p459 = pneg %p301
        %p460 = pneg %p298
        %p461 = scmp.lt.s32.totalorder %s28, 1
        %s462 = scalar_select %p461, %s28, 1
        %s463 = smul.addr %s462, 5
        %s464 = scalar_lea.vmem %s13, %s463
        %p465 = pneg %p327
        %p466 = pneg %p324
        %p467 = pneg %p353
        %p468 = pneg %p350
        %s469 = sand.u32 %s340, 1
        %s470 = scalar_lea.sflag [#allocation7], %s469
        %s471 = sand.u32 %s340, 1
        %s472 = scalar_lea.vmem [#allocation6], %s471
        %p473 = scmp.lt.s32.totalorder %s28, 1
        %s474 = scalar_select %p473, %s28, 1
        %s475 = smul.addr %s474, 32
        %s476 = smul.addr %s475, 8
        %s477 = scalar_lea.vmem %s0, %s476
        %p478 = scmp.lt.s32.totalorder %s28, 1
        %s479 = scalar_select %p478, %s28, 1
        %s480 = smul.addr %s479, 5
        %s481 = scalar_lea.vmem %s13, %s480
        %v483 = vld [vmem:[%s1] sm:$0xff]
        %v484 = vld [vmem:[%s1 + $0x8] sm:$0xff]
        %v485 = vld [vmem:[%s1 + $0x10] sm:$0xff]
        %v486 = vld [vmem:[%s1 + $0x18] sm:$0xff]
        %v487 = vld [vmem:[%s1 + $0x20] sm:$0xff]
        %v488 = vld [vmem:[%s1 + $0x28] sm:$0xff]
        %v489 = vld [vmem:[%s1 + $0x30] sm:$0xff]
        %v490 = vld [vmem:[%s1 + $0x38] sm:$0xff]
        %v491 = vld [vmem:[%s1 + $0x40] sm:$0xff]
        %v492 = vld [vmem:[%s1 + $0x48] sm:$0xff]
        %v493 = vld [vmem:[%s1 + $0x50] sm:$0xff]
        %v494 = vld [vmem:[%s1 + $0x58] sm:$0xff]
        %v495 = vld [vmem:[%s1 + $0x60] sm:$0xff]
        %v496 = vld [vmem:[%s1 + $0x68] sm:$0xff]
        %v497 = vld [vmem:[%s1 + $0x70] sm:$0xff]
        %v498 = vld [vmem:[%s1 + $0x78] sm:$0xff]
        %v499 = vld [vmem:[%s3] sm:$0xff]
        %v500 = vld [vmem:[%s3 + $0x8] sm:$0xff]
        %v501 = vld [vmem:[%s3 + $0x10] sm:$0xff]
        %v502 = vld [vmem:[%s3 + $0x18] sm:$0xff]
        %v503 = vld [vmem:[%s3 + $0x20] sm:$0xff]
        %v504 = vld [vmem:[%s3 + $0x28] sm:$0xff]
        %v505 = vld [vmem:[%s3 + $0x30] sm:$0xff]
        %v506 = vld [vmem:[%s3 + $0x38] sm:$0xff]
        %v507 = vld [vmem:[%s3 + $0x40] sm:$0xff]
        %v508 = vld [vmem:[%s3 + $0x48] sm:$0xff]
        %v509 = vld [vmem:[%s3 + $0x50] sm:$0xff]
        %v510 = vld [vmem:[%s3 + $0x58] sm:$0xff]
        %v511 = vld [vmem:[%s3 + $0x60] sm:$0xff]
        %v512 = vld [vmem:[%s3 + $0x68] sm:$0xff]
        %v513 = vld [vmem:[%s3 + $0x70] sm:$0xff]
        %v514 = vld [vmem:[%s3 + $0x78] sm:$0xff]
        %v515 = vld [vmem:[%s2] sm:$0xff]
        %v516 = vld [vmem:[%s2 + $0x8] sm:$0xff]
        %v517 = vld [vmem:[%s2 + $0x10] sm:$0xff]
        %v518 = vld [vmem:[%s2 + $0x18] sm:$0xff]
        %v519 = vld [vmem:[%s2 + $0x20] sm:$0xff]
        %v520 = vld [vmem:[%s2 + $0x28] sm:$0xff]
        %v521 = vld [vmem:[%s2 + $0x30] sm:$0xff]
        %v522 = vld [vmem:[%s2 + $0x38] sm:$0xff]
        %v523 = vld [vmem:[%s2 + $0x40] sm:$0xff]
        %v524 = vld [vmem:[%s2 + $0x48] sm:$0xff]
        %v525 = vld [vmem:[%s2 + $0x50] sm:$0xff]
        %v526 = vld [vmem:[%s2 + $0x58] sm:$0xff]
        %v527 = vld [vmem:[%s2 + $0x60] sm:$0xff]
        %v528 = vld [vmem:[%s2 + $0x68] sm:$0xff]
        %v529 = vld [vmem:[%s2 + $0x70] sm:$0xff]
        %v530 = vld [vmem:[%s2 + $0x78] sm:$0xff]
        %v531 = vmul.f32 %v515, 0.5
        %v532 = vmul.f32 %v516, 0.5
        %v533 = vmul.f32 %v517, 0.5
        %v534 = vmul.f32 %v518, 0.5
        %v535 = vmul.f32 %v519, 0.5
        %v536 = vmul.f32 %v520, 0.5
        %v537 = vmul.f32 %v521, 0.5
        %v538 = vmul.f32 %v522, 0.5
        %v539 = vmul.f32 %v523, 0.5
        %v540 = vmul.f32 %v524, 0.5
        %v541 = vmul.f32 %v525, 0.5
        %v542 = vmul.f32 %v526, 0.5
        %v543 = vmul.f32 %v527, 0.5
        %v544 = vmul.f32 %v528, 0.5
        %v545 = vmul.f32 %v529, 0.5
        %v546 = vmul.f32 %v530, 0.5
        %v547 = vmul.f32 %v531, 1.442695
        %v548 = vpow.pop %v547
        %v549 = vmul.f32 %v532, 1.442695
        %v550 = vpow.pop %v549
        %v551 = vmul.f32 %v533, 1.442695
        %v552 = vpow.pop %v551
        %v553 = vmul.f32 %v534, 1.442695
        %v554 = vpow.pop %v553
        %v555 = vmul.f32 %v535, 1.442695
        %v556 = vpow.pop %v555
        %v557 = vmul.f32 %v536, 1.442695
        %v558 = vpow.pop %v557
        %v559 = vmul.f32 %v537, 1.442695
        %v560 = vpow.pop %v559
        %v561 = vmul.f32 %v538, 1.442695
        %v562 = vpow.pop %v561
        %v563 = vmul.f32 %v539, 1.442695
        %v564 = vpow.pop %v563
        %v565 = vmul.f32 %v540, 1.442695
        %v566 = vpow.pop %v565
        %v567 = vmul.f32 %v541, 1.442695
        %v568 = vpow.pop %v567
        %v569 = vmul.f32 %v542, 1.442695
        %v570 = vpow.pop %v569
        %v571 = vmul.f32 %v543, 1.442695
        %v572 = vpow.pop %v571
        %v573 = vmul.f32 %v544, 1.442695
        %v574 = vpow.pop %v573
        %v575 = vmul.f32 %v545, 1.442695
        %v576 = vpow.pop %v575
        %v577 = vmul.f32 %v546, 1.442695
        %v578 = vpow.pop %v577
        %v579 = vmul.f32 %v499, %v548
        %v580 = vmul.f32 %v500, %v550
        %v581 = vmul.f32 %v501, %v552
        %v582 = vmul.f32 %v502, %v554
        %v583 = vmul.f32 %v503, %v556
        %v584 = vmul.f32 %v504, %v558
        %v585 = vmul.f32 %v505, %v560
        %v586 = vmul.f32 %v506, %v562
        %v587 = vmul.f32 %v507, %v564
        %v588 = vmul.f32 %v508, %v566
        %v589 = vmul.f32 %v509, %v568
        %v590 = vmul.f32 %v510, %v570
        %v591 = vmul.f32 %v511, %v572
        %v592 = vmul.f32 %v512, %v574
        %v593 = vmul.f32 %v513, %v576
        %v594 = vmul.f32 %v514, %v578
        %v595 = vadd.f32 %v483, %v579
        %v596 = vadd.f32 %v484, %v580
        %v597 = vadd.f32 %v485, %v581
        %v598 = vadd.f32 %v486, %v582
        %v599 = vadd.f32 %v487, %v583
        %v600 = vadd.f32 %v488, %v584
        %v601 = vadd.f32 %v489, %v585
        %v602 = vadd.f32 %v490, %v586
        %v603 = vadd.f32 %v491, %v587
        %v604 = vadd.f32 %v492, %v588
        %v605 = vadd.f32 %v493, %v589
        %v606 = vadd.f32 %v494, %v590
        %v607 = vadd.f32 %v495, %v591
        %v608 = vadd.f32 %v496, %v592
        %v609 = vadd.f32 %v497, %v593
        %v610 = vadd.f32 %v498, %v594
        %v611 = vpack.c.bf16 %v596, %v595
        %v612 = vpack.c.bf16 %v598, %v597
        %v613 = vpack.c.bf16 %v600, %v599
        %v614 = vpack.c.bf16 %v602, %v601
        %v615 = vpack.c.bf16 %v604, %v603
        %v616 = vpack.c.bf16 %v606, %v605
        %v617 = vpack.c.bf16 %v608, %v607
        %v618 = vpack.c.bf16 %v610, %v609
        %vm619 = vcmask 1048352
        %620 = vst.msk [vmem:[#allocation2] sm:$0xff] %vm619, 0.0
        %vm621 = vcmask 1044256
        %622 = vst.msk [vmem:[#allocation2 + $0x8] sm:$0xf] %vm621, 0.0
        %623 = vst.msk [vmem:[#allocation2 + $0x10] sm:$0xff] %vm619, 0.0
        %624 = vst.msk [vmem:[#allocation2 + $0x18] sm:$0xf] %vm621, 0.0
        %625 = vst.msk [vmem:[#allocation2 + $0x20] sm:$0xff] %vm619, 0.0
        %626 = vst.msk [vmem:[#allocation2 + $0x28] sm:$0xf] %vm621, 0.0
        %627 = vst.msk [vmem:[#allocation2 + $0x30] sm:$0xff] %vm619, 0.0
        %628 = vst.msk [vmem:[#allocation2 + $0x38] sm:$0xf] %vm621, 0.0
        %629 = vst.msk [vmem:[#allocation2 + $0x40] sm:$0xff] %vm619, 0.0
        %630 = vst.msk [vmem:[#allocation2 + $0x48] sm:$0xf] %vm621, 0.0
        %631 = vst.msk [vmem:[#allocation2 + $0x50] sm:$0xff] %vm619, 0.0
        %632 = vst.msk [vmem:[#allocation2 + $0x58] sm:$0xf] %vm621, 0.0
        %633 = vst.msk [vmem:[#allocation2 + $0x60] sm:$0xff] %vm619, 0.0
        %634 = vst.msk [vmem:[#allocation2 + $0x68] sm:$0xf] %vm621, 0.0
        %635 = vst.msk [vmem:[#allocation2 + $0x70] sm:$0xff] %vm619, 0.0
        %636 = vst.msk [vmem:[#allocation2 + $0x78] sm:$0xf] %vm621, 0.0
        %637 = vst.msk [vmem:[#allocation2 + $0x80] sm:$0xff] %vm619, 0.0
        %638 = vst.msk [vmem:[#allocation2 + $0x88] sm:$0xf] %vm621, 0.0
        %639 = vst.msk [vmem:[#allocation2 + $0x90] sm:$0xff] %vm619, 0.0
        %640 = vst.msk [vmem:[#allocation2 + $0x98] sm:$0xf] %vm621, 0.0
        %641 = vst.msk [vmem:[#allocation2 + $0xa0] sm:$0xff] %vm619, 0.0
        %642 = vst.msk [vmem:[#allocation2 + $0xa8] sm:$0xf] %vm621, 0.0
        %643 = vst.msk [vmem:[#allocation2 + $0xb0] sm:$0xff] %vm619, 0.0
        %644 = vst.msk [vmem:[#allocation2 + $0xb8] sm:$0xf] %vm621, 0.0
        %v645 = vld [vmem:[%s477] sm:$0xff]
        %v646 = vld [vmem:[%s477 + $0x8] sm:$0xf]
        %v647 = vld [vmem:[%s477 + $0x10] sm:$0xff]
        %v648 = vld [vmem:[%s477 + $0x18] sm:$0xf]
        %v649 = vld [vmem:[%s477 + $0x20] sm:$0xff]
        %v650 = vld [vmem:[%s477 + $0x28] sm:$0xf]
        %v651 = vld [vmem:[%s477 + $0x30] sm:$0xff]
        %v652 = vld [vmem:[%s477 + $0x38] sm:$0xf]
        %v653 = vld [vmem:[%s477 + $0x40] sm:$0xff]
        %v654 = vld [vmem:[%s477 + $0x48] sm:$0xf]
        %v655 = vld [vmem:[%s477 + $0x50] sm:$0xff]
        %v656 = vld [vmem:[%s477 + $0x58] sm:$0xf]
        %v657 = vld [vmem:[%s477 + $0x60] sm:$0xff]
        %v658 = vld [vmem:[%s477 + $0x68] sm:$0xf]
        %v659 = vld [vmem:[%s477 + $0x70] sm:$0xff]
        %v660 = vld [vmem:[%s477 + $0x78] sm:$0xf]
        %v661 = vld [vmem:[%s477 + $0x80] sm:$0xff]
        %v662 = vld [vmem:[%s477 + $0x88] sm:$0xf]
        %v663 = vld [vmem:[%s477 + $0x90] sm:$0xff]
        %v664 = vld [vmem:[%s477 + $0x98] sm:$0xf]
        %v665 = vld [vmem:[%s477 + $0xa0] sm:$0xff]
        %v666 = vld [vmem:[%s477 + $0xa8] sm:$0xf]
        %v667 = vld [vmem:[%s477 + $0xb0] sm:$0xff]
        %v668 = vld [vmem:[%s477 + $0xb8] sm:$0xf]
        %vm669 = vcmask 31744
        %670 = vst.msk [vmem:[#allocation2] sm:$0xff] %vm669, %v645
        %vm671 = vcmask 27648
        %672 = vst.msk [vmem:[#allocation2 + $0x8] sm:$0xf] %vm671, %v646
        %673 = vst.msk [vmem:[#allocation2 + $0x10] sm:$0xff] %vm669, %v647
        %674 = vst.msk [vmem:[#allocation2 + $0x18] sm:$0xf] %vm671, %v648
        %675 = vst.msk [vmem:[#allocation2 + $0x20] sm:$0xff] %vm669, %v649
        %676 = vst.msk [vmem:[#allocation2 + $0x28] sm:$0xf] %vm671, %v650
        %677 = vst.msk [vmem:[#allocation2 + $0x30] sm:$0xff] %vm669, %v651
        %678 = vst.msk [vmem:[#allocation2 + $0x38] sm:$0xf] %vm671, %v652
        %679 = vst.msk [vmem:[#allocation2 + $0x40] sm:$0xff] %vm669, %v653
        %680 = vst.msk [vmem:[#allocation2 + $0x48] sm:$0xf] %vm671, %v654
        %681 = vst.msk [vmem:[#allocation2 + $0x50] sm:$0xff] %vm669, %v655
        %682 = vst.msk [vmem:[#allocation2 + $0x58] sm:$0xf] %vm671, %v656
        %683 = vst.msk [vmem:[#allocation2 + $0x60] sm:$0xff] %vm669, %v657
        %684 = vst.msk [vmem:[#allocation2 + $0x68] sm:$0xf] %vm671, %v658
        %685 = vst.msk [vmem:[#allocation2 + $0x70] sm:$0xff] %vm669, %v659
        %686 = vst.msk [vmem:[#allocation2 + $0x78] sm:$0xf] %vm671, %v660
        %687 = vst.msk [vmem:[#allocation2 + $0x80] sm:$0xff] %vm669, %v661
        %688 = vst.msk [vmem:[#allocation2 + $0x88] sm:$0xf] %vm671, %v662
        %689 = vst.msk [vmem:[#allocation2 + $0x90] sm:$0xff] %vm669, %v663
        %690 = vst.msk [vmem:[#allocation2 + $0x98] sm:$0xf] %vm671, %v664
        %691 = vst.msk [vmem:[#allocation2 + $0xa0] sm:$0xff] %vm669, %v665
        %692 = vst.msk [vmem:[#allocation2 + $0xa8] sm:$0xf] %vm671, %v666
        %693 = vst.msk [vmem:[#allocation2 + $0xb0] sm:$0xff] %vm669, %v667
        %694 = vst.msk [vmem:[#allocation2 + $0xb8] sm:$0xf] %vm671, %v668
        %v695 = vld [vmem:[%s477 + $0x1] sm:$0xff]
        %v696 = vld [vmem:[%s477 + $0x9] sm:$0xf]
        %v697 = vld [vmem:[%s477 + $0x11] sm:$0xff]
        %v698 = vld [vmem:[%s477 + $0x19] sm:$0xf]
        %v699 = vld [vmem:[%s477 + $0x21] sm:$0xff]
        %v700 = vld [vmem:[%s477 + $0x29] sm:$0xf]
        %v701 = vld [vmem:[%s477 + $0x31] sm:$0xff]
        %v702 = vld [vmem:[%s477 + $0x39] sm:$0xf]
        %v703 = vld [vmem:[%s477 + $0x41] sm:$0xff]
        %v704 = vld [vmem:[%s477 + $0x49] sm:$0xf]
        %v705 = vld [vmem:[%s477 + $0x51] sm:$0xff]
        %v706 = vld [vmem:[%s477 + $0x59] sm:$0xf]
        %v707 = vld [vmem:[%s477 + $0x61] sm:$0xff]
        %v708 = vld [vmem:[%s477 + $0x69] sm:$0xf]
        %v709 = vld [vmem:[%s477 + $0x71] sm:$0xff]
        %v710 = vld [vmem:[%s477 + $0x79] sm:$0xf]
        %v711 = vld [vmem:[%s477 + $0x81] sm:$0xff]
        %v712 = vld [vmem:[%s477 + $0x89] sm:$0xf]
        %v713 = vld [vmem:[%s477 + $0x91] sm:$0xff]
        %v714 = vld [vmem:[%s477 + $0x99] sm:$0xf]
        %v715 = vld [vmem:[%s477 + $0xa1] sm:$0xff]
        %v716 = vld [vmem:[%s477 + $0xa9] sm:$0xf]
        %v717 = vld [vmem:[%s477 + $0xb1] sm:$0xff]
        %v718 = vld [vmem:[%s477 + $0xb9] sm:$0xf]
        %743 = vrot.lane.b32.xlu0 %v695, 4
        %v744 = vpop.permute.xlu0 %743
        %745 = vrot.lane.b32.xlu0 %v696, 4
        %v746 = vpop.permute.xlu0 %745
        %747 = vrot.lane.b32.xlu0 %v697, 4
        %v748 = vpop.permute.xlu0 %747
        %749 = vrot.lane.b32.xlu0 %v698, 4
        %v750 = vpop.permute.xlu0 %749
        %751 = vrot.lane.b32.xlu0 %v699, 4
        %v752 = vpop.permute.xlu0 %751
        %753 = vrot.lane.b32.xlu0 %v700, 4
        %v754 = vpop.permute.xlu0 %753
        %755 = vrot.lane.b32.xlu0 %v701, 4
        %v756 = vpop.permute.xlu0 %755
        %757 = vrot.lane.b32.xlu0 %v702, 4
        %v758 = vpop.permute.xlu0 %757
        %759 = vrot.lane.b32.xlu0 %v703, 4
        %v760 = vpop.permute.xlu0 %759
        %761 = vrot.lane.b32.xlu0 %v704, 4
        %v762 = vpop.permute.xlu0 %761
        %763 = vrot.lane.b32.xlu0 %v705, 4
        %v764 = vpop.permute.xlu0 %763
        %765 = vrot.lane.b32.xlu0 %v706, 4
        %v766 = vpop.permute.xlu0 %765
        %767 = vrot.lane.b32.xlu0 %v707, 4
        %v768 = vpop.permute.xlu0 %767
        %769 = vrot.lane.b32.xlu0 %v708, 4
        %v770 = vpop.permute.xlu0 %769
        %771 = vrot.lane.b32.xlu0 %v709, 4
        %v772 = vpop.permute.xlu0 %771
        %773 = vrot.lane.b32.xlu0 %v710, 4
        %v774 = vpop.permute.xlu0 %773
        %775 = vrot.lane.b32.xlu0 %v711, 4
        %v776 = vpop.permute.xlu0 %775
        %777 = vrot.lane.b32.xlu0 %v712, 4
        %v778 = vpop.permute.xlu0 %777
        %779 = vrot.lane.b32.xlu0 %v713, 4
        %v780 = vpop.permute.xlu0 %779
        %781 = vrot.lane.b32.xlu0 %v714, 4
        %v782 = vpop.permute.xlu0 %781
        %783 = vrot.lane.b32.xlu0 %v715, 4
        %v784 = vpop.permute.xlu0 %783
        %785 = vrot.lane.b32.xlu0 %v716, 4
        %v786 = vpop.permute.xlu0 %785
        %787 = vrot.lane.b32.xlu0 %v717, 4
        %v788 = vpop.permute.xlu0 %787
        %789 = vrot.lane.b32.xlu0 %v718, 4
        %v790 = vpop.permute.xlu0 %789
        %vm815 = vcmask 64544
        %816 = vst.msk [vmem:[#allocation2] sm:$0xff] %vm815, %v744
        %vm817 = vcmask 60448
        %818 = vst.msk [vmem:[#allocation2 + $0x8] sm:$0xf] %vm817, %v746
        %819 = vst.msk [vmem:[#allocation2 + $0x10] sm:$0xff] %vm815, %v748
        %820 = vst.msk [vmem:[#allocation2 + $0x18] sm:$0xf] %vm817, %v750
        %821 = vst.msk [vmem:[#allocation2 + $0x20] sm:$0xff] %vm815, %v752
        %822 = vst.msk [vmem:[#allocation2 + $0x28] sm:$0xf] %vm817, %v754
        %823 = vst.msk [vmem:[#allocation2 + $0x30] sm:$0xff] %vm815, %v756
        %824 = vst.msk [vmem:[#allocation2 + $0x38] sm:$0xf] %vm817, %v758
        %825 = vst.msk [vmem:[#allocation2 + $0x40] sm:$0xff] %vm815, %v760
        %826 = vst.msk [vmem:[#allocation2 + $0x48] sm:$0xf] %vm817, %v762
        %827 = vst.msk [vmem:[#allocation2 + $0x50] sm:$0xff] %vm815, %v764
        %828 = vst.msk [vmem:[#allocation2 + $0x58] sm:$0xf] %vm817, %v766
        %829 = vst.msk [vmem:[#allocation2 + $0x60] sm:$0xff] %vm815, %v768
        %830 = vst.msk [vmem:[#allocation2 + $0x68] sm:$0xf] %vm817, %v770
        %831 = vst.msk [vmem:[#allocation2 + $0x70] sm:$0xff] %vm815, %v772
        %832 = vst.msk [vmem:[#allocation2 + $0x78] sm:$0xf] %vm817, %v774
        %833 = vst.msk [vmem:[#allocation2 + $0x80] sm:$0xff] %vm815, %v776
        %834 = vst.msk [vmem:[#allocation2 + $0x88] sm:$0xf] %vm817, %v778
        %835 = vst.msk [vmem:[#allocation2 + $0x90] sm:$0xff] %vm815, %v780
        %836 = vst.msk [vmem:[#allocation2 + $0x98] sm:$0xf] %vm817, %v782
        %837 = vst.msk [vmem:[#allocation2 + $0xa0] sm:$0xff] %vm815, %v784
        %838 = vst.msk [vmem:[#allocation2 + $0xa8] sm:$0xf] %vm817, %v786
        %839 = vst.msk [vmem:[#allocation2 + $0xb0] sm:$0xff] %vm815, %v788
        %840 = vst.msk [vmem:[#allocation2 + $0xb8] sm:$0xf] %vm817, %v790
        %v841 = vld [vmem:[%s477 + $0x2] sm:$0xff]
        %v842 = vld [vmem:[%s477 + $0xa] sm:$0xf]
        %v843 = vld [vmem:[%s477 + $0x12] sm:$0xff]
        %v844 = vld [vmem:[%s477 + $0x1a] sm:$0xf]
        %v845 = vld [vmem:[%s477 + $0x22] sm:$0xff]
        %v846 = vld [vmem:[%s477 + $0x2a] sm:$0xf]
        %v847 = vld [vmem:[%s477 + $0x32] sm:$0xff]
        %v848 = vld [vmem:[%s477 + $0x3a] sm:$0xf]
        %v849 = vld [vmem:[%s477 + $0x42] sm:$0xff]
        %v850 = vld [vmem:[%s477 + $0x4a] sm:$0xf]
        %v851 = vld [vmem:[%s477 + $0x52] sm:$0xff]
        %v852 = vld [vmem:[%s477 + $0x5a] sm:$0xf]
        %v853 = vld [vmem:[%s477 + $0x62] sm:$0xff]
        %v854 = vld [vmem:[%s477 + $0x6a] sm:$0xf]
        %v855 = vld [vmem:[%s477 + $0x72] sm:$0xff]
        %v856 = vld [vmem:[%s477 + $0x7a] sm:$0xf]
        %v857 = vld [vmem:[%s477 + $0x82] sm:$0xff]
        %v858 = vld [vmem:[%s477 + $0x8a] sm:$0xf]
        %v859 = vld [vmem:[%s477 + $0x92] sm:$0xff]
        %v860 = vld [vmem:[%s477 + $0x9a] sm:$0xf]
        %v861 = vld [vmem:[%s477 + $0xa2] sm:$0xff]
        %v862 = vld [vmem:[%s477 + $0xaa] sm:$0xf]
        %v863 = vld [vmem:[%s477 + $0xb2] sm:$0xff]
        %v864 = vld [vmem:[%s477 + $0xba] sm:$0xf]
        %889 = vrot.lane.b32.xlu0 %v841, 8
        %v890 = vpop.permute.xlu0 %889
        %891 = vrot.lane.b32.xlu0 %v842, 8
        %v892 = vpop.permute.xlu0 %891
        %893 = vrot.lane.b32.xlu0 %v843, 8
        %v894 = vpop.permute.xlu0 %893
        %895 = vrot.lane.b32.xlu0 %v844, 8
        %v896 = vpop.permute.xlu0 %895
        %897 = vrot.lane.b32.xlu0 %v845, 8
        %v898 = vpop.permute.xlu0 %897
        %899 = vrot.lane.b32.xlu0 %v846, 8
        %v900 = vpop.permute.xlu0 %899
        %901 = vrot.lane.b32.xlu0 %v847, 8
        %v902 = vpop.permute.xlu0 %901
        %903 = vrot.lane.b32.xlu0 %v848, 8
        %v904 = vpop.permute.xlu0 %903
        %905 = vrot.lane.b32.xlu0 %v849, 8
        %v906 = vpop.permute.xlu0 %905
        %907 = vrot.lane.b32.xlu0 %v850, 8
        %v908 = vpop.permute.xlu0 %907
        %909 = vrot.lane.b32.xlu0 %v851, 8
        %v910 = vpop.permute.xlu0 %909
        %911 = vrot.lane.b32.xlu0 %v852, 8
        %v912 = vpop.permute.xlu0 %911
        %913 = vrot.lane.b32.xlu0 %v853, 8
        %v914 = vpop.permute.xlu0 %913
        %915 = vrot.lane.b32.xlu0 %v854, 8
        %v916 = vpop.permute.xlu0 %915
        %917 = vrot.lane.b32.xlu0 %v855, 8
        %v918 = vpop.permute.xlu0 %917
        %919 = vrot.lane.b32.xlu0 %v856, 8
        %v920 = vpop.permute.xlu0 %919
        %921 = vrot.lane.b32.xlu0 %v857, 8
        %v922 = vpop.permute.xlu0 %921
        %923 = vrot.lane.b32.xlu0 %v858, 8
        %v924 = vpop.permute.xlu0 %923
        %925 = vrot.lane.b32.xlu0 %v859, 8
        %v926 = vpop.permute.xlu0 %925
        %927 = vrot.lane.b32.xlu0 %v860, 8
        %v928 = vpop.permute.xlu0 %927
        %929 = vrot.lane.b32.xlu0 %v861, 8
        %v930 = vpop.permute.xlu0 %929
        %931 = vrot.lane.b32.xlu0 %v862, 8
        %v932 = vpop.permute.xlu0 %931
        %933 = vrot.lane.b32.xlu0 %v863, 8
        %v934 = vpop.permute.xlu0 %933
        %935 = vrot.lane.b32.xlu0 %v864, 8
        %v936 = vpop.permute.xlu0 %935
        %vm961 = vcmask 97344
        %962 = vst.msk [vmem:[#allocation2] sm:$0xff] %vm961, %v890
        %vm963 = vcmask 93248
        %964 = vst.msk [vmem:[#allocation2 + $0x8] sm:$0xf] %vm963, %v892
        %965 = vst.msk [vmem:[#allocation2 + $0x10] sm:$0xff] %vm961, %v894
        %966 = vst.msk [vmem:[#allocation2 + $0x18] sm:$0xf] %vm963, %v896
        %967 = vst.msk [vmem:[#allocation2 + $0x20] sm:$0xff] %vm961, %v898
        %968 = vst.msk [vmem:[#allocation2 + $0x28] sm:$0xf] %vm963, %v900
        %969 = vst.msk [vmem:[#allocation2 + $0x30] sm:$0xff] %vm961, %v902
        %970 = vst.msk [vmem:[#allocation2 + $0x38] sm:$0xf] %vm963, %v904
        %971 = vst.msk [vmem:[#allocation2 + $0x40] sm:$0xff] %vm961, %v906
        %972 = vst.msk [vmem:[#allocation2 + $0x48] sm:$0xf] %vm963, %v908
        %973 = vst.msk [vmem:[#allocation2 + $0x50] sm:$0xff] %vm961, %v910
        %974 = vst.msk [vmem:[#allocation2 + $0x58] sm:$0xf] %vm963, %v912
        %975 = vst.msk [vmem:[#allocation2 + $0x60] sm:$0xff] %vm961, %v914
        %976 = vst.msk [vmem:[#allocation2 + $0x68] sm:$0xf] %vm963, %v916
        %977 = vst.msk [vmem:[#allocation2 + $0x70] sm:$0xff] %vm961, %v918
        %978 = vst.msk [vmem:[#allocation2 + $0x78] sm:$0xf] %vm963, %v920
        %979 = vst.msk [vmem:[#allocation2 + $0x80] sm:$0xff] %vm961, %v922
        %980 = vst.msk [vmem:[#allocation2 + $0x88] sm:$0xf] %vm963, %v924
        %981 = vst.msk [vmem:[#allocation2 + $0x90] sm:$0xff] %vm961, %v926
        %982 = vst.msk [vmem:[#allocation2 + $0x98] sm:$0xf] %vm963, %v928
        %983 = vst.msk [vmem:[#allocation2 + $0xa0] sm:$0xff] %vm961, %v930
        %984 = vst.msk [vmem:[#allocation2 + $0xa8] sm:$0xf] %vm963, %v932
        %985 = vst.msk [vmem:[#allocation2 + $0xb0] sm:$0xff] %vm961, %v934
        %986 = vst.msk [vmem:[#allocation2 + $0xb8] sm:$0xf] %vm963, %v936
        %v987 = vld [vmem:[%s477 + $0x3] sm:$0xff]
        %v988 = vld [vmem:[%s477 + $0xb] sm:$0xf]
        %v989 = vld [vmem:[%s477 + $0x13] sm:$0xff]
        %v990 = vld [vmem:[%s477 + $0x1b] sm:$0xf]
        %v991 = vld [vmem:[%s477 + $0x23] sm:$0xff]
        %v992 = vld [vmem:[%s477 + $0x2b] sm:$0xf]
        %v993 = vld [vmem:[%s477 + $0x33] sm:$0xff]
        %v994 = vld [vmem:[%s477 + $0x3b] sm:$0xf]
        %v995 = vld [vmem:[%s477 + $0x43] sm:$0xff]
        %v996 = vld [vmem:[%s477 + $0x4b] sm:$0xf]
        %v997 = vld [vmem:[%s477 + $0x53] sm:$0xff]
        %v998 = vld [vmem:[%s477 + $0x5b] sm:$0xf]
        %v999 = vld [vmem:[%s477 + $0x63] sm:$0xff]
        %v1000 = vld [vmem:[%s477 + $0x6b] sm:$0xf]
        %v1001 = vld [vmem:[%s477 + $0x73] sm:$0xff]
        %v1002 = vld [vmem:[%s477 + $0x7b] sm:$0xf]
        %v1003 = vld [vmem:[%s477 + $0x83] sm:$0xff]
        %v1004 = vld [vmem:[%s477 + $0x8b] sm:$0xf]
        %v1005 = vld [vmem:[%s477 + $0x93] sm:$0xff]
        %v1006 = vld [vmem:[%s477 + $0x9b] sm:$0xf]
        %v1007 = vld [vmem:[%s477 + $0xa3] sm:$0xff]
        %v1008 = vld [vmem:[%s477 + $0xab] sm:$0xf]
        %v1009 = vld [vmem:[%s477 + $0xb3] sm:$0xff]
        %v1010 = vld [vmem:[%s477 + $0xbb] sm:$0xf]
        %1035 = vrot.lane.b32.xlu0 %v987, 12
        %v1036 = vpop.permute.xlu0 %1035
        %1037 = vrot.lane.b32.xlu0 %v988, 12
        %v1038 = vpop.permute.xlu0 %1037
        %1039 = vrot.lane.b32.xlu0 %v989, 12
        %v1040 = vpop.permute.xlu0 %1039
        %1041 = vrot.lane.b32.xlu0 %v990, 12
        %v1042 = vpop.permute.xlu0 %1041
        %1043 = vrot.lane.b32.xlu0 %v991, 12
        %v1044 = vpop.permute.xlu0 %1043
        %1045 = vrot.lane.b32.xlu0 %v992, 12
        %v1046 = vpop.permute.xlu0 %1045
        %1047 = vrot.lane.b32.xlu0 %v993, 12
        %v1048 = vpop.permute.xlu0 %1047
        %1049 = vrot.lane.b32.xlu0 %v994, 12
        %v1050 = vpop.permute.xlu0 %1049
        %1051 = vrot.lane.b32.xlu0 %v995, 12
        %v1052 = vpop.permute.xlu0 %1051
        %1053 = vrot.lane.b32.xlu0 %v996, 12
        %v1054 = vpop.permute.xlu0 %1053
        %1055 = vrot.lane.b32.xlu0 %v997, 12
        %v1056 = vpop.permute.xlu0 %1055
        %1057 = vrot.lane.b32.xlu0 %v998, 12
        %v1058 = vpop.permute.xlu0 %1057
        %1059 = vrot.lane.b32.xlu0 %v999, 12
        %v1060 = vpop.permute.xlu0 %1059
        %1061 = vrot.lane.b32.xlu0 %v1000, 12
        %v1062 = vpop.permute.xlu0 %1061
        %1063 = vrot.lane.b32.xlu0 %v1001, 12
        %v1064 = vpop.permute.xlu0 %1063
        %1065 = vrot.lane.b32.xlu0 %v1002, 12
        %v1066 = vpop.permute.xlu0 %1065
        %1067 = vrot.lane.b32.xlu0 %v1003, 12
        %v1068 = vpop.permute.xlu0 %1067
        %1069 = vrot.lane.b32.xlu0 %v1004, 12
        %v1070 = vpop.permute.xlu0 %1069
        %1071 = vrot.lane.b32.xlu0 %v1005, 12
        %v1072 = vpop.permute.xlu0 %1071
        %1073 = vrot.lane.b32.xlu0 %v1006, 12
        %v1074 = vpop.permute.xlu0 %1073
        %1075 = vrot.lane.b32.xlu0 %v1007, 12
        %v1076 = vpop.permute.xlu0 %1075
        %1077 = vrot.lane.b32.xlu0 %v1008, 12
        %v1078 = vpop.permute.xlu0 %1077
        %1079 = vrot.lane.b32.xlu0 %v1009, 12
        %v1080 = vpop.permute.xlu0 %1079
        %1081 = vrot.lane.b32.xlu0 %v1010, 12
        %v1082 = vpop.permute.xlu0 %1081
        %vm1107 = vcmask 130144
        %1108 = vst.msk [vmem:[#allocation2] sm:$0xff] %vm1107, %v1036
        %vm1109 = vcmask 126048
        %1110 = vst.msk [vmem:[#allocation2 + $0x8] sm:$0xf] %vm1109, %v1038
        %1111 = vst.msk [vmem:[#allocation2 + $0x10] sm:$0xff] %vm1107, %v1040
        %1112 = vst.msk [vmem:[#allocation2 + $0x18] sm:$0xf] %vm1109, %v1042
        %1113 = vst.msk [vmem:[#allocation2 + $0x20] sm:$0xff] %vm1107, %v1044
        %1114 = vst.msk [vmem:[#allocation2 + $0x28] sm:$0xf] %vm1109, %v1046
        %1115 = vst.msk [vmem:[#allocation2 + $0x30] sm:$0xff] %vm1107, %v1048
        %1116 = vst.msk [vmem:[#allocation2 + $0x38] sm:$0xf] %vm1109, %v1050
        %1117 = vst.msk [vmem:[#allocation2 + $0x40] sm:$0xff] %vm1107, %v1052
        %1118 = vst.msk [vmem:[#allocation2 + $0x48] sm:$0xf] %vm1109, %v1054
        %1119 = vst.msk [vmem:[#allocation2 + $0x50] sm:$0xff] %vm1107, %v1056
        %1120 = vst.msk [vmem:[#allocation2 + $0x58] sm:$0xf] %vm1109, %v1058
        %1121 = vst.msk [vmem:[#allocation2 + $0x60] sm:$0xff] %vm1107, %v1060
        %1122 = vst.msk [vmem:[#allocation2 + $0x68] sm:$0xf] %vm1109, %v1062
        %1123 = vst.msk [vmem:[#allocation2 + $0x70] sm:$0xff] %vm1107, %v1064
        %1124 = vst.msk [vmem:[#allocation2 + $0x78] sm:$0xf] %vm1109, %v1066
        %1125 = vst.msk [vmem:[#allocation2 + $0x80] sm:$0xff] %vm1107, %v1068
        %1126 = vst.msk [vmem:[#allocation2 + $0x88] sm:$0xf] %vm1109, %v1070
        %1127 = vst.msk [vmem:[#allocation2 + $0x90] sm:$0xff] %vm1107, %v1072
        %1128 = vst.msk [vmem:[#allocation2 + $0x98] sm:$0xf] %vm1109, %v1074
        %1129 = vst.msk [vmem:[#allocation2 + $0xa0] sm:$0xff] %vm1107, %v1076
        %1130 = vst.msk [vmem:[#allocation2 + $0xa8] sm:$0xf] %vm1109, %v1078
        %1131 = vst.msk [vmem:[#allocation2 + $0xb0] sm:$0xff] %vm1107, %v1080
        %1132 = vst.msk [vmem:[#allocation2 + $0xb8] sm:$0xf] %vm1109, %v1082
        %v1133 = vld [vmem:[%s477 + $0x4] sm:$0xff]
        %v1134 = vld [vmem:[%s477 + $0xc] sm:$0xf]
        %v1135 = vld [vmem:[%s477 + $0x14] sm:$0xff]
        %v1136 = vld [vmem:[%s477 + $0x1c] sm:$0xf]
        %v1137 = vld [vmem:[%s477 + $0x24] sm:$0xff]
        %v1138 = vld [vmem:[%s477 + $0x2c] sm:$0xf]
        %v1139 = vld [vmem:[%s477 + $0x34] sm:$0xff]
        %v1140 = vld [vmem:[%s477 + $0x3c] sm:$0xf]
        %v1141 = vld [vmem:[%s477 + $0x44] sm:$0xff]
        %v1142 = vld [vmem:[%s477 + $0x4c] sm:$0xf]
        %v1143 = vld [vmem:[%s477 + $0x54] sm:$0xff]
        %v1144 = vld [vmem:[%s477 + $0x5c] sm:$0xf]
        %v1145 = vld [vmem:[%s477 + $0x64] sm:$0xff]
        %v1146 = vld [vmem:[%s477 + $0x6c] sm:$0xf]
        %v1147 = vld [vmem:[%s477 + $0x74] sm:$0xff]
        %v1148 = vld [vmem:[%s477 + $0x7c] sm:$0xf]
        %v1149 = vld [vmem:[%s477 + $0x84] sm:$0xff]
        %v1150 = vld [vmem:[%s477 + $0x8c] sm:$0xf]
        %v1151 = vld [vmem:[%s477 + $0x94] sm:$0xff]
        %v1152 = vld [vmem:[%s477 + $0x9c] sm:$0xf]
        %v1153 = vld [vmem:[%s477 + $0xa4] sm:$0xff]
        %v1154 = vld [vmem:[%s477 + $0xac] sm:$0xf]
        %v1155 = vld [vmem:[%s477 + $0xb4] sm:$0xff]
        %v1156 = vld [vmem:[%s477 + $0xbc] sm:$0xf]
        %1181 = vrot.lane.b32.xlu0 %v1133, 16
        %v1182 = vpop.permute.xlu0 %1181
        %1183 = vrot.lane.b32.xlu0 %v1134, 16
        %v1184 = vpop.permute.xlu0 %1183
        %1185 = vrot.lane.b32.xlu0 %v1135, 16
        %v1186 = vpop.permute.xlu0 %1185
        %1187 = vrot.lane.b32.xlu0 %v1136, 16
        %v1188 = vpop.permute.xlu0 %1187
        %1189 = vrot.lane.b32.xlu0 %v1137, 16
        %v1190 = vpop.permute.xlu0 %1189
        %1191 = vrot.lane.b32.xlu0 %v1138, 16
        %v1192 = vpop.permute.xlu0 %1191
        %1193 = vrot.lane.b32.xlu0 %v1139, 16
        %v1194 = vpop.permute.xlu0 %1193
        %1195 = vrot.lane.b32.xlu0 %v1140, 16
        %v1196 = vpop.permute.xlu0 %1195
        %1197 = vrot.lane.b32.xlu0 %v1141, 16
        %v1198 = vpop.permute.xlu0 %1197
        %1199 = vrot.lane.b32.xlu0 %v1142, 16
        %v1200 = vpop.permute.xlu0 %1199
        %1201 = vrot.lane.b32.xlu0 %v1143, 16
        %v1202 = vpop.permute.xlu0 %1201
        %1203 = vrot.lane.b32.xlu0 %v1144, 16
        %v1204 = vpop.permute.xlu0 %1203
        %1205 = vrot.lane.b32.xlu0 %v1145, 16
        %v1206 = vpop.permute.xlu0 %1205
        %1207 = vrot.lane.b32.xlu0 %v1146, 16
        %v1208 = vpop.permute.xlu0 %1207
        %1209 = vrot.lane.b32.xlu0 %v1147, 16
        %v1210 = vpop.permute.xlu0 %1209
        %1211 = vrot.lane.b32.xlu0 %v1148, 16
        %v1212 = vpop.permute.xlu0 %1211
        %1213 = vrot.lane.b32.xlu0 %v1149, 16
        %v1214 = vpop.permute.xlu0 %1213
        %1215 = vrot.lane.b32.xlu0 %v1150, 16
        %v1216 = vpop.permute.xlu0 %1215
        %1217 = vrot.lane.b32.xlu0 %v1151, 16
        %v1218 = vpop.permute.xlu0 %1217
        %1219 = vrot.lane.b32.xlu0 %v1152, 16
        %v1220 = vpop.permute.xlu0 %1219
        %1221 = vrot.lane.b32.xlu0 %v1153, 16
        %v1222 = vpop.permute.xlu0 %1221
        %1223 = vrot.lane.b32.xlu0 %v1154, 16
        %v1224 = vpop.permute.xlu0 %1223
        %1225 = vrot.lane.b32.xlu0 %v1155, 16
        %v1226 = vpop.permute.xlu0 %1225
        %1227 = vrot.lane.b32.xlu0 %v1156, 16
        %v1228 = vpop.permute.xlu0 %1227
        %vm1253 = vcmask 162944
        %1254 = vst.msk [vmem:[#allocation2] sm:$0xff] %vm1253, %v1182
        %vm1255 = vcmask 158848
        %1256 = vst.msk [vmem:[#allocation2 + $0x8] sm:$0xf] %vm1255, %v1184
        %1257 = vst.msk [vmem:[#allocation2 + $0x10] sm:$0xff] %vm1253, %v1186
        %1258 = vst.msk [vmem:[#allocation2 + $0x18] sm:$0xf] %vm1255, %v1188
        %1259 = vst.msk [vmem:[#allocation2 + $0x20] sm:$0xff] %vm1253, %v1190
        %1260 = vst.msk [vmem:[#allocation2 + $0x28] sm:$0xf] %vm1255, %v1192
        %1261 = vst.msk [vmem:[#allocation2 + $0x30] sm:$0xff] %vm1253, %v1194
        %1262 = vst.msk [vmem:[#allocation2 + $0x38] sm:$0xf] %vm1255, %v1196
        %1263 = vst.msk [vmem:[#allocation2 + $0x40] sm:$0xff] %vm1253, %v1198
        %1264 = vst.msk [vmem:[#allocation2 + $0x48] sm:$0xf] %vm1255, %v1200
        %1265 = vst.msk [vmem:[#allocation2 + $0x50] sm:$0xff] %vm1253, %v1202
        %1266 = vst.msk [vmem:[#allocation2 + $0x58] sm:$0xf] %vm1255, %v1204
        %1267 = vst.msk [vmem:[#allocation2 + $0x60] sm:$0xff] %vm1253, %v1206
        %1268 = vst.msk [vmem:[#allocation2 + $0x68] sm:$0xf] %vm1255, %v1208
        %1269 = vst.msk [vmem:[#allocation2 + $0x70] sm:$0xff] %vm1253, %v1210
        %1270 = vst.msk [vmem:[#allocation2 + $0x78] sm:$0xf] %vm1255, %v1212
        %1271 = vst.msk [vmem:[#allocation2 + $0x80] sm:$0xff] %vm1253, %v1214
        %1272 = vst.msk [vmem:[#allocation2 + $0x88] sm:$0xf] %vm1255, %v1216
        %1273 = vst.msk [vmem:[#allocation2 + $0x90] sm:$0xff] %vm1253, %v1218
        %1274 = vst.msk [vmem:[#allocation2 + $0x98] sm:$0xf] %vm1255, %v1220
        %1275 = vst.msk [vmem:[#allocation2 + $0xa0] sm:$0xff] %vm1253, %v1222
        %1276 = vst.msk [vmem:[#allocation2 + $0xa8] sm:$0xf] %vm1255, %v1224
        %1277 = vst.msk [vmem:[#allocation2 + $0xb0] sm:$0xff] %vm1253, %v1226
        %1278 = vst.msk [vmem:[#allocation2 + $0xb8] sm:$0xf] %vm1255, %v1228
        %s1279 = scalar_lea.vmem %s477, 16
        %v1280 = vld [vmem:[%s1279] sm:$0xff]
        %v1281 = vld [vmem:[%s1279 + $0x8] sm:$0xf]
        %v1282 = vld [vmem:[%s1279 + $0x10] sm:$0xff]
        %v1283 = vld [vmem:[%s1279 + $0x18] sm:$0xf]
        %v1284 = vld [vmem:[%s1279 + $0x20] sm:$0xff]
        %v1285 = vld [vmem:[%s1279 + $0x28] sm:$0xf]
        %v1286 = vld [vmem:[%s1279 + $0x30] sm:$0xff]
        %v1287 = vld [vmem:[%s1279 + $0x38] sm:$0xf]
        %v1288 = vld [vmem:[%s1279 + $0x40] sm:$0xff]
        %v1289 = vld [vmem:[%s1279 + $0x48] sm:$0xf]
        %v1290 = vld [vmem:[%s1279 + $0x50] sm:$0xff]
        %v1291 = vld [vmem:[%s1279 + $0x58] sm:$0xf]
        %v1292 = vld [vmem:[%s1279 + $0x60] sm:$0xff]
        %v1293 = vld [vmem:[%s1279 + $0x68] sm:$0xf]
        %v1294 = vld [vmem:[%s1279 + $0x70] sm:$0xff]
        %v1295 = vld [vmem:[%s1279 + $0x78] sm:$0xf]
        %v1296 = vld [vmem:[%s1279 + $0x80] sm:$0xff]
        %v1297 = vld [vmem:[%s1279 + $0x88] sm:$0xf]
        %v1298 = vld [vmem:[%s1279 + $0x90] sm:$0xff]
        %v1299 = vld [vmem:[%s1279 + $0x98] sm:$0xf]
        %v1300 = vld [vmem:[%s1279 + $0xa0] sm:$0xff]
        %v1301 = vld [vmem:[%s1279 + $0xa8] sm:$0xf]
        %v1302 = vld [vmem:[%s1279 + $0xb0] sm:$0xff]
        %v1303 = vld [vmem:[%s1279 + $0xb8] sm:$0xf]
        %1328 = vrot.lane.b32.xlu0 %v1280, 20
        %v1329 = vpop.permute.xlu0 %1328
        %1330 = vrot.lane.b32.xlu0 %v1281, 20
        %v1331 = vpop.permute.xlu0 %1330
        %1332 = vrot.lane.b32.xlu0 %v1282, 20
        %v1333 = vpop.permute.xlu0 %1332
        %1334 = vrot.lane.b32.xlu0 %v1283, 20
        %v1335 = vpop.permute.xlu0 %1334
        %1336 = vrot.lane.b32.xlu0 %v1284, 20
        %v1337 = vpop.permute.xlu0 %1336
        %1338 = vrot.lane.b32.xlu0 %v1285, 20
        %v1339 = vpop.permute.xlu0 %1338
        %1340 = vrot.lane.b32.xlu0 %v1286, 20
        %v1341 = vpop.permute.xlu0 %1340
        %1342 = vrot.lane.b32.xlu0 %v1287, 20
        %v1343 = vpop.permute.xlu0 %1342
        %1344 = vrot.lane.b32.xlu0 %v1288, 20
        %v1345 = vpop.permute.xlu0 %1344
        %1346 = vrot.lane.b32.xlu0 %v1289, 20
        %v1347 = vpop.permute.xlu0 %1346
        %1348 = vrot.lane.b32.xlu0 %v1290, 20
        %v1349 = vpop.permute.xlu0 %1348
        %1350 = vrot.lane.b32.xlu0 %v1291, 20
        %v1351 = vpop.permute.xlu0 %1350
        %1352 = vrot.lane.b32.xlu0 %v1292, 20
        %v1353 = vpop.permute.xlu0 %1352
        %1354 = vrot.lane.b32.xlu0 %v1293, 20
        %v1355 = vpop.permute.xlu0 %1354
        %1356 = vrot.lane.b32.xlu0 %v1294, 20
        %v1357 = vpop.permute.xlu0 %1356
        %1358 = vrot.lane.b32.xlu0 %v1295, 20
        %v1359 = vpop.permute.xlu0 %1358
        %1360 = vrot.lane.b32.xlu0 %v1296, 20
        %v1361 = vpop.permute.xlu0 %1360
        %1362 = vrot.lane.b32.xlu0 %v1297, 20
        %v1363 = vpop.permute.xlu0 %1362
        %1364 = vrot.lane.b32.xlu0 %v1298, 20
        %v1365 = vpop.permute.xlu0 %1364
        %1366 = vrot.lane.b32.xlu0 %v1299, 20
        %v1367 = vpop.permute.xlu0 %1366
        %1368 = vrot.lane.b32.xlu0 %v1300, 20
        %v1369 = vpop.permute.xlu0 %1368
        %1370 = vrot.lane.b32.xlu0 %v1301, 20
        %v1371 = vpop.permute.xlu0 %1370
        %1372 = vrot.lane.b32.xlu0 %v1302, 20
        %v1373 = vpop.permute.xlu0 %1372
        %1374 = vrot.lane.b32.xlu0 %v1303, 20
        %v1375 = vpop.permute.xlu0 %1374
        %vm1400 = vcmask 195744
        %1401 = vst.msk [vmem:[#allocation2] sm:$0xff] %vm1400, %v1329
        %vm1402 = vcmask 191648
        %1403 = vst.msk [vmem:[#allocation2 + $0x8] sm:$0xf] %vm1402, %v1331
        %1404 = vst.msk [vmem:[#allocation2 + $0x10] sm:$0xff] %vm1400, %v1333
        %1405 = vst.msk [vmem:[#allocation2 + $0x18] sm:$0xf] %vm1402, %v1335
        %1406 = vst.msk [vmem:[#allocation2 + $0x20] sm:$0xff] %vm1400, %v1337
        %1407 = vst.msk [vmem:[#allocation2 + $0x28] sm:$0xf] %vm1402, %v1339
        %1408 = vst.msk [vmem:[#allocation2 + $0x30] sm:$0xff] %vm1400, %v1341
        %1409 = vst.msk [vmem:[#allocation2 + $0x38] sm:$0xf] %vm1402, %v1343
        %1410 = vst.msk [vmem:[#allocation2 + $0x40] sm:$0xff] %vm1400, %v1345
        %1411 = vst.msk [vmem:[#allocation2 + $0x48] sm:$0xf] %vm1402, %v1347
        %1412 = vst.msk [vmem:[#allocation2 + $0x50] sm:$0xff] %vm1400, %v1349
        %1413 = vst.msk [vmem:[#allocation2 + $0x58] sm:$0xf] %vm1402, %v1351
        %1414 = vst.msk [vmem:[#allocation2 + $0x60] sm:$0xff] %vm1400, %v1353
        %1415 = vst.msk [vmem:[#allocation2 + $0x68] sm:$0xf] %vm1402, %v1355
        %1416 = vst.msk [vmem:[#allocation2 + $0x70] sm:$0xff] %vm1400, %v1357
        %1417 = vst.msk [vmem:[#allocation2 + $0x78] sm:$0xf] %vm1402, %v1359
        %1418 = vst.msk [vmem:[#allocation2 + $0x80] sm:$0xff] %vm1400, %v1361
        %1419 = vst.msk [vmem:[#allocation2 + $0x88] sm:$0xf] %vm1402, %v1363
        %1420 = vst.msk [vmem:[#allocation2 + $0x90] sm:$0xff] %vm1400, %v1365
        %1421 = vst.msk [vmem:[#allocation2 + $0x98] sm:$0xf] %vm1402, %v1367
        %1422 = vst.msk [vmem:[#allocation2 + $0xa0] sm:$0xff] %vm1400, %v1369
        %1423 = vst.msk [vmem:[#allocation2 + $0xa8] sm:$0xf] %vm1402, %v1371
        %1424 = vst.msk [vmem:[#allocation2 + $0xb0] sm:$0xff] %vm1400, %v1373
        %1425 = vst.msk [vmem:[#allocation2 + $0xb8] sm:$0xf] %vm1402, %v1375
        %v1426 = vld [vmem:[%s1279 + $0x1] sm:$0xff]
        %v1427 = vld [vmem:[%s1279 + $0x9] sm:$0xf]
        %v1428 = vld [vmem:[%s1279 + $0x11] sm:$0xff]
        %v1429 = vld [vmem:[%s1279 + $0x19] sm:$0xf]
        %v1430 = vld [vmem:[%s1279 + $0x21] sm:$0xff]
        %v1431 = vld [vmem:[%s1279 + $0x29] sm:$0xf]
        %v1432 = vld [vmem:[%s1279 + $0x31] sm:$0xff]
        %v1433 = vld [vmem:[%s1279 + $0x39] sm:$0xf]
        %v1434 = vld [vmem:[%s1279 + $0x41] sm:$0xff]
        %v1435 = vld [vmem:[%s1279 + $0x49] sm:$0xf]
        %v1436 = vld [vmem:[%s1279 + $0x51] sm:$0xff]
        %v1437 = vld [vmem:[%s1279 + $0x59] sm:$0xf]
        %v1438 = vld [vmem:[%s1279 + $0x61] sm:$0xff]
        %v1439 = vld [vmem:[%s1279 + $0x69] sm:$0xf]
        %v1440 = vld [vmem:[%s1279 + $0x71] sm:$0xff]
        %v1441 = vld [vmem:[%s1279 + $0x79] sm:$0xf]
        %v1442 = vld [vmem:[%s1279 + $0x81] sm:$0xff]
        %v1443 = vld [vmem:[%s1279 + $0x89] sm:$0xf]
        %v1444 = vld [vmem:[%s1279 + $0x91] sm:$0xff]
        %v1445 = vld [vmem:[%s1279 + $0x99] sm:$0xf]
        %v1446 = vld [vmem:[%s1279 + $0xa1] sm:$0xff]
        %v1447 = vld [vmem:[%s1279 + $0xa9] sm:$0xf]
        %v1448 = vld [vmem:[%s1279 + $0xb1] sm:$0xff]
        %v1449 = vld [vmem:[%s1279 + $0xb9] sm:$0xf]
        %1474 = vrot.lane.b32.xlu0 %v1426, 24
        %v1475 = vpop.permute.xlu0 %1474
        %1476 = vrot.lane.b32.xlu0 %v1427, 24
        %v1477 = vpop.permute.xlu0 %1476
        %1478 = vrot.lane.b32.xlu0 %v1428, 24
        %v1479 = vpop.permute.xlu0 %1478
        %1480 = vrot.lane.b32.xlu0 %v1429, 24
        %v1481 = vpop.permute.xlu0 %1480
        %1482 = vrot.lane.b32.xlu0 %v1430, 24
        %v1483 = vpop.permute.xlu0 %1482
        %1484 = vrot.lane.b32.xlu0 %v1431, 24
        %v1485 = vpop.permute.xlu0 %1484
        %1486 = vrot.lane.b32.xlu0 %v1432, 24
        %v1487 = vpop.permute.xlu0 %1486
        %1488 = vrot.lane.b32.xlu0 %v1433, 24
        %v1489 = vpop.permute.xlu0 %1488
        %1490 = vrot.lane.b32.xlu0 %v1434, 24
        %v1491 = vpop.permute.xlu0 %1490
        %1492 = vrot.lane.b32.xlu0 %v1435, 24
        %v1493 = vpop.permute.xlu0 %1492
        %1494 = vrot.lane.b32.xlu0 %v1436, 24
        %v1495 = vpop.permute.xlu0 %1494
        %1496 = vrot.lane.b32.xlu0 %v1437, 24
        %v1497 = vpop.permute.xlu0 %1496
        %1498 = vrot.lane.b32.xlu0 %v1438, 24
        %v1499 = vpop.permute.xlu0 %1498
        %1500 = vrot.lane.b32.xlu0 %v1439, 24
        %v1501 = vpop.permute.xlu0 %1500
        %1502 = vrot.lane.b32.xlu0 %v1440, 24
        %v1503 = vpop.permute.xlu0 %1502
        %1504 = vrot.lane.b32.xlu0 %v1441, 24
        %v1505 = vpop.permute.xlu0 %1504
        %1506 = vrot.lane.b32.xlu0 %v1442, 24
        %v1507 = vpop.permute.xlu0 %1506
        %1508 = vrot.lane.b32.xlu0 %v1443, 24
        %v1509 = vpop.permute.xlu0 %1508
        %1510 = vrot.lane.b32.xlu0 %v1444, 24
        %v1511 = vpop.permute.xlu0 %1510
        %1512 = vrot.lane.b32.xlu0 %v1445, 24
        %v1513 = vpop.permute.xlu0 %1512
        %1514 = vrot.lane.b32.xlu0 %v1446, 24
        %v1515 = vpop.permute.xlu0 %1514
        %1516 = vrot.lane.b32.xlu0 %v1447, 24
        %v1517 = vpop.permute.xlu0 %1516
        %1518 = vrot.lane.b32.xlu0 %v1448, 24
        %v1519 = vpop.permute.xlu0 %1518
        %1520 = vrot.lane.b32.xlu0 %v1449, 24
        %v1521 = vpop.permute.xlu0 %1520
        %vm1546 = vcmask 228544
        %1547 = vst.msk [vmem:[#allocation2] sm:$0xff] %vm1546, %v1475
        %vm1548 = vcmask 224448
        %1549 = vst.msk [vmem:[#allocation2 + $0x8] sm:$0xf] %vm1548, %v1477
        %1550 = vst.msk [vmem:[#allocation2 + $0x10] sm:$0xff] %vm1546, %v1479
        %1551 = vst.msk [vmem:[#allocation2 + $0x18] sm:$0xf] %vm1548, %v1481
        %1552 = vst.msk [vmem:[#allocation2 + $0x20] sm:$0xff] %vm1546, %v1483
        %1553 = vst.msk [vmem:[#allocation2 + $0x28] sm:$0xf] %vm1548, %v1485
        %1554 = vst.msk [vmem:[#allocation2 + $0x30] sm:$0xff] %vm1546, %v1487
        %1555 = vst.msk [vmem:[#allocation2 + $0x38] sm:$0xf] %vm1548, %v1489
        %1556 = vst.msk [vmem:[#allocation2 + $0x40] sm:$0xff] %vm1546, %v1491
        %1557 = vst.msk [vmem:[#allocation2 + $0x48] sm:$0xf] %vm1548, %v1493
        %1558 = vst.msk [vmem:[#allocation2 + $0x50] sm:$0xff] %vm1546, %v1495
        %1559 = vst.msk [vmem:[#allocation2 + $0x58] sm:$0xf] %vm1548, %v1497
        %1560 = vst.msk [vmem:[#allocation2 + $0x60] sm:$0xff] %vm1546, %v1499
        %1561 = vst.msk [vmem:[#allocation2 + $0x68] sm:$0xf] %vm1548, %v1501
        %1562 = vst.msk [vmem:[#allocation2 + $0x70] sm:$0xff] %vm1546, %v1503
        %1563 = vst.msk [vmem:[#allocation2 + $0x78] sm:$0xf] %vm1548, %v1505
        %1564 = vst.msk [vmem:[#allocation2 + $0x80] sm:$0xff] %vm1546, %v1507
        %1565 = vst.msk [vmem:[#allocation2 + $0x88] sm:$0xf] %vm1548, %v1509
        %1566 = vst.msk [vmem:[#allocation2 + $0x90] sm:$0xff] %vm1546, %v1511
        %1567 = vst.msk [vmem:[#allocation2 + $0x98] sm:$0xf] %vm1548, %v1513
        %1568 = vst.msk [vmem:[#allocation2 + $0xa0] sm:$0xff] %vm1546, %v1515
        %1569 = vst.msk [vmem:[#allocation2 + $0xa8] sm:$0xf] %vm1548, %v1517
        %1570 = vst.msk [vmem:[#allocation2 + $0xb0] sm:$0xff] %vm1546, %v1519
        %1571 = vst.msk [vmem:[#allocation2 + $0xb8] sm:$0xf] %vm1548, %v1521
        %v1572 = vld [vmem:[%s1279 + $0x2] sm:$0xff]
        %v1573 = vld [vmem:[%s1279 + $0xa] sm:$0xf]
        %v1574 = vld [vmem:[%s1279 + $0x12] sm:$0xff]
        %v1575 = vld [vmem:[%s1279 + $0x1a] sm:$0xf]
        %v1576 = vld [vmem:[%s1279 + $0x22] sm:$0xff]
        %v1577 = vld [vmem:[%s1279 + $0x2a] sm:$0xf]
        %v1578 = vld [vmem:[%s1279 + $0x32] sm:$0xff]
        %v1579 = vld [vmem:[%s1279 + $0x3a] sm:$0xf]
        %v1580 = vld [vmem:[%s1279 + $0x42] sm:$0xff]
        %v1581 = vld [vmem:[%s1279 + $0x4a] sm:$0xf]
        %v1582 = vld [vmem:[%s1279 + $0x52] sm:$0xff]
        %v1583 = vld [vmem:[%s1279 + $0x5a] sm:$0xf]
        %v1584 = vld [vmem:[%s1279 + $0x62] sm:$0xff]
        %v1585 = vld [vmem:[%s1279 + $0x6a] sm:$0xf]
        %v1586 = vld [vmem:[%s1279 + $0x72] sm:$0xff]
        %v1587 = vld [vmem:[%s1279 + $0x7a] sm:$0xf]
        %v1588 = vld [vmem:[%s1279 + $0x82] sm:$0xff]
        %v1589 = vld [vmem:[%s1279 + $0x8a] sm:$0xf]
        %v1590 = vld [vmem:[%s1279 + $0x92] sm:$0xff]
        %v1591 = vld [vmem:[%s1279 + $0x9a] sm:$0xf]
        %v1592 = vld [vmem:[%s1279 + $0xa2] sm:$0xff]
        %v1593 = vld [vmem:[%s1279 + $0xaa] sm:$0xf]
        %v1594 = vld [vmem:[%s1279 + $0xb2] sm:$0xff]
        %v1595 = vld [vmem:[%s1279 + $0xba] sm:$0xf]
        %1620 = vrot.lane.b32.xlu0 %v1572, 28
        %v1621 = vpop.permute.xlu0 %1620
        %1622 = vrot.lane.b32.xlu0 %v1573, 28
        %v1623 = vpop.permute.xlu0 %1622
        %1624 = vrot.lane.b32.xlu0 %v1574, 28
        %v1625 = vpop.permute.xlu0 %1624
        %1626 = vrot.lane.b32.xlu0 %v1575, 28
        %v1627 = vpop.permute.xlu0 %1626
        %1628 = vrot.lane.b32.xlu0 %v1576, 28
        %v1629 = vpop.permute.xlu0 %1628
        %1630 = vrot.lane.b32.xlu0 %v1577, 28
        %v1631 = vpop.permute.xlu0 %1630
        %1632 = vrot.lane.b32.xlu0 %v1578, 28
        %v1633 = vpop.permute.xlu0 %1632
        %1634 = vrot.lane.b32.xlu0 %v1579, 28
        %v1635 = vpop.permute.xlu0 %1634
        %1636 = vrot.lane.b32.xlu0 %v1580, 28
        %v1637 = vpop.permute.xlu0 %1636
        %1638 = vrot.lane.b32.xlu0 %v1581, 28
        %v1639 = vpop.permute.xlu0 %1638
        %1640 = vrot.lane.b32.xlu0 %v1582, 28
        %v1641 = vpop.permute.xlu0 %1640
        %1642 = vrot.lane.b32.xlu0 %v1583, 28
        %v1643 = vpop.permute.xlu0 %1642
        %1644 = vrot.lane.b32.xlu0 %v1584, 28
        %v1645 = vpop.permute.xlu0 %1644
        %1646 = vrot.lane.b32.xlu0 %v1585, 28
        %v1647 = vpop.permute.xlu0 %1646
        %1648 = vrot.lane.b32.xlu0 %v1586, 28
        %v1649 = vpop.permute.xlu0 %1648
        %1650 = vrot.lane.b32.xlu0 %v1587, 28
        %v1651 = vpop.permute.xlu0 %1650
        %1652 = vrot.lane.b32.xlu0 %v1588, 28
        %v1653 = vpop.permute.xlu0 %1652
        %1654 = vrot.lane.b32.xlu0 %v1589, 28
        %v1655 = vpop.permute.xlu0 %1654
        %1656 = vrot.lane.b32.xlu0 %v1590, 28
        %v1657 = vpop.permute.xlu0 %1656
        %1658 = vrot.lane.b32.xlu0 %v1591, 28
        %v1659 = vpop.permute.xlu0 %1658
        %1660 = vrot.lane.b32.xlu0 %v1592, 28
        %v1661 = vpop.permute.xlu0 %1660
        %1662 = vrot.lane.b32.xlu0 %v1593, 28
        %v1663 = vpop.permute.xlu0 %1662
        %1664 = vrot.lane.b32.xlu0 %v1594, 28
        %v1665 = vpop.permute.xlu0 %1664
        %1666 = vrot.lane.b32.xlu0 %v1595, 28
        %v1667 = vpop.permute.xlu0 %1666
        %vm1692 = vcmask 261344
        %1693 = vst.msk [vmem:[#allocation2] sm:$0xff] %vm1692, %v1621
        %vm1694 = vcmask 257248
        %1695 = vst.msk [vmem:[#allocation2 + $0x8] sm:$0xf] %vm1694, %v1623
        %1696 = vst.msk [vmem:[#allocation2 + $0x10] sm:$0xff] %vm1692, %v1625
        %1697 = vst.msk [vmem:[#allocation2 + $0x18] sm:$0xf] %vm1694, %v1627
        %1698 = vst.msk [vmem:[#allocation2 + $0x20] sm:$0xff] %vm1692, %v1629
        %1699 = vst.msk [vmem:[#allocation2 + $0x28] sm:$0xf] %vm1694, %v1631
        %1700 = vst.msk [vmem:[#allocation2 + $0x30] sm:$0xff] %vm1692, %v1633
        %1701 = vst.msk [vmem:[#allocation2 + $0x38] sm:$0xf] %vm1694, %v1635
        %1702 = vst.msk [vmem:[#allocation2 + $0x40] sm:$0xff] %vm1692, %v1637
        %1703 = vst.msk [vmem:[#allocation2 + $0x48] sm:$0xf] %vm1694, %v1639
        %1704 = vst.msk [vmem:[#allocation2 + $0x50] sm:$0xff] %vm1692, %v1641
        %1705 = vst.msk [vmem:[#allocation2 + $0x58] sm:$0xf] %vm1694, %v1643
        %1706 = vst.msk [vmem:[#allocation2 + $0x60] sm:$0xff] %vm1692, %v1645
        %1707 = vst.msk [vmem:[#allocation2 + $0x68] sm:$0xf] %vm1694, %v1647
        %1708 = vst.msk [vmem:[#allocation2 + $0x70] sm:$0xff] %vm1692, %v1649
        %1709 = vst.msk [vmem:[#allocation2 + $0x78] sm:$0xf] %vm1694, %v1651
        %1710 = vst.msk [vmem:[#allocation2 + $0x80] sm:$0xff] %vm1692, %v1653
        %1711 = vst.msk [vmem:[#allocation2 + $0x88] sm:$0xf] %vm1694, %v1655
        %1712 = vst.msk [vmem:[#allocation2 + $0x90] sm:$0xff] %vm1692, %v1657
        %1713 = vst.msk [vmem:[#allocation2 + $0x98] sm:$0xf] %vm1694, %v1659
        %1714 = vst.msk [vmem:[#allocation2 + $0xa0] sm:$0xff] %vm1692, %v1661
        %1715 = vst.msk [vmem:[#allocation2 + $0xa8] sm:$0xf] %vm1694, %v1663
        %1716 = vst.msk [vmem:[#allocation2 + $0xb0] sm:$0xff] %vm1692, %v1665
        %1717 = vst.msk [vmem:[#allocation2 + $0xb8] sm:$0xf] %vm1694, %v1667
        %v1718 = vld [vmem:[%s1279 + $0x3] sm:$0xff]
        %v1719 = vld [vmem:[%s1279 + $0xb] sm:$0xf]
        %v1720 = vld [vmem:[%s1279 + $0x13] sm:$0xff]
        %v1721 = vld [vmem:[%s1279 + $0x1b] sm:$0xf]
        %v1722 = vld [vmem:[%s1279 + $0x23] sm:$0xff]
        %v1723 = vld [vmem:[%s1279 + $0x2b] sm:$0xf]
        %v1724 = vld [vmem:[%s1279 + $0x33] sm:$0xff]
        %v1725 = vld [vmem:[%s1279 + $0x3b] sm:$0xf]
        %v1726 = vld [vmem:[%s1279 + $0x43] sm:$0xff]
        %v1727 = vld [vmem:[%s1279 + $0x4b] sm:$0xf]
        %v1728 = vld [vmem:[%s1279 + $0x53] sm:$0xff]
        %v1729 = vld [vmem:[%s1279 + $0x5b] sm:$0xf]
        %v1730 = vld [vmem:[%s1279 + $0x63] sm:$0xff]
        %v1731 = vld [vmem:[%s1279 + $0x6b] sm:$0xf]
        %v1732 = vld [vmem:[%s1279 + $0x73] sm:$0xff]
        %v1733 = vld [vmem:[%s1279 + $0x7b] sm:$0xf]
        %v1734 = vld [vmem:[%s1279 + $0x83] sm:$0xff]
        %v1735 = vld [vmem:[%s1279 + $0x8b] sm:$0xf]
        %v1736 = vld [vmem:[%s1279 + $0x93] sm:$0xff]
        %v1737 = vld [vmem:[%s1279 + $0x9b] sm:$0xf]
        %v1738 = vld [vmem:[%s1279 + $0xa3] sm:$0xff]
        %v1739 = vld [vmem:[%s1279 + $0xab] sm:$0xf]
        %v1740 = vld [vmem:[%s1279 + $0xb3] sm:$0xff]
        %v1741 = vld [vmem:[%s1279 + $0xbb] sm:$0xf]
        %1766 = vrot.lane.b32.xlu0 %v1718, 32
        %v1767 = vpop.permute.xlu0 %1766
        %1768 = vrot.lane.b32.xlu0 %v1719, 32
        %v1769 = vpop.permute.xlu0 %1768
        %1770 = vrot.lane.b32.xlu0 %v1720, 32
        %v1771 = vpop.permute.xlu0 %1770
        %1772 = vrot.lane.b32.xlu0 %v1721, 32
        %v1773 = vpop.permute.xlu0 %1772
        %1774 = vrot.lane.b32.xlu0 %v1722, 32
        %v1775 = vpop.permute.xlu0 %1774
        %1776 = vrot.lane.b32.xlu0 %v1723, 32
        %v1777 = vpop.permute.xlu0 %1776
        %1778 = vrot.lane.b32.xlu0 %v1724, 32
        %v1779 = vpop.permute.xlu0 %1778
        %1780 = vrot.lane.b32.xlu0 %v1725, 32
        %v1781 = vpop.permute.xlu0 %1780
        %1782 = vrot.lane.b32.xlu0 %v1726, 32
        %v1783 = vpop.permute.xlu0 %1782
        %1784 = vrot.lane.b32.xlu0 %v1727, 32
        %v1785 = vpop.permute.xlu0 %1784
        %1786 = vrot.lane.b32.xlu0 %v1728, 32
        %v1787 = vpop.permute.xlu0 %1786
        %1788 = vrot.lane.b32.xlu0 %v1729, 32
        %v1789 = vpop.permute.xlu0 %1788
        %1790 = vrot.lane.b32.xlu0 %v1730, 32
        %v1791 = vpop.permute.xlu0 %1790
        %1792 = vrot.lane.b32.xlu0 %v1731, 32
        %v1793 = vpop.permute.xlu0 %1792
        %1794 = vrot.lane.b32.xlu0 %v1732, 32
        %v1795 = vpop.permute.xlu0 %1794
        %1796 = vrot.lane.b32.xlu0 %v1733, 32
        %v1797 = vpop.permute.xlu0 %1796
        %1798 = vrot.lane.b32.xlu0 %v1734, 32
        %v1799 = vpop.permute.xlu0 %1798
        %1800 = vrot.lane.b32.xlu0 %v1735, 32
        %v1801 = vpop.permute.xlu0 %1800
        %1802 = vrot.lane.b32.xlu0 %v1736, 32
        %v1803 = vpop.permute.xlu0 %1802
        %1804 = vrot.lane.b32.xlu0 %v1737, 32
        %v1805 = vpop.permute.xlu0 %1804
        %1806 = vrot.lane.b32.xlu0 %v1738, 32
        %v1807 = vpop.permute.xlu0 %1806
        %1808 = vrot.lane.b32.xlu0 %v1739, 32
        %v1809 = vpop.permute.xlu0 %1808
        %1810 = vrot.lane.b32.xlu0 %v1740, 32
        %v1811 = vpop.permute.xlu0 %1810
        %1812 = vrot.lane.b32.xlu0 %v1741, 32
        %v1813 = vpop.permute.xlu0 %1812
        %vm1838 = vcmask 294144
        %1839 = vst.msk [vmem:[#allocation2] sm:$0xff] %vm1838, %v1767
        %vm1840 = vcmask 290048
        %1841 = vst.msk [vmem:[#allocation2 + $0x8] sm:$0xf] %vm1840, %v1769
        %1842 = vst.msk [vmem:[#allocation2 + $0x10] sm:$0xff] %vm1838, %v1771
        %1843 = vst.msk [vmem:[#allocation2 + $0x18] sm:$0xf] %vm1840, %v1773
        %1844 = vst.msk [vmem:[#allocation2 + $0x20] sm:$0xff] %vm1838, %v1775
        %1845 = vst.msk [vmem:[#allocation2 + $0x28] sm:$0xf] %vm1840, %v1777
        %1846 = vst.msk [vmem:[#allocation2 + $0x30] sm:$0xff] %vm1838, %v1779
        %1847 = vst.msk [vmem:[#allocation2 + $0x38] sm:$0xf] %vm1840, %v1781
        %1848 = vst.msk [vmem:[#allocation2 + $0x40] sm:$0xff] %vm1838, %v1783
        %1849 = vst.msk [vmem:[#allocation2 + $0x48] sm:$0xf] %vm1840, %v1785
        %1850 = vst.msk [vmem:[#allocation2 + $0x50] sm:$0xff] %vm1838, %v1787
        %1851 = vst.msk [vmem:[#allocation2 + $0x58] sm:$0xf] %vm1840, %v1789
        %1852 = vst.msk [vmem:[#allocation2 + $0x60] sm:$0xff] %vm1838, %v1791
        %1853 = vst.msk [vmem:[#allocation2 + $0x68] sm:$0xf] %vm1840, %v1793
        %1854 = vst.msk [vmem:[#allocation2 + $0x70] sm:$0xff] %vm1838, %v1795
        %1855 = vst.msk [vmem:[#allocation2 + $0x78] sm:$0xf] %vm1840, %v1797
        %1856 = vst.msk [vmem:[#allocation2 + $0x80] sm:$0xff] %vm1838, %v1799
        %1857 = vst.msk [vmem:[#allocation2 + $0x88] sm:$0xf] %vm1840, %v1801
        %1858 = vst.msk [vmem:[#allocation2 + $0x90] sm:$0xff] %vm1838, %v1803
        %1859 = vst.msk [vmem:[#allocation2 + $0x98] sm:$0xf] %vm1840, %v1805
        %1860 = vst.msk [vmem:[#allocation2 + $0xa0] sm:$0xff] %vm1838, %v1807
        %1861 = vst.msk [vmem:[#allocation2 + $0xa8] sm:$0xf] %vm1840, %v1809
        %1862 = vst.msk [vmem:[#allocation2 + $0xb0] sm:$0xff] %vm1838, %v1811
        %1863 = vst.msk [vmem:[#allocation2 + $0xb8] sm:$0xf] %vm1840, %v1813
        %v1864 = vld [vmem:[%s1279 + $0x4] sm:$0xff]
        %v1865 = vld [vmem:[%s1279 + $0xc] sm:$0xf]
        %v1866 = vld [vmem:[%s1279 + $0x14] sm:$0xff]
        %v1867 = vld [vmem:[%s1279 + $0x1c] sm:$0xf]
        %v1868 = vld [vmem:[%s1279 + $0x24] sm:$0xff]
        %v1869 = vld [vmem:[%s1279 + $0x2c] sm:$0xf]
        %v1870 = vld [vmem:[%s1279 + $0x34] sm:$0xff]
        %v1871 = vld [vmem:[%s1279 + $0x3c] sm:$0xf]
        %v1872 = vld [vmem:[%s1279 + $0x44] sm:$0xff]
        %v1873 = vld [vmem:[%s1279 + $0x4c] sm:$0xf]
        %v1874 = vld [vmem:[%s1279 + $0x54] sm:$0xff]
        %v1875 = vld [vmem:[%s1279 + $0x5c] sm:$0xf]
        %v1876 = vld [vmem:[%s1279 + $0x64] sm:$0xff]
        %v1877 = vld [vmem:[%s1279 + $0x6c] sm:$0xf]
        %v1878 = vld [vmem:[%s1279 + $0x74] sm:$0xff]
        %v1879 = vld [vmem:[%s1279 + $0x7c] sm:$0xf]
        %v1880 = vld [vmem:[%s1279 + $0x84] sm:$0xff]
        %v1881 = vld [vmem:[%s1279 + $0x8c] sm:$0xf]
        %v1882 = vld [vmem:[%s1279 + $0x94] sm:$0xff]
        %v1883 = vld [vmem:[%s1279 + $0x9c] sm:$0xf]
        %v1884 = vld [vmem:[%s1279 + $0xa4] sm:$0xff]
        %v1885 = vld [vmem:[%s1279 + $0xac] sm:$0xf]
        %v1886 = vld [vmem:[%s1279 + $0xb4] sm:$0xff]
        %v1887 = vld [vmem:[%s1279 + $0xbc] sm:$0xf]
        %1912 = vrot.lane.b32.xlu0 %v1864, 36
        %v1913 = vpop.permute.xlu0 %1912
        %1914 = vrot.lane.b32.xlu0 %v1865, 36
        %v1915 = vpop.permute.xlu0 %1914
        %1916 = vrot.lane.b32.xlu0 %v1866, 36
        %v1917 = vpop.permute.xlu0 %1916
        %1918 = vrot.lane.b32.xlu0 %v1867, 36
        %v1919 = vpop.permute.xlu0 %1918
        %1920 = vrot.lane.b32.xlu0 %v1868, 36
        %v1921 = vpop.permute.xlu0 %1920
        %1922 = vrot.lane.b32.xlu0 %v1869, 36
        %v1923 = vpop.permute.xlu0 %1922
        %1924 = vrot.lane.b32.xlu0 %v1870, 36
        %v1925 = vpop.permute.xlu0 %1924
        %1926 = vrot.lane.b32.xlu0 %v1871, 36
        %v1927 = vpop.permute.xlu0 %1926
        %1928 = vrot.lane.b32.xlu0 %v1872, 36
        %v1929 = vpop.permute.xlu0 %1928
        %1930 = vrot.lane.b32.xlu0 %v1873, 36
        %v1931 = vpop.permute.xlu0 %1930
        %1932 = vrot.lane.b32.xlu0 %v1874, 36
        %v1933 = vpop.permute.xlu0 %1932
        %1934 = vrot.lane.b32.xlu0 %v1875, 36
        %v1935 = vpop.permute.xlu0 %1934
        %1936 = vrot.lane.b32.xlu0 %v1876, 36
        %v1937 = vpop.permute.xlu0 %1936
        %1938 = vrot.lane.b32.xlu0 %v1877, 36
        %v1939 = vpop.permute.xlu0 %1938
        %1940 = vrot.lane.b32.xlu0 %v1878, 36
        %v1941 = vpop.permute.xlu0 %1940
        %1942 = vrot.lane.b32.xlu0 %v1879, 36
        %v1943 = vpop.permute.xlu0 %1942
        %1944 = vrot.lane.b32.xlu0 %v1880, 36
        %v1945 = vpop.permute.xlu0 %1944
        %1946 = vrot.lane.b32.xlu0 %v1881, 36
        %v1947 = vpop.permute.xlu0 %1946
        %1948 = vrot.lane.b32.xlu0 %v1882, 36
        %v1949 = vpop.permute.xlu0 %1948
        %1950 = vrot.lane.b32.xlu0 %v1883, 36
        %v1951 = vpop.permute.xlu0 %1950
        %1952 = vrot.lane.b32.xlu0 %v1884, 36
        %v1953 = vpop.permute.xlu0 %1952
        %1954 = vrot.lane.b32.xlu0 %v1885, 36
        %v1955 = vpop.permute.xlu0 %1954
        %1956 = vrot.lane.b32.xlu0 %v1886, 36
        %v1957 = vpop.permute.xlu0 %1956
        %1958 = vrot.lane.b32.xlu0 %v1887, 36
        %v1959 = vpop.permute.xlu0 %1958
        %vm1984 = vcmask 326944
        %1985 = vst.msk [vmem:[#allocation2] sm:$0xff] %vm1984, %v1913
        %vm1986 = vcmask 322848
        %1987 = vst.msk [vmem:[#allocation2 + $0x8] sm:$0xf] %vm1986, %v1915
        %1988 = vst.msk [vmem:[#allocation2 + $0x10] sm:$0xff] %vm1984, %v1917
        %1989 = vst.msk [vmem:[#allocation2 + $0x18] sm:$0xf] %vm1986, %v1919
        %1990 = vst.msk [vmem:[#allocation2 + $0x20] sm:$0xff] %vm1984, %v1921
        %1991 = vst.msk [vmem:[#allocation2 + $0x28] sm:$0xf] %vm1986, %v1923
        %1992 = vst.msk [vmem:[#allocation2 + $0x30] sm:$0xff] %vm1984, %v1925
        %1993 = vst.msk [vmem:[#allocation2 + $0x38] sm:$0xf] %vm1986, %v1927
        %1994 = vst.msk [vmem:[#allocation2 + $0x40] sm:$0xff] %vm1984, %v1929
        %1995 = vst.msk [vmem:[#allocation2 + $0x48] sm:$0xf] %vm1986, %v1931
        %1996 = vst.msk [vmem:[#allocation2 + $0x50] sm:$0xff] %vm1984, %v1933
        %1997 = vst.msk [vmem:[#allocation2 + $0x58] sm:$0xf] %vm1986, %v1935
        %1998 = vst.msk [vmem:[#allocation2 + $0x60] sm:$0xff] %vm1984, %v1937
        %1999 = vst.msk [vmem:[#allocation2 + $0x68] sm:$0xf] %vm1986, %v1939
        %2000 = vst.msk [vmem:[#allocation2 + $0x70] sm:$0xff] %vm1984, %v1941
        %2001 = vst.msk [vmem:[#allocation2 + $0x78] sm:$0xf] %vm1986, %v1943
        %2002 = vst.msk [vmem:[#allocation2 + $0x80] sm:$0xff] %vm1984, %v1945
        %2003 = vst.msk [vmem:[#allocation2 + $0x88] sm:$0xf] %vm1986, %v1947
        %2004 = vst.msk [vmem:[#allocation2 + $0x90] sm:$0xff] %vm1984, %v1949
        %2005 = vst.msk [vmem:[#allocation2 + $0x98] sm:$0xf] %vm1986, %v1951
        %2006 = vst.msk [vmem:[#allocation2 + $0xa0] sm:$0xff] %vm1984, %v1953
        %2007 = vst.msk [vmem:[#allocation2 + $0xa8] sm:$0xf] %vm1986, %v1955
        %2008 = vst.msk [vmem:[#allocation2 + $0xb0] sm:$0xff] %vm1984, %v1957
        %2009 = vst.msk [vmem:[#allocation2 + $0xb8] sm:$0xf] %vm1986, %v1959
        %s2010 = scalar_lea.vmem %s477, 32
        %v2011 = vld [vmem:[%s2010] sm:$0xff]
        %v2012 = vld [vmem:[%s2010 + $0x8] sm:$0xf]
        %v2013 = vld [vmem:[%s2010 + $0x10] sm:$0xff]
        %v2014 = vld [vmem:[%s2010 + $0x18] sm:$0xf]
        %v2015 = vld [vmem:[%s2010 + $0x20] sm:$0xff]
        %v2016 = vld [vmem:[%s2010 + $0x28] sm:$0xf]
        %v2017 = vld [vmem:[%s2010 + $0x30] sm:$0xff]
        %v2018 = vld [vmem:[%s2010 + $0x38] sm:$0xf]
        %v2019 = vld [vmem:[%s2010 + $0x40] sm:$0xff]
        %v2020 = vld [vmem:[%s2010 + $0x48] sm:$0xf]
        %v2021 = vld [vmem:[%s2010 + $0x50] sm:$0xff]
        %v2022 = vld [vmem:[%s2010 + $0x58] sm:$0xf]
        %v2023 = vld [vmem:[%s2010 + $0x60] sm:$0xff]
        %v2024 = vld [vmem:[%s2010 + $0x68] sm:$0xf]
        %v2025 = vld [vmem:[%s2010 + $0x70] sm:$0xff]
        %v2026 = vld [vmem:[%s2010 + $0x78] sm:$0xf]
        %v2027 = vld [vmem:[%s2010 + $0x80] sm:$0xff]
        %v2028 = vld [vmem:[%s2010 + $0x88] sm:$0xf]
        %v2029 = vld [vmem:[%s2010 + $0x90] sm:$0xff]
        %v2030 = vld [vmem:[%s2010 + $0x98] sm:$0xf]
        %v2031 = vld [vmem:[%s2010 + $0xa0] sm:$0xff]
        %v2032 = vld [vmem:[%s2010 + $0xa8] sm:$0xf]
        %v2033 = vld [vmem:[%s2010 + $0xb0] sm:$0xff]
        %v2034 = vld [vmem:[%s2010 + $0xb8] sm:$0xf]
        %2059 = vrot.lane.b32.xlu0 %v2011, 40
        %v2060 = vpop.permute.xlu0 %2059
        %2061 = vrot.lane.b32.xlu0 %v2012, 40
        %v2062 = vpop.permute.xlu0 %2061
        %2063 = vrot.lane.b32.xlu0 %v2013, 40
        %v2064 = vpop.permute.xlu0 %2063
        %2065 = vrot.lane.b32.xlu0 %v2014, 40
        %v2066 = vpop.permute.xlu0 %2065
        %2067 = vrot.lane.b32.xlu0 %v2015, 40
        %v2068 = vpop.permute.xlu0 %2067
        %2069 = vrot.lane.b32.xlu0 %v2016, 40
        %v2070 = vpop.permute.xlu0 %2069
        %2071 = vrot.lane.b32.xlu0 %v2017, 40
        %v2072 = vpop.permute.xlu0 %2071
        %2073 = vrot.lane.b32.xlu0 %v2018, 40
        %v2074 = vpop.permute.xlu0 %2073
        %2075 = vrot.lane.b32.xlu0 %v2019, 40
        %v2076 = vpop.permute.xlu0 %2075
        %2077 = vrot.lane.b32.xlu0 %v2020, 40
        %v2078 = vpop.permute.xlu0 %2077
        %2079 = vrot.lane.b32.xlu0 %v2021, 40
        %v2080 = vpop.permute.xlu0 %2079
        %2081 = vrot.lane.b32.xlu0 %v2022, 40
        %v2082 = vpop.permute.xlu0 %2081
        %2083 = vrot.lane.b32.xlu0 %v2023, 40
        %v2084 = vpop.permute.xlu0 %2083
        %2085 = vrot.lane.b32.xlu0 %v2024, 40
        %v2086 = vpop.permute.xlu0 %2085
        %2087 = vrot.lane.b32.xlu0 %v2025, 40
        %v2088 = vpop.permute.xlu0 %2087
        %2089 = vrot.lane.b32.xlu0 %v2026, 40
        %v2090 = vpop.permute.xlu0 %2089
        %2091 = vrot.lane.b32.xlu0 %v2027, 40
        %v2092 = vpop.permute.xlu0 %2091
        %2093 = vrot.lane.b32.xlu0 %v2028, 40
        %v2094 = vpop.permute.xlu0 %2093
        %2095 = vrot.lane.b32.xlu0 %v2029, 40
        %v2096 = vpop.permute.xlu0 %2095
        %2097 = vrot.lane.b32.xlu0 %v2030, 40
        %v2098 = vpop.permute.xlu0 %2097
        %2099 = vrot.lane.b32.xlu0 %v2031, 40
        %v2100 = vpop.permute.xlu0 %2099
        %2101 = vrot.lane.b32.xlu0 %v2032, 40
        %v2102 = vpop.permute.xlu0 %2101
        %2103 = vrot.lane.b32.xlu0 %v2033, 40
        %v2104 = vpop.permute.xlu0 %2103
        %2105 = vrot.lane.b32.xlu0 %v2034, 40
        %v2106 = vpop.permute.xlu0 %2105
        %vm2131 = vcmask 359744
        %2132 = vst.msk [vmem:[#allocation2] sm:$0xff] %vm2131, %v2060
        %vm2133 = vcmask 355648
        %2134 = vst.msk [vmem:[#allocation2 + $0x8] sm:$0xf] %vm2133, %v2062
        %2135 = vst.msk [vmem:[#allocation2 + $0x10] sm:$0xff] %vm2131, %v2064
        %2136 = vst.msk [vmem:[#allocation2 + $0x18] sm:$0xf] %vm2133, %v2066
        %2137 = vst.msk [vmem:[#allocation2 + $0x20] sm:$0xff] %vm2131, %v2068
        %2138 = vst.msk [vmem:[#allocation2 + $0x28] sm:$0xf] %vm2133, %v2070
        %2139 = vst.msk [vmem:[#allocation2 + $0x30] sm:$0xff] %vm2131, %v2072
        %2140 = vst.msk [vmem:[#allocation2 + $0x38] sm:$0xf] %vm2133, %v2074
        %2141 = vst.msk [vmem:[#allocation2 + $0x40] sm:$0xff] %vm2131, %v2076
        %2142 = vst.msk [vmem:[#allocation2 + $0x48] sm:$0xf] %vm2133, %v2078
        %2143 = vst.msk [vmem:[#allocation2 + $0x50] sm:$0xff] %vm2131, %v2080
        %2144 = vst.msk [vmem:[#allocation2 + $0x58] sm:$0xf] %vm2133, %v2082
        %2145 = vst.msk [vmem:[#allocation2 + $0x60] sm:$0xff] %vm2131, %v2084
        %2146 = vst.msk [vmem:[#allocation2 + $0x68] sm:$0xf] %vm2133, %v2086
        %2147 = vst.msk [vmem:[#allocation2 + $0x70] sm:$0xff] %vm2131, %v2088
        %2148 = vst.msk [vmem:[#allocation2 + $0x78] sm:$0xf] %vm2133, %v2090
        %2149 = vst.msk [vmem:[#allocation2 + $0x80] sm:$0xff] %vm2131, %v2092
        %2150 = vst.msk [vmem:[#allocation2 + $0x88] sm:$0xf] %vm2133, %v2094
        %2151 = vst.msk [vmem:[#allocation2 + $0x90] sm:$0xff] %vm2131, %v2096
        %2152 = vst.msk [vmem:[#allocation2 + $0x98] sm:$0xf] %vm2133, %v2098
        %2153 = vst.msk [vmem:[#allocation2 + $0xa0] sm:$0xff] %vm2131, %v2100
        %2154 = vst.msk [vmem:[#allocation2 + $0xa8] sm:$0xf] %vm2133, %v2102
        %2155 = vst.msk [vmem:[#allocation2 + $0xb0] sm:$0xff] %vm2131, %v2104
        %2156 = vst.msk [vmem:[#allocation2 + $0xb8] sm:$0xf] %vm2133, %v2106
        %v2157 = vld [vmem:[%s2010 + $0x1] sm:$0xff]
        %v2158 = vld [vmem:[%s2010 + $0x9] sm:$0xf]
        %v2159 = vld [vmem:[%s2010 + $0x11] sm:$0xff]
        %v2160 = vld [vmem:[%s2010 + $0x19] sm:$0xf]
        %v2161 = vld [vmem:[%s2010 + $0x21] sm:$0xff]
        %v2162 = vld [vmem:[%s2010 + $0x29] sm:$0xf]
        %v2163 = vld [vmem:[%s2010 + $0x31] sm:$0xff]
        %v2164 = vld [vmem:[%s2010 + $0x39] sm:$0xf]
        %v2165 = vld [vmem:[%s2010 + $0x41] sm:$0xff]
        %v2166 = vld [vmem:[%s2010 + $0x49] sm:$0xf]
        %v2167 = vld [vmem:[%s2010 + $0x51] sm:$0xff]
        %v2168 = vld [vmem:[%s2010 + $0x59] sm:$0xf]
        %v2169 = vld [vmem:[%s2010 + $0x61] sm:$0xff]
        %v2170 = vld [vmem:[%s2010 + $0x69] sm:$0xf]
        %v2171 = vld [vmem:[%s2010 + $0x71] sm:$0xff]
        %v2172 = vld [vmem:[%s2010 + $0x79] sm:$0xf]
        %v2173 = vld [vmem:[%s2010 + $0x81] sm:$0xff]
        %v2174 = vld [vmem:[%s2010 + $0x89] sm:$0xf]
        %v2175 = vld [vmem:[%s2010 + $0x91] sm:$0xff]
        %v2176 = vld [vmem:[%s2010 + $0x99] sm:$0xf]
        %v2177 = vld [vmem:[%s2010 + $0xa1] sm:$0xff]
        %v2178 = vld [vmem:[%s2010 + $0xa9] sm:$0xf]
        %v2179 = vld [vmem:[%s2010 + $0xb1] sm:$0xff]
        %v2180 = vld [vmem:[%s2010 + $0xb9] sm:$0xf]
        %2205 = vrot.lane.b32.xlu0 %v2157, 44
        %v2206 = vpop.permute.xlu0 %2205
        %2207 = vrot.lane.b32.xlu0 %v2158, 44
        %v2208 = vpop.permute.xlu0 %2207
        %2209 = vrot.lane.b32.xlu0 %v2159, 44
        %v2210 = vpop.permute.xlu0 %2209
        %2211 = vrot.lane.b32.xlu0 %v2160, 44
        %v2212 = vpop.permute.xlu0 %2211
        %2213 = vrot.lane.b32.xlu0 %v2161, 44
        %v2214 = vpop.permute.xlu0 %2213
        %2215 = vrot.lane.b32.xlu0 %v2162, 44
        %v2216 = vpop.permute.xlu0 %2215
        %2217 = vrot.lane.b32.xlu0 %v2163, 44
        %v2218 = vpop.permute.xlu0 %2217
        %2219 = vrot.lane.b32.xlu0 %v2164, 44
        %v2220 = vpop.permute.xlu0 %2219
        %2221 = vrot.lane.b32.xlu0 %v2165, 44
        %v2222 = vpop.permute.xlu0 %2221
        %2223 = vrot.lane.b32.xlu0 %v2166, 44
        %v2224 = vpop.permute.xlu0 %2223
        %2225 = vrot.lane.b32.xlu0 %v2167, 44
        %v2226 = vpop.permute.xlu0 %2225
        %2227 = vrot.lane.b32.xlu0 %v2168, 44
        %v2228 = vpop.permute.xlu0 %2227
        %2229 = vrot.lane.b32.xlu0 %v2169, 44
        %v2230 = vpop.permute.xlu0 %2229
        %2231 = vrot.lane.b32.xlu0 %v2170, 44
        %v2232 = vpop.permute.xlu0 %2231
        %2233 = vrot.lane.b32.xlu0 %v2171, 44
        %v2234 = vpop.permute.xlu0 %2233
        %2235 = vrot.lane.b32.xlu0 %v2172, 44
        %v2236 = vpop.permute.xlu0 %2235
        %2237 = vrot.lane.b32.xlu0 %v2173, 44
        %v2238 = vpop.permute.xlu0 %2237
        %2239 = vrot.lane.b32.xlu0 %v2174, 44
        %v2240 = vpop.permute.xlu0 %2239
        %2241 = vrot.lane.b32.xlu0 %v2175, 44
        %v2242 = vpop.permute.xlu0 %2241
        %2243 = vrot.lane.b32.xlu0 %v2176, 44
        %v2244 = vpop.permute.xlu0 %2243
        %2245 = vrot.lane.b32.xlu0 %v2177, 44
        %v2246 = vpop.permute.xlu0 %2245
        %2247 = vrot.lane.b32.xlu0 %v2178, 44
        %v2248 = vpop.permute.xlu0 %2247
        %2249 = vrot.lane.b32.xlu0 %v2179, 44
        %v2250 = vpop.permute.xlu0 %2249
        %2251 = vrot.lane.b32.xlu0 %v2180, 44
        %v2252 = vpop.permute.xlu0 %2251
        %vm2277 = vcmask 392544
        %2278 = vst.msk [vmem:[#allocation2] sm:$0xff] %vm2277, %v2206
        %vm2279 = vcmask 388448
        %2280 = vst.msk [vmem:[#allocation2 + $0x8] sm:$0xf] %vm2279, %v2208
        %2281 = vst.msk [vmem:[#allocation2 + $0x10] sm:$0xff] %vm2277, %v2210
        %2282 = vst.msk [vmem:[#allocation2 + $0x18] sm:$0xf] %vm2279, %v2212
        %2283 = vst.msk [vmem:[#allocation2 + $0x20] sm:$0xff] %vm2277, %v2214
        %2284 = vst.msk [vmem:[#allocation2 + $0x28] sm:$0xf] %vm2279, %v2216
        %2285 = vst.msk [vmem:[#allocation2 + $0x30] sm:$0xff] %vm2277, %v2218
        %2286 = vst.msk [vmem:[#allocation2 + $0x38] sm:$0xf] %vm2279, %v2220
        %2287 = vst.msk [vmem:[#allocation2 + $0x40] sm:$0xff] %vm2277, %v2222
        %2288 = vst.msk [vmem:[#allocation2 + $0x48] sm:$0xf] %vm2279, %v2224
        %2289 = vst.msk [vmem:[#allocation2 + $0x50] sm:$0xff] %vm2277, %v2226
        %2290 = vst.msk [vmem:[#allocation2 + $0x58] sm:$0xf] %vm2279, %v2228
        %2291 = vst.msk [vmem:[#allocation2 + $0x60] sm:$0xff] %vm2277, %v2230
        %2292 = vst.msk [vmem:[#allocation2 + $0x68] sm:$0xf] %vm2279, %v2232
        %2293 = vst.msk [vmem:[#allocation2 + $0x70] sm:$0xff] %vm2277, %v2234
        %2294 = vst.msk [vmem:[#allocation2 + $0x78] sm:$0xf] %vm2279, %v2236
        %2295 = vst.msk [vmem:[#allocation2 + $0x80] sm:$0xff] %vm2277, %v2238
        %2296 = vst.msk [vmem:[#allocation2 + $0x88] sm:$0xf] %vm2279, %v2240
        %2297 = vst.msk [vmem:[#allocation2 + $0x90] sm:$0xff] %vm2277, %v2242
        %2298 = vst.msk [vmem:[#allocation2 + $0x98] sm:$0xf] %vm2279, %v2244
        %2299 = vst.msk [vmem:[#allocation2 + $0xa0] sm:$0xff] %vm2277, %v2246
        %2300 = vst.msk [vmem:[#allocation2 + $0xa8] sm:$0xf] %vm2279, %v2248
        %2301 = vst.msk [vmem:[#allocation2 + $0xb0] sm:$0xff] %vm2277, %v2250
        %2302 = vst.msk [vmem:[#allocation2 + $0xb8] sm:$0xf] %vm2279, %v2252
        %v2303 = vld [vmem:[%s2010 + $0x2] sm:$0xff]
        %v2304 = vld [vmem:[%s2010 + $0xa] sm:$0xf]
        %v2305 = vld [vmem:[%s2010 + $0x12] sm:$0xff]
        %v2306 = vld [vmem:[%s2010 + $0x1a] sm:$0xf]
        %v2307 = vld [vmem:[%s2010 + $0x22] sm:$0xff]
        %v2308 = vld [vmem:[%s2010 + $0x2a] sm:$0xf]
        %v2309 = vld [vmem:[%s2010 + $0x32] sm:$0xff]
        %v2310 = vld [vmem:[%s2010 + $0x3a] sm:$0xf]
        %v2311 = vld [vmem:[%s2010 + $0x42] sm:$0xff]
        %v2312 = vld [vmem:[%s2010 + $0x4a] sm:$0xf]
        %v2313 = vld [vmem:[%s2010 + $0x52] sm:$0xff]
        %v2314 = vld [vmem:[%s2010 + $0x5a] sm:$0xf]
        %v2315 = vld [vmem:[%s2010 + $0x62] sm:$0xff]
        %v2316 = vld [vmem:[%s2010 + $0x6a] sm:$0xf]
        %v2317 = vld [vmem:[%s2010 + $0x72] sm:$0xff]
        %v2318 = vld [vmem:[%s2010 + $0x7a] sm:$0xf]
        %v2319 = vld [vmem:[%s2010 + $0x82] sm:$0xff]
        %v2320 = vld [vmem:[%s2010 + $0x8a] sm:$0xf]
        %v2321 = vld [vmem:[%s2010 + $0x92] sm:$0xff]
        %v2322 = vld [vmem:[%s2010 + $0x9a] sm:$0xf]
        %v2323 = vld [vmem:[%s2010 + $0xa2] sm:$0xff]
        %v2324 = vld [vmem:[%s2010 + $0xaa] sm:$0xf]
        %v2325 = vld [vmem:[%s2010 + $0xb2] sm:$0xff]
        %v2326 = vld [vmem:[%s2010 + $0xba] sm:$0xf]
        %2351 = vrot.lane.b32.xlu0 %v2303, 48
        %v2352 = vpop.permute.xlu0 %2351
        %2353 = vrot.lane.b32.xlu0 %v2304, 48
        %v2354 = vpop.permute.xlu0 %2353
        %2355 = vrot.lane.b32.xlu0 %v2305, 48
        %v2356 = vpop.permute.xlu0 %2355
        %2357 = vrot.lane.b32.xlu0 %v2306, 48
        %v2358 = vpop.permute.xlu0 %2357
        %2359 = vrot.lane.b32.xlu0 %v2307, 48
        %v2360 = vpop.permute.xlu0 %2359
        %2361 = vrot.lane.b32.xlu0 %v2308, 48
        %v2362 = vpop.permute.xlu0 %2361
        %2363 = vrot.lane.b32.xlu0 %v2309, 48
        %v2364 = vpop.permute.xlu0 %2363
        %2365 = vrot.lane.b32.xlu0 %v2310, 48
        %v2366 = vpop.permute.xlu0 %2365
        %2367 = vrot.lane.b32.xlu0 %v2311, 48
        %v2368 = vpop.permute.xlu0 %2367
        %2369 = vrot.lane.b32.xlu0 %v2312, 48
        %v2370 = vpop.permute.xlu0 %2369
        %2371 = vrot.lane.b32.xlu0 %v2313, 48
        %v2372 = vpop.permute.xlu0 %2371
        %2373 = vrot.lane.b32.xlu0 %v2314, 48
        %v2374 = vpop.permute.xlu0 %2373
        %2375 = vrot.lane.b32.xlu0 %v2315, 48
        %v2376 = vpop.permute.xlu0 %2375
        %2377 = vrot.lane.b32.xlu0 %v2316, 48
        %v2378 = vpop.permute.xlu0 %2377
        %2379 = vrot.lane.b32.xlu0 %v2317, 48
        %v2380 = vpop.permute.xlu0 %2379
        %2381 = vrot.lane.b32.xlu0 %v2318, 48
        %v2382 = vpop.permute.xlu0 %2381
        %2383 = vrot.lane.b32.xlu0 %v2319, 48
        %v2384 = vpop.permute.xlu0 %2383
        %2385 = vrot.lane.b32.xlu0 %v2320, 48
        %v2386 = vpop.permute.xlu0 %2385
        %2387 = vrot.lane.b32.xlu0 %v2321, 48
        %v2388 = vpop.permute.xlu0 %2387
        %2389 = vrot.lane.b32.xlu0 %v2322, 48
        %v2390 = vpop.permute.xlu0 %2389
        %2391 = vrot.lane.b32.xlu0 %v2323, 48
        %v2392 = vpop.permute.xlu0 %2391
        %2393 = vrot.lane.b32.xlu0 %v2324, 48
        %v2394 = vpop.permute.xlu0 %2393
        %2395 = vrot.lane.b32.xlu0 %v2325, 48
        %v2396 = vpop.permute.xlu0 %2395
        %2397 = vrot.lane.b32.xlu0 %v2326, 48
        %v2398 = vpop.permute.xlu0 %2397
        %vm2423 = vcmask 425344
        %2424 = vst.msk [vmem:[#allocation2] sm:$0xff] %vm2423, %v2352
        %vm2425 = vcmask 421248
        %2426 = vst.msk [vmem:[#allocation2 + $0x8] sm:$0xf] %vm2425, %v2354
        %2427 = vst.msk [vmem:[#allocation2 + $0x10] sm:$0xff] %vm2423, %v2356
        %2428 = vst.msk [vmem:[#allocation2 + $0x18] sm:$0xf] %vm2425, %v2358
        %2429 = vst.msk [vmem:[#allocation2 + $0x20] sm:$0xff] %vm2423, %v2360
        %2430 = vst.msk [vmem:[#allocation2 + $0x28] sm:$0xf] %vm2425, %v2362
        %2431 = vst.msk [vmem:[#allocation2 + $0x30] sm:$0xff] %vm2423, %v2364
        %2432 = vst.msk [vmem:[#allocation2 + $0x38] sm:$0xf] %vm2425, %v2366
        %2433 = vst.msk [vmem:[#allocation2 + $0x40] sm:$0xff] %vm2423, %v2368
        %2434 = vst.msk [vmem:[#allocation2 + $0x48] sm:$0xf] %vm2425, %v2370
        %2435 = vst.msk [vmem:[#allocation2 + $0x50] sm:$0xff] %vm2423, %v2372
        %2436 = vst.msk [vmem:[#allocation2 + $0x58] sm:$0xf] %vm2425, %v2374
        %2437 = vst.msk [vmem:[#allocation2 + $0x60] sm:$0xff] %vm2423, %v2376
        %2438 = vst.msk [vmem:[#allocation2 + $0x68] sm:$0xf] %vm2425, %v2378
        %2439 = vst.msk [vmem:[#allocation2 + $0x70] sm:$0xff] %vm2423, %v2380
        %2440 = vst.msk [vmem:[#allocation2 + $0x78] sm:$0xf] %vm2425, %v2382
        %2441 = vst.msk [vmem:[#allocation2 + $0x80] sm:$0xff] %vm2423, %v2384
        %2442 = vst.msk [vmem:[#allocation2 + $0x88] sm:$0xf] %vm2425, %v2386
        %2443 = vst.msk [vmem:[#allocation2 + $0x90] sm:$0xff] %vm2423, %v2388
        %2444 = vst.msk [vmem:[#allocation2 + $0x98] sm:$0xf] %vm2425, %v2390
        %2445 = vst.msk [vmem:[#allocation2 + $0xa0] sm:$0xff] %vm2423, %v2392
        %2446 = vst.msk [vmem:[#allocation2 + $0xa8] sm:$0xf] %vm2425, %v2394
        %2447 = vst.msk [vmem:[#allocation2 + $0xb0] sm:$0xff] %vm2423, %v2396
        %2448 = vst.msk [vmem:[#allocation2 + $0xb8] sm:$0xf] %vm2425, %v2398
        %v2449 = vld [vmem:[%s2010 + $0x3] sm:$0xff]
        %v2450 = vld [vmem:[%s2010 + $0xb] sm:$0xf]
        %v2451 = vld [vmem:[%s2010 + $0x13] sm:$0xff]
        %v2452 = vld [vmem:[%s2010 + $0x1b] sm:$0xf]
        %v2453 = vld [vmem:[%s2010 + $0x23] sm:$0xff]
        %v2454 = vld [vmem:[%s2010 + $0x2b] sm:$0xf]
        %v2455 = vld [vmem:[%s2010 + $0x33] sm:$0xff]
        %v2456 = vld [vmem:[%s2010 + $0x3b] sm:$0xf]
        %v2457 = vld [vmem:[%s2010 + $0x43] sm:$0xff]
        %v2458 = vld [vmem:[%s2010 + $0x4b] sm:$0xf]
        %v2459 = vld [vmem:[%s2010 + $0x53] sm:$0xff]
        %v2460 = vld [vmem:[%s2010 + $0x5b] sm:$0xf]
        %v2461 = vld [vmem:[%s2010 + $0x63] sm:$0xff]
        %v2462 = vld [vmem:[%s2010 + $0x6b] sm:$0xf]
        %v2463 = vld [vmem:[%s2010 + $0x73] sm:$0xff]
        %v2464 = vld [vmem:[%s2010 + $0x7b] sm:$0xf]
        %v2465 = vld [vmem:[%s2010 + $0x83] sm:$0xff]
        %v2466 = vld [vmem:[%s2010 + $0x8b] sm:$0xf]
        %v2467 = vld [vmem:[%s2010 + $0x93] sm:$0xff]
        %v2468 = vld [vmem:[%s2010 + $0x9b] sm:$0xf]
        %v2469 = vld [vmem:[%s2010 + $0xa3] sm:$0xff]
        %v2470 = vld [vmem:[%s2010 + $0xab] sm:$0xf]
        %v2471 = vld [vmem:[%s2010 + $0xb3] sm:$0xff]
        %v2472 = vld [vmem:[%s2010 + $0xbb] sm:$0xf]
        %2497 = vrot.lane.b32.xlu0 %v2449, 52
        %v2498 = vpop.permute.xlu0 %2497
        %2499 = vrot.lane.b32.xlu0 %v2450, 52
        %v2500 = vpop.permute.xlu0 %2499
        %2501 = vrot.lane.b32.xlu0 %v2451, 52
        %v2502 = vpop.permute.xlu0 %2501
        %2503 = vrot.lane.b32.xlu0 %v2452, 52
        %v2504 = vpop.permute.xlu0 %2503
        %2505 = vrot.lane.b32.xlu0 %v2453, 52
        %v2506 = vpop.permute.xlu0 %2505
        %2507 = vrot.lane.b32.xlu0 %v2454, 52
        %v2508 = vpop.permute.xlu0 %2507
        %2509 = vrot.lane.b32.xlu0 %v2455, 52
        %v2510 = vpop.permute.xlu0 %2509
        %2511 = vrot.lane.b32.xlu0 %v2456, 52
        %v2512 = vpop.permute.xlu0 %2511
        %2513 = vrot.lane.b32.xlu0 %v2457, 52
        %v2514 = vpop.permute.xlu0 %2513
        %2515 = vrot.lane.b32.xlu0 %v2458, 52
        %v2516 = vpop.permute.xlu0 %2515
        %2517 = vrot.lane.b32.xlu0 %v2459, 52
        %v2518 = vpop.permute.xlu0 %2517
        %2519 = vrot.lane.b32.xlu0 %v2460, 52
        %v2520 = vpop.permute.xlu0 %2519
        %2521 = vrot.lane.b32.xlu0 %v2461, 52
        %v2522 = vpop.permute.xlu0 %2521
        %2523 = vrot.lane.b32.xlu0 %v2462, 52
        %v2524 = vpop.permute.xlu0 %2523
        %2525 = vrot.lane.b32.xlu0 %v2463, 52
        %v2526 = vpop.permute.xlu0 %2525
        %2527 = vrot.lane.b32.xlu0 %v2464, 52
        %v2528 = vpop.permute.xlu0 %2527
        %2529 = vrot.lane.b32.xlu0 %v2465, 52
        %v2530 = vpop.permute.xlu0 %2529
        %2531 = vrot.lane.b32.xlu0 %v2466, 52
        %v2532 = vpop.permute.xlu0 %2531
        %2533 = vrot.lane.b32.xlu0 %v2467, 52
        %v2534 = vpop.permute.xlu0 %2533
        %2535 = vrot.lane.b32.xlu0 %v2468, 52
        %v2536 = vpop.permute.xlu0 %2535
        %2537 = vrot.lane.b32.xlu0 %v2469, 52
        %v2538 = vpop.permute.xlu0 %2537
        %2539 = vrot.lane.b32.xlu0 %v2470, 52
        %v2540 = vpop.permute.xlu0 %2539
        %2541 = vrot.lane.b32.xlu0 %v2471, 52
        %v2542 = vpop.permute.xlu0 %2541
        %2543 = vrot.lane.b32.xlu0 %v2472, 52
        %v2544 = vpop.permute.xlu0 %2543
        %vm2569 = vcmask 458144
        %2570 = vst.msk [vmem:[#allocation2] sm:$0xff] %vm2569, %v2498
        %vm2571 = vcmask 454048
        %2572 = vst.msk [vmem:[#allocation2 + $0x8] sm:$0xf] %vm2571, %v2500
        %2573 = vst.msk [vmem:[#allocation2 + $0x10] sm:$0xff] %vm2569, %v2502
        %2574 = vst.msk [vmem:[#allocation2 + $0x18] sm:$0xf] %vm2571, %v2504
        %2575 = vst.msk [vmem:[#allocation2 + $0x20] sm:$0xff] %vm2569, %v2506
        %2576 = vst.msk [vmem:[#allocation2 + $0x28] sm:$0xf] %vm2571, %v2508
        %2577 = vst.msk [vmem:[#allocation2 + $0x30] sm:$0xff] %vm2569, %v2510
        %2578 = vst.msk [vmem:[#allocation2 + $0x38] sm:$0xf] %vm2571, %v2512
        %2579 = vst.msk [vmem:[#allocation2 + $0x40] sm:$0xff] %vm2569, %v2514
        %2580 = vst.msk [vmem:[#allocation2 + $0x48] sm:$0xf] %vm2571, %v2516
        %2581 = vst.msk [vmem:[#allocation2 + $0x50] sm:$0xff] %vm2569, %v2518
        %2582 = vst.msk [vmem:[#allocation2 + $0x58] sm:$0xf] %vm2571, %v2520
        %2583 = vst.msk [vmem:[#allocation2 + $0x60] sm:$0xff] %vm2569, %v2522
        %2584 = vst.msk [vmem:[#allocation2 + $0x68] sm:$0xf] %vm2571, %v2524
        %2585 = vst.msk [vmem:[#allocation2 + $0x70] sm:$0xff] %vm2569, %v2526
        %2586 = vst.msk [vmem:[#allocation2 + $0x78] sm:$0xf] %vm2571, %v2528
        %2587 = vst.msk [vmem:[#allocation2 + $0x80] sm:$0xff] %vm2569, %v2530
        %2588 = vst.msk [vmem:[#allocation2 + $0x88] sm:$0xf] %vm2571, %v2532
        %2589 = vst.msk [vmem:[#allocation2 + $0x90] sm:$0xff] %vm2569, %v2534
        %2590 = vst.msk [vmem:[#allocation2 + $0x98] sm:$0xf] %vm2571, %v2536
        %2591 = vst.msk [vmem:[#allocation2 + $0xa0] sm:$0xff] %vm2569, %v2538
        %2592 = vst.msk [vmem:[#allocation2 + $0xa8] sm:$0xf] %vm2571, %v2540
        %2593 = vst.msk [vmem:[#allocation2 + $0xb0] sm:$0xff] %vm2569, %v2542
        %2594 = vst.msk [vmem:[#allocation2 + $0xb8] sm:$0xf] %vm2571, %v2544
        %v2595 = vld [vmem:[%s2010 + $0x4] sm:$0xff]
        %v2596 = vld [vmem:[%s2010 + $0xc] sm:$0xf]
        %v2597 = vld [vmem:[%s2010 + $0x14] sm:$0xff]
        %v2598 = vld [vmem:[%s2010 + $0x1c] sm:$0xf]
        %v2599 = vld [vmem:[%s2010 + $0x24] sm:$0xff]
        %v2600 = vld [vmem:[%s2010 + $0x2c] sm:$0xf]
        %v2601 = vld [vmem:[%s2010 + $0x34] sm:$0xff]
        %v2602 = vld [vmem:[%s2010 + $0x3c] sm:$0xf]
        %v2603 = vld [vmem:[%s2010 + $0x44] sm:$0xff]
        %v2604 = vld [vmem:[%s2010 + $0x4c] sm:$0xf]
        %v2605 = vld [vmem:[%s2010 + $0x54] sm:$0xff]
        %v2606 = vld [vmem:[%s2010 + $0x5c] sm:$0xf]
        %v2607 = vld [vmem:[%s2010 + $0x64] sm:$0xff]
        %v2608 = vld [vmem:[%s2010 + $0x6c] sm:$0xf]
        %v2609 = vld [vmem:[%s2010 + $0x74] sm:$0xff]
        %v2610 = vld [vmem:[%s2010 + $0x7c] sm:$0xf]
        %v2611 = vld [vmem:[%s2010 + $0x84] sm:$0xff]
        %v2612 = vld [vmem:[%s2010 + $0x8c] sm:$0xf]
        %v2613 = vld [vmem:[%s2010 + $0x94] sm:$0xff]
        %v2614 = vld [vmem:[%s2010 + $0x9c] sm:$0xf]
        %v2615 = vld [vmem:[%s2010 + $0xa4] sm:$0xff]
        %v2616 = vld [vmem:[%s2010 + $0xac] sm:$0xf]
        %v2617 = vld [vmem:[%s2010 + $0xb4] sm:$0xff]
        %v2618 = vld [vmem:[%s2010 + $0xbc] sm:$0xf]
        %2643 = vrot.lane.b32.xlu0 %v2595, 56
        %v2644 = vpop.permute.xlu0 %2643
        %2645 = vrot.lane.b32.xlu0 %v2596, 56
        %v2646 = vpop.permute.xlu0 %2645
        %2647 = vrot.lane.b32.xlu0 %v2597, 56
        %v2648 = vpop.permute.xlu0 %2647
        %2649 = vrot.lane.b32.xlu0 %v2598, 56
        %v2650 = vpop.permute.xlu0 %2649
        %2651 = vrot.lane.b32.xlu0 %v2599, 56
        %v2652 = vpop.permute.xlu0 %2651
        %2653 = vrot.lane.b32.xlu0 %v2600, 56
        %v2654 = vpop.permute.xlu0 %2653
        %2655 = vrot.lane.b32.xlu0 %v2601, 56
        %v2656 = vpop.permute.xlu0 %2655
        %2657 = vrot.lane.b32.xlu0 %v2602, 56
        %v2658 = vpop.permute.xlu0 %2657
        %2659 = vrot.lane.b32.xlu0 %v2603, 56
        %v2660 = vpop.permute.xlu0 %2659
        %2661 = vrot.lane.b32.xlu0 %v2604, 56
        %v2662 = vpop.permute.xlu0 %2661
        %2663 = vrot.lane.b32.xlu0 %v2605, 56
        %v2664 = vpop.permute.xlu0 %2663
        %2665 = vrot.lane.b32.xlu0 %v2606, 56
        %v2666 = vpop.permute.xlu0 %2665
        %2667 = vrot.lane.b32.xlu0 %v2607, 56
        %v2668 = vpop.permute.xlu0 %2667
        %2669 = vrot.lane.b32.xlu0 %v2608, 56
        %v2670 = vpop.permute.xlu0 %2669
        %2671 = vrot.lane.b32.xlu0 %v2609, 56
        %v2672 = vpop.permute.xlu0 %2671
        %2673 = vrot.lane.b32.xlu0 %v2610, 56
        %v2674 = vpop.permute.xlu0 %2673
        %2675 = vrot.lane.b32.xlu0 %v2611, 56
        %v2676 = vpop.permute.xlu0 %2675
        %2677 = vrot.lane.b32.xlu0 %v2612, 56
        %v2678 = vpop.permute.xlu0 %2677
        %2679 = vrot.lane.b32.xlu0 %v2613, 56
        %v2680 = vpop.permute.xlu0 %2679
        %2681 = vrot.lane.b32.xlu0 %v2614, 56
        %v2682 = vpop.permute.xlu0 %2681
        %2683 = vrot.lane.b32.xlu0 %v2615, 56
        %v2684 = vpop.permute.xlu0 %2683
        %2685 = vrot.lane.b32.xlu0 %v2616, 56
        %v2686 = vpop.permute.xlu0 %2685
        %2687 = vrot.lane.b32.xlu0 %v2617, 56
        %v2688 = vpop.permute.xlu0 %2687
        %2689 = vrot.lane.b32.xlu0 %v2618, 56
        %v2690 = vpop.permute.xlu0 %2689
        %vm2715 = vcmask 490944
        %2716 = vst.msk [vmem:[#allocation2] sm:$0xff] %vm2715, %v2644
        %vm2717 = vcmask 486848
        %2718 = vst.msk [vmem:[#allocation2 + $0x8] sm:$0xf] %vm2717, %v2646
        %2719 = vst.msk [vmem:[#allocation2 + $0x10] sm:$0xff] %vm2715, %v2648
        %2720 = vst.msk [vmem:[#allocation2 + $0x18] sm:$0xf] %vm2717, %v2650
        %2721 = vst.msk [vmem:[#allocation2 + $0x20] sm:$0xff] %vm2715, %v2652
        %2722 = vst.msk [vmem:[#allocation2 + $0x28] sm:$0xf] %vm2717, %v2654
        %2723 = vst.msk [vmem:[#allocation2 + $0x30] sm:$0xff] %vm2715, %v2656
        %2724 = vst.msk [vmem:[#allocation2 + $0x38] sm:$0xf] %vm2717, %v2658
        %2725 = vst.msk [vmem:[#allocation2 + $0x40] sm:$0xff] %vm2715, %v2660
        %2726 = vst.msk [vmem:[#allocation2 + $0x48] sm:$0xf] %vm2717, %v2662
        %2727 = vst.msk [vmem:[#allocation2 + $0x50] sm:$0xff] %vm2715, %v2664
        %2728 = vst.msk [vmem:[#allocation2 + $0x58] sm:$0xf] %vm2717, %v2666
        %2729 = vst.msk [vmem:[#allocation2 + $0x60] sm:$0xff] %vm2715, %v2668
        %2730 = vst.msk [vmem:[#allocation2 + $0x68] sm:$0xf] %vm2717, %v2670
        %2731 = vst.msk [vmem:[#allocation2 + $0x70] sm:$0xff] %vm2715, %v2672
        %2732 = vst.msk [vmem:[#allocation2 + $0x78] sm:$0xf] %vm2717, %v2674
        %2733 = vst.msk [vmem:[#allocation2 + $0x80] sm:$0xff] %vm2715, %v2676
        %2734 = vst.msk [vmem:[#allocation2 + $0x88] sm:$0xf] %vm2717, %v2678
        %2735 = vst.msk [vmem:[#allocation2 + $0x90] sm:$0xff] %vm2715, %v2680
        %2736 = vst.msk [vmem:[#allocation2 + $0x98] sm:$0xf] %vm2717, %v2682
        %2737 = vst.msk [vmem:[#allocation2 + $0xa0] sm:$0xff] %vm2715, %v2684
        %2738 = vst.msk [vmem:[#allocation2 + $0xa8] sm:$0xf] %vm2717, %v2686
        %2739 = vst.msk [vmem:[#allocation2 + $0xb0] sm:$0xff] %vm2715, %v2688
        %2740 = vst.msk [vmem:[#allocation2 + $0xb8] sm:$0xf] %vm2717, %v2690
        %s2741 = scalar_lea.vmem %s477, 48
        %v2742 = vld [vmem:[%s2741] sm:$0xff]
        %v2743 = vld [vmem:[%s2741 + $0x8] sm:$0xf]
        %v2744 = vld [vmem:[%s2741 + $0x10] sm:$0xff]
        %v2745 = vld [vmem:[%s2741 + $0x18] sm:$0xf]
        %v2746 = vld [vmem:[%s2741 + $0x20] sm:$0xff]
        %v2747 = vld [vmem:[%s2741 + $0x28] sm:$0xf]
        %v2748 = vld [vmem:[%s2741 + $0x30] sm:$0xff]
        %v2749 = vld [vmem:[%s2741 + $0x38] sm:$0xf]
        %v2750 = vld [vmem:[%s2741 + $0x40] sm:$0xff]
        %v2751 = vld [vmem:[%s2741 + $0x48] sm:$0xf]
        %v2752 = vld [vmem:[%s2741 + $0x50] sm:$0xff]
        %v2753 = vld [vmem:[%s2741 + $0x58] sm:$0xf]
        %v2754 = vld [vmem:[%s2741 + $0x60] sm:$0xff]
        %v2755 = vld [vmem:[%s2741 + $0x68] sm:$0xf]
        %v2756 = vld [vmem:[%s2741 + $0x70] sm:$0xff]
        %v2757 = vld [vmem:[%s2741 + $0x78] sm:$0xf]
        %v2758 = vld [vmem:[%s2741 + $0x80] sm:$0xff]
        %v2759 = vld [vmem:[%s2741 + $0x88] sm:$0xf]
        %v2760 = vld [vmem:[%s2741 + $0x90] sm:$0xff]
        %v2761 = vld [vmem:[%s2741 + $0x98] sm:$0xf]
        %v2762 = vld [vmem:[%s2741 + $0xa0] sm:$0xff]
        %v2763 = vld [vmem:[%s2741 + $0xa8] sm:$0xf]
        %v2764 = vld [vmem:[%s2741 + $0xb0] sm:$0xff]
        %v2765 = vld [vmem:[%s2741 + $0xb8] sm:$0xf]
        %2790 = vrot.lane.b32.xlu0 %v2742, 60
        %v2791 = vpop.permute.xlu0 %2790
        %2792 = vrot.lane.b32.xlu0 %v2743, 60
        %v2793 = vpop.permute.xlu0 %2792
        %2794 = vrot.lane.b32.xlu0 %v2744, 60
        %v2795 = vpop.permute.xlu0 %2794
        %2796 = vrot.lane.b32.xlu0 %v2745, 60
        %v2797 = vpop.permute.xlu0 %2796
        %2798 = vrot.lane.b32.xlu0 %v2746, 60
        %v2799 = vpop.permute.xlu0 %2798
        %2800 = vrot.lane.b32.xlu0 %v2747, 60
        %v2801 = vpop.permute.xlu0 %2800
        %2802 = vrot.lane.b32.xlu0 %v2748, 60
        %v2803 = vpop.permute.xlu0 %2802
        %2804 = vrot.lane.b32.xlu0 %v2749, 60
        %v2805 = vpop.permute.xlu0 %2804
        %2806 = vrot.lane.b32.xlu0 %v2750, 60
        %v2807 = vpop.permute.xlu0 %2806
        %2808 = vrot.lane.b32.xlu0 %v2751, 60
        %v2809 = vpop.permute.xlu0 %2808
        %2810 = vrot.lane.b32.xlu0 %v2752, 60
        %v2811 = vpop.permute.xlu0 %2810
        %2812 = vrot.lane.b32.xlu0 %v2753, 60
        %v2813 = vpop.permute.xlu0 %2812
        %2814 = vrot.lane.b32.xlu0 %v2754, 60
        %v2815 = vpop.permute.xlu0 %2814
        %2816 = vrot.lane.b32.xlu0 %v2755, 60
        %v2817 = vpop.permute.xlu0 %2816
        %2818 = vrot.lane.b32.xlu0 %v2756, 60
        %v2819 = vpop.permute.xlu0 %2818
        %2820 = vrot.lane.b32.xlu0 %v2757, 60
        %v2821 = vpop.permute.xlu0 %2820
        %2822 = vrot.lane.b32.xlu0 %v2758, 60
        %v2823 = vpop.permute.xlu0 %2822
        %2824 = vrot.lane.b32.xlu0 %v2759, 60
        %v2825 = vpop.permute.xlu0 %2824
        %2826 = vrot.lane.b32.xlu0 %v2760, 60
        %v2827 = vpop.permute.xlu0 %2826
        %2828 = vrot.lane.b32.xlu0 %v2761, 60
        %v2829 = vpop.permute.xlu0 %2828
        %2830 = vrot.lane.b32.xlu0 %v2762, 60
        %v2831 = vpop.permute.xlu0 %2830
        %2832 = vrot.lane.b32.xlu0 %v2763, 60
        %v2833 = vpop.permute.xlu0 %2832
        %2834 = vrot.lane.b32.xlu0 %v2764, 60
        %v2835 = vpop.permute.xlu0 %2834
        %2836 = vrot.lane.b32.xlu0 %v2765, 60
        %v2837 = vpop.permute.xlu0 %2836
        %vm2862 = vcmask 523744
        %2863 = vst.msk [vmem:[#allocation2] sm:$0xff] %vm2862, %v2791
        %vm2864 = vcmask 519648
        %2865 = vst.msk [vmem:[#allocation2 + $0x8] sm:$0xf] %vm2864, %v2793
        %2866 = vst.msk [vmem:[#allocation2 + $0x10] sm:$0xff] %vm2862, %v2795
        %2867 = vst.msk [vmem:[#allocation2 + $0x18] sm:$0xf] %vm2864, %v2797
        %2868 = vst.msk [vmem:[#allocation2 + $0x20] sm:$0xff] %vm2862, %v2799
        %2869 = vst.msk [vmem:[#allocation2 + $0x28] sm:$0xf] %vm2864, %v2801
        %2870 = vst.msk [vmem:[#allocation2 + $0x30] sm:$0xff] %vm2862, %v2803
        %2871 = vst.msk [vmem:[#allocation2 + $0x38] sm:$0xf] %vm2864, %v2805
        %2872 = vst.msk [vmem:[#allocation2 + $0x40] sm:$0xff] %vm2862, %v2807
        %2873 = vst.msk [vmem:[#allocation2 + $0x48] sm:$0xf] %vm2864, %v2809
        %2874 = vst.msk [vmem:[#allocation2 + $0x50] sm:$0xff] %vm2862, %v2811
        %2875 = vst.msk [vmem:[#allocation2 + $0x58] sm:$0xf] %vm2864, %v2813
        %2876 = vst.msk [vmem:[#allocation2 + $0x60] sm:$0xff] %vm2862, %v2815
        %2877 = vst.msk [vmem:[#allocation2 + $0x68] sm:$0xf] %vm2864, %v2817
        %2878 = vst.msk [vmem:[#allocation2 + $0x70] sm:$0xff] %vm2862, %v2819
        %2879 = vst.msk [vmem:[#allocation2 + $0x78] sm:$0xf] %vm2864, %v2821
        %2880 = vst.msk [vmem:[#allocation2 + $0x80] sm:$0xff] %vm2862, %v2823
        %2881 = vst.msk [vmem:[#allocation2 + $0x88] sm:$0xf] %vm2864, %v2825
        %2882 = vst.msk [vmem:[#allocation2 + $0x90] sm:$0xff] %vm2862, %v2827
        %2883 = vst.msk [vmem:[#allocation2 + $0x98] sm:$0xf] %vm2864, %v2829
        %2884 = vst.msk [vmem:[#allocation2 + $0xa0] sm:$0xff] %vm2862, %v2831
        %2885 = vst.msk [vmem:[#allocation2 + $0xa8] sm:$0xf] %vm2864, %v2833
        %2886 = vst.msk [vmem:[#allocation2 + $0xb0] sm:$0xff] %vm2862, %v2835
        %2887 = vst.msk [vmem:[#allocation2 + $0xb8] sm:$0xf] %vm2864, %v2837
        %v2888 = vld [vmem:[%s2741 + $0x1] sm:$0xff]
        %v2889 = vld [vmem:[%s2741 + $0x9] sm:$0xf]
        %v2890 = vld [vmem:[%s2741 + $0x11] sm:$0xff]
        %v2891 = vld [vmem:[%s2741 + $0x19] sm:$0xf]
        %v2892 = vld [vmem:[%s2741 + $0x21] sm:$0xff]
        %v2893 = vld [vmem:[%s2741 + $0x29] sm:$0xf]
        %v2894 = vld [vmem:[%s2741 + $0x31] sm:$0xff]
        %v2895 = vld [vmem:[%s2741 + $0x39] sm:$0xf]
        %v2896 = vld [vmem:[%s2741 + $0x41] sm:$0xff]
        %v2897 = vld [vmem:[%s2741 + $0x49] sm:$0xf]
        %v2898 = vld [vmem:[%s2741 + $0x51] sm:$0xff]
        %v2899 = vld [vmem:[%s2741 + $0x59] sm:$0xf]
        %v2900 = vld [vmem:[%s2741 + $0x61] sm:$0xff]
        %v2901 = vld [vmem:[%s2741 + $0x69] sm:$0xf]
        %v2902 = vld [vmem:[%s2741 + $0x71] sm:$0xff]
        %v2903 = vld [vmem:[%s2741 + $0x79] sm:$0xf]
        %v2904 = vld [vmem:[%s2741 + $0x81] sm:$0xff]
        %v2905 = vld [vmem:[%s2741 + $0x89] sm:$0xf]
        %v2906 = vld [vmem:[%s2741 + $0x91] sm:$0xff]
        %v2907 = vld [vmem:[%s2741 + $0x99] sm:$0xf]
        %v2908 = vld [vmem:[%s2741 + $0xa1] sm:$0xff]
        %v2909 = vld [vmem:[%s2741 + $0xa9] sm:$0xf]
        %v2910 = vld [vmem:[%s2741 + $0xb1] sm:$0xff]
        %v2911 = vld [vmem:[%s2741 + $0xb9] sm:$0xf]
        %2936 = vrot.lane.b32.xlu0 %v2888, 64
        %v2937 = vpop.permute.xlu0 %2936
        %2938 = vrot.lane.b32.xlu0 %v2889, 64
        %v2939 = vpop.permute.xlu0 %2938
        %2940 = vrot.lane.b32.xlu0 %v2890, 64
        %v2941 = vpop.permute.xlu0 %2940
        %2942 = vrot.lane.b32.xlu0 %v2891, 64
        %v2943 = vpop.permute.xlu0 %2942
        %2944 = vrot.lane.b32.xlu0 %v2892, 64
        %v2945 = vpop.permute.xlu0 %2944
        %2946 = vrot.lane.b32.xlu0 %v2893, 64
        %v2947 = vpop.permute.xlu0 %2946
        %2948 = vrot.lane.b32.xlu0 %v2894, 64
        %v2949 = vpop.permute.xlu0 %2948
        %2950 = vrot.lane.b32.xlu0 %v2895, 64
        %v2951 = vpop.permute.xlu0 %2950
        %2952 = vrot.lane.b32.xlu0 %v2896, 64
        %v2953 = vpop.permute.xlu0 %2952
        %2954 = vrot.lane.b32.xlu0 %v2897, 64
        %v2955 = vpop.permute.xlu0 %2954
        %2956 = vrot.lane.b32.xlu0 %v2898, 64
        %v2957 = vpop.permute.xlu0 %2956
        %2958 = vrot.lane.b32.xlu0 %v2899, 64
        %v2959 = vpop.permute.xlu0 %2958
        %2960 = vrot.lane.b32.xlu0 %v2900, 64
        %v2961 = vpop.permute.xlu0 %2960
        %2962 = vrot.lane.b32.xlu0 %v2901, 64
        %v2963 = vpop.permute.xlu0 %2962
        %2964 = vrot.lane.b32.xlu0 %v2902, 64
        %v2965 = vpop.permute.xlu0 %2964
        %2966 = vrot.lane.b32.xlu0 %v2903, 64
        %v2967 = vpop.permute.xlu0 %2966
        %2968 = vrot.lane.b32.xlu0 %v2904, 64
        %v2969 = vpop.permute.xlu0 %2968
        %2970 = vrot.lane.b32.xlu0 %v2905, 64
        %v2971 = vpop.permute.xlu0 %2970
        %2972 = vrot.lane.b32.xlu0 %v2906, 64
        %v2973 = vpop.permute.xlu0 %2972
        %2974 = vrot.lane.b32.xlu0 %v2907, 64
        %v2975 = vpop.permute.xlu0 %2974
        %2976 = vrot.lane.b32.xlu0 %v2908, 64
        %v2977 = vpop.permute.xlu0 %2976
        %2978 = vrot.lane.b32.xlu0 %v2909, 64
        %v2979 = vpop.permute.xlu0 %2978
        %2980 = vrot.lane.b32.xlu0 %v2910, 64
        %v2981 = vpop.permute.xlu0 %2980
        %2982 = vrot.lane.b32.xlu0 %v2911, 64
        %v2983 = vpop.permute.xlu0 %2982
        %vm3008 = vcmask 556544
        %3009 = vst.msk [vmem:[#allocation2] sm:$0xff] %vm3008, %v2937
        %vm3010 = vcmask 552448
        %3011 = vst.msk [vmem:[#allocation2 + $0x8] sm:$0xf] %vm3010, %v2939
        %3012 = vst.msk [vmem:[#allocation2 + $0x10] sm:$0xff] %vm3008, %v2941
        %3013 = vst.msk [vmem:[#allocation2 + $0x18] sm:$0xf] %vm3010, %v2943
        %3014 = vst.msk [vmem:[#allocation2 + $0x20] sm:$0xff] %vm3008, %v2945
        %3015 = vst.msk [vmem:[#allocation2 + $0x28] sm:$0xf] %vm3010, %v2947
        %3016 = vst.msk [vmem:[#allocation2 + $0x30] sm:$0xff] %vm3008, %v2949
        %3017 = vst.msk [vmem:[#allocation2 + $0x38] sm:$0xf] %vm3010, %v2951
        %3018 = vst.msk [vmem:[#allocation2 + $0x40] sm:$0xff] %vm3008, %v2953
        %3019 = vst.msk [vmem:[#allocation2 + $0x48] sm:$0xf] %vm3010, %v2955
        %3020 = vst.msk [vmem:[#allocation2 + $0x50] sm:$0xff] %vm3008, %v2957
        %3021 = vst.msk [vmem:[#allocation2 + $0x58] sm:$0xf] %vm3010, %v2959
        %3022 = vst.msk [vmem:[#allocation2 + $0x60] sm:$0xff] %vm3008, %v2961
        %3023 = vst.msk [vmem:[#allocation2 + $0x68] sm:$0xf] %vm3010, %v2963
        %3024 = vst.msk [vmem:[#allocation2 + $0x70] sm:$0xff] %vm3008, %v2965
        %3025 = vst.msk [vmem:[#allocation2 + $0x78] sm:$0xf] %vm3010, %v2967
        %3026 = vst.msk [vmem:[#allocation2 + $0x80] sm:$0xff] %vm3008, %v2969
        %3027 = vst.msk [vmem:[#allocation2 + $0x88] sm:$0xf] %vm3010, %v2971
        %3028 = vst.msk [vmem:[#allocation2 + $0x90] sm:$0xff] %vm3008, %v2973
        %3029 = vst.msk [vmem:[#allocation2 + $0x98] sm:$0xf] %vm3010, %v2975
        %3030 = vst.msk [vmem:[#allocation2 + $0xa0] sm:$0xff] %vm3008, %v2977
        %3031 = vst.msk [vmem:[#allocation2 + $0xa8] sm:$0xf] %vm3010, %v2979
        %3032 = vst.msk [vmem:[#allocation2 + $0xb0] sm:$0xff] %vm3008, %v2981
        %3033 = vst.msk [vmem:[#allocation2 + $0xb8] sm:$0xf] %vm3010, %v2983
        %v3034 = vld [vmem:[%s2741 + $0x2] sm:$0xff]
        %v3035 = vld [vmem:[%s2741 + $0xa] sm:$0xf]
        %v3036 = vld [vmem:[%s2741 + $0x12] sm:$0xff]
        %v3037 = vld [vmem:[%s2741 + $0x1a] sm:$0xf]
        %v3038 = vld [vmem:[%s2741 + $0x22] sm:$0xff]
        %v3039 = vld [vmem:[%s2741 + $0x2a] sm:$0xf]
        %v3040 = vld [vmem:[%s2741 + $0x32] sm:$0xff]
        %v3041 = vld [vmem:[%s2741 + $0x3a] sm:$0xf]
        %v3042 = vld [vmem:[%s2741 + $0x42] sm:$0xff]
        %v3043 = vld [vmem:[%s2741 + $0x4a] sm:$0xf]
        %v3044 = vld [vmem:[%s2741 + $0x52] sm:$0xff]
        %v3045 = vld [vmem:[%s2741 + $0x5a] sm:$0xf]
        %v3046 = vld [vmem:[%s2741 + $0x62] sm:$0xff]
        %v3047 = vld [vmem:[%s2741 + $0x6a] sm:$0xf]
        %v3048 = vld [vmem:[%s2741 + $0x72] sm:$0xff]
        %v3049 = vld [vmem:[%s2741 + $0x7a] sm:$0xf]
        %v3050 = vld [vmem:[%s2741 + $0x82] sm:$0xff]
        %v3051 = vld [vmem:[%s2741 + $0x8a] sm:$0xf]
        %v3052 = vld [vmem:[%s2741 + $0x92] sm:$0xff]
        %v3053 = vld [vmem:[%s2741 + $0x9a] sm:$0xf]
        %v3054 = vld [vmem:[%s2741 + $0xa2] sm:$0xff]
        %v3055 = vld [vmem:[%s2741 + $0xaa] sm:$0xf]
        %v3056 = vld [vmem:[%s2741 + $0xb2] sm:$0xff]
        %v3057 = vld [vmem:[%s2741 + $0xba] sm:$0xf]
        %3082 = vrot.lane.b32.xlu0 %v3034, 68
        %v3083 = vpop.permute.xlu0 %3082
        %3084 = vrot.lane.b32.xlu0 %v3035, 68
        %v3085 = vpop.permute.xlu0 %3084
        %3086 = vrot.lane.b32.xlu0 %v3036, 68
        %v3087 = vpop.permute.xlu0 %3086
        %3088 = vrot.lane.b32.xlu0 %v3037, 68
        %v3089 = vpop.permute.xlu0 %3088
        %3090 = vrot.lane.b32.xlu0 %v3038, 68
        %v3091 = vpop.permute.xlu0 %3090
        %3092 = vrot.lane.b32.xlu0 %v3039, 68
        %v3093 = vpop.permute.xlu0 %3092
        %3094 = vrot.lane.b32.xlu0 %v3040, 68
        %v3095 = vpop.permute.xlu0 %3094
        %3096 = vrot.lane.b32.xlu0 %v3041, 68
        %v3097 = vpop.permute.xlu0 %3096
        %3098 = vrot.lane.b32.xlu0 %v3042, 68
        %v3099 = vpop.permute.xlu0 %3098
        %3100 = vrot.lane.b32.xlu0 %v3043, 68
        %v3101 = vpop.permute.xlu0 %3100
        %3102 = vrot.lane.b32.xlu0 %v3044, 68
        %v3103 = vpop.permute.xlu0 %3102
        %3104 = vrot.lane.b32.xlu0 %v3045, 68
        %v3105 = vpop.permute.xlu0 %3104
        %3106 = vrot.lane.b32.xlu0 %v3046, 68
        %v3107 = vpop.permute.xlu0 %3106
        %3108 = vrot.lane.b32.xlu0 %v3047, 68
        %v3109 = vpop.permute.xlu0 %3108
        %3110 = vrot.lane.b32.xlu0 %v3048, 68
        %v3111 = vpop.permute.xlu0 %3110
        %3112 = vrot.lane.b32.xlu0 %v3049, 68
        %v3113 = vpop.permute.xlu0 %3112
        %3114 = vrot.lane.b32.xlu0 %v3050, 68
        %v3115 = vpop.permute.xlu0 %3114
        %3116 = vrot.lane.b32.xlu0 %v3051, 68
        %v3117 = vpop.permute.xlu0 %3116
        %3118 = vrot.lane.b32.xlu0 %v3052, 68
        %v3119 = vpop.permute.xlu0 %3118
        %3120 = vrot.lane.b32.xlu0 %v3053, 68
        %v3121 = vpop.permute.xlu0 %3120
        %3122 = vrot.lane.b32.xlu0 %v3054, 68
        %v3123 = vpop.permute.xlu0 %3122
        %3124 = vrot.lane.b32.xlu0 %v3055, 68
        %v3125 = vpop.permute.xlu0 %3124
        %3126 = vrot.lane.b32.xlu0 %v3056, 68
        %v3127 = vpop.permute.xlu0 %3126
        %3128 = vrot.lane.b32.xlu0 %v3057, 68
        %v3129 = vpop.permute.xlu0 %3128
        %vm3154 = vcmask 589344
        %3155 = vst.msk [vmem:[#allocation2] sm:$0xff] %vm3154, %v3083
        %vm3156 = vcmask 585248
        %3157 = vst.msk [vmem:[#allocation2 + $0x8] sm:$0xf] %vm3156, %v3085
        %3158 = vst.msk [vmem:[#allocation2 + $0x10] sm:$0xff] %vm3154, %v3087
        %3159 = vst.msk [vmem:[#allocation2 + $0x18] sm:$0xf] %vm3156, %v3089
        %3160 = vst.msk [vmem:[#allocation2 + $0x20] sm:$0xff] %vm3154, %v3091
        %3161 = vst.msk [vmem:[#allocation2 + $0x28] sm:$0xf] %vm3156, %v3093
        %3162 = vst.msk [vmem:[#allocation2 + $0x30] sm:$0xff] %vm3154, %v3095
        %3163 = vst.msk [vmem:[#allocation2 + $0x38] sm:$0xf] %vm3156, %v3097
        %3164 = vst.msk [vmem:[#allocation2 + $0x40] sm:$0xff] %vm3154, %v3099
        %3165 = vst.msk [vmem:[#allocation2 + $0x48] sm:$0xf] %vm3156, %v3101
        %3166 = vst.msk [vmem:[#allocation2 + $0x50] sm:$0xff] %vm3154, %v3103
        %3167 = vst.msk [vmem:[#allocation2 + $0x58] sm:$0xf] %vm3156, %v3105
        %3168 = vst.msk [vmem:[#allocation2 + $0x60] sm:$0xff] %vm3154, %v3107
        %3169 = vst.msk [vmem:[#allocation2 + $0x68] sm:$0xf] %vm3156, %v3109
        %3170 = vst.msk [vmem:[#allocation2 + $0x70] sm:$0xff] %vm3154, %v3111
        %3171 = vst.msk [vmem:[#allocation2 + $0x78] sm:$0xf] %vm3156, %v3113
        %3172 = vst.msk [vmem:[#allocation2 + $0x80] sm:$0xff] %vm3154, %v3115
        %3173 = vst.msk [vmem:[#allocation2 + $0x88] sm:$0xf] %vm3156, %v3117
        %3174 = vst.msk [vmem:[#allocation2 + $0x90] sm:$0xff] %vm3154, %v3119
        %3175 = vst.msk [vmem:[#allocation2 + $0x98] sm:$0xf] %vm3156, %v3121
        %3176 = vst.msk [vmem:[#allocation2 + $0xa0] sm:$0xff] %vm3154, %v3123
        %3177 = vst.msk [vmem:[#allocation2 + $0xa8] sm:$0xf] %vm3156, %v3125
        %3178 = vst.msk [vmem:[#allocation2 + $0xb0] sm:$0xff] %vm3154, %v3127
        %3179 = vst.msk [vmem:[#allocation2 + $0xb8] sm:$0xf] %vm3156, %v3129
        %v3180 = vld [vmem:[%s2741 + $0x3] sm:$0xff]
        %v3181 = vld [vmem:[%s2741 + $0xb] sm:$0xf]
        %v3182 = vld [vmem:[%s2741 + $0x13] sm:$0xff]
        %v3183 = vld [vmem:[%s2741 + $0x1b] sm:$0xf]
        %v3184 = vld [vmem:[%s2741 + $0x23] sm:$0xff]
        %v3185 = vld [vmem:[%s2741 + $0x2b] sm:$0xf]
        %v3186 = vld [vmem:[%s2741 + $0x33] sm:$0xff]
        %v3187 = vld [vmem:[%s2741 + $0x3b] sm:$0xf]
        %v3188 = vld [vmem:[%s2741 + $0x43] sm:$0xff]
        %v3189 = vld [vmem:[%s2741 + $0x4b] sm:$0xf]
        %v3190 = vld [vmem:[%s2741 + $0x53] sm:$0xff]
        %v3191 = vld [vmem:[%s2741 + $0x5b] sm:$0xf]
        %v3192 = vld [vmem:[%s2741 + $0x63] sm:$0xff]
        %v3193 = vld [vmem:[%s2741 + $0x6b] sm:$0xf]
        %v3194 = vld [vmem:[%s2741 + $0x73] sm:$0xff]
        %v3195 = vld [vmem:[%s2741 + $0x7b] sm:$0xf]
        %v3196 = vld [vmem:[%s2741 + $0x83] sm:$0xff]
        %v3197 = vld [vmem:[%s2741 + $0x8b] sm:$0xf]
        %v3198 = vld [vmem:[%s2741 + $0x93] sm:$0xff]
        %v3199 = vld [vmem:[%s2741 + $0x9b] sm:$0xf]
        %v3200 = vld [vmem:[%s2741 + $0xa3] sm:$0xff]
        %v3201 = vld [vmem:[%s2741 + $0xab] sm:$0xf]
        %v3202 = vld [vmem:[%s2741 + $0xb3] sm:$0xff]
        %v3203 = vld [vmem:[%s2741 + $0xbb] sm:$0xf]
        %3228 = vrot.lane.b32.xlu0 %v3180, 72
        %v3229 = vpop.permute.xlu0 %3228
        %3230 = vrot.lane.b32.xlu0 %v3181, 72
        %v3231 = vpop.permute.xlu0 %3230
        %3232 = vrot.lane.b32.xlu0 %v3182, 72
        %v3233 = vpop.permute.xlu0 %3232
        %3234 = vrot.lane.b32.xlu0 %v3183, 72
        %v3235 = vpop.permute.xlu0 %3234
        %3236 = vrot.lane.b32.xlu0 %v3184, 72
        %v3237 = vpop.permute.xlu0 %3236
        %3238 = vrot.lane.b32.xlu0 %v3185, 72
        %v3239 = vpop.permute.xlu0 %3238
        %3240 = vrot.lane.b32.xlu0 %v3186, 72
        %v3241 = vpop.permute.xlu0 %3240
        %3242 = vrot.lane.b32.xlu0 %v3187, 72
        %v3243 = vpop.permute.xlu0 %3242
        %3244 = vrot.lane.b32.xlu0 %v3188, 72
        %v3245 = vpop.permute.xlu0 %3244
        %3246 = vrot.lane.b32.xlu0 %v3189, 72
        %v3247 = vpop.permute.xlu0 %3246
        %3248 = vrot.lane.b32.xlu0 %v3190, 72
        %v3249 = vpop.permute.xlu0 %3248
        %3250 = vrot.lane.b32.xlu0 %v3191, 72
        %v3251 = vpop.permute.xlu0 %3250
        %3252 = vrot.lane.b32.xlu0 %v3192, 72
        %v3253 = vpop.permute.xlu0 %3252
        %3254 = vrot.lane.b32.xlu0 %v3193, 72
        %v3255 = vpop.permute.xlu0 %3254
        %3256 = vrot.lane.b32.xlu0 %v3194, 72
        %v3257 = vpop.permute.xlu0 %3256
        %3258 = vrot.lane.b32.xlu0 %v3195, 72
        %v3259 = vpop.permute.xlu0 %3258
        %3260 = vrot.lane.b32.xlu0 %v3196, 72
        %v3261 = vpop.permute.xlu0 %3260
        %3262 = vrot.lane.b32.xlu0 %v3197, 72
        %v3263 = vpop.permute.xlu0 %3262
        %3264 = vrot.lane.b32.xlu0 %v3198, 72
        %v3265 = vpop.permute.xlu0 %3264
        %3266 = vrot.lane.b32.xlu0 %v3199, 72
        %v3267 = vpop.permute.xlu0 %3266
        %3268 = vrot.lane.b32.xlu0 %v3200, 72
        %v3269 = vpop.permute.xlu0 %3268
        %3270 = vrot.lane.b32.xlu0 %v3201, 72
        %v3271 = vpop.permute.xlu0 %3270
        %3272 = vrot.lane.b32.xlu0 %v3202, 72
        %v3273 = vpop.permute.xlu0 %3272
        %3274 = vrot.lane.b32.xlu0 %v3203, 72
        %v3275 = vpop.permute.xlu0 %3274
        %vm3300 = vcmask 622144
        %3301 = vst.msk [vmem:[#allocation2] sm:$0xff] %vm3300, %v3229
        %vm3302 = vcmask 618048
        %3303 = vst.msk [vmem:[#allocation2 + $0x8] sm:$0xf] %vm3302, %v3231
        %3304 = vst.msk [vmem:[#allocation2 + $0x10] sm:$0xff] %vm3300, %v3233
        %3305 = vst.msk [vmem:[#allocation2 + $0x18] sm:$0xf] %vm3302, %v3235
        %3306 = vst.msk [vmem:[#allocation2 + $0x20] sm:$0xff] %vm3300, %v3237
        %3307 = vst.msk [vmem:[#allocation2 + $0x28] sm:$0xf] %vm3302, %v3239
        %3308 = vst.msk [vmem:[#allocation2 + $0x30] sm:$0xff] %vm3300, %v3241
        %3309 = vst.msk [vmem:[#allocation2 + $0x38] sm:$0xf] %vm3302, %v3243
        %3310 = vst.msk [vmem:[#allocation2 + $0x40] sm:$0xff] %vm3300, %v3245
        %3311 = vst.msk [vmem:[#allocation2 + $0x48] sm:$0xf] %vm3302, %v3247
        %3312 = vst.msk [vmem:[#allocation2 + $0x50] sm:$0xff] %vm3300, %v3249
        %3313 = vst.msk [vmem:[#allocation2 + $0x58] sm:$0xf] %vm3302, %v3251
        %3314 = vst.msk [vmem:[#allocation2 + $0x60] sm:$0xff] %vm3300, %v3253
        %3315 = vst.msk [vmem:[#allocation2 + $0x68] sm:$0xf] %vm3302, %v3255
        %3316 = vst.msk [vmem:[#allocation2 + $0x70] sm:$0xff] %vm3300, %v3257
        %3317 = vst.msk [vmem:[#allocation2 + $0x78] sm:$0xf] %vm3302, %v3259
        %3318 = vst.msk [vmem:[#allocation2 + $0x80] sm:$0xff] %vm3300, %v3261
        %3319 = vst.msk [vmem:[#allocation2 + $0x88] sm:$0xf] %vm3302, %v3263
        %3320 = vst.msk [vmem:[#allocation2 + $0x90] sm:$0xff] %vm3300, %v3265
        %3321 = vst.msk [vmem:[#allocation2 + $0x98] sm:$0xf] %vm3302, %v3267
        %3322 = vst.msk [vmem:[#allocation2 + $0xa0] sm:$0xff] %vm3300, %v3269
        %3323 = vst.msk [vmem:[#allocation2 + $0xa8] sm:$0xf] %vm3302, %v3271
        %3324 = vst.msk [vmem:[#allocation2 + $0xb0] sm:$0xff] %vm3300, %v3273
        %3325 = vst.msk [vmem:[#allocation2 + $0xb8] sm:$0xf] %vm3302, %v3275
        %v3326 = vld [vmem:[%s2741 + $0x4] sm:$0xff]
        %v3327 = vld [vmem:[%s2741 + $0xc] sm:$0xf]
        %v3328 = vld [vmem:[%s2741 + $0x14] sm:$0xff]
        %v3329 = vld [vmem:[%s2741 + $0x1c] sm:$0xf]
        %v3330 = vld [vmem:[%s2741 + $0x24] sm:$0xff]
        %v3331 = vld [vmem:[%s2741 + $0x2c] sm:$0xf]
        %v3332 = vld [vmem:[%s2741 + $0x34] sm:$0xff]
        %v3333 = vld [vmem:[%s2741 + $0x3c] sm:$0xf]
        %v3334 = vld [vmem:[%s2741 + $0x44] sm:$0xff]
        %v3335 = vld [vmem:[%s2741 + $0x4c] sm:$0xf]
        %v3336 = vld [vmem:[%s2741 + $0x54] sm:$0xff]
        %v3337 = vld [vmem:[%s2741 + $0x5c] sm:$0xf]
        %v3338 = vld [vmem:[%s2741 + $0x64] sm:$0xff]
        %v3339 = vld [vmem:[%s2741 + $0x6c] sm:$0xf]
        %v3340 = vld [vmem:[%s2741 + $0x74] sm:$0xff]
        %v3341 = vld [vmem:[%s2741 + $0x7c] sm:$0xf]
        %v3342 = vld [vmem:[%s2741 + $0x84] sm:$0xff]
        %v3343 = vld [vmem:[%s2741 + $0x8c] sm:$0xf]
        %v3344 = vld [vmem:[%s2741 + $0x94] sm:$0xff]
        %v3345 = vld [vmem:[%s2741 + $0x9c] sm:$0xf]
        %v3346 = vld [vmem:[%s2741 + $0xa4] sm:$0xff]
        %v3347 = vld [vmem:[%s2741 + $0xac] sm:$0xf]
        %v3348 = vld [vmem:[%s2741 + $0xb4] sm:$0xff]
        %v3349 = vld [vmem:[%s2741 + $0xbc] sm:$0xf]
        %3374 = vrot.lane.b32.xlu0 %v3326, 76
        %v3375 = vpop.permute.xlu0 %3374
        %3376 = vrot.lane.b32.xlu0 %v3327, 76
        %v3377 = vpop.permute.xlu0 %3376
        %3378 = vrot.lane.b32.xlu0 %v3328, 76
        %v3379 = vpop.permute.xlu0 %3378
        %3380 = vrot.lane.b32.xlu0 %v3329, 76
        %v3381 = vpop.permute.xlu0 %3380
        %3382 = vrot.lane.b32.xlu0 %v3330, 76
        %v3383 = vpop.permute.xlu0 %3382
        %3384 = vrot.lane.b32.xlu0 %v3331, 76
        %v3385 = vpop.permute.xlu0 %3384
        %3386 = vrot.lane.b32.xlu0 %v3332, 76
        %v3387 = vpop.permute.xlu0 %3386
        %3388 = vrot.lane.b32.xlu0 %v3333, 76
        %v3389 = vpop.permute.xlu0 %3388
        %3390 = vrot.lane.b32.xlu0 %v3334, 76
        %v3391 = vpop.permute.xlu0 %3390
        %3392 = vrot.lane.b32.xlu0 %v3335, 76
        %v3393 = vpop.permute.xlu0 %3392
        %3394 = vrot.lane.b32.xlu0 %v3336, 76
        %v3395 = vpop.permute.xlu0 %3394
        %3396 = vrot.lane.b32.xlu0 %v3337, 76
        %v3397 = vpop.permute.xlu0 %3396
        %3398 = vrot.lane.b32.xlu0 %v3338, 76
        %v3399 = vpop.permute.xlu0 %3398
        %3400 = vrot.lane.b32.xlu0 %v3339, 76
        %v3401 = vpop.permute.xlu0 %3400
        %3402 = vrot.lane.b32.xlu0 %v3340, 76
        %v3403 = vpop.permute.xlu0 %3402
        %3404 = vrot.lane.b32.xlu0 %v3341, 76
        %v3405 = vpop.permute.xlu0 %3404
        %3406 = vrot.lane.b32.xlu0 %v3342, 76
        %v3407 = vpop.permute.xlu0 %3406
        %3408 = vrot.lane.b32.xlu0 %v3343, 76
        %v3409 = vpop.permute.xlu0 %3408
        %3410 = vrot.lane.b32.xlu0 %v3344, 76
        %v3411 = vpop.permute.xlu0 %3410
        %3412 = vrot.lane.b32.xlu0 %v3345, 76
        %v3413 = vpop.permute.xlu0 %3412
        %3414 = vrot.lane.b32.xlu0 %v3346, 76
        %v3415 = vpop.permute.xlu0 %3414
        %3416 = vrot.lane.b32.xlu0 %v3347, 76
        %v3417 = vpop.permute.xlu0 %3416
        %3418 = vrot.lane.b32.xlu0 %v3348, 76
        %v3419 = vpop.permute.xlu0 %3418
        %3420 = vrot.lane.b32.xlu0 %v3349, 76
        %v3421 = vpop.permute.xlu0 %3420
        %vm3446 = vcmask 654944
        %3447 = vst.msk [vmem:[#allocation2] sm:$0xff] %vm3446, %v3375
        %vm3448 = vcmask 650848
        %3449 = vst.msk [vmem:[#allocation2 + $0x8] sm:$0xf] %vm3448, %v3377
        %3450 = vst.msk [vmem:[#allocation2 + $0x10] sm:$0xff] %vm3446, %v3379
        %3451 = vst.msk [vmem:[#allocation2 + $0x18] sm:$0xf] %vm3448, %v3381
        %3452 = vst.msk [vmem:[#allocation2 + $0x20] sm:$0xff] %vm3446, %v3383
        %3453 = vst.msk [vmem:[#allocation2 + $0x28] sm:$0xf] %vm3448, %v3385
        %3454 = vst.msk [vmem:[#allocation2 + $0x30] sm:$0xff] %vm3446, %v3387
        %3455 = vst.msk [vmem:[#allocation2 + $0x38] sm:$0xf] %vm3448, %v3389
        %3456 = vst.msk [vmem:[#allocation2 + $0x40] sm:$0xff] %vm3446, %v3391
        %3457 = vst.msk [vmem:[#allocation2 + $0x48] sm:$0xf] %vm3448, %v3393
        %3458 = vst.msk [vmem:[#allocation2 + $0x50] sm:$0xff] %vm3446, %v3395
        %3459 = vst.msk [vmem:[#allocation2 + $0x58] sm:$0xf] %vm3448, %v3397
        %3460 = vst.msk [vmem:[#allocation2 + $0x60] sm:$0xff] %vm3446, %v3399
        %3461 = vst.msk [vmem:[#allocation2 + $0x68] sm:$0xf] %vm3448, %v3401
        %3462 = vst.msk [vmem:[#allocation2 + $0x70] sm:$0xff] %vm3446, %v3403
        %3463 = vst.msk [vmem:[#allocation2 + $0x78] sm:$0xf] %vm3448, %v3405
        %3464 = vst.msk [vmem:[#allocation2 + $0x80] sm:$0xff] %vm3446, %v3407
        %3465 = vst.msk [vmem:[#allocation2 + $0x88] sm:$0xf] %vm3448, %v3409
        %3466 = vst.msk [vmem:[#allocation2 + $0x90] sm:$0xff] %vm3446, %v3411
        %3467 = vst.msk [vmem:[#allocation2 + $0x98] sm:$0xf] %vm3448, %v3413
        %3468 = vst.msk [vmem:[#allocation2 + $0xa0] sm:$0xff] %vm3446, %v3415
        %3469 = vst.msk [vmem:[#allocation2 + $0xa8] sm:$0xf] %vm3448, %v3417
        %3470 = vst.msk [vmem:[#allocation2 + $0xb0] sm:$0xff] %vm3446, %v3419
        %3471 = vst.msk [vmem:[#allocation2 + $0xb8] sm:$0xf] %vm3448, %v3421
        %s3472 = scalar_lea.vmem %s477, 64
        %v3473 = vld [vmem:[%s3472] sm:$0xff]
        %v3474 = vld [vmem:[%s3472 + $0x8] sm:$0xf]
        %v3475 = vld [vmem:[%s3472 + $0x10] sm:$0xff]
        %v3476 = vld [vmem:[%s3472 + $0x18] sm:$0xf]
        %v3477 = vld [vmem:[%s3472 + $0x20] sm:$0xff]
        %v3478 = vld [vmem:[%s3472 + $0x28] sm:$0xf]
        %v3479 = vld [vmem:[%s3472 + $0x30] sm:$0xff]
        %v3480 = vld [vmem:[%s3472 + $0x38] sm:$0xf]
        %v3481 = vld [vmem:[%s3472 + $0x40] sm:$0xff]
        %v3482 = vld [vmem:[%s3472 + $0x48] sm:$0xf]
        %v3483 = vld [vmem:[%s3472 + $0x50] sm:$0xff]
        %v3484 = vld [vmem:[%s3472 + $0x58] sm:$0xf]
        %v3485 = vld [vmem:[%s3472 + $0x60] sm:$0xff]
        %v3486 = vld [vmem:[%s3472 + $0x68] sm:$0xf]
        %v3487 = vld [vmem:[%s3472 + $0x70] sm:$0xff]
        %v3488 = vld [vmem:[%s3472 + $0x78] sm:$0xf]
        %v3489 = vld [vmem:[%s3472 + $0x80] sm:$0xff]
        %v3490 = vld [vmem:[%s3472 + $0x88] sm:$0xf]
        %v3491 = vld [vmem:[%s3472 + $0x90] sm:$0xff]
        %v3492 = vld [vmem:[%s3472 + $0x98] sm:$0xf]
        %v3493 = vld [vmem:[%s3472 + $0xa0] sm:$0xff]
        %v3494 = vld [vmem:[%s3472 + $0xa8] sm:$0xf]
        %v3495 = vld [vmem:[%s3472 + $0xb0] sm:$0xff]
        %v3496 = vld [vmem:[%s3472 + $0xb8] sm:$0xf]
        %3521 = vrot.lane.b32.xlu0 %v3473, 80
        %v3522 = vpop.permute.xlu0 %3521
        %3523 = vrot.lane.b32.xlu0 %v3474, 80
        %v3524 = vpop.permute.xlu0 %3523
        %3525 = vrot.lane.b32.xlu0 %v3475, 80
        %v3526 = vpop.permute.xlu0 %3525
        %3527 = vrot.lane.b32.xlu0 %v3476, 80
        %v3528 = vpop.permute.xlu0 %3527
        %3529 = vrot.lane.b32.xlu0 %v3477, 80
        %v3530 = vpop.permute.xlu0 %3529
        %3531 = vrot.lane.b32.xlu0 %v3478, 80
        %v3532 = vpop.permute.xlu0 %3531
        %3533 = vrot.lane.b32.xlu0 %v3479, 80
        %v3534 = vpop.permute.xlu0 %3533
        %3535 = vrot.lane.b32.xlu0 %v3480, 80
        %v3536 = vpop.permute.xlu0 %3535
        %3537 = vrot.lane.b32.xlu0 %v3481, 80
        %v3538 = vpop.permute.xlu0 %3537
        %3539 = vrot.lane.b32.xlu0 %v3482, 80
        %v3540 = vpop.permute.xlu0 %3539
        %3541 = vrot.lane.b32.xlu0 %v3483, 80
        %v3542 = vpop.permute.xlu0 %3541
        %3543 = vrot.lane.b32.xlu0 %v3484, 80
        %v3544 = vpop.permute.xlu0 %3543
        %3545 = vrot.lane.b32.xlu0 %v3485, 80
        %v3546 = vpop.permute.xlu0 %3545
        %3547 = vrot.lane.b32.xlu0 %v3486, 80
        %v3548 = vpop.permute.xlu0 %3547
        %3549 = vrot.lane.b32.xlu0 %v3487, 80
        %v3550 = vpop.permute.xlu0 %3549
        %3551 = vrot.lane.b32.xlu0 %v3488, 80
        %v3552 = vpop.permute.xlu0 %3551
        %3553 = vrot.lane.b32.xlu0 %v3489, 80
        %v3554 = vpop.permute.xlu0 %3553
        %3555 = vrot.lane.b32.xlu0 %v3490, 80
        %v3556 = vpop.permute.xlu0 %3555
        %3557 = vrot.lane.b32.xlu0 %v3491, 80
        %v3558 = vpop.permute.xlu0 %3557
        %3559 = vrot.lane.b32.xlu0 %v3492, 80
        %v3560 = vpop.permute.xlu0 %3559
        %3561 = vrot.lane.b32.xlu0 %v3493, 80
        %v3562 = vpop.permute.xlu0 %3561
        %3563 = vrot.lane.b32.xlu0 %v3494, 80
        %v3564 = vpop.permute.xlu0 %3563
        %3565 = vrot.lane.b32.xlu0 %v3495, 80
        %v3566 = vpop.permute.xlu0 %3565
        %3567 = vrot.lane.b32.xlu0 %v3496, 80
        %v3568 = vpop.permute.xlu0 %3567
        %vm3593 = vcmask 687744
        %3594 = vst.msk [vmem:[#allocation2] sm:$0xff] %vm3593, %v3522
        %vm3595 = vcmask 683648
        %3596 = vst.msk [vmem:[#allocation2 + $0x8] sm:$0xf] %vm3595, %v3524
        %3597 = vst.msk [vmem:[#allocation2 + $0x10] sm:$0xff] %vm3593, %v3526
        %3598 = vst.msk [vmem:[#allocation2 + $0x18] sm:$0xf] %vm3595, %v3528
        %3599 = vst.msk [vmem:[#allocation2 + $0x20] sm:$0xff] %vm3593, %v3530
        %3600 = vst.msk [vmem:[#allocation2 + $0x28] sm:$0xf] %vm3595, %v3532
        %3601 = vst.msk [vmem:[#allocation2 + $0x30] sm:$0xff] %vm3593, %v3534
        %3602 = vst.msk [vmem:[#allocation2 + $0x38] sm:$0xf] %vm3595, %v3536
        %3603 = vst.msk [vmem:[#allocation2 + $0x40] sm:$0xff] %vm3593, %v3538
        %3604 = vst.msk [vmem:[#allocation2 + $0x48] sm:$0xf] %vm3595, %v3540
        %3605 = vst.msk [vmem:[#allocation2 + $0x50] sm:$0xff] %vm3593, %v3542
        %3606 = vst.msk [vmem:[#allocation2 + $0x58] sm:$0xf] %vm3595, %v3544
        %3607 = vst.msk [vmem:[#allocation2 + $0x60] sm:$0xff] %vm3593, %v3546
        %3608 = vst.msk [vmem:[#allocation2 + $0x68] sm:$0xf] %vm3595, %v3548
        %3609 = vst.msk [vmem:[#allocation2 + $0x70] sm:$0xff] %vm3593, %v3550
        %3610 = vst.msk [vmem:[#allocation2 + $0x78] sm:$0xf] %vm3595, %v3552
        %3611 = vst.msk [vmem:[#allocation2 + $0x80] sm:$0xff] %vm3593, %v3554
        %3612 = vst.msk [vmem:[#allocation2 + $0x88] sm:$0xf] %vm3595, %v3556
        %3613 = vst.msk [vmem:[#allocation2 + $0x90] sm:$0xff] %vm3593, %v3558
        %3614 = vst.msk [vmem:[#allocation2 + $0x98] sm:$0xf] %vm3595, %v3560
        %3615 = vst.msk [vmem:[#allocation2 + $0xa0] sm:$0xff] %vm3593, %v3562
        %3616 = vst.msk [vmem:[#allocation2 + $0xa8] sm:$0xf] %vm3595, %v3564
        %3617 = vst.msk [vmem:[#allocation2 + $0xb0] sm:$0xff] %vm3593, %v3566
        %3618 = vst.msk [vmem:[#allocation2 + $0xb8] sm:$0xf] %vm3595, %v3568
        %v3619 = vld [vmem:[%s3472 + $0x1] sm:$0xff]
        %v3620 = vld [vmem:[%s3472 + $0x9] sm:$0xf]
        %v3621 = vld [vmem:[%s3472 + $0x11] sm:$0xff]
        %v3622 = vld [vmem:[%s3472 + $0x19] sm:$0xf]
        %v3623 = vld [vmem:[%s3472 + $0x21] sm:$0xff]
        %v3624 = vld [vmem:[%s3472 + $0x29] sm:$0xf]
        %v3625 = vld [vmem:[%s3472 + $0x31] sm:$0xff]
        %v3626 = vld [vmem:[%s3472 + $0x39] sm:$0xf]
        %v3627 = vld [vmem:[%s3472 + $0x41] sm:$0xff]
        %v3628 = vld [vmem:[%s3472 + $0x49] sm:$0xf]
        %v3629 = vld [vmem:[%s3472 + $0x51] sm:$0xff]
        %v3630 = vld [vmem:[%s3472 + $0x59] sm:$0xf]
        %v3631 = vld [vmem:[%s3472 + $0x61] sm:$0xff]
        %v3632 = vld [vmem:[%s3472 + $0x69] sm:$0xf]
        %v3633 = vld [vmem:[%s3472 + $0x71] sm:$0xff]
        %v3634 = vld [vmem:[%s3472 + $0x79] sm:$0xf]
        %v3635 = vld [vmem:[%s3472 + $0x81] sm:$0xff]
        %v3636 = vld [vmem:[%s3472 + $0x89] sm:$0xf]
        %v3637 = vld [vmem:[%s3472 + $0x91] sm:$0xff]
        %v3638 = vld [vmem:[%s3472 + $0x99] sm:$0xf]
        %v3639 = vld [vmem:[%s3472 + $0xa1] sm:$0xff]
        %v3640 = vld [vmem:[%s3472 + $0xa9] sm:$0xf]
        %v3641 = vld [vmem:[%s3472 + $0xb1] sm:$0xff]
        %v3642 = vld [vmem:[%s3472 + $0xb9] sm:$0xf]
        %3667 = vrot.lane.b32.xlu0 %v3619, 84
        %v3668 = vpop.permute.xlu0 %3667
        %3669 = vrot.lane.b32.xlu0 %v3620, 84
        %v3670 = vpop.permute.xlu0 %3669
        %3671 = vrot.lane.b32.xlu0 %v3621, 84
        %v3672 = vpop.permute.xlu0 %3671
        %3673 = vrot.lane.b32.xlu0 %v3622, 84
        %v3674 = vpop.permute.xlu0 %3673
        %3675 = vrot.lane.b32.xlu0 %v3623, 84
        %v3676 = vpop.permute.xlu0 %3675
        %3677 = vrot.lane.b32.xlu0 %v3624, 84
        %v3678 = vpop.permute.xlu0 %3677
        %3679 = vrot.lane.b32.xlu0 %v3625, 84
        %v3680 = vpop.permute.xlu0 %3679
        %3681 = vrot.lane.b32.xlu0 %v3626, 84
        %v3682 = vpop.permute.xlu0 %3681
        %3683 = vrot.lane.b32.xlu0 %v3627, 84
        %v3684 = vpop.permute.xlu0 %3683
        %3685 = vrot.lane.b32.xlu0 %v3628, 84
        %v3686 = vpop.permute.xlu0 %3685
        %3687 = vrot.lane.b32.xlu0 %v3629, 84
        %v3688 = vpop.permute.xlu0 %3687
        %3689 = vrot.lane.b32.xlu0 %v3630, 84
        %v3690 = vpop.permute.xlu0 %3689
        %3691 = vrot.lane.b32.xlu0 %v3631, 84
        %v3692 = vpop.permute.xlu0 %3691
        %3693 = vrot.lane.b32.xlu0 %v3632, 84
        %v3694 = vpop.permute.xlu0 %3693
        %3695 = vrot.lane.b32.xlu0 %v3633, 84
        %v3696 = vpop.permute.xlu0 %3695
        %3697 = vrot.lane.b32.xlu0 %v3634, 84
        %v3698 = vpop.permute.xlu0 %3697
        %3699 = vrot.lane.b32.xlu0 %v3635, 84
        %v3700 = vpop.permute.xlu0 %3699
        %3701 = vrot.lane.b32.xlu0 %v3636, 84
        %v3702 = vpop.permute.xlu0 %3701
        %3703 = vrot.lane.b32.xlu0 %v3637, 84
        %v3704 = vpop.permute.xlu0 %3703
        %3705 = vrot.lane.b32.xlu0 %v3638, 84
        %v3706 = vpop.permute.xlu0 %3705
        %3707 = vrot.lane.b32.xlu0 %v3639, 84
        %v3708 = vpop.permute.xlu0 %3707
        %3709 = vrot.lane.b32.xlu0 %v3640, 84
        %v3710 = vpop.permute.xlu0 %3709
        %3711 = vrot.lane.b32.xlu0 %v3641, 84
        %v3712 = vpop.permute.xlu0 %3711
        %3713 = vrot.lane.b32.xlu0 %v3642, 84
        %v3714 = vpop.permute.xlu0 %3713
        %vm3739 = vcmask 720544
        %3740 = vst.msk [vmem:[#allocation2] sm:$0xff] %vm3739, %v3668
        %vm3741 = vcmask 716448
        %3742 = vst.msk [vmem:[#allocation2 + $0x8] sm:$0xf] %vm3741, %v3670
        %3743 = vst.msk [vmem:[#allocation2 + $0x10] sm:$0xff] %vm3739, %v3672
        %3744 = vst.msk [vmem:[#allocation2 + $0x18] sm:$0xf] %vm3741, %v3674
        %3745 = vst.msk [vmem:[#allocation2 + $0x20] sm:$0xff] %vm3739, %v3676
        %3746 = vst.msk [vmem:[#allocation2 + $0x28] sm:$0xf] %vm3741, %v3678
        %3747 = vst.msk [vmem:[#allocation2 + $0x30] sm:$0xff] %vm3739, %v3680
        %3748 = vst.msk [vmem:[#allocation2 + $0x38] sm:$0xf] %vm3741, %v3682
        %3749 = vst.msk [vmem:[#allocation2 + $0x40] sm:$0xff] %vm3739, %v3684
        %3750 = vst.msk [vmem:[#allocation2 + $0x48] sm:$0xf] %vm3741, %v3686
        %3751 = vst.msk [vmem:[#allocation2 + $0x50] sm:$0xff] %vm3739, %v3688
        %3752 = vst.msk [vmem:[#allocation2 + $0x58] sm:$0xf] %vm3741, %v3690
        %3753 = vst.msk [vmem:[#allocation2 + $0x60] sm:$0xff] %vm3739, %v3692
        %3754 = vst.msk [vmem:[#allocation2 + $0x68] sm:$0xf] %vm3741, %v3694
        %3755 = vst.msk [vmem:[#allocation2 + $0x70] sm:$0xff] %vm3739, %v3696
        %3756 = vst.msk [vmem:[#allocation2 + $0x78] sm:$0xf] %vm3741, %v3698
        %3757 = vst.msk [vmem:[#allocation2 + $0x80] sm:$0xff] %vm3739, %v3700
        %3758 = vst.msk [vmem:[#allocation2 + $0x88] sm:$0xf] %vm3741, %v3702
        %3759 = vst.msk [vmem:[#allocation2 + $0x90] sm:$0xff] %vm3739, %v3704
        %3760 = vst.msk [vmem:[#allocation2 + $0x98] sm:$0xf] %vm3741, %v3706
        %3761 = vst.msk [vmem:[#allocation2 + $0xa0] sm:$0xff] %vm3739, %v3708
        %3762 = vst.msk [vmem:[#allocation2 + $0xa8] sm:$0xf] %vm3741, %v3710
        %3763 = vst.msk [vmem:[#allocation2 + $0xb0] sm:$0xff] %vm3739, %v3712
        %3764 = vst.msk [vmem:[#allocation2 + $0xb8] sm:$0xf] %vm3741, %v3714
        %v3765 = vld [vmem:[%s3472 + $0x2] sm:$0xff]
        %v3766 = vld [vmem:[%s3472 + $0xa] sm:$0xf]
        %v3767 = vld [vmem:[%s3472 + $0x12] sm:$0xff]
        %v3768 = vld [vmem:[%s3472 + $0x1a] sm:$0xf]
        %v3769 = vld [vmem:[%s3472 + $0x22] sm:$0xff]
        %v3770 = vld [vmem:[%s3472 + $0x2a] sm:$0xf]
        %v3771 = vld [vmem:[%s3472 + $0x32] sm:$0xff]
        %v3772 = vld [vmem:[%s3472 + $0x3a] sm:$0xf]
        %v3773 = vld [vmem:[%s3472 + $0x42] sm:$0xff]
        %v3774 = vld [vmem:[%s3472 + $0x4a] sm:$0xf]
        %v3775 = vld [vmem:[%s3472 + $0x52] sm:$0xff]
        %v3776 = vld [vmem:[%s3472 + $0x5a] sm:$0xf]
        %v3777 = vld [vmem:[%s3472 + $0x62] sm:$0xff]
        %v3778 = vld [vmem:[%s3472 + $0x6a] sm:$0xf]
        %v3779 = vld [vmem:[%s3472 + $0x72] sm:$0xff]
        %v3780 = vld [vmem:[%s3472 + $0x7a] sm:$0xf]
        %v3781 = vld [vmem:[%s3472 + $0x82] sm:$0xff]
        %v3782 = vld [vmem:[%s3472 + $0x8a] sm:$0xf]
        %v3783 = vld [vmem:[%s3472 + $0x92] sm:$0xff]
        %v3784 = vld [vmem:[%s3472 + $0x9a] sm:$0xf]
        %v3785 = vld [vmem:[%s3472 + $0xa2] sm:$0xff]
        %v3786 = vld [vmem:[%s3472 + $0xaa] sm:$0xf]
        %v3787 = vld [vmem:[%s3472 + $0xb2] sm:$0xff]
        %v3788 = vld [vmem:[%s3472 + $0xba] sm:$0xf]
        %3813 = vrot.lane.b32.xlu0 %v3765, 88
        %v3814 = vpop.permute.xlu0 %3813
        %3815 = vrot.lane.b32.xlu0 %v3766, 88
        %v3816 = vpop.permute.xlu0 %3815
        %3817 = vrot.lane.b32.xlu0 %v3767, 88
        %v3818 = vpop.permute.xlu0 %3817
        %3819 = vrot.lane.b32.xlu0 %v3768, 88
        %v3820 = vpop.permute.xlu0 %3819
        %3821 = vrot.lane.b32.xlu0 %v3769, 88
        %v3822 = vpop.permute.xlu0 %3821
        %3823 = vrot.lane.b32.xlu0 %v3770, 88
        %v3824 = vpop.permute.xlu0 %3823
        %3825 = vrot.lane.b32.xlu0 %v3771, 88
        %v3826 = vpop.permute.xlu0 %3825
        %3827 = vrot.lane.b32.xlu0 %v3772, 88
        %v3828 = vpop.permute.xlu0 %3827
        %3829 = vrot.lane.b32.xlu0 %v3773, 88
        %v3830 = vpop.permute.xlu0 %3829
        %3831 = vrot.lane.b32.xlu0 %v3774, 88
        %v3832 = vpop.permute.xlu0 %3831
        %3833 = vrot.lane.b32.xlu0 %v3775, 88
        %v3834 = vpop.permute.xlu0 %3833
        %3835 = vrot.lane.b32.xlu0 %v3776, 88
        %v3836 = vpop.permute.xlu0 %3835
        %3837 = vrot.lane.b32.xlu0 %v3777, 88
        %v3838 = vpop.permute.xlu0 %3837
        %3839 = vrot.lane.b32.xlu0 %v3778, 88
        %v3840 = vpop.permute.xlu0 %3839
        %3841 = vrot.lane.b32.xlu0 %v3779, 88
        %v3842 = vpop.permute.xlu0 %3841
        %3843 = vrot.lane.b32.xlu0 %v3780, 88
        %v3844 = vpop.permute.xlu0 %3843
        %3845 = vrot.lane.b32.xlu0 %v3781, 88
        %v3846 = vpop.permute.xlu0 %3845
        %3847 = vrot.lane.b32.xlu0 %v3782, 88
        %v3848 = vpop.permute.xlu0 %3847
        %3849 = vrot.lane.b32.xlu0 %v3783, 88
        %v3850 = vpop.permute.xlu0 %3849
        %3851 = vrot.lane.b32.xlu0 %v3784, 88
        %v3852 = vpop.permute.xlu0 %3851
        %3853 = vrot.lane.b32.xlu0 %v3785, 88
        %v3854 = vpop.permute.xlu0 %3853
        %3855 = vrot.lane.b32.xlu0 %v3786, 88
        %v3856 = vpop.permute.xlu0 %3855
        %3857 = vrot.lane.b32.xlu0 %v3787, 88
        %v3858 = vpop.permute.xlu0 %3857
        %3859 = vrot.lane.b32.xlu0 %v3788, 88
        %v3860 = vpop.permute.xlu0 %3859
        %vm3885 = vcmask 753344
        %3886 = vst.msk [vmem:[#allocation2] sm:$0xff] %vm3885, %v3814
        %vm3887 = vcmask 749248
        %3888 = vst.msk [vmem:[#allocation2 + $0x8] sm:$0xf] %vm3887, %v3816
        %3889 = vst.msk [vmem:[#allocation2 + $0x10] sm:$0xff] %vm3885, %v3818
        %3890 = vst.msk [vmem:[#allocation2 + $0x18] sm:$0xf] %vm3887, %v3820
        %3891 = vst.msk [vmem:[#allocation2 + $0x20] sm:$0xff] %vm3885, %v3822
        %3892 = vst.msk [vmem:[#allocation2 + $0x28] sm:$0xf] %vm3887, %v3824
        %3893 = vst.msk [vmem:[#allocation2 + $0x30] sm:$0xff] %vm3885, %v3826
        %3894 = vst.msk [vmem:[#allocation2 + $0x38] sm:$0xf] %vm3887, %v3828
        %3895 = vst.msk [vmem:[#allocation2 + $0x40] sm:$0xff] %vm3885, %v3830
        %3896 = vst.msk [vmem:[#allocation2 + $0x48] sm:$0xf] %vm3887, %v3832
        %3897 = vst.msk [vmem:[#allocation2 + $0x50] sm:$0xff] %vm3885, %v3834
        %3898 = vst.msk [vmem:[#allocation2 + $0x58] sm:$0xf] %vm3887, %v3836
        %3899 = vst.msk [vmem:[#allocation2 + $0x60] sm:$0xff] %vm3885, %v3838
        %3900 = vst.msk [vmem:[#allocation2 + $0x68] sm:$0xf] %vm3887, %v3840
        %3901 = vst.msk [vmem:[#allocation2 + $0x70] sm:$0xff] %vm3885, %v3842
        %3902 = vst.msk [vmem:[#allocation2 + $0x78] sm:$0xf] %vm3887, %v3844
        %3903 = vst.msk [vmem:[#allocation2 + $0x80] sm:$0xff] %vm3885, %v3846
        %3904 = vst.msk [vmem:[#allocation2 + $0x88] sm:$0xf] %vm3887, %v3848
        %3905 = vst.msk [vmem:[#allocation2 + $0x90] sm:$0xff] %vm3885, %v3850
        %3906 = vst.msk [vmem:[#allocation2 + $0x98] sm:$0xf] %vm3887, %v3852
        %3907 = vst.msk [vmem:[#allocation2 + $0xa0] sm:$0xff] %vm3885, %v3854
        %3908 = vst.msk [vmem:[#allocation2 + $0xa8] sm:$0xf] %vm3887, %v3856
        %3909 = vst.msk [vmem:[#allocation2 + $0xb0] sm:$0xff] %vm3885, %v3858
        %3910 = vst.msk [vmem:[#allocation2 + $0xb8] sm:$0xf] %vm3887, %v3860
        %v3911 = vld [vmem:[%s3472 + $0x3] sm:$0xff]
        %v3912 = vld [vmem:[%s3472 + $0xb] sm:$0xf]
        %v3913 = vld [vmem:[%s3472 + $0x13] sm:$0xff]
        %v3914 = vld [vmem:[%s3472 + $0x1b] sm:$0xf]
        %v3915 = vld [vmem:[%s3472 + $0x23] sm:$0xff]
        %v3916 = vld [vmem:[%s3472 + $0x2b] sm:$0xf]
        %v3917 = vld [vmem:[%s3472 + $0x33] sm:$0xff]
        %v3918 = vld [vmem:[%s3472 + $0x3b] sm:$0xf]
        %v3919 = vld [vmem:[%s3472 + $0x43] sm:$0xff]
        %v3920 = vld [vmem:[%s3472 + $0x4b] sm:$0xf]
        %v3921 = vld [vmem:[%s3472 + $0x53] sm:$0xff]
        %v3922 = vld [vmem:[%s3472 + $0x5b] sm:$0xf]
        %v3923 = vld [vmem:[%s3472 + $0x63] sm:$0xff]
        %v3924 = vld [vmem:[%s3472 + $0x6b] sm:$0xf]
        %v3925 = vld [vmem:[%s3472 + $0x73] sm:$0xff]
        %v3926 = vld [vmem:[%s3472 + $0x7b] sm:$0xf]
        %v3927 = vld [vmem:[%s3472 + $0x83] sm:$0xff]
        %v3928 = vld [vmem:[%s3472 + $0x8b] sm:$0xf]
        %v3929 = vld [vmem:[%s3472 + $0x93] sm:$0xff]
        %v3930 = vld [vmem:[%s3472 + $0x9b] sm:$0xf]
        %v3931 = vld [vmem:[%s3472 + $0xa3] sm:$0xff]
        %v3932 = vld [vmem:[%s3472 + $0xab] sm:$0xf]
        %v3933 = vld [vmem:[%s3472 + $0xb3] sm:$0xff]
        %v3934 = vld [vmem:[%s3472 + $0xbb] sm:$0xf]
        %3959 = vrot.lane.b32.xlu0 %v3911, 92
        %v3960 = vpop.permute.xlu0 %3959
        %3961 = vrot.lane.b32.xlu0 %v3912, 92
        %v3962 = vpop.permute.xlu0 %3961
        %3963 = vrot.lane.b32.xlu0 %v3913, 92
        %v3964 = vpop.permute.xlu0 %3963
        %3965 = vrot.lane.b32.xlu0 %v3914, 92
        %v3966 = vpop.permute.xlu0 %3965
        %3967 = vrot.lane.b32.xlu0 %v3915, 92
        %v3968 = vpop.permute.xlu0 %3967
        %3969 = vrot.lane.b32.xlu0 %v3916, 92
        %v3970 = vpop.permute.xlu0 %3969
        %3971 = vrot.lane.b32.xlu0 %v3917, 92
        %v3972 = vpop.permute.xlu0 %3971
        %3973 = vrot.lane.b32.xlu0 %v3918, 92
        %v3974 = vpop.permute.xlu0 %3973
        %3975 = vrot.lane.b32.xlu0 %v3919, 92
        %v3976 = vpop.permute.xlu0 %3975
        %3977 = vrot.lane.b32.xlu0 %v3920, 92
        %v3978 = vpop.permute.xlu0 %3977
        %3979 = vrot.lane.b32.xlu0 %v3921, 92
        %v3980 = vpop.permute.xlu0 %3979
        %3981 = vrot.lane.b32.xlu0 %v3922, 92
        %v3982 = vpop.permute.xlu0 %3981
        %3983 = vrot.lane.b32.xlu0 %v3923, 92
        %v3984 = vpop.permute.xlu0 %3983
        %3985 = vrot.lane.b32.xlu0 %v3924, 92
        %v3986 = vpop.permute.xlu0 %3985
        %3987 = vrot.lane.b32.xlu0 %v3925, 92
        %v3988 = vpop.permute.xlu0 %3987
        %3989 = vrot.lane.b32.xlu0 %v3926, 92
        %v3990 = vpop.permute.xlu0 %3989
        %3991 = vrot.lane.b32.xlu0 %v3927, 92
        %v3992 = vpop.permute.xlu0 %3991
        %3993 = vrot.lane.b32.xlu0 %v3928, 92
        %v3994 = vpop.permute.xlu0 %3993
        %3995 = vrot.lane.b32.xlu0 %v3929, 92
        %v3996 = vpop.permute.xlu0 %3995
        %3997 = vrot.lane.b32.xlu0 %v3930, 92
        %v3998 = vpop.permute.xlu0 %3997
        %3999 = vrot.lane.b32.xlu0 %v3931, 92
        %v4000 = vpop.permute.xlu0 %3999
        %4001 = vrot.lane.b32.xlu0 %v3932, 92
        %v4002 = vpop.permute.xlu0 %4001
        %4003 = vrot.lane.b32.xlu0 %v3933, 92
        %v4004 = vpop.permute.xlu0 %4003
        %4005 = vrot.lane.b32.xlu0 %v3934, 92
        %v4006 = vpop.permute.xlu0 %4005
        %vm4031 = vcmask 786144
        %4032 = vst.msk [vmem:[#allocation2] sm:$0xff] %vm4031, %v3960
        %vm4033 = vcmask 782048
        %4034 = vst.msk [vmem:[#allocation2 + $0x8] sm:$0xf] %vm4033, %v3962
        %4035 = vst.msk [vmem:[#allocation2 + $0x10] sm:$0xff] %vm4031, %v3964
        %4036 = vst.msk [vmem:[#allocation2 + $0x18] sm:$0xf] %vm4033, %v3966
        %4037 = vst.msk [vmem:[#allocation2 + $0x20] sm:$0xff] %vm4031, %v3968
        %4038 = vst.msk [vmem:[#allocation2 + $0x28] sm:$0xf] %vm4033, %v3970
        %4039 = vst.msk [vmem:[#allocation2 + $0x30] sm:$0xff] %vm4031, %v3972
        %4040 = vst.msk [vmem:[#allocation2 + $0x38] sm:$0xf] %vm4033, %v3974
        %4041 = vst.msk [vmem:[#allocation2 + $0x40] sm:$0xff] %vm4031, %v3976
        %4042 = vst.msk [vmem:[#allocation2 + $0x48] sm:$0xf] %vm4033, %v3978
        %4043 = vst.msk [vmem:[#allocation2 + $0x50] sm:$0xff] %vm4031, %v3980
        %4044 = vst.msk [vmem:[#allocation2 + $0x58] sm:$0xf] %vm4033, %v3982
        %4045 = vst.msk [vmem:[#allocation2 + $0x60] sm:$0xff] %vm4031, %v3984
        %4046 = vst.msk [vmem:[#allocation2 + $0x68] sm:$0xf] %vm4033, %v3986
        %4047 = vst.msk [vmem:[#allocation2 + $0x70] sm:$0xff] %vm4031, %v3988
        %4048 = vst.msk [vmem:[#allocation2 + $0x78] sm:$0xf] %vm4033, %v3990
        %4049 = vst.msk [vmem:[#allocation2 + $0x80] sm:$0xff] %vm4031, %v3992
        %4050 = vst.msk [vmem:[#allocation2 + $0x88] sm:$0xf] %vm4033, %v3994
        %4051 = vst.msk [vmem:[#allocation2 + $0x90] sm:$0xff] %vm4031, %v3996
        %4052 = vst.msk [vmem:[#allocation2 + $0x98] sm:$0xf] %vm4033, %v3998
        %4053 = vst.msk [vmem:[#allocation2 + $0xa0] sm:$0xff] %vm4031, %v4000
        %4054 = vst.msk [vmem:[#allocation2 + $0xa8] sm:$0xf] %vm4033, %v4002
        %4055 = vst.msk [vmem:[#allocation2 + $0xb0] sm:$0xff] %vm4031, %v4004
        %4056 = vst.msk [vmem:[#allocation2 + $0xb8] sm:$0xf] %vm4033, %v4006
        %v4057 = vld [vmem:[%s3472 + $0x4] sm:$0xff]
        %v4058 = vld [vmem:[%s3472 + $0xc] sm:$0xf]
        %v4059 = vld [vmem:[%s3472 + $0x14] sm:$0xff]
        %v4060 = vld [vmem:[%s3472 + $0x1c] sm:$0xf]
        %v4061 = vld [vmem:[%s3472 + $0x24] sm:$0xff]
        %v4062 = vld [vmem:[%s3472 + $0x2c] sm:$0xf]
        %v4063 = vld [vmem:[%s3472 + $0x34] sm:$0xff]
        %v4064 = vld [vmem:[%s3472 + $0x3c] sm:$0xf]
        %v4065 = vld [vmem:[%s3472 + $0x44] sm:$0xff]
        %v4066 = vld [vmem:[%s3472 + $0x4c] sm:$0xf]
        %v4067 = vld [vmem:[%s3472 + $0x54] sm:$0xff]
        %v4068 = vld [vmem:[%s3472 + $0x5c] sm:$0xf]
        %v4069 = vld [vmem:[%s3472 + $0x64] sm:$0xff]
        %v4070 = vld [vmem:[%s3472 + $0x6c] sm:$0xf]
        %v4071 = vld [vmem:[%s3472 + $0x74] sm:$0xff]
        %v4072 = vld [vmem:[%s3472 + $0x7c] sm:$0xf]
        %v4073 = vld [vmem:[%s3472 + $0x84] sm:$0xff]
        %v4074 = vld [vmem:[%s3472 + $0x8c] sm:$0xf]
        %v4075 = vld [vmem:[%s3472 + $0x94] sm:$0xff]
        %v4076 = vld [vmem:[%s3472 + $0x9c] sm:$0xf]
        %v4077 = vld [vmem:[%s3472 + $0xa4] sm:$0xff]
        %v4078 = vld [vmem:[%s3472 + $0xac] sm:$0xf]
        %v4079 = vld [vmem:[%s3472 + $0xb4] sm:$0xff]
        %v4080 = vld [vmem:[%s3472 + $0xbc] sm:$0xf]
        %4105 = vrot.lane.b32.xlu0 %v4057, 96
        %v4106 = vpop.permute.xlu0 %4105
        %4107 = vrot.lane.b32.xlu0 %v4058, 96
        %v4108 = vpop.permute.xlu0 %4107
        %4109 = vrot.lane.b32.xlu0 %v4059, 96
        %v4110 = vpop.permute.xlu0 %4109
        %4111 = vrot.lane.b32.xlu0 %v4060, 96
        %v4112 = vpop.permute.xlu0 %4111
        %4113 = vrot.lane.b32.xlu0 %v4061, 96
        %v4114 = vpop.permute.xlu0 %4113
        %4115 = vrot.lane.b32.xlu0 %v4062, 96
        %v4116 = vpop.permute.xlu0 %4115
        %4117 = vrot.lane.b32.xlu0 %v4063, 96
        %v4118 = vpop.permute.xlu0 %4117
        %4119 = vrot.lane.b32.xlu0 %v4064, 96
        %v4120 = vpop.permute.xlu0 %4119
        %4121 = vrot.lane.b32.xlu0 %v4065, 96
        %v4122 = vpop.permute.xlu0 %4121
        %4123 = vrot.lane.b32.xlu0 %v4066, 96
        %v4124 = vpop.permute.xlu0 %4123
        %4125 = vrot.lane.b32.xlu0 %v4067, 96
        %v4126 = vpop.permute.xlu0 %4125
        %4127 = vrot.lane.b32.xlu0 %v4068, 96
        %v4128 = vpop.permute.xlu0 %4127
        %4129 = vrot.lane.b32.xlu0 %v4069, 96
        %v4130 = vpop.permute.xlu0 %4129
        %4131 = vrot.lane.b32.xlu0 %v4070, 96
        %v4132 = vpop.permute.xlu0 %4131
        %4133 = vrot.lane.b32.xlu0 %v4071, 96
        %v4134 = vpop.permute.xlu0 %4133
        %4135 = vrot.lane.b32.xlu0 %v4072, 96
        %v4136 = vpop.permute.xlu0 %4135
        %4137 = vrot.lane.b32.xlu0 %v4073, 96
        %v4138 = vpop.permute.xlu0 %4137
        %4139 = vrot.lane.b32.xlu0 %v4074, 96
        %v4140 = vpop.permute.xlu0 %4139
        %4141 = vrot.lane.b32.xlu0 %v4075, 96
        %v4142 = vpop.permute.xlu0 %4141
        %4143 = vrot.lane.b32.xlu0 %v4076, 96
        %v4144 = vpop.permute.xlu0 %4143
        %4145 = vrot.lane.b32.xlu0 %v4077, 96
        %v4146 = vpop.permute.xlu0 %4145
        %4147 = vrot.lane.b32.xlu0 %v4078, 96
        %v4148 = vpop.permute.xlu0 %4147
        %4149 = vrot.lane.b32.xlu0 %v4079, 96
        %v4150 = vpop.permute.xlu0 %4149
        %4151 = vrot.lane.b32.xlu0 %v4080, 96
        %v4152 = vpop.permute.xlu0 %4151
        %vm4177 = vcmask 818944
        %4178 = vst.msk [vmem:[#allocation2] sm:$0xff] %vm4177, %v4106
        %vm4179 = vcmask 814848
        %4180 = vst.msk [vmem:[#allocation2 + $0x8] sm:$0xf] %vm4179, %v4108
        %4181 = vst.msk [vmem:[#allocation2 + $0x10] sm:$0xff] %vm4177, %v4110
        %4182 = vst.msk [vmem:[#allocation2 + $0x18] sm:$0xf] %vm4179, %v4112
        %4183 = vst.msk [vmem:[#allocation2 + $0x20] sm:$0xff] %vm4177, %v4114
        %4184 = vst.msk [vmem:[#allocation2 + $0x28] sm:$0xf] %vm4179, %v4116
        %4185 = vst.msk [vmem:[#allocation2 + $0x30] sm:$0xff] %vm4177, %v4118
        %4186 = vst.msk [vmem:[#allocation2 + $0x38] sm:$0xf] %vm4179, %v4120
        %4187 = vst.msk [vmem:[#allocation2 + $0x40] sm:$0xff] %vm4177, %v4122
        %4188 = vst.msk [vmem:[#allocation2 + $0x48] sm:$0xf] %vm4179, %v4124
        %4189 = vst.msk [vmem:[#allocation2 + $0x50] sm:$0xff] %vm4177, %v4126
        %4190 = vst.msk [vmem:[#allocation2 + $0x58] sm:$0xf] %vm4179, %v4128
        %4191 = vst.msk [vmem:[#allocation2 + $0x60] sm:$0xff] %vm4177, %v4130
        %4192 = vst.msk [vmem:[#allocation2 + $0x68] sm:$0xf] %vm4179, %v4132
        %4193 = vst.msk [vmem:[#allocation2 + $0x70] sm:$0xff] %vm4177, %v4134
        %4194 = vst.msk [vmem:[#allocation2 + $0x78] sm:$0xf] %vm4179, %v4136
        %4195 = vst.msk [vmem:[#allocation2 + $0x80] sm:$0xff] %vm4177, %v4138
        %4196 = vst.msk [vmem:[#allocation2 + $0x88] sm:$0xf] %vm4179, %v4140
        %4197 = vst.msk [vmem:[#allocation2 + $0x90] sm:$0xff] %vm4177, %v4142
        %4198 = vst.msk [vmem:[#allocation2 + $0x98] sm:$0xf] %vm4179, %v4144
        %4199 = vst.msk [vmem:[#allocation2 + $0xa0] sm:$0xff] %vm4177, %v4146
        %4200 = vst.msk [vmem:[#allocation2 + $0xa8] sm:$0xf] %vm4179, %v4148
        %4201 = vst.msk [vmem:[#allocation2 + $0xb0] sm:$0xff] %vm4177, %v4150
        %4202 = vst.msk [vmem:[#allocation2 + $0xb8] sm:$0xf] %vm4179, %v4152
        %v4203 = vld [vmem:[#allocation2] sm:$0xff]
        %v4204 = vld [vmem:[#allocation2 + $0x8] sm:$0xf]
        %v4205 = vld [vmem:[#allocation2 + $0x10] sm:$0xff]
        %v4206 = vld [vmem:[#allocation2 + $0x18] sm:$0xf]
        %v4207 = vld [vmem:[#allocation2 + $0x20] sm:$0xff]
        %v4208 = vld [vmem:[#allocation2 + $0x28] sm:$0xf]
        %v4209 = vld [vmem:[#allocation2 + $0x30] sm:$0xff]
        %v4210 = vld [vmem:[#allocation2 + $0x38] sm:$0xf]
        %v4211 = vld [vmem:[#allocation2 + $0x40] sm:$0xff]
        %v4212 = vld [vmem:[#allocation2 + $0x48] sm:$0xf]
        %v4213 = vld [vmem:[#allocation2 + $0x50] sm:$0xff]
        %v4214 = vld [vmem:[#allocation2 + $0x58] sm:$0xf]
        %v4215 = vld [vmem:[#allocation2 + $0x60] sm:$0xff]
        %v4216 = vld [vmem:[#allocation2 + $0x68] sm:$0xf]
        %v4217 = vld [vmem:[#allocation2 + $0x70] sm:$0xff]
        %v4218 = vld [vmem:[#allocation2 + $0x78] sm:$0xf]
        %v4219 = vld [vmem:[#allocation2 + $0x80] sm:$0xff]
        %v4220 = vld [vmem:[#allocation2 + $0x88] sm:$0xf]
        %v4221 = vld [vmem:[#allocation2 + $0x90] sm:$0xff]
        %v4222 = vld [vmem:[#allocation2 + $0x98] sm:$0xf]
        %v4223 = vld [vmem:[#allocation2 + $0xa0] sm:$0xff]
        %v4224 = vld [vmem:[#allocation2 + $0xa8] sm:$0xf]
        %v4225 = vld [vmem:[#allocation2 + $0xb0] sm:$0xff]
        %v4226 = vld [vmem:[#allocation2 + $0xb8] sm:$0xf]
        %v4227 = vpack.c.bf16 %v4204, %v4203
        %v4228 = vpack.c.bf16 %v4206, %v4205
        %v4229 = vpack.c.bf16 %v4208, %v4207
        %v4230 = vpack.c.bf16 %v4210, %v4209
        %v4231 = vpack.c.bf16 %v4212, %v4211
        %v4232 = vpack.c.bf16 %v4214, %v4213
        %v4233 = vpack.c.bf16 %v4216, %v4215
        %v4234 = vpack.c.bf16 %v4218, %v4217
        %v4235 = vpack.c.bf16 %v4220, %v4219
        %v4236 = vpack.c.bf16 %v4222, %v4221
        %v4237 = vpack.c.bf16 %v4224, %v4223
        %v4238 = vpack.c.bf16 %v4226, %v4225
        %4239 = vmatprep.subr.bf16.mxu0 0
        %4240 = vmatpush1.bf16.msra.mxu0 %v611
        %4241 = vmatprep.subr.bf16.mxu0 0
        %4242 = vmatpush1.bf16.msra.mxu0 %v612
        %4243 = vmatprep.subr.bf16.mxu0 0
        %4244 = vmatpush1.bf16.msra.mxu0 %v613
        %4245 = vmatprep.subr.bf16.mxu0 0
        %4246 = vmatpush1.bf16.msra.mxu0 %v614
        %4247 = vmatprep.subr.bf16.mxu0 0
        %4248 = vmatpush1.bf16.msra.mxu0 %v615
        %4249 = vmatprep.subr.bf16.mxu0 0
        %4250 = vmatpush1.bf16.msra.mxu0 %v616
        %4251 = vmatprep.subr.bf16.mxu0 0
        %4252 = vmatpush1.bf16.msra.mxu0 %v617
        %4253 = vmatprep.subr.bf16.mxu0 0
        %4254 = vmatpush1.bf16.msra.mxu0 %v618
        %4255 = vmatprep.subr.bf16.mxu0 0
        %4256 = vmatpush1.bf16.msra.mxu0 0
        %4257 = vmatprep.subr.bf16.mxu0 0
        %4258 = vmatpush1.bf16.msra.mxu0 0
        %4259 = vmatprep.subr.bf16.mxu0 0
        %4260 = vmatpush1.bf16.msra.mxu0 0
        %4261 = vmatprep.subr.bf16.mxu0 0
        %4262 = vmatpush1.bf16.msra.mxu0 0
        %4263 = vmatprep.subr.bf16.mxu0 0
        %4264 = vmatpush1.bf16.msra.mxu0 0
        %4265 = vmatprep.subr.bf16.mxu0 0
        %4266 = vmatpush1.bf16.msra.mxu0 0
        %4267 = vmatprep.subr.bf16.mxu0 0
        %4268 = vmatpush1.bf16.msra.mxu0 0
        %4269 = vmatprep.subr.bf16.mxu0 0
        %4270 = vmatpush1.bf16.msra.mxu0 0
        %4271 = vmatprep.mubr.bf16.mxu0 0
        %4272 = vmatmul.mubr.bf16.gmra.mrb[0].mxu0 %v4227
        %v4273 = vpop.f32.mrb[0].mxu0
        %v4274 = vadd.f32 0.0, %v4273
        %v4275 = vpop.f32.mrb[0].mxu0
        %v4276 = vpop.f32.mrb[0].mxu0
        %v4277 = vadd.f32 0.0, %v4276
        %v4278 = vpop.f32.mrb[0].mxu0
        %4279 = vdwg.mxu0
        %4280 = vmatprep.subr.bf16.mxu0 0
        %4281 = vmatpush1.bf16.msra.mxu0 %v611
        %4282 = vmatprep.subr.bf16.mxu0 0
        %4283 = vmatpush1.bf16.msra.mxu0 %v612
        %4284 = vmatprep.subr.bf16.mxu0 0
        %4285 = vmatpush1.bf16.msra.mxu0 %v613
        %4286 = vmatprep.subr.bf16.mxu0 0
        %4287 = vmatpush1.bf16.msra.mxu0 %v614
        %4288 = vmatprep.subr.bf16.mxu0 0
        %4289 = vmatpush1.bf16.msra.mxu0 %v615
        %4290 = vmatprep.subr.bf16.mxu0 0
        %4291 = vmatpush1.bf16.msra.mxu0 %v616
        %4292 = vmatprep.subr.bf16.mxu0 0
        %4293 = vmatpush1.bf16.msra.mxu0 %v617
        %4294 = vmatprep.subr.bf16.mxu0 0
        %4295 = vmatpush1.bf16.msra.mxu0 %v618
        %4296 = vmatprep.subr.bf16.mxu0 0
        %4297 = vmatpush1.bf16.msra.mxu0 0
        %4298 = vmatprep.subr.bf16.mxu0 0
        %4299 = vmatpush1.bf16.msra.mxu0 0
        %4300 = vmatprep.subr.bf16.mxu0 0
        %4301 = vmatpush1.bf16.msra.mxu0 0
        %4302 = vmatprep.subr.bf16.mxu0 0
        %4303 = vmatpush1.bf16.msra.mxu0 0
        %4304 = vmatprep.subr.bf16.mxu0 0
        %4305 = vmatpush1.bf16.msra.mxu0 0
        %4306 = vmatprep.subr.bf16.mxu0 0
        %4307 = vmatpush1.bf16.msra.mxu0 0
        %4308 = vmatprep.subr.bf16.mxu0 0
        %4309 = vmatpush1.bf16.msra.mxu0 0
        %4310 = vmatprep.subr.bf16.mxu0 0
        %4311 = vmatpush1.bf16.msra.mxu0 0
        %4312 = vmatprep.mubr.bf16.mxu0 0
        %4313 = vmatmul.mubr.bf16.gmra.mrb[0].mxu0 %v4228
        %v4314 = vpop.f32.mrb[0].mxu0
        %v4315 = vadd.f32 0.0, %v4314
        %v4316 = vpop.f32.mrb[0].mxu0
        %v4317 = vpop.f32.mrb[0].mxu0
        %v4318 = vadd.f32 0.0, %v4317
        %v4319 = vpop.f32.mrb[0].mxu0
        %4320 = vdwg.mxu0
        %4321 = vmatprep.subr.bf16.mxu0 0
        %4322 = vmatpush1.bf16.msra.mxu0 %v611
        %4323 = vmatprep.subr.bf16.mxu0 0
        %4324 = vmatpush1.bf16.msra.mxu0 %v612
        %4325 = vmatprep.subr.bf16.mxu0 0
        %4326 = vmatpush1.bf16.msra.mxu0 %v613
        %4327 = vmatprep.subr.bf16.mxu0 0
        %4328 = vmatpush1.bf16.msra.mxu0 %v614
        %4329 = vmatprep.subr.bf16.mxu0 0
        %4330 = vmatpush1.bf16.msra.mxu0 %v615
        %4331 = vmatprep.subr.bf16.mxu0 0
        %4332 = vmatpush1.bf16.msra.mxu0 %v616
        %4333 = vmatprep.subr.bf16.mxu0 0
        %4334 = vmatpush1.bf16.msra.mxu0 %v617
        %4335 = vmatprep.subr.bf16.mxu0 0
        %4336 = vmatpush1.bf16.msra.mxu0 %v618
        %4337 = vmatprep.subr.bf16.mxu0 0
        %4338 = vmatpush1.bf16.msra.mxu0 0
        %4339 = vmatprep.subr.bf16.mxu0 0
        %4340 = vmatpush1.bf16.msra.mxu0 0
        %4341 = vmatprep.subr.bf16.mxu0 0
        %4342 = vmatpush1.bf16.msra.mxu0 0
        %4343 = vmatprep.subr.bf16.mxu0 0
        %4344 = vmatpush1.bf16.msra.mxu0 0
        %4345 = vmatprep.subr.bf16.mxu0 0
        %4346 = vmatpush1.bf16.msra.mxu0 0
        %4347 = vmatprep.subr.bf16.mxu0 0
        %4348 = vmatpush1.bf16.msra.mxu0 0
        %4349 = vmatprep.subr.bf16.mxu0 0
        %4350 = vmatpush1.bf16.msra.mxu0 0
        %4351 = vmatprep.subr.bf16.mxu0 0
        %4352 = vmatpush1.bf16.msra.mxu0 0
        %4353 = vmatprep.mubr.bf16.mxu0 0
        %4354 = vmatmul.mubr.bf16.gmra.mrb[0].mxu0 %v4229
        %v4355 = vpop.f32.mrb[0].mxu0
        %v4356 = vadd.f32 0.0, %v4355
        %v4357 = vpop.f32.mrb[0].mxu0
        %v4358 = vpop.f32.mrb[0].mxu0
        %v4359 = vadd.f32 0.0, %v4358
        %v4360 = vpop.f32.mrb[0].mxu0
        %4361 = vdwg.mxu0
        %4362 = vmatprep.subr.bf16.mxu0 0
        %4363 = vmatpush1.bf16.msra.mxu0 %v611
        %4364 = vmatprep.subr.bf16.mxu0 0
        %4365 = vmatpush1.bf16.msra.mxu0 %v612
        %4366 = vmatprep.subr.bf16.mxu0 0
        %4367 = vmatpush1.bf16.msra.mxu0 %v613
        %4368 = vmatprep.subr.bf16.mxu0 0
        %4369 = vmatpush1.bf16.msra.mxu0 %v614
        %4370 = vmatprep.subr.bf16.mxu0 0
        %4371 = vmatpush1.bf16.msra.mxu0 %v615
        %4372 = vmatprep.subr.bf16.mxu0 0
        %4373 = vmatpush1.bf16.msra.mxu0 %v616
        %4374 = vmatprep.subr.bf16.mxu0 0
        %4375 = vmatpush1.bf16.msra.mxu0 %v617
        %4376 = vmatprep.subr.bf16.mxu0 0
        %4377 = vmatpush1.bf16.msra.mxu0 %v618
        %4378 = vmatprep.subr.bf16.mxu0 0
        %4379 = vmatpush1.bf16.msra.mxu0 0
        %4380 = vmatprep.subr.bf16.mxu0 0
        %4381 = vmatpush1.bf16.msra.mxu0 0
        %4382 = vmatprep.subr.bf16.mxu0 0
        %4383 = vmatpush1.bf16.msra.mxu0 0
        %4384 = vmatprep.subr.bf16.mxu0 0
        %4385 = vmatpush1.bf16.msra.mxu0 0
        %4386 = vmatprep.subr.bf16.mxu0 0
        %4387 = vmatpush1.bf16.msra.mxu0 0
        %4388 = vmatprep.subr.bf16.mxu0 0
        %4389 = vmatpush1.bf16.msra.mxu0 0
        %4390 = vmatprep.subr.bf16.mxu0 0
        %4391 = vmatpush1.bf16.msra.mxu0 0
        %4392 = vmatprep.subr.bf16.mxu0 0
        %4393 = vmatpush1.bf16.msra.mxu0 0
        %4394 = vmatprep.mubr.bf16.mxu0 0
        %4395 = vmatmul.mubr.bf16.gmra.mrb[0].mxu0 %v4230
        %v4396 = vpop.f32.mrb[0].mxu0
        %v4397 = vadd.f32 0.0, %v4396
        %v4398 = vpop.f32.mrb[0].mxu0
        %v4399 = vpop.f32.mrb[0].mxu0
        %v4400 = vadd.f32 0.0, %v4399
        %v4401 = vpop.f32.mrb[0].mxu0
        %4402 = vdwg.mxu0
        %4403 = vmatprep.subr.bf16.mxu0 0
        %4404 = vmatpush1.bf16.msra.mxu0 %v611
        %4405 = vmatprep.subr.bf16.mxu0 0
        %4406 = vmatpush1.bf16.msra.mxu0 %v612
        %4407 = vmatprep.subr.bf16.mxu0 0
        %4408 = vmatpush1.bf16.msra.mxu0 %v613
        %4409 = vmatprep.subr.bf16.mxu0 0
        %4410 = vmatpush1.bf16.msra.mxu0 %v614
        %4411 = vmatprep.subr.bf16.mxu0 0
        %4412 = vmatpush1.bf16.msra.mxu0 %v615
        %4413 = vmatprep.subr.bf16.mxu0 0
        %4414 = vmatpush1.bf16.msra.mxu0 %v616
        %4415 = vmatprep.subr.bf16.mxu0 0
        %4416 = vmatpush1.bf16.msra.mxu0 %v617
        %4417 = vmatprep.subr.bf16.mxu0 0
        %4418 = vmatpush1.bf16.msra.mxu0 %v618
        %4419 = vmatprep.subr.bf16.mxu0 0
        %4420 = vmatpush1.bf16.msra.mxu0 0
        %4421 = vmatprep.subr.bf16.mxu0 0
        %4422 = vmatpush1.bf16.msra.mxu0 0
        %4423 = vmatprep.subr.bf16.mxu0 0
        %4424 = vmatpush1.bf16.msra.mxu0 0
        %4425 = vmatprep.subr.bf16.mxu0 0
        %4426 = vmatpush1.bf16.msra.mxu0 0
        %4427 = vmatprep.subr.bf16.mxu0 0
        %4428 = vmatpush1.bf16.msra.mxu0 0
        %4429 = vmatprep.subr.bf16.mxu0 0
        %4430 = vmatpush1.bf16.msra.mxu0 0
        %4431 = vmatprep.subr.bf16.mxu0 0
        %4432 = vmatpush1.bf16.msra.mxu0 0
        %4433 = vmatprep.subr.bf16.mxu0 0
        %4434 = vmatpush1.bf16.msra.mxu0 0
        %4435 = vmatprep.mubr.bf16.mxu0 0
        %4436 = vmatmul.mubr.bf16.gmra.mrb[0].mxu0 %v4231
        %v4437 = vpop.f32.mrb[0].mxu0
        %v4438 = vadd.f32 0.0, %v4437
        %v4439 = vpop.f32.mrb[0].mxu0
        %v4440 = vpop.f32.mrb[0].mxu0
        %v4441 = vadd.f32 0.0, %v4440
        %v4442 = vpop.f32.mrb[0].mxu0
        %4443 = vdwg.mxu0
        %4444 = vmatprep.subr.bf16.mxu0 0
        %4445 = vmatpush1.bf16.msra.mxu0 %v611
        %4446 = vmatprep.subr.bf16.mxu0 0
        %4447 = vmatpush1.bf16.msra.mxu0 %v612
        %4448 = vmatprep.subr.bf16.mxu0 0
        %4449 = vmatpush1.bf16.msra.mxu0 %v613
        %4450 = vmatprep.subr.bf16.mxu0 0
        %4451 = vmatpush1.bf16.msra.mxu0 %v614
        %4452 = vmatprep.subr.bf16.mxu0 0
        %4453 = vmatpush1.bf16.msra.mxu0 %v615
        %4454 = vmatprep.subr.bf16.mxu0 0
        %4455 = vmatpush1.bf16.msra.mxu0 %v616
        %4456 = vmatprep.subr.bf16.mxu0 0
        %4457 = vmatpush1.bf16.msra.mxu0 %v617
        %4458 = vmatprep.subr.bf16.mxu0 0
        %4459 = vmatpush1.bf16.msra.mxu0 %v618
        %4460 = vmatprep.subr.bf16.mxu0 0
        %4461 = vmatpush1.bf16.msra.mxu0 0
        %4462 = vmatprep.subr.bf16.mxu0 0
        %4463 = vmatpush1.bf16.msra.mxu0 0
        %4464 = vmatprep.subr.bf16.mxu0 0
        %4465 = vmatpush1.bf16.msra.mxu0 0
        %4466 = vmatprep.subr.bf16.mxu0 0
        %4467 = vmatpush1.bf16.msra.mxu0 0
        %4468 = vmatprep.subr.bf16.mxu0 0
        %4469 = vmatpush1.bf16.msra.mxu0 0
        %4470 = vmatprep.subr.bf16.mxu0 0
        %4471 = vmatpush1.bf16.msra.mxu0 0
        %4472 = vmatprep.subr.bf16.mxu0 0
        %4473 = vmatpush1.bf16.msra.mxu0 0
        %4474 = vmatprep.subr.bf16.mxu0 0
        %4475 = vmatpush1.bf16.msra.mxu0 0
        %4476 = vmatprep.mubr.bf16.mxu0 0
        %4477 = vmatmul.mubr.bf16.gmra.mrb[0].mxu0 %v4232
        %v4478 = vpop.f32.mrb[0].mxu0
        %v4479 = vadd.f32 0.0, %v4478
        %v4480 = vpop.f32.mrb[0].mxu0
        %v4481 = vpop.f32.mrb[0].mxu0
        %v4482 = vadd.f32 0.0, %v4481
        %v4483 = vpop.f32.mrb[0].mxu0
        %4484 = vdwg.mxu0
        %4485 = vmatprep.subr.bf16.mxu0 0
        %4486 = vmatpush1.bf16.msra.mxu0 %v611
        %4487 = vmatprep.subr.bf16.mxu0 0
        %4488 = vmatpush1.bf16.msra.mxu0 %v612
        %4489 = vmatprep.subr.bf16.mxu0 0
        %4490 = vmatpush1.bf16.msra.mxu0 %v613
        %4491 = vmatprep.subr.bf16.mxu0 0
        %4492 = vmatpush1.bf16.msra.mxu0 %v614
        %4493 = vmatprep.subr.bf16.mxu0 0
        %4494 = vmatpush1.bf16.msra.mxu0 %v615
        %4495 = vmatprep.subr.bf16.mxu0 0
        %4496 = vmatpush1.bf16.msra.mxu0 %v616
        %4497 = vmatprep.subr.bf16.mxu0 0
        %4498 = vmatpush1.bf16.msra.mxu0 %v617
        %4499 = vmatprep.subr.bf16.mxu0 0
        %4500 = vmatpush1.bf16.msra.mxu0 %v618
        %4501 = vmatprep.subr.bf16.mxu0 0
        %4502 = vmatpush1.bf16.msra.mxu0 0
        %4503 = vmatprep.subr.bf16.mxu0 0
        %4504 = vmatpush1.bf16.msra.mxu0 0
        %4505 = vmatprep.subr.bf16.mxu0 0
        %4506 = vmatpush1.bf16.msra.mxu0 0
        %4507 = vmatprep.subr.bf16.mxu0 0
        %4508 = vmatpush1.bf16.msra.mxu0 0
        %4509 = vmatprep.subr.bf16.mxu0 0
        %4510 = vmatpush1.bf16.msra.mxu0 0
        %4511 = vmatprep.subr.bf16.mxu0 0
        %4512 = vmatpush1.bf16.msra.mxu0 0
        %4513 = vmatprep.subr.bf16.mxu0 0
        %4514 = vmatpush1.bf16.msra.mxu0 0
        %4515 = vmatprep.subr.bf16.mxu0 0
        %4516 = vmatpush1.bf16.msra.mxu0 0
        %4517 = vmatprep.mubr.bf16.mxu0 0
        %4518 = vmatmul.mubr.bf16.gmra.mrb[0].mxu0 %v4233
        %v4519 = vpop.f32.mrb[0].mxu0
        %v4520 = vadd.f32 0.0, %v4519
        %v4521 = vpop.f32.mrb[0].mxu0
        %v4522 = vpop.f32.mrb[0].mxu0
        %v4523 = vadd.f32 0.0, %v4522
        %v4524 = vpop.f32.mrb[0].mxu0
        %4525 = vdwg.mxu0
        %4526 = vmatprep.subr.bf16.mxu0 0
        %4527 = vmatpush1.bf16.msra.mxu0 %v611
        %4528 = vmatprep.subr.bf16.mxu0 0
        %4529 = vmatpush1.bf16.msra.mxu0 %v612
        %4530 = vmatprep.subr.bf16.mxu0 0
        %4531 = vmatpush1.bf16.msra.mxu0 %v613
        %4532 = vmatprep.subr.bf16.mxu0 0
        %4533 = vmatpush1.bf16.msra.mxu0 %v614
        %4534 = vmatprep.subr.bf16.mxu0 0
        %4535 = vmatpush1.bf16.msra.mxu0 %v615
        %4536 = vmatprep.subr.bf16.mxu0 0
        %4537 = vmatpush1.bf16.msra.mxu0 %v616
        %4538 = vmatprep.subr.bf16.mxu0 0
        %4539 = vmatpush1.bf16.msra.mxu0 %v617
        %4540 = vmatprep.subr.bf16.mxu0 0
        %4541 = vmatpush1.bf16.msra.mxu0 %v618
        %4542 = vmatprep.subr.bf16.mxu0 0
        %4543 = vmatpush1.bf16.msra.mxu0 0
        %4544 = vmatprep.subr.bf16.mxu0 0
        %4545 = vmatpush1.bf16.msra.mxu0 0
        %4546 = vmatprep.subr.bf16.mxu0 0
        %4547 = vmatpush1.bf16.msra.mxu0 0
        %4548 = vmatprep.subr.bf16.mxu0 0
        %4549 = vmatpush1.bf16.msra.mxu0 0
        %4550 = vmatprep.subr.bf16.mxu0 0
        %4551 = vmatpush1.bf16.msra.mxu0 0
        %4552 = vmatprep.subr.bf16.mxu0 0
        %4553 = vmatpush1.bf16.msra.mxu0 0
        %4554 = vmatprep.subr.bf16.mxu0 0
        %4555 = vmatpush1.bf16.msra.mxu0 0
        %4556 = vmatprep.subr.bf16.mxu0 0
        %4557 = vmatpush1.bf16.msra.mxu0 0
        %4558 = vmatprep.mubr.bf16.mxu0 0
        %4559 = vmatmul.mubr.bf16.gmra.mrb[0].mxu0 %v4234
        %v4560 = vpop.f32.mrb[0].mxu0
        %v4561 = vadd.f32 0.0, %v4560
        %v4562 = vpop.f32.mrb[0].mxu0
        %v4563 = vpop.f32.mrb[0].mxu0
        %v4564 = vadd.f32 0.0, %v4563
        %v4565 = vpop.f32.mrb[0].mxu0
        %4566 = vdwg.mxu0
        %4567 = vmatprep.subr.bf16.mxu0 0
        %4568 = vmatpush1.bf16.msra.mxu0 %v611
        %4569 = vmatprep.subr.bf16.mxu0 0
        %4570 = vmatpush1.bf16.msra.mxu0 %v612
        %4571 = vmatprep.subr.bf16.mxu0 0
        %4572 = vmatpush1.bf16.msra.mxu0 %v613
        %4573 = vmatprep.subr.bf16.mxu0 0
        %4574 = vmatpush1.bf16.msra.mxu0 %v614
        %4575 = vmatprep.subr.bf16.mxu0 0
        %4576 = vmatpush1.bf16.msra.mxu0 %v615
        %4577 = vmatprep.subr.bf16.mxu0 0
        %4578 = vmatpush1.bf16.msra.mxu0 %v616
        %4579 = vmatprep.subr.bf16.mxu0 0
        %4580 = vmatpush1.bf16.msra.mxu0 %v617
        %4581 = vmatprep.subr.bf16.mxu0 0
        %4582 = vmatpush1.bf16.msra.mxu0 %v618
        %4583 = vmatprep.subr.bf16.mxu0 0
        %4584 = vmatpush1.bf16.msra.mxu0 0
        %4585 = vmatprep.subr.bf16.mxu0 0
        %4586 = vmatpush1.bf16.msra.mxu0 0
        %4587 = vmatprep.subr.bf16.mxu0 0
        %4588 = vmatpush1.bf16.msra.mxu0 0
        %4589 = vmatprep.subr.bf16.mxu0 0
        %4590 = vmatpush1.bf16.msra.mxu0 0
        %4591 = vmatprep.subr.bf16.mxu0 0
        %4592 = vmatpush1.bf16.msra.mxu0 0
        %4593 = vmatprep.subr.bf16.mxu0 0
        %4594 = vmatpush1.bf16.msra.mxu0 0
        %4595 = vmatprep.subr.bf16.mxu0 0
        %4596 = vmatpush1.bf16.msra.mxu0 0
        %4597 = vmatprep.subr.bf16.mxu0 0
        %4598 = vmatpush1.bf16.msra.mxu0 0
        %4599 = vmatprep.mubr.bf16.mxu0 0
        %4600 = vmatmul.mubr.bf16.gmra.mrb[0].mxu0 %v4235
        %v4601 = vpop.f32.mrb[0].mxu0
        %v4602 = vadd.f32 0.0, %v4601
        %v4603 = vpop.f32.mrb[0].mxu0
        %v4604 = vpop.f32.mrb[0].mxu0
        %v4605 = vadd.f32 0.0, %v4604
        %v4606 = vpop.f32.mrb[0].mxu0
        %4607 = vdwg.mxu0
        %4608 = vmatprep.subr.bf16.mxu0 0
        %4609 = vmatpush1.bf16.msra.mxu0 %v611
        %4610 = vmatprep.subr.bf16.mxu0 0
        %4611 = vmatpush1.bf16.msra.mxu0 %v612
        %4612 = vmatprep.subr.bf16.mxu0 0
        %4613 = vmatpush1.bf16.msra.mxu0 %v613
        %4614 = vmatprep.subr.bf16.mxu0 0
        %4615 = vmatpush1.bf16.msra.mxu0 %v614
        %4616 = vmatprep.subr.bf16.mxu0 0
        %4617 = vmatpush1.bf16.msra.mxu0 %v615
        %4618 = vmatprep.subr.bf16.mxu0 0
        %4619 = vmatpush1.bf16.msra.mxu0 %v616
        %4620 = vmatprep.subr.bf16.mxu0 0
        %4621 = vmatpush1.bf16.msra.mxu0 %v617
        %4622 = vmatprep.subr.bf16.mxu0 0
        %4623 = vmatpush1.bf16.msra.mxu0 %v618
        %4624 = vmatprep.subr.bf16.mxu0 0
        %4625 = vmatpush1.bf16.msra.mxu0 0
        %4626 = vmatprep.subr.bf16.mxu0 0
        %4627 = vmatpush1.bf16.msra.mxu0 0
        %4628 = vmatprep.subr.bf16.mxu0 0
        %4629 = vmatpush1.bf16.msra.mxu0 0
        %4630 = vmatprep.subr.bf16.mxu0 0
        %4631 = vmatpush1.bf16.msra.mxu0 0
        %4632 = vmatprep.subr.bf16.mxu0 0
        %4633 = vmatpush1.bf16.msra.mxu0 0
        %4634 = vmatprep.subr.bf16.mxu0 0
        %4635 = vmatpush1.bf16.msra.mxu0 0
        %4636 = vmatprep.subr.bf16.mxu0 0
        %4637 = vmatpush1.bf16.msra.mxu0 0
        %4638 = vmatprep.subr.bf16.mxu0 0
        %4639 = vmatpush1.bf16.msra.mxu0 0
        %4640 = vmatprep.mubr.bf16.mxu0 0
        %4641 = vmatmul.mubr.bf16.gmra.mrb[0].mxu0 %v4236
        %v4642 = vpop.f32.mrb[0].mxu0
        %v4643 = vadd.f32 0.0, %v4642
        %v4644 = vpop.f32.mrb[0].mxu0
        %v4645 = vpop.f32.mrb[0].mxu0
        %v4646 = vadd.f32 0.0, %v4645
        %v4647 = vpop.f32.mrb[0].mxu0
        %4648 = vdwg.mxu0
        %4649 = vmatprep.subr.bf16.mxu0 0
        %4650 = vmatpush1.bf16.msra.mxu0 %v611
        %4651 = vmatprep.subr.bf16.mxu0 0
        %4652 = vmatpush1.bf16.msra.mxu0 %v612
        %4653 = vmatprep.subr.bf16.mxu0 0
        %4654 = vmatpush1.bf16.msra.mxu0 %v613
        %4655 = vmatprep.subr.bf16.mxu0 0
        %4656 = vmatpush1.bf16.msra.mxu0 %v614
        %4657 = vmatprep.subr.bf16.mxu0 0
        %4658 = vmatpush1.bf16.msra.mxu0 %v615
        %4659 = vmatprep.subr.bf16.mxu0 0
        %4660 = vmatpush1.bf16.msra.mxu0 %v616
        %4661 = vmatprep.subr.bf16.mxu0 0
        %4662 = vmatpush1.bf16.msra.mxu0 %v617
        %4663 = vmatprep.subr.bf16.mxu0 0
        %4664 = vmatpush1.bf16.msra.mxu0 %v618
        %4665 = vmatprep.subr.bf16.mxu0 0
        %4666 = vmatpush1.bf16.msra.mxu0 0
        %4667 = vmatprep.subr.bf16.mxu0 0
        %4668 = vmatpush1.bf16.msra.mxu0 0
        %4669 = vmatprep.subr.bf16.mxu0 0
        %4670 = vmatpush1.bf16.msra.mxu0 0
        %4671 = vmatprep.subr.bf16.mxu0 0
        %4672 = vmatpush1.bf16.msra.mxu0 0
        %4673 = vmatprep.subr.bf16.mxu0 0
        %4674 = vmatpush1.bf16.msra.mxu0 0
        %4675 = vmatprep.subr.bf16.mxu0 0
        %4676 = vmatpush1.bf16.msra.mxu0 0
        %4677 = vmatprep.subr.bf16.mxu0 0
        %4678 = vmatpush1.bf16.msra.mxu0 0
        %4679 = vmatprep.subr.bf16.mxu0 0
        %4680 = vmatpush1.bf16.msra.mxu0 0
        %4681 = vmatprep.mubr.bf16.mxu0 0
        %4682 = vmatmul.mubr.bf16.gmra.mrb[0].mxu0 %v4237
        %v4683 = vpop.f32.mrb[0].mxu0
        %v4684 = vadd.f32 0.0, %v4683
        %v4685 = vpop.f32.mrb[0].mxu0
        %v4686 = vpop.f32.mrb[0].mxu0
        %v4687 = vadd.f32 0.0, %v4686
        %v4688 = vpop.f32.mrb[0].mxu0
        %4689 = vdwg.mxu0
        %4690 = vmatprep.subr.bf16.mxu0 0
        %4691 = vmatpush1.bf16.msra.mxu0 %v611
        %4692 = vmatprep.subr.bf16.mxu0 0
        %4693 = vmatpush1.bf16.msra.mxu0 %v612
        %4694 = vmatprep.subr.bf16.mxu0 0
        %4695 = vmatpush1.bf16.msra.mxu0 %v613
        %4696 = vmatprep.subr.bf16.mxu0 0
        %4697 = vmatpush1.bf16.msra.mxu0 %v614
        %4698 = vmatprep.subr.bf16.mxu0 0
        %4699 = vmatpush1.bf16.msra.mxu0 %v615
        %4700 = vmatprep.subr.bf16.mxu0 0
        %4701 = vmatpush1.bf16.msra.mxu0 %v616
        %4702 = vmatprep.subr.bf16.mxu0 0
        %4703 = vmatpush1.bf16.msra.mxu0 %v617
        %4704 = vmatprep.subr.bf16.mxu0 0
        %4705 = vmatpush1.bf16.msra.mxu0 %v618
        %4706 = vmatprep.subr.bf16.mxu0 0
        %4707 = vmatpush1.bf16.msra.mxu0 0
        %4708 = vmatprep.subr.bf16.mxu0 0
        %4709 = vmatpush1.bf16.msra.mxu0 0
        %4710 = vmatprep.subr.bf16.mxu0 0
        %4711 = vmatpush1.bf16.msra.mxu0 0
        %4712 = vmatprep.subr.bf16.mxu0 0
        %4713 = vmatpush1.bf16.msra.mxu0 0
        %4714 = vmatprep.subr.bf16.mxu0 0
        %4715 = vmatpush1.bf16.msra.mxu0 0
        %4716 = vmatprep.subr.bf16.mxu0 0
        %4717 = vmatpush1.bf16.msra.mxu0 0
        %4718 = vmatprep.subr.bf16.mxu0 0
        %4719 = vmatpush1.bf16.msra.mxu0 0
        %4720 = vmatprep.subr.bf16.mxu0 0
        %4721 = vmatpush1.bf16.msra.mxu0 0
        %4722 = vmatprep.mubr.bf16.mxu0 0
        %4723 = vmatmul.mubr.bf16.gmra.mrb[0].mxu0 %v4238
        %v4724 = vpop.f32.mrb[0].mxu0
        %v4725 = vadd.f32 0.0, %v4724
        %v4726 = vpop.f32.mrb[0].mxu0
        %v4727 = vpop.f32.mrb[0].mxu0
        %v4728 = vadd.f32 0.0, %v4727
        %v4729 = vpop.f32.mrb[0].mxu0
        %4730 = vdwg.mxu0
        %v4731 = vmax.f32 %v4274, 0.0
        %v4732 = vmax.f32 %v4277, 0.0
        %v4733 = vmax.f32 %v4315, 0.0
        %v4734 = vmax.f32 %v4318, 0.0
        %v4735 = vmax.f32 %v4356, 0.0
        %v4736 = vmax.f32 %v4359, 0.0
        %v4737 = vmax.f32 %v4397, 0.0
        %v4738 = vmax.f32 %v4400, 0.0
        %v4739 = vmax.f32 %v4438, 0.0
        %v4740 = vmax.f32 %v4441, 0.0
        %v4741 = vmax.f32 %v4479, 0.0
        %v4742 = vmax.f32 %v4482, 0.0
        %v4743 = vmax.f32 %v4520, 0.0
        %v4744 = vmax.f32 %v4523, 0.0
        %v4745 = vmax.f32 %v4561, 0.0
        %v4746 = vmax.f32 %v4564, 0.0
        %v4747 = vmax.f32 %v4602, 0.0
        %v4748 = vmax.f32 %v4605, 0.0
        %v4749 = vmax.f32 %v4643, 0.0
        %v4750 = vmax.f32 %v4646, 0.0
        %v4751 = vmax.f32 %v4684, 0.0
        %v4752 = vmax.f32 %v4687, 0.0
        %v4753 = vmax.f32 %v4725, 0.0
        %v4754 = vmax.f32 %v4728, 0.0
        %vm4755 = vcmask 48128
        %4756 = vst.msk [vmem:[#allocation4] sm:$0xff] %vm4755, %v4731
        %vm4757 = vcmask 44032
        %4758 = vst.msk [vmem:[#allocation4 + $0x8] sm:$0xf] %vm4757, %v4732
        %4759 = vst.msk [vmem:[#allocation4 + $0x10] sm:$0xff] %vm4755, %v4733
        %4760 = vst.msk [vmem:[#allocation4 + $0x18] sm:$0xf] %vm4757, %v4734
        %4761 = vst.msk [vmem:[#allocation4 + $0x20] sm:$0xff] %vm4755, %v4735
        %4762 = vst.msk [vmem:[#allocation4 + $0x28] sm:$0xf] %vm4757, %v4736
        %4763 = vst.msk [vmem:[#allocation4 + $0x30] sm:$0xff] %vm4755, %v4737
        %4764 = vst.msk [vmem:[#allocation4 + $0x38] sm:$0xf] %vm4757, %v4738
        %4765 = vst.msk [vmem:[#allocation4 + $0x40] sm:$0xff] %vm4755, %v4739
        %4766 = vst.msk [vmem:[#allocation4 + $0x48] sm:$0xf] %vm4757, %v4740
        %4767 = vst.msk [vmem:[#allocation4 + $0x50] sm:$0xff] %vm4755, %v4741
        %4768 = vst.msk [vmem:[#allocation4 + $0x58] sm:$0xf] %vm4757, %v4742
        %4769 = vst.msk [vmem:[#allocation4 + $0x60] sm:$0xff] %vm4755, %v4743
        %4770 = vst.msk [vmem:[#allocation4 + $0x68] sm:$0xf] %vm4757, %v4744
        %4771 = vst.msk [vmem:[#allocation4 + $0x70] sm:$0xff] %vm4755, %v4745
        %4772 = vst.msk [vmem:[#allocation4 + $0x78] sm:$0xf] %vm4757, %v4746
        %4773 = vst.msk [vmem:[#allocation4 + $0x80] sm:$0xff] %vm4755, %v4747
        %4774 = vst.msk [vmem:[#allocation4 + $0x88] sm:$0xf] %vm4757, %v4748
        %4775 = vst.msk [vmem:[#allocation4 + $0x90] sm:$0xff] %vm4755, %v4749
        %4776 = vst.msk [vmem:[#allocation4 + $0x98] sm:$0xf] %vm4757, %v4750
        %4777 = vst.msk [vmem:[#allocation4 + $0xa0] sm:$0xff] %vm4755, %v4751
        %4778 = vst.msk [vmem:[#allocation4 + $0xa8] sm:$0xf] %vm4757, %v4752
        %4779 = vst.msk [vmem:[#allocation4 + $0xb0] sm:$0xff] %vm4755, %v4753
        %4780 = vst.msk [vmem:[#allocation4 + $0xb8] sm:$0xf] %vm4757, %v4754
        %v4781 = vld [vmem:[%s4] sm:$0xff]
        %v4782 = vld [vmem:[%s4 + $0x8] sm:$0xff]
        %v4783 = vld [vmem:[%s4 + $0x10] sm:$0xff]
        %v4784 = vld [vmem:[%s4 + $0x18] sm:$0xff]
        %v4785 = vld [vmem:[%s4 + $0x20] sm:$0xff]
        %v4786 = vld [vmem:[%s4 + $0x28] sm:$0xff]
        %v4787 = vld [vmem:[%s4 + $0x30] sm:$0xff]
        %v4788 = vld [vmem:[%s4 + $0x38] sm:$0xff]
        %v4789 = vld [vmem:[%s4 + $0x40] sm:$0xff]
        %v4790 = vld [vmem:[%s4 + $0x48] sm:$0xff]
        %v4791 = vld [vmem:[%s4 + $0x50] sm:$0xff]
        %v4792 = vld [vmem:[%s4 + $0x58] sm:$0xff]
        %v4793 = vld [vmem:[%s4 + $0x60] sm:$0xff]
        %v4794 = vld [vmem:[%s4 + $0x68] sm:$0xff]
        %v4795 = vld [vmem:[%s4 + $0x70] sm:$0xff]
        %v4796 = vld [vmem:[%s4 + $0x78] sm:$0xff]
        %v4797 = vld [vmem:[%s4 + $0x80] sm:$0xff]
        %v4798 = vld [vmem:[%s4 + $0x88] sm:$0xff]
        %v4799 = vld [vmem:[%s4 + $0x90] sm:$0xff]
        %v4800 = vld [vmem:[%s4 + $0x98] sm:$0xff]
        %v4801 = vld [vmem:[%s4 + $0xa0] sm:$0xff]
        %v4802 = vld [vmem:[%s4 + $0xa8] sm:$0xff]
        %v4803 = vld [vmem:[%s4 + $0xb0] sm:$0xff]
        %v4804 = vld [vmem:[%s4 + $0xb8] sm:$0xff]
        %v4805 = vld [vmem:[%s4 + $0xc0] sm:$0xff]
        %v4806 = vld [vmem:[%s4 + $0xc8] sm:$0xff]
        %v4807 = vld [vmem:[%s4 + $0xd0] sm:$0xff]
        %v4808 = vld [vmem:[%s4 + $0xd8] sm:$0xff]
        %v4809 = vld [vmem:[%s4 + $0xe0] sm:$0xff]
        %v4810 = vld [vmem:[%s4 + $0xe8] sm:$0xff]
        %v4811 = vld [vmem:[%s4 + $0xf0] sm:$0xff]
        %v4812 = vld [vmem:[%s4 + $0xf8] sm:$0xff]
        %v4813 = vld [vmem:[%s6] sm:$0xff]
        %v4814 = vld [vmem:[%s6 + $0x8] sm:$0xff]
        %v4815 = vld [vmem:[%s6 + $0x10] sm:$0xff]
        %v4816 = vld [vmem:[%s6 + $0x18] sm:$0xff]
        %v4817 = vld [vmem:[%s6 + $0x20] sm:$0xff]
        %v4818 = vld [vmem:[%s6 + $0x28] sm:$0xff]
        %v4819 = vld [vmem:[%s6 + $0x30] sm:$0xff]
        %v4820 = vld [vmem:[%s6 + $0x38] sm:$0xff]
        %v4821 = vld [vmem:[%s6 + $0x40] sm:$0xff]
        %v4822 = vld [vmem:[%s6 + $0x48] sm:$0xff]
        %v4823 = vld [vmem:[%s6 + $0x50] sm:$0xff]
        %v4824 = vld [vmem:[%s6 + $0x58] sm:$0xff]
        %v4825 = vld [vmem:[%s6 + $0x60] sm:$0xff]
        %v4826 = vld [vmem:[%s6 + $0x68] sm:$0xff]
        %v4827 = vld [vmem:[%s6 + $0x70] sm:$0xff]
        %v4828 = vld [vmem:[%s6 + $0x78] sm:$0xff]
        %v4829 = vld [vmem:[%s6 + $0x80] sm:$0xff]
        %v4830 = vld [vmem:[%s6 + $0x88] sm:$0xff]
        %v4831 = vld [vmem:[%s6 + $0x90] sm:$0xff]
        %v4832 = vld [vmem:[%s6 + $0x98] sm:$0xff]
        %v4833 = vld [vmem:[%s6 + $0xa0] sm:$0xff]
        %v4834 = vld [vmem:[%s6 + $0xa8] sm:$0xff]
        %v4835 = vld [vmem:[%s6 + $0xb0] sm:$0xff]
        %v4836 = vld [vmem:[%s6 + $0xb8] sm:$0xff]
        %v4837 = vld [vmem:[%s6 + $0xc0] sm:$0xff]
        %v4838 = vld [vmem:[%s6 + $0xc8] sm:$0xff]
        %v4839 = vld [vmem:[%s6 + $0xd0] sm:$0xff]
        %v4840 = vld [vmem:[%s6 + $0xd8] sm:$0xff]
        %v4841 = vld [vmem:[%s6 + $0xe0] sm:$0xff]
        %v4842 = vld [vmem:[%s6 + $0xe8] sm:$0xff]
        %v4843 = vld [vmem:[%s6 + $0xf0] sm:$0xff]
        %v4844 = vld [vmem:[%s6 + $0xf8] sm:$0xff]
        %v4845 = vld [vmem:[%s5] sm:$0xff]
        %v4846 = vld [vmem:[%s5 + $0x8] sm:$0xff]
        %v4847 = vld [vmem:[%s5 + $0x10] sm:$0xff]
        %v4848 = vld [vmem:[%s5 + $0x18] sm:$0xff]
        %v4849 = vld [vmem:[%s5 + $0x20] sm:$0xff]
        %v4850 = vld [vmem:[%s5 + $0x28] sm:$0xff]
        %v4851 = vld [vmem:[%s5 + $0x30] sm:$0xff]
        %v4852 = vld [vmem:[%s5 + $0x38] sm:$0xff]
        %v4853 = vld [vmem:[%s5 + $0x40] sm:$0xff]
        %v4854 = vld [vmem:[%s5 + $0x48] sm:$0xff]
        %v4855 = vld [vmem:[%s5 + $0x50] sm:$0xff]
        %v4856 = vld [vmem:[%s5 + $0x58] sm:$0xff]
        %v4857 = vld [vmem:[%s5 + $0x60] sm:$0xff]
        %v4858 = vld [vmem:[%s5 + $0x68] sm:$0xff]
        %v4859 = vld [vmem:[%s5 + $0x70] sm:$0xff]
        %v4860 = vld [vmem:[%s5 + $0x78] sm:$0xff]
        %v4861 = vld [vmem:[%s5 + $0x80] sm:$0xff]
        %v4862 = vld [vmem:[%s5 + $0x88] sm:$0xff]
        %v4863 = vld [vmem:[%s5 + $0x90] sm:$0xff]
        %v4864 = vld [vmem:[%s5 + $0x98] sm:$0xff]
        %v4865 = vld [vmem:[%s5 + $0xa0] sm:$0xff]
        %v4866 = vld [vmem:[%s5 + $0xa8] sm:$0xff]
        %v4867 = vld [vmem:[%s5 + $0xb0] sm:$0xff]
        %v4868 = vld [vmem:[%s5 + $0xb8] sm:$0xff]
        %v4869 = vld [vmem:[%s5 + $0xc0] sm:$0xff]
        %v4870 = vld [vmem:[%s5 + $0xc8] sm:$0xff]
        %v4871 = vld [vmem:[%s5 + $0xd0] sm:$0xff]
        %v4872 = vld [vmem:[%s5 + $0xd8] sm:$0xff]
        %v4873 = vld [vmem:[%s5 + $0xe0] sm:$0xff]
        %v4874 = vld [vmem:[%s5 + $0xe8] sm:$0xff]
        %v4875 = vld [vmem:[%s5 + $0xf0] sm:$0xff]
        %v4876 = vld [vmem:[%s5 + $0xf8] sm:$0xff]
        %v4877 = vmul.f32 %v4845, 0.5
        %v4878 = vmul.f32 %v4846, 0.5
        %v4879 = vmul.f32 %v4847, 0.5
        %v4880 = vmul.f32 %v4848, 0.5
        %v4881 = vmul.f32 %v4849, 0.5
        %v4882 = vmul.f32 %v4850, 0.5
        %v4883 = vmul.f32 %v4851, 0.5
        %v4884 = vmul.f32 %v4852, 0.5
        %v4885 = vmul.f32 %v4853, 0.5
        %v4886 = vmul.f32 %v4854, 0.5
        %v4887 = vmul.f32 %v4855, 0.5
        %v4888 = vmul.f32 %v4856, 0.5
        %v4889 = vmul.f32 %v4857, 0.5
        %v4890 = vmul.f32 %v4858, 0.5
        %v4891 = vmul.f32 %v4859, 0.5
        %v4892 = vmul.f32 %v4860, 0.5
        %v4893 = vmul.f32 %v4861, 0.5
        %v4894 = vmul.f32 %v4862, 0.5
        %v4895 = vmul.f32 %v4863, 0.5
        %v4896 = vmul.f32 %v4864, 0.5
        %v4897 = vmul.f32 %v4865, 0.5
        %v4898 = vmul.f32 %v4866, 0.5
        %v4899 = vmul.f32 %v4867, 0.5
        %v4900 = vmul.f32 %v4868, 0.5
        %v4901 = vmul.f32 %v4869, 0.5
        %v4902 = vmul.f32 %v4870, 0.5
        %v4903 = vmul.f32 %v4871, 0.5
        %v4904 = vmul.f32 %v4872, 0.5
        %v4905 = vmul.f32 %v4873, 0.5
        %v4906 = vmul.f32 %v4874, 0.5
        %v4907 = vmul.f32 %v4875, 0.5
        %v4908 = vmul.f32 %v4876, 0.5
        %v4909 = vmul.f32 %v4877, 1.442695
        %v4910 = vpow.pop %v4909
        %v4911 = vmul.f32 %v4878, 1.442695
        %v4912 = vpow.pop %v4911
        %v4913 = vmul.f32 %v4879, 1.442695
        %v4914 = vpow.pop %v4913
        %v4915 = vmul.f32 %v4880, 1.442695
        %v4916 = vpow.pop %v4915
        %v4917 = vmul.f32 %v4881, 1.442695
        %v4918 = vpow.pop %v4917
        %v4919 = vmul.f32 %v4882, 1.442695
        %v4920 = vpow.pop %v4919
        %v4921 = vmul.f32 %v4883, 1.442695
        %v4922 = vpow.pop %v4921
        %v4923 = vmul.f32 %v4884, 1.442695
        %v4924 = vpow.pop %v4923
        %v4925 = vmul.f32 %v4885, 1.442695
        %v4926 = vpow.pop %v4925
        %v4927 = vmul.f32 %v4886, 1.442695
        %v4928 = vpow.pop %v4927
        %v4929 = vmul.f32 %v4887, 1.442695
        %v4930 = vpow.pop %v4929
        %v4931 = vmul.f32 %v4888, 1.442695
        %v4932 = vpow.pop %v4931
        %v4933 = vmul.f32 %v4889, 1.442695
        %v4934 = vpow.pop %v4933
        %v4935 = vmul.f32 %v4890, 1.442695
        %v4936 = vpow.pop %v4935
        %v4937 = vmul.f32 %v4891, 1.442695
        %v4938 = vpow.pop %v4937
        %v4939 = vmul.f32 %v4892, 1.442695
        %v4940 = vpow.pop %v4939
        %v4941 = vmul.f32 %v4893, 1.442695
        %v4942 = vpow.pop %v4941
        %v4943 = vmul.f32 %v4894, 1.442695
        %v4944 = vpow.pop %v4943
        %v4945 = vmul.f32 %v4895, 1.442695
        %v4946 = vpow.pop %v4945
        %v4947 = vmul.f32 %v4896, 1.442695
        %v4948 = vpow.pop %v4947
        %v4949 = vmul.f32 %v4897, 1.442695
        %v4950 = vpow.pop %v4949
        %v4951 = vmul.f32 %v4898, 1.442695
        %v4952 = vpow.pop %v4951
        %v4953 = vmul.f32 %v4899, 1.442695
        %v4954 = vpow.pop %v4953
        %v4955 = vmul.f32 %v4900, 1.442695
        %v4956 = vpow.pop %v4955
        %v4957 = vmul.f32 %v4901, 1.442695
        %v4958 = vpow.pop %v4957
        %v4959 = vmul.f32 %v4902, 1.442695
        %v4960 = vpow.pop %v4959
        %v4961 = vmul.f32 %v4903, 1.442695
        %v4962 = vpow.pop %v4961
        %v4963 = vmul.f32 %v4904, 1.442695
        %v4964 = vpow.pop %v4963
        %v4965 = vmul.f32 %v4905, 1.442695
        %v4966 = vpow.pop %v4965
        %v4967 = vmul.f32 %v4906, 1.442695
        %v4968 = vpow.pop %v4967
        %v4969 = vmul.f32 %v4907, 1.442695
        %v4970 = vpow.pop %v4969
        %v4971 = vmul.f32 %v4908, 1.442695
        %v4972 = vpow.pop %v4971
        %v4973 = vmul.f32 %v4813, %v4910
        %v4974 = vmul.f32 %v4814, %v4912
        %v4975 = vmul.f32 %v4815, %v4914
        %v4976 = vmul.f32 %v4816, %v4916
        %v4977 = vmul.f32 %v4817, %v4918
        %v4978 = vmul.f32 %v4818, %v4920
        %v4979 = vmul.f32 %v4819, %v4922
        %v4980 = vmul.f32 %v4820, %v4924
        %v4981 = vmul.f32 %v4821, %v4926
        %v4982 = vmul.f32 %v4822, %v4928
        %v4983 = vmul.f32 %v4823, %v4930
        %v4984 = vmul.f32 %v4824, %v4932
        %v4985 = vmul.f32 %v4825, %v4934
        %v4986 = vmul.f32 %v4826, %v4936
        %v4987 = vmul.f32 %v4827, %v4938
        %v4988 = vmul.f32 %v4828, %v4940
        %v4989 = vmul.f32 %v4829, %v4942
        %v4990 = vmul.f32 %v4830, %v4944
        %v4991 = vmul.f32 %v4831, %v4946
        %v4992 = vmul.f32 %v4832, %v4948
        %v4993 = vmul.f32 %v4833, %v4950
        %v4994 = vmul.f32 %v4834, %v4952
        %v4995 = vmul.f32 %v4835, %v4954
        %v4996 = vmul.f32 %v4836, %v4956
        %v4997 = vmul.f32 %v4837, %v4958
        %v4998 = vmul.f32 %v4838, %v4960
        %v4999 = vmul.f32 %v4839, %v4962
        %v5000 = vmul.f32 %v4840, %v4964
        %v5001 = vmul.f32 %v4841, %v4966
        %v5002 = vmul.f32 %v4842, %v4968
        %v5003 = vmul.f32 %v4843, %v4970
        %v5004 = vmul.f32 %v4844, %v4972
        %v5005 = vadd.f32 %v4781, %v4973
        %v5006 = vadd.f32 %v4782, %v4974
        %v5007 = vadd.f32 %v4783, %v4975
        %v5008 = vadd.f32 %v4784, %v4976
        %v5009 = vadd.f32 %v4785, %v4977
        %v5010 = vadd.f32 %v4786, %v4978
        %v5011 = vadd.f32 %v4787, %v4979
        %v5012 = vadd.f32 %v4788, %v4980
        %v5013 = vadd.f32 %v4789, %v4981
        %v5014 = vadd.f32 %v4790, %v4982
        %v5015 = vadd.f32 %v4791, %v4983
        %v5016 = vadd.f32 %v4792, %v4984
        %v5017 = vadd.f32 %v4793, %v4985
        %v5018 = vadd.f32 %v4794, %v4986
        %v5019 = vadd.f32 %v4795, %v4987
        %v5020 = vadd.f32 %v4796, %v4988
        %v5021 = vadd.f32 %v4797, %v4989
        %v5022 = vadd.f32 %v4798, %v4990
        %v5023 = vadd.f32 %v4799, %v4991
        %v5024 = vadd.f32 %v4800, %v4992
        %v5025 = vadd.f32 %v4801, %v4993
        %v5026 = vadd.f32 %v4802, %v4994
        %v5027 = vadd.f32 %v4803, %v4995
        %v5028 = vadd.f32 %v4804, %v4996
        %v5029 = vadd.f32 %v4805, %v4997
        %v5030 = vadd.f32 %v4806, %v4998
        %v5031 = vadd.f32 %v4807, %v4999
        %v5032 = vadd.f32 %v4808, %v5000
        %v5033 = vadd.f32 %v4809, %v5001
        %v5034 = vadd.f32 %v4810, %v5002
        %v5035 = vadd.f32 %v4811, %v5003
        %v5036 = vadd.f32 %v4812, %v5004
        %v5037 = vpack.c.bf16 %v5006, %v5005
        %v5038 = vpack.c.bf16 %v5008, %v5007
        %v5039 = vpack.c.bf16 %v5010, %v5009
        %v5040 = vpack.c.bf16 %v5012, %v5011
        %v5041 = vpack.c.bf16 %v5014, %v5013
        %v5042 = vpack.c.bf16 %v5016, %v5015
        %v5043 = vpack.c.bf16 %v5018, %v5017
        %v5044 = vpack.c.bf16 %v5020, %v5019
        %v5045 = vpack.c.bf16 %v5022, %v5021
        %v5046 = vpack.c.bf16 %v5024, %v5023
        %v5047 = vpack.c.bf16 %v5026, %v5025
        %v5048 = vpack.c.bf16 %v5028, %v5027
        %v5049 = vpack.c.bf16 %v5030, %v5029
        %v5050 = vpack.c.bf16 %v5032, %v5031
        %v5051 = vpack.c.bf16 %v5034, %v5033
        %v5052 = vpack.c.bf16 %v5036, %v5035
        %vm5053 = vcmask 1047728
        %5054 = vst.msk [vmem:[#allocation3 + $0x8] sm:$0xff] %vm5053, 0.0
        %5055 = vst.msk [vmem:[#allocation3 + $0x18] sm:$0xff] %vm5053, 0.0
        %5056 = vst.msk [vmem:[#allocation3 + $0x28] sm:$0xff] %vm5053, 0.0
        %5057 = vst.msk [vmem:[#allocation3 + $0x38] sm:$0xff] %vm5053, 0.0
        %5058 = vst.msk [vmem:[#allocation3 + $0x48] sm:$0xff] %vm5053, 0.0
        %5059 = vst.msk [vmem:[#allocation3 + $0x58] sm:$0xff] %vm5053, 0.0
        %5060 = vst.msk [vmem:[#allocation3 + $0x68] sm:$0xff] %vm5053, 0.0
        %5061 = vst.msk [vmem:[#allocation3 + $0x78] sm:$0xff] %vm5053, 0.0
        %v5062 = vld [vmem:[#allocation4] sm:$0xff]
        %v5063 = vld [vmem:[#allocation4 + $0x10] sm:$0xff]
        %v5064 = vld [vmem:[#allocation4 + $0x20] sm:$0xff]
        %v5065 = vld [vmem:[#allocation4 + $0x30] sm:$0xff]
        %v5066 = vld [vmem:[#allocation4 + $0x40] sm:$0xff]
        %v5067 = vld [vmem:[#allocation4 + $0x50] sm:$0xff]
        %v5068 = vld [vmem:[#allocation4 + $0x60] sm:$0xff]
        %v5069 = vld [vmem:[#allocation4 + $0x70] sm:$0xff]
        %5070 = vst.msk [vmem:[#allocation3] sm:$0xff] %vm4755, %v5062
        %5071 = vst.msk [vmem:[#allocation3 + $0x10] sm:$0xff] %vm4755, %v5063
        %5072 = vst.msk [vmem:[#allocation3 + $0x20] sm:$0xff] %vm4755, %v5064
        %5073 = vst.msk [vmem:[#allocation3 + $0x30] sm:$0xff] %vm4755, %v5065
        %5074 = vst.msk [vmem:[#allocation3 + $0x40] sm:$0xff] %vm4755, %v5066
        %5075 = vst.msk [vmem:[#allocation3 + $0x50] sm:$0xff] %vm4755, %v5067
        %5076 = vst.msk [vmem:[#allocation3 + $0x60] sm:$0xff] %vm4755, %v5068
        %5077 = vst.msk [vmem:[#allocation3 + $0x70] sm:$0xff] %vm4755, %v5069
        %v5078 = vld [vmem:[#allocation4 + $0x1] sm:$0xff]
        %v5079 = vld [vmem:[#allocation4 + $0x11] sm:$0xff]
        %v5080 = vld [vmem:[#allocation4 + $0x21] sm:$0xff]
        %v5081 = vld [vmem:[#allocation4 + $0x31] sm:$0xff]
        %v5082 = vld [vmem:[#allocation4 + $0x41] sm:$0xff]
        %v5083 = vld [vmem:[#allocation4 + $0x51] sm:$0xff]
        %v5084 = vld [vmem:[#allocation4 + $0x61] sm:$0xff]
        %v5085 = vld [vmem:[#allocation4 + $0x71] sm:$0xff]
        %5094 = vrot.lane.b32.xlu0 %v5078, 6
        %v5095 = vpop.permute.xlu0 %5094
        %5096 = vrot.lane.b32.xlu0 %v5079, 6
        %v5097 = vpop.permute.xlu0 %5096
        %5098 = vrot.lane.b32.xlu0 %v5080, 6
        %v5099 = vpop.permute.xlu0 %5098
        %5100 = vrot.lane.b32.xlu0 %v5081, 6
        %v5101 = vpop.permute.xlu0 %5100
        %5102 = vrot.lane.b32.xlu0 %v5082, 6
        %v5103 = vpop.permute.xlu0 %5102
        %5104 = vrot.lane.b32.xlu0 %v5083, 6
        %v5105 = vpop.permute.xlu0 %5104
        %5106 = vrot.lane.b32.xlu0 %v5084, 6
        %v5107 = vpop.permute.xlu0 %5106
        %5108 = vrot.lane.b32.xlu0 %v5085, 6
        %v5109 = vpop.permute.xlu0 %5108
        %vm5118 = vcmask 97328
        %5119 = vst.msk [vmem:[#allocation3] sm:$0xff] %vm5118, %v5095
        %5120 = vst.msk [vmem:[#allocation3 + $0x10] sm:$0xff] %vm5118, %v5097
        %5121 = vst.msk [vmem:[#allocation3 + $0x20] sm:$0xff] %vm5118, %v5099
        %5122 = vst.msk [vmem:[#allocation3 + $0x30] sm:$0xff] %vm5118, %v5101
        %5123 = vst.msk [vmem:[#allocation3 + $0x40] sm:$0xff] %vm5118, %v5103
        %5124 = vst.msk [vmem:[#allocation3 + $0x50] sm:$0xff] %vm5118, %v5105
        %5125 = vst.msk [vmem:[#allocation3 + $0x60] sm:$0xff] %vm5118, %v5107
        %5126 = vst.msk [vmem:[#allocation3 + $0x70] sm:$0xff] %vm5118, %v5109
        %v5127 = vld [vmem:[#allocation4 + $0x2] sm:$0xff]
        %v5128 = vld [vmem:[#allocation4 + $0x12] sm:$0xff]
        %v5129 = vld [vmem:[#allocation4 + $0x22] sm:$0xff]
        %v5130 = vld [vmem:[#allocation4 + $0x32] sm:$0xff]
        %v5131 = vld [vmem:[#allocation4 + $0x42] sm:$0xff]
        %v5132 = vld [vmem:[#allocation4 + $0x52] sm:$0xff]
        %v5133 = vld [vmem:[#allocation4 + $0x62] sm:$0xff]
        %v5134 = vld [vmem:[#allocation4 + $0x72] sm:$0xff]
        %5143 = vrot.lane.b32.xlu0 %v5127, 12
        %v5144 = vpop.permute.xlu0 %5143
        %5145 = vrot.lane.b32.xlu0 %v5128, 12
        %v5146 = vpop.permute.xlu0 %5145
        %5147 = vrot.lane.b32.xlu0 %v5129, 12
        %v5148 = vpop.permute.xlu0 %5147
        %5149 = vrot.lane.b32.xlu0 %v5130, 12
        %v5150 = vpop.permute.xlu0 %5149
        %5151 = vrot.lane.b32.xlu0 %v5131, 12
        %v5152 = vpop.permute.xlu0 %5151
        %5153 = vrot.lane.b32.xlu0 %v5132, 12
        %v5154 = vpop.permute.xlu0 %5153
        %5155 = vrot.lane.b32.xlu0 %v5133, 12
        %v5156 = vpop.permute.xlu0 %5155
        %5157 = vrot.lane.b32.xlu0 %v5134, 12
        %v5158 = vpop.permute.xlu0 %5157
        %vm5167 = vcmask 146528
        %5168 = vst.msk [vmem:[#allocation3] sm:$0xff] %vm5167, %v5144
        %5169 = vst.msk [vmem:[#allocation3 + $0x10] sm:$0xff] %vm5167, %v5146
        %5170 = vst.msk [vmem:[#allocation3 + $0x20] sm:$0xff] %vm5167, %v5148
        %5171 = vst.msk [vmem:[#allocation3 + $0x30] sm:$0xff] %vm5167, %v5150
        %5172 = vst.msk [vmem:[#allocation3 + $0x40] sm:$0xff] %vm5167, %v5152
        %5173 = vst.msk [vmem:[#allocation3 + $0x50] sm:$0xff] %vm5167, %v5154
        %5174 = vst.msk [vmem:[#allocation3 + $0x60] sm:$0xff] %vm5167, %v5156
        %5175 = vst.msk [vmem:[#allocation3 + $0x70] sm:$0xff] %vm5167, %v5158
        %v5176 = vld [vmem:[#allocation4 + $0x3] sm:$0xff]
        %v5177 = vld [vmem:[#allocation4 + $0x13] sm:$0xff]
        %v5178 = vld [vmem:[#allocation4 + $0x23] sm:$0xff]
        %v5179 = vld [vmem:[#allocation4 + $0x33] sm:$0xff]
        %v5180 = vld [vmem:[#allocation4 + $0x43] sm:$0xff]
        %v5181 = vld [vmem:[#allocation4 + $0x53] sm:$0xff]
        %v5182 = vld [vmem:[#allocation4 + $0x63] sm:$0xff]
        %v5183 = vld [vmem:[#allocation4 + $0x73] sm:$0xff]
        %5192 = vrot.lane.b32.xlu0 %v5176, 18
        %v5193 = vpop.permute.xlu0 %5192
        %5194 = vrot.lane.b32.xlu0 %v5177, 18
        %v5195 = vpop.permute.xlu0 %5194
        %5196 = vrot.lane.b32.xlu0 %v5178, 18
        %v5197 = vpop.permute.xlu0 %5196
        %5198 = vrot.lane.b32.xlu0 %v5179, 18
        %v5199 = vpop.permute.xlu0 %5198
        %5200 = vrot.lane.b32.xlu0 %v5180, 18
        %v5201 = vpop.permute.xlu0 %5200
        %5202 = vrot.lane.b32.xlu0 %v5181, 18
        %v5203 = vpop.permute.xlu0 %5202
        %5204 = vrot.lane.b32.xlu0 %v5182, 18
        %v5205 = vpop.permute.xlu0 %5204
        %5206 = vrot.lane.b32.xlu0 %v5183, 18
        %v5207 = vpop.permute.xlu0 %5206
        %vm5216 = vcmask 195728
        %5217 = vst.msk [vmem:[#allocation3] sm:$0xff] %vm5216, %v5193
        %5218 = vst.msk [vmem:[#allocation3 + $0x10] sm:$0xff] %vm5216, %v5195
        %5219 = vst.msk [vmem:[#allocation3 + $0x20] sm:$0xff] %vm5216, %v5197
        %5220 = vst.msk [vmem:[#allocation3 + $0x30] sm:$0xff] %vm5216, %v5199
        %5221 = vst.msk [vmem:[#allocation3 + $0x40] sm:$0xff] %vm5216, %v5201
        %5222 = vst.msk [vmem:[#allocation3 + $0x50] sm:$0xff] %vm5216, %v5203
        %5223 = vst.msk [vmem:[#allocation3 + $0x60] sm:$0xff] %vm5216, %v5205
        %5224 = vst.msk [vmem:[#allocation3 + $0x70] sm:$0xff] %vm5216, %v5207
        %v5225 = vld [vmem:[#allocation4 + $0x4] sm:$0xff]
        %v5226 = vld [vmem:[#allocation4 + $0x14] sm:$0xff]
        %v5227 = vld [vmem:[#allocation4 + $0x24] sm:$0xff]
        %v5228 = vld [vmem:[#allocation4 + $0x34] sm:$0xff]
        %v5229 = vld [vmem:[#allocation4 + $0x44] sm:$0xff]
        %v5230 = vld [vmem:[#allocation4 + $0x54] sm:$0xff]
        %v5231 = vld [vmem:[#allocation4 + $0x64] sm:$0xff]
        %v5232 = vld [vmem:[#allocation4 + $0x74] sm:$0xff]
        %5241 = vrot.lane.b32.xlu0 %v5225, 24
        %v5242 = vpop.permute.xlu0 %5241
        %5243 = vrot.lane.b32.xlu0 %v5226, 24
        %v5244 = vpop.permute.xlu0 %5243
        %5245 = vrot.lane.b32.xlu0 %v5227, 24
        %v5246 = vpop.permute.xlu0 %5245
        %5247 = vrot.lane.b32.xlu0 %v5228, 24
        %v5248 = vpop.permute.xlu0 %5247
        %5249 = vrot.lane.b32.xlu0 %v5229, 24
        %v5250 = vpop.permute.xlu0 %5249
        %5251 = vrot.lane.b32.xlu0 %v5230, 24
        %v5252 = vpop.permute.xlu0 %5251
        %5253 = vrot.lane.b32.xlu0 %v5231, 24
        %v5254 = vpop.permute.xlu0 %5253
        %5255 = vrot.lane.b32.xlu0 %v5232, 24
        %v5256 = vpop.permute.xlu0 %5255
        %vm5265 = vcmask 244928
        %5266 = vst.msk [vmem:[#allocation3] sm:$0xff] %vm5265, %v5242
        %5267 = vst.msk [vmem:[#allocation3 + $0x10] sm:$0xff] %vm5265, %v5244
        %5268 = vst.msk [vmem:[#allocation3 + $0x20] sm:$0xff] %vm5265, %v5246
        %5269 = vst.msk [vmem:[#allocation3 + $0x30] sm:$0xff] %vm5265, %v5248
        %5270 = vst.msk [vmem:[#allocation3 + $0x40] sm:$0xff] %vm5265, %v5250
        %5271 = vst.msk [vmem:[#allocation3 + $0x50] sm:$0xff] %vm5265, %v5252
        %5272 = vst.msk [vmem:[#allocation3 + $0x60] sm:$0xff] %vm5265, %v5254
        %5273 = vst.msk [vmem:[#allocation3 + $0x70] sm:$0xff] %vm5265, %v5256
        %s5274 = scalar_lea.vmem [#allocation4], 16
        %v5275 = vld [vmem:[%s5274] sm:$0xff]
        %v5276 = vld [vmem:[%s5274 + $0x10] sm:$0xff]
        %v5277 = vld [vmem:[%s5274 + $0x20] sm:$0xff]
        %v5278 = vld [vmem:[%s5274 + $0x30] sm:$0xff]
        %v5279 = vld [vmem:[%s5274 + $0x40] sm:$0xff]
        %v5280 = vld [vmem:[%s5274 + $0x50] sm:$0xff]
        %v5281 = vld [vmem:[%s5274 + $0x60] sm:$0xff]
        %v5282 = vld [vmem:[%s5274 + $0x70] sm:$0xff]
        %5291 = vrot.lane.b32.xlu0 %v5275, 30
        %v5292 = vpop.permute.xlu0 %5291
        %5293 = vrot.lane.b32.xlu0 %v5276, 30
        %v5294 = vpop.permute.xlu0 %5293
        %5295 = vrot.lane.b32.xlu0 %v5277, 30
        %v5296 = vpop.permute.xlu0 %5295
        %5297 = vrot.lane.b32.xlu0 %v5278, 30
        %v5298 = vpop.permute.xlu0 %5297
        %5299 = vrot.lane.b32.xlu0 %v5279, 30
        %v5300 = vpop.permute.xlu0 %5299
        %5301 = vrot.lane.b32.xlu0 %v5280, 30
        %v5302 = vpop.permute.xlu0 %5301
        %5303 = vrot.lane.b32.xlu0 %v5281, 30
        %v5304 = vpop.permute.xlu0 %5303
        %5305 = vrot.lane.b32.xlu0 %v5282, 30
        %v5306 = vpop.permute.xlu0 %5305
        %vm5315 = vcmask 294128
        %5316 = vst.msk [vmem:[#allocation3] sm:$0xff] %vm5315, %v5292
        %5317 = vst.msk [vmem:[#allocation3 + $0x10] sm:$0xff] %vm5315, %v5294
        %5318 = vst.msk [vmem:[#allocation3 + $0x20] sm:$0xff] %vm5315, %v5296
        %5319 = vst.msk [vmem:[#allocation3 + $0x30] sm:$0xff] %vm5315, %v5298
        %5320 = vst.msk [vmem:[#allocation3 + $0x40] sm:$0xff] %vm5315, %v5300
        %5321 = vst.msk [vmem:[#allocation3 + $0x50] sm:$0xff] %vm5315, %v5302
        %5322 = vst.msk [vmem:[#allocation3 + $0x60] sm:$0xff] %vm5315, %v5304
        %5323 = vst.msk [vmem:[#allocation3 + $0x70] sm:$0xff] %vm5315, %v5306
        %v5324 = vld [vmem:[%s5274 + $0x1] sm:$0xff]
        %v5325 = vld [vmem:[%s5274 + $0x11] sm:$0xff]
        %v5326 = vld [vmem:[%s5274 + $0x21] sm:$0xff]
        %v5327 = vld [vmem:[%s5274 + $0x31] sm:$0xff]
        %v5328 = vld [vmem:[%s5274 + $0x41] sm:$0xff]
        %v5329 = vld [vmem:[%s5274 + $0x51] sm:$0xff]
        %v5330 = vld [vmem:[%s5274 + $0x61] sm:$0xff]
        %v5331 = vld [vmem:[%s5274 + $0x71] sm:$0xff]
        %5340 = vrot.lane.b32.xlu0 %v5324, 36
        %v5341 = vpop.permute.xlu0 %5340
        %5342 = vrot.lane.b32.xlu0 %v5325, 36
        %v5343 = vpop.permute.xlu0 %5342
        %5344 = vrot.lane.b32.xlu0 %v5326, 36
        %v5345 = vpop.permute.xlu0 %5344
        %5346 = vrot.lane.b32.xlu0 %v5327, 36
        %v5347 = vpop.permute.xlu0 %5346
        %5348 = vrot.lane.b32.xlu0 %v5328, 36
        %v5349 = vpop.permute.xlu0 %5348
        %5350 = vrot.lane.b32.xlu0 %v5329, 36
        %v5351 = vpop.permute.xlu0 %5350
        %5352 = vrot.lane.b32.xlu0 %v5330, 36
        %v5353 = vpop.permute.xlu0 %5352
        %5354 = vrot.lane.b32.xlu0 %v5331, 36
        %v5355 = vpop.permute.xlu0 %5354
        %vm5364 = vcmask 343328
        %5365 = vst.msk [vmem:[#allocation3] sm:$0xff] %vm5364, %v5341
        %5366 = vst.msk [vmem:[#allocation3 + $0x10] sm:$0xff] %vm5364, %v5343
        %5367 = vst.msk [vmem:[#allocation3 + $0x20] sm:$0xff] %vm5364, %v5345
        %5368 = vst.msk [vmem:[#allocation3 + $0x30] sm:$0xff] %vm5364, %v5347
        %5369 = vst.msk [vmem:[#allocation3 + $0x40] sm:$0xff] %vm5364, %v5349
        %5370 = vst.msk [vmem:[#allocation3 + $0x50] sm:$0xff] %vm5364, %v5351
        %5371 = vst.msk [vmem:[#allocation3 + $0x60] sm:$0xff] %vm5364, %v5353
        %5372 = vst.msk [vmem:[#allocation3 + $0x70] sm:$0xff] %vm5364, %v5355
        %v5373 = vld [vmem:[%s5274 + $0x2] sm:$0xff]
        %v5374 = vld [vmem:[%s5274 + $0x12] sm:$0xff]
        %v5375 = vld [vmem:[%s5274 + $0x22] sm:$0xff]
        %v5376 = vld [vmem:[%s5274 + $0x32] sm:$0xff]
        %v5377 = vld [vmem:[%s5274 + $0x42] sm:$0xff]
        %v5378 = vld [vmem:[%s5274 + $0x52] sm:$0xff]
        %v5379 = vld [vmem:[%s5274 + $0x62] sm:$0xff]
        %v5380 = vld [vmem:[%s5274 + $0x72] sm:$0xff]
        %5389 = vrot.lane.b32.xlu0 %v5373, 42
        %v5390 = vpop.permute.xlu0 %5389
        %5391 = vrot.lane.b32.xlu0 %v5374, 42
        %v5392 = vpop.permute.xlu0 %5391
        %5393 = vrot.lane.b32.xlu0 %v5375, 42
        %v5394 = vpop.permute.xlu0 %5393
        %5395 = vrot.lane.b32.xlu0 %v5376, 42
        %v5396 = vpop.permute.xlu0 %5395
        %5397 = vrot.lane.b32.xlu0 %v5377, 42
        %v5398 = vpop.permute.xlu0 %5397
        %5399 = vrot.lane.b32.xlu0 %v5378, 42
        %v5400 = vpop.permute.xlu0 %5399
        %5401 = vrot.lane.b32.xlu0 %v5379, 42
        %v5402 = vpop.permute.xlu0 %5401
        %5403 = vrot.lane.b32.xlu0 %v5380, 42
        %v5404 = vpop.permute.xlu0 %5403
        %vm5413 = vcmask 392528
        %5414 = vst.msk [vmem:[#allocation3] sm:$0xff] %vm5413, %v5390
        %5415 = vst.msk [vmem:[#allocation3 + $0x10] sm:$0xff] %vm5413, %v5392
        %5416 = vst.msk [vmem:[#allocation3 + $0x20] sm:$0xff] %vm5413, %v5394
        %5417 = vst.msk [vmem:[#allocation3 + $0x30] sm:$0xff] %vm5413, %v5396
        %5418 = vst.msk [vmem:[#allocation3 + $0x40] sm:$0xff] %vm5413, %v5398
        %5419 = vst.msk [vmem:[#allocation3 + $0x50] sm:$0xff] %vm5413, %v5400
        %5420 = vst.msk [vmem:[#allocation3 + $0x60] sm:$0xff] %vm5413, %v5402
        %5421 = vst.msk [vmem:[#allocation3 + $0x70] sm:$0xff] %vm5413, %v5404
        %v5422 = vld [vmem:[%s5274 + $0x3] sm:$0xff]
        %v5423 = vld [vmem:[%s5274 + $0x13] sm:$0xff]
        %v5424 = vld [vmem:[%s5274 + $0x23] sm:$0xff]
        %v5425 = vld [vmem:[%s5274 + $0x33] sm:$0xff]
        %v5426 = vld [vmem:[%s5274 + $0x43] sm:$0xff]
        %v5427 = vld [vmem:[%s5274 + $0x53] sm:$0xff]
        %v5428 = vld [vmem:[%s5274 + $0x63] sm:$0xff]
        %v5429 = vld [vmem:[%s5274 + $0x73] sm:$0xff]
        %5438 = vrot.lane.b32.xlu0 %v5422, 48
        %v5439 = vpop.permute.xlu0 %5438
        %5440 = vrot.lane.b32.xlu0 %v5423, 48
        %v5441 = vpop.permute.xlu0 %5440
        %5442 = vrot.lane.b32.xlu0 %v5424, 48
        %v5443 = vpop.permute.xlu0 %5442
        %5444 = vrot.lane.b32.xlu0 %v5425, 48
        %v5445 = vpop.permute.xlu0 %5444
        %5446 = vrot.lane.b32.xlu0 %v5426, 48
        %v5447 = vpop.permute.xlu0 %5446
        %5448 = vrot.lane.b32.xlu0 %v5427, 48
        %v5449 = vpop.permute.xlu0 %5448
        %5450 = vrot.lane.b32.xlu0 %v5428, 48
        %v5451 = vpop.permute.xlu0 %5450
        %5452 = vrot.lane.b32.xlu0 %v5429, 48
        %v5453 = vpop.permute.xlu0 %5452
        %vm5462 = vcmask 441728
        %5463 = vst.msk [vmem:[#allocation3] sm:$0xff] %vm5462, %v5439
        %5464 = vst.msk [vmem:[#allocation3 + $0x10] sm:$0xff] %vm5462, %v5441
        %5465 = vst.msk [vmem:[#allocation3 + $0x20] sm:$0xff] %vm5462, %v5443
        %5466 = vst.msk [vmem:[#allocation3 + $0x30] sm:$0xff] %vm5462, %v5445
        %5467 = vst.msk [vmem:[#allocation3 + $0x40] sm:$0xff] %vm5462, %v5447
        %5468 = vst.msk [vmem:[#allocation3 + $0x50] sm:$0xff] %vm5462, %v5449
        %5469 = vst.msk [vmem:[#allocation3 + $0x60] sm:$0xff] %vm5462, %v5451
        %5470 = vst.msk [vmem:[#allocation3 + $0x70] sm:$0xff] %vm5462, %v5453
        %v5471 = vld [vmem:[%s5274 + $0x4] sm:$0xff]
        %v5472 = vld [vmem:[%s5274 + $0x14] sm:$0xff]
        %v5473 = vld [vmem:[%s5274 + $0x24] sm:$0xff]
        %v5474 = vld [vmem:[%s5274 + $0x34] sm:$0xff]
        %v5475 = vld [vmem:[%s5274 + $0x44] sm:$0xff]
        %v5476 = vld [vmem:[%s5274 + $0x54] sm:$0xff]
        %v5477 = vld [vmem:[%s5274 + $0x64] sm:$0xff]
        %v5478 = vld [vmem:[%s5274 + $0x74] sm:$0xff]
        %5487 = vrot.lane.b32.xlu0 %v5471, 54
        %v5488 = vpop.permute.xlu0 %5487
        %5489 = vrot.lane.b32.xlu0 %v5472, 54
        %v5490 = vpop.permute.xlu0 %5489
        %5491 = vrot.lane.b32.xlu0 %v5473, 54
        %v5492 = vpop.permute.xlu0 %5491
        %5493 = vrot.lane.b32.xlu0 %v5474, 54
        %v5494 = vpop.permute.xlu0 %5493
        %5495 = vrot.lane.b32.xlu0 %v5475, 54
        %v5496 = vpop.permute.xlu0 %5495
        %5497 = vrot.lane.b32.xlu0 %v5476, 54
        %v5498 = vpop.permute.xlu0 %5497
        %5499 = vrot.lane.b32.xlu0 %v5477, 54
        %v5500 = vpop.permute.xlu0 %5499
        %5501 = vrot.lane.b32.xlu0 %v5478, 54
        %v5502 = vpop.permute.xlu0 %5501
        %vm5511 = vcmask 490928
        %5512 = vst.msk [vmem:[#allocation3] sm:$0xff] %vm5511, %v5488
        %5513 = vst.msk [vmem:[#allocation3 + $0x10] sm:$0xff] %vm5511, %v5490
        %5514 = vst.msk [vmem:[#allocation3 + $0x20] sm:$0xff] %vm5511, %v5492
        %5515 = vst.msk [vmem:[#allocation3 + $0x30] sm:$0xff] %vm5511, %v5494
        %5516 = vst.msk [vmem:[#allocation3 + $0x40] sm:$0xff] %vm5511, %v5496
        %5517 = vst.msk [vmem:[#allocation3 + $0x50] sm:$0xff] %vm5511, %v5498
        %5518 = vst.msk [vmem:[#allocation3 + $0x60] sm:$0xff] %vm5511, %v5500
        %5519 = vst.msk [vmem:[#allocation3 + $0x70] sm:$0xff] %vm5511, %v5502
        %s5520 = scalar_lea.vmem [#allocation4], 32
        %v5521 = vld [vmem:[%s5520] sm:$0xff]
        %v5522 = vld [vmem:[%s5520 + $0x10] sm:$0xff]
        %v5523 = vld [vmem:[%s5520 + $0x20] sm:$0xff]
        %v5524 = vld [vmem:[%s5520 + $0x30] sm:$0xff]
        %v5525 = vld [vmem:[%s5520 + $0x40] sm:$0xff]
        %v5526 = vld [vmem:[%s5520 + $0x50] sm:$0xff]
        %v5527 = vld [vmem:[%s5520 + $0x60] sm:$0xff]
        %v5528 = vld [vmem:[%s5520 + $0x70] sm:$0xff]
        %5537 = vrot.lane.b32.xlu0 %v5521, 60
        %v5538 = vpop.permute.xlu0 %5537
        %5539 = vrot.lane.b32.xlu0 %v5522, 60
        %v5540 = vpop.permute.xlu0 %5539
        %5541 = vrot.lane.b32.xlu0 %v5523, 60
        %v5542 = vpop.permute.xlu0 %5541
        %5543 = vrot.lane.b32.xlu0 %v5524, 60
        %v5544 = vpop.permute.xlu0 %5543
        %5545 = vrot.lane.b32.xlu0 %v5525, 60
        %v5546 = vpop.permute.xlu0 %5545
        %5547 = vrot.lane.b32.xlu0 %v5526, 60
        %v5548 = vpop.permute.xlu0 %5547
        %5549 = vrot.lane.b32.xlu0 %v5527, 60
        %v5550 = vpop.permute.xlu0 %5549
        %5551 = vrot.lane.b32.xlu0 %v5528, 60
        %v5552 = vpop.permute.xlu0 %5551
        %vm5561 = vcmask 540128
        %5562 = vst.msk [vmem:[#allocation3] sm:$0xff] %vm5561, %v5538
        %5563 = vst.msk [vmem:[#allocation3 + $0x10] sm:$0xff] %vm5561, %v5540
        %5564 = vst.msk [vmem:[#allocation3 + $0x20] sm:$0xff] %vm5561, %v5542
        %5565 = vst.msk [vmem:[#allocation3 + $0x30] sm:$0xff] %vm5561, %v5544
        %5566 = vst.msk [vmem:[#allocation3 + $0x40] sm:$0xff] %vm5561, %v5546
        %5567 = vst.msk [vmem:[#allocation3 + $0x50] sm:$0xff] %vm5561, %v5548
        %5568 = vst.msk [vmem:[#allocation3 + $0x60] sm:$0xff] %vm5561, %v5550
        %5569 = vst.msk [vmem:[#allocation3 + $0x70] sm:$0xff] %vm5561, %v5552
        %v5570 = vld [vmem:[%s5520 + $0x1] sm:$0xff]
        %v5571 = vld [vmem:[%s5520 + $0x11] sm:$0xff]
        %v5572 = vld [vmem:[%s5520 + $0x21] sm:$0xff]
        %v5573 = vld [vmem:[%s5520 + $0x31] sm:$0xff]
        %v5574 = vld [vmem:[%s5520 + $0x41] sm:$0xff]
        %v5575 = vld [vmem:[%s5520 + $0x51] sm:$0xff]
        %v5576 = vld [vmem:[%s5520 + $0x61] sm:$0xff]
        %v5577 = vld [vmem:[%s5520 + $0x71] sm:$0xff]
        %5586 = vrot.lane.b32.xlu0 %v5570, 66
        %v5587 = vpop.permute.xlu0 %5586
        %5588 = vrot.lane.b32.xlu0 %v5571, 66
        %v5589 = vpop.permute.xlu0 %5588
        %5590 = vrot.lane.b32.xlu0 %v5572, 66
        %v5591 = vpop.permute.xlu0 %5590
        %5592 = vrot.lane.b32.xlu0 %v5573, 66
        %v5593 = vpop.permute.xlu0 %5592
        %5594 = vrot.lane.b32.xlu0 %v5574, 66
        %v5595 = vpop.permute.xlu0 %5594
        %5596 = vrot.lane.b32.xlu0 %v5575, 66
        %v5597 = vpop.permute.xlu0 %5596
        %5598 = vrot.lane.b32.xlu0 %v5576, 66
        %v5599 = vpop.permute.xlu0 %5598
        %5600 = vrot.lane.b32.xlu0 %v5577, 66
        %v5601 = vpop.permute.xlu0 %5600
        %vm5610 = vcmask 589328
        %5611 = vst.msk [vmem:[#allocation3] sm:$0xff] %vm5610, %v5587
        %5612 = vst.msk [vmem:[#allocation3 + $0x10] sm:$0xff] %vm5610, %v5589
        %5613 = vst.msk [vmem:[#allocation3 + $0x20] sm:$0xff] %vm5610, %v5591
        %5614 = vst.msk [vmem:[#allocation3 + $0x30] sm:$0xff] %vm5610, %v5593
        %5615 = vst.msk [vmem:[#allocation3 + $0x40] sm:$0xff] %vm5610, %v5595
        %5616 = vst.msk [vmem:[#allocation3 + $0x50] sm:$0xff] %vm5610, %v5597
        %5617 = vst.msk [vmem:[#allocation3 + $0x60] sm:$0xff] %vm5610, %v5599
        %5618 = vst.msk [vmem:[#allocation3 + $0x70] sm:$0xff] %vm5610, %v5601
        %v5619 = vld [vmem:[%s5520 + $0x2] sm:$0xff]
        %v5620 = vld [vmem:[%s5520 + $0x12] sm:$0xff]
        %v5621 = vld [vmem:[%s5520 + $0x22] sm:$0xff]
        %v5622 = vld [vmem:[%s5520 + $0x32] sm:$0xff]
        %v5623 = vld [vmem:[%s5520 + $0x42] sm:$0xff]
        %v5624 = vld [vmem:[%s5520 + $0x52] sm:$0xff]
        %v5625 = vld [vmem:[%s5520 + $0x62] sm:$0xff]
        %v5626 = vld [vmem:[%s5520 + $0x72] sm:$0xff]
        %5635 = vrot.lane.b32.xlu0 %v5619, 72
        %v5636 = vpop.permute.xlu0 %5635
        %5637 = vrot.lane.b32.xlu0 %v5620, 72
        %v5638 = vpop.permute.xlu0 %5637
        %5639 = vrot.lane.b32.xlu0 %v5621, 72
        %v5640 = vpop.permute.xlu0 %5639
        %5641 = vrot.lane.b32.xlu0 %v5622, 72
        %v5642 = vpop.permute.xlu0 %5641
        %5643 = vrot.lane.b32.xlu0 %v5623, 72
        %v5644 = vpop.permute.xlu0 %5643
        %5645 = vrot.lane.b32.xlu0 %v5624, 72
        %v5646 = vpop.permute.xlu0 %5645
        %5647 = vrot.lane.b32.xlu0 %v5625, 72
        %v5648 = vpop.permute.xlu0 %5647
        %5649 = vrot.lane.b32.xlu0 %v5626, 72
        %v5650 = vpop.permute.xlu0 %5649
        %vm5659 = vcmask 638528
        %5660 = vst.msk [vmem:[#allocation3] sm:$0xff] %vm5659, %v5636
        %5661 = vst.msk [vmem:[#allocation3 + $0x10] sm:$0xff] %vm5659, %v5638
        %5662 = vst.msk [vmem:[#allocation3 + $0x20] sm:$0xff] %vm5659, %v5640
        %5663 = vst.msk [vmem:[#allocation3 + $0x30] sm:$0xff] %vm5659, %v5642
        %5664 = vst.msk [vmem:[#allocation3 + $0x40] sm:$0xff] %vm5659, %v5644
        %5665 = vst.msk [vmem:[#allocation3 + $0x50] sm:$0xff] %vm5659, %v5646
        %5666 = vst.msk [vmem:[#allocation3 + $0x60] sm:$0xff] %vm5659, %v5648
        %5667 = vst.msk [vmem:[#allocation3 + $0x70] sm:$0xff] %vm5659, %v5650
        %v5668 = vld [vmem:[%s5520 + $0x3] sm:$0xff]
        %v5669 = vld [vmem:[%s5520 + $0x13] sm:$0xff]
        %v5670 = vld [vmem:[%s5520 + $0x23] sm:$0xff]
        %v5671 = vld [vmem:[%s5520 + $0x33] sm:$0xff]
        %v5672 = vld [vmem:[%s5520 + $0x43] sm:$0xff]
        %v5673 = vld [vmem:[%s5520 + $0x53] sm:$0xff]
        %v5674 = vld [vmem:[%s5520 + $0x63] sm:$0xff]
        %v5675 = vld [vmem:[%s5520 + $0x73] sm:$0xff]
        %5684 = vrot.lane.b32.xlu0 %v5668, 78
        %v5685 = vpop.permute.xlu0 %5684
        %5686 = vrot.lane.b32.xlu0 %v5669, 78
        %v5687 = vpop.permute.xlu0 %5686
        %5688 = vrot.lane.b32.xlu0 %v5670, 78
        %v5689 = vpop.permute.xlu0 %5688
        %5690 = vrot.lane.b32.xlu0 %v5671, 78
        %v5691 = vpop.permute.xlu0 %5690
        %5692 = vrot.lane.b32.xlu0 %v5672, 78
        %v5693 = vpop.permute.xlu0 %5692
        %5694 = vrot.lane.b32.xlu0 %v5673, 78
        %v5695 = vpop.permute.xlu0 %5694
        %5696 = vrot.lane.b32.xlu0 %v5674, 78
        %v5697 = vpop.permute.xlu0 %5696
        %5698 = vrot.lane.b32.xlu0 %v5675, 78
        %v5699 = vpop.permute.xlu0 %5698
        %vm5708 = vcmask 687728
        %5709 = vst.msk [vmem:[#allocation3] sm:$0xff] %vm5708, %v5685
        %5710 = vst.msk [vmem:[#allocation3 + $0x10] sm:$0xff] %vm5708, %v5687
        %5711 = vst.msk [vmem:[#allocation3 + $0x20] sm:$0xff] %vm5708, %v5689
        %5712 = vst.msk [vmem:[#allocation3 + $0x30] sm:$0xff] %vm5708, %v5691
        %5713 = vst.msk [vmem:[#allocation3 + $0x40] sm:$0xff] %vm5708, %v5693
        %5714 = vst.msk [vmem:[#allocation3 + $0x50] sm:$0xff] %vm5708, %v5695
        %5715 = vst.msk [vmem:[#allocation3 + $0x60] sm:$0xff] %vm5708, %v5697
        %5716 = vst.msk [vmem:[#allocation3 + $0x70] sm:$0xff] %vm5708, %v5699
        %v5717 = vld [vmem:[%s5520 + $0x4] sm:$0xff]
        %v5718 = vld [vmem:[%s5520 + $0x14] sm:$0xff]
        %v5719 = vld [vmem:[%s5520 + $0x24] sm:$0xff]
        %v5720 = vld [vmem:[%s5520 + $0x34] sm:$0xff]
        %v5721 = vld [vmem:[%s5520 + $0x44] sm:$0xff]
        %v5722 = vld [vmem:[%s5520 + $0x54] sm:$0xff]
        %v5723 = vld [vmem:[%s5520 + $0x64] sm:$0xff]
        %v5724 = vld [vmem:[%s5520 + $0x74] sm:$0xff]
        %5733 = vrot.lane.b32.xlu0 %v5717, 84
        %v5734 = vpop.permute.xlu0 %5733
        %5735 = vrot.lane.b32.xlu0 %v5718, 84
        %v5736 = vpop.permute.xlu0 %5735
        %5737 = vrot.lane.b32.xlu0 %v5719, 84
        %v5738 = vpop.permute.xlu0 %5737
        %5739 = vrot.lane.b32.xlu0 %v5720, 84
        %v5740 = vpop.permute.xlu0 %5739
        %5741 = vrot.lane.b32.xlu0 %v5721, 84
        %v5742 = vpop.permute.xlu0 %5741
        %5743 = vrot.lane.b32.xlu0 %v5722, 84
        %v5744 = vpop.permute.xlu0 %5743
        %5745 = vrot.lane.b32.xlu0 %v5723, 84
        %v5746 = vpop.permute.xlu0 %5745
        %5747 = vrot.lane.b32.xlu0 %v5724, 84
        %v5748 = vpop.permute.xlu0 %5747
        %vm5757 = vcmask 736928
        %5758 = vst.msk [vmem:[#allocation3] sm:$0xff] %vm5757, %v5734
        %5759 = vst.msk [vmem:[#allocation3 + $0x10] sm:$0xff] %vm5757, %v5736
        %5760 = vst.msk [vmem:[#allocation3 + $0x20] sm:$0xff] %vm5757, %v5738
        %5761 = vst.msk [vmem:[#allocation3 + $0x30] sm:$0xff] %vm5757, %v5740
        %5762 = vst.msk [vmem:[#allocation3 + $0x40] sm:$0xff] %vm5757, %v5742
        %5763 = vst.msk [vmem:[#allocation3 + $0x50] sm:$0xff] %vm5757, %v5744
        %5764 = vst.msk [vmem:[#allocation3 + $0x60] sm:$0xff] %vm5757, %v5746
        %5765 = vst.msk [vmem:[#allocation3 + $0x70] sm:$0xff] %vm5757, %v5748
        %s5766 = scalar_lea.vmem [#allocation4], 48
        %v5767 = vld [vmem:[%s5766] sm:$0xff]
        %v5768 = vld [vmem:[%s5766 + $0x10] sm:$0xff]
        %v5769 = vld [vmem:[%s5766 + $0x20] sm:$0xff]
        %v5770 = vld [vmem:[%s5766 + $0x30] sm:$0xff]
        %v5771 = vld [vmem:[%s5766 + $0x40] sm:$0xff]
        %v5772 = vld [vmem:[%s5766 + $0x50] sm:$0xff]
        %v5773 = vld [vmem:[%s5766 + $0x60] sm:$0xff]
        %v5774 = vld [vmem:[%s5766 + $0x70] sm:$0xff]
        %5783 = vrot.lane.b32.xlu0 %v5767, 90
        %v5784 = vpop.permute.xlu0 %5783
        %5785 = vrot.lane.b32.xlu0 %v5768, 90
        %v5786 = vpop.permute.xlu0 %5785
        %5787 = vrot.lane.b32.xlu0 %v5769, 90
        %v5788 = vpop.permute.xlu0 %5787
        %5789 = vrot.lane.b32.xlu0 %v5770, 90
        %v5790 = vpop.permute.xlu0 %5789
        %5791 = vrot.lane.b32.xlu0 %v5771, 90
        %v5792 = vpop.permute.xlu0 %5791
        %5793 = vrot.lane.b32.xlu0 %v5772, 90
        %v5794 = vpop.permute.xlu0 %5793
        %5795 = vrot.lane.b32.xlu0 %v5773, 90
        %v5796 = vpop.permute.xlu0 %5795
        %5797 = vrot.lane.b32.xlu0 %v5774, 90
        %v5798 = vpop.permute.xlu0 %5797
        %vm5807 = vcmask 786128
        %5808 = vst.msk [vmem:[#allocation3] sm:$0xff] %vm5807, %v5784
        %5809 = vst.msk [vmem:[#allocation3 + $0x10] sm:$0xff] %vm5807, %v5786
        %5810 = vst.msk [vmem:[#allocation3 + $0x20] sm:$0xff] %vm5807, %v5788
        %5811 = vst.msk [vmem:[#allocation3 + $0x30] sm:$0xff] %vm5807, %v5790
        %5812 = vst.msk [vmem:[#allocation3 + $0x40] sm:$0xff] %vm5807, %v5792
        %5813 = vst.msk [vmem:[#allocation3 + $0x50] sm:$0xff] %vm5807, %v5794
        %5814 = vst.msk [vmem:[#allocation3 + $0x60] sm:$0xff] %vm5807, %v5796
        %5815 = vst.msk [vmem:[#allocation3 + $0x70] sm:$0xff] %vm5807, %v5798
        %v5816 = vld [vmem:[%s5766 + $0x1] sm:$0xff]
        %v5817 = vld [vmem:[%s5766 + $0x11] sm:$0xff]
        %v5818 = vld [vmem:[%s5766 + $0x21] sm:$0xff]
        %v5819 = vld [vmem:[%s5766 + $0x31] sm:$0xff]
        %v5820 = vld [vmem:[%s5766 + $0x41] sm:$0xff]
        %v5821 = vld [vmem:[%s5766 + $0x51] sm:$0xff]
        %v5822 = vld [vmem:[%s5766 + $0x61] sm:$0xff]
        %v5823 = vld [vmem:[%s5766 + $0x71] sm:$0xff]
        %5832 = vrot.lane.b32.xlu0 %v5816, 96
        %v5833 = vpop.permute.xlu0 %5832
        %5834 = vrot.lane.b32.xlu0 %v5817, 96
        %v5835 = vpop.permute.xlu0 %5834
        %5836 = vrot.lane.b32.xlu0 %v5818, 96
        %v5837 = vpop.permute.xlu0 %5836
        %5838 = vrot.lane.b32.xlu0 %v5819, 96
        %v5839 = vpop.permute.xlu0 %5838
        %5840 = vrot.lane.b32.xlu0 %v5820, 96
        %v5841 = vpop.permute.xlu0 %5840
        %5842 = vrot.lane.b32.xlu0 %v5821, 96
        %v5843 = vpop.permute.xlu0 %5842
        %5844 = vrot.lane.b32.xlu0 %v5822, 96
        %v5845 = vpop.permute.xlu0 %5844
        %5846 = vrot.lane.b32.xlu0 %v5823, 96
        %v5847 = vpop.permute.xlu0 %5846
        %vm5856 = vcmask 835328
        %5857 = vst.msk [vmem:[#allocation3] sm:$0xff] %vm5856, %v5833
        %5858 = vst.msk [vmem:[#allocation3 + $0x10] sm:$0xff] %vm5856, %v5835
        %5859 = vst.msk [vmem:[#allocation3 + $0x20] sm:$0xff] %vm5856, %v5837
        %5860 = vst.msk [vmem:[#allocation3 + $0x30] sm:$0xff] %vm5856, %v5839
        %5861 = vst.msk [vmem:[#allocation3 + $0x40] sm:$0xff] %vm5856, %v5841
        %5862 = vst.msk [vmem:[#allocation3 + $0x50] sm:$0xff] %vm5856, %v5843
        %5863 = vst.msk [vmem:[#allocation3 + $0x60] sm:$0xff] %vm5856, %v5845
        %5864 = vst.msk [vmem:[#allocation3 + $0x70] sm:$0xff] %vm5856, %v5847
        %v5865 = vld [vmem:[%s5766 + $0x2] sm:$0xff]
        %v5866 = vld [vmem:[%s5766 + $0x12] sm:$0xff]
        %v5867 = vld [vmem:[%s5766 + $0x22] sm:$0xff]
        %v5868 = vld [vmem:[%s5766 + $0x32] sm:$0xff]
        %v5869 = vld [vmem:[%s5766 + $0x42] sm:$0xff]
        %v5870 = vld [vmem:[%s5766 + $0x52] sm:$0xff]
        %v5871 = vld [vmem:[%s5766 + $0x62] sm:$0xff]
        %v5872 = vld [vmem:[%s5766 + $0x72] sm:$0xff]
        %5881 = vrot.lane.b32.xlu0 %v5865, 102
        %v5882 = vpop.permute.xlu0 %5881
        %5883 = vrot.lane.b32.xlu0 %v5866, 102
        %v5884 = vpop.permute.xlu0 %5883
        %5885 = vrot.lane.b32.xlu0 %v5867, 102
        %v5886 = vpop.permute.xlu0 %5885
        %5887 = vrot.lane.b32.xlu0 %v5868, 102
        %v5888 = vpop.permute.xlu0 %5887
        %5889 = vrot.lane.b32.xlu0 %v5869, 102
        %v5890 = vpop.permute.xlu0 %5889
        %5891 = vrot.lane.b32.xlu0 %v5870, 102
        %v5892 = vpop.permute.xlu0 %5891
        %5893 = vrot.lane.b32.xlu0 %v5871, 102
        %v5894 = vpop.permute.xlu0 %5893
        %5895 = vrot.lane.b32.xlu0 %v5872, 102
        %v5896 = vpop.permute.xlu0 %5895
        %vm5905 = vcmask 884528
        %5906 = vst.msk [vmem:[#allocation3] sm:$0xff] %vm5905, %v5882
        %5907 = vst.msk [vmem:[#allocation3 + $0x10] sm:$0xff] %vm5905, %v5884
        %5908 = vst.msk [vmem:[#allocation3 + $0x20] sm:$0xff] %vm5905, %v5886
        %5909 = vst.msk [vmem:[#allocation3 + $0x30] sm:$0xff] %vm5905, %v5888
        %5910 = vst.msk [vmem:[#allocation3 + $0x40] sm:$0xff] %vm5905, %v5890
        %5911 = vst.msk [vmem:[#allocation3 + $0x50] sm:$0xff] %vm5905, %v5892
        %5912 = vst.msk [vmem:[#allocation3 + $0x60] sm:$0xff] %vm5905, %v5894
        %5913 = vst.msk [vmem:[#allocation3 + $0x70] sm:$0xff] %vm5905, %v5896
        %v5914 = vld [vmem:[%s5766 + $0x3] sm:$0xff]
        %v5915 = vld [vmem:[%s5766 + $0x13] sm:$0xff]
        %v5916 = vld [vmem:[%s5766 + $0x23] sm:$0xff]
        %v5917 = vld [vmem:[%s5766 + $0x33] sm:$0xff]
        %v5918 = vld [vmem:[%s5766 + $0x43] sm:$0xff]
        %v5919 = vld [vmem:[%s5766 + $0x53] sm:$0xff]
        %v5920 = vld [vmem:[%s5766 + $0x63] sm:$0xff]
        %v5921 = vld [vmem:[%s5766 + $0x73] sm:$0xff]
        %5930 = vrot.lane.b32.xlu0 %v5914, 108
        %v5931 = vpop.permute.xlu0 %5930
        %5932 = vrot.lane.b32.xlu0 %v5915, 108
        %v5933 = vpop.permute.xlu0 %5932
        %5934 = vrot.lane.b32.xlu0 %v5916, 108
        %v5935 = vpop.permute.xlu0 %5934
        %5936 = vrot.lane.b32.xlu0 %v5917, 108
        %v5937 = vpop.permute.xlu0 %5936
        %5938 = vrot.lane.b32.xlu0 %v5918, 108
        %v5939 = vpop.permute.xlu0 %5938
        %5940 = vrot.lane.b32.xlu0 %v5919, 108
        %v5941 = vpop.permute.xlu0 %5940
        %5942 = vrot.lane.b32.xlu0 %v5920, 108
        %v5943 = vpop.permute.xlu0 %5942
        %5944 = vrot.lane.b32.xlu0 %v5921, 108
        %v5945 = vpop.permute.xlu0 %5944
        %vm5954 = vcmask 933728
        %5955 = vst.msk [vmem:[#allocation3] sm:$0xff] %vm5954, %v5931
        %5956 = vst.msk [vmem:[#allocation3 + $0x10] sm:$0xff] %vm5954, %v5933
        %5957 = vst.msk [vmem:[#allocation3 + $0x20] sm:$0xff] %vm5954, %v5935
        %5958 = vst.msk [vmem:[#allocation3 + $0x30] sm:$0xff] %vm5954, %v5937
        %5959 = vst.msk [vmem:[#allocation3 + $0x40] sm:$0xff] %vm5954, %v5939
        %5960 = vst.msk [vmem:[#allocation3 + $0x50] sm:$0xff] %vm5954, %v5941
        %5961 = vst.msk [vmem:[#allocation3 + $0x60] sm:$0xff] %vm5954, %v5943
        %5962 = vst.msk [vmem:[#allocation3 + $0x70] sm:$0xff] %vm5954, %v5945
        %v5963 = vld [vmem:[%s5766 + $0x4] sm:$0xff]
        %v5964 = vld [vmem:[%s5766 + $0x14] sm:$0xff]
        %v5965 = vld [vmem:[%s5766 + $0x24] sm:$0xff]
        %v5966 = vld [vmem:[%s5766 + $0x34] sm:$0xff]
        %v5967 = vld [vmem:[%s5766 + $0x44] sm:$0xff]
        %v5968 = vld [vmem:[%s5766 + $0x54] sm:$0xff]
        %v5969 = vld [vmem:[%s5766 + $0x64] sm:$0xff]
        %v5970 = vld [vmem:[%s5766 + $0x74] sm:$0xff]
        %5979 = vrot.lane.b32.xlu0 %v5963, 114
        %v5980 = vpop.permute.xlu0 %5979
        %5981 = vrot.lane.b32.xlu0 %v5964, 114
        %v5982 = vpop.permute.xlu0 %5981
        %5983 = vrot.lane.b32.xlu0 %v5965, 114
        %v5984 = vpop.permute.xlu0 %5983
        %5985 = vrot.lane.b32.xlu0 %v5966, 114
        %v5986 = vpop.permute.xlu0 %5985
        %5987 = vrot.lane.b32.xlu0 %v5967, 114
        %v5988 = vpop.permute.xlu0 %5987
        %5989 = vrot.lane.b32.xlu0 %v5968, 114
        %v5990 = vpop.permute.xlu0 %5989
        %5991 = vrot.lane.b32.xlu0 %v5969, 114
        %v5992 = vpop.permute.xlu0 %5991
        %5993 = vrot.lane.b32.xlu0 %v5970, 114
        %v5994 = vpop.permute.xlu0 %5993
        %vm6003 = vcmask 982928
        %6004 = vst.msk [vmem:[#allocation3] sm:$0xff] %vm6003, %v5980
        %6005 = vst.msk [vmem:[#allocation3 + $0x10] sm:$0xff] %vm6003, %v5982
        %6006 = vst.msk [vmem:[#allocation3 + $0x20] sm:$0xff] %vm6003, %v5984
        %6007 = vst.msk [vmem:[#allocation3 + $0x30] sm:$0xff] %vm6003, %v5986
        %6008 = vst.msk [vmem:[#allocation3 + $0x40] sm:$0xff] %vm6003, %v5988
        %6009 = vst.msk [vmem:[#allocation3 + $0x50] sm:$0xff] %vm6003, %v5990
        %6010 = vst.msk [vmem:[#allocation3 + $0x60] sm:$0xff] %vm6003, %v5992
        %6011 = vst.msk [vmem:[#allocation3 + $0x70] sm:$0xff] %vm6003, %v5994
        %s6012 = scalar_lea.vmem [#allocation4], 64
        %v6013 = vld [vmem:[%s6012] sm:$0xff]
        %v6014 = vld [vmem:[%s6012 + $0x10] sm:$0xff]
        %v6015 = vld [vmem:[%s6012 + $0x20] sm:$0xff]
        %v6016 = vld [vmem:[%s6012 + $0x30] sm:$0xff]
        %v6017 = vld [vmem:[%s6012 + $0x40] sm:$0xff]
        %v6018 = vld [vmem:[%s6012 + $0x50] sm:$0xff]
        %v6019 = vld [vmem:[%s6012 + $0x60] sm:$0xff]
        %v6020 = vld [vmem:[%s6012 + $0x70] sm:$0xff]
        %6029 = vrot.lane.b32.xlu0 %v6013, 120
        %v6030 = vpop.permute.xlu0 %6029
        %6031 = vrot.lane.b32.xlu0 %v6014, 120
        %v6032 = vpop.permute.xlu0 %6031
        %6033 = vrot.lane.b32.xlu0 %v6015, 120
        %v6034 = vpop.permute.xlu0 %6033
        %6035 = vrot.lane.b32.xlu0 %v6016, 120
        %v6036 = vpop.permute.xlu0 %6035
        %6037 = vrot.lane.b32.xlu0 %v6017, 120
        %v6038 = vpop.permute.xlu0 %6037
        %6039 = vrot.lane.b32.xlu0 %v6018, 120
        %v6040 = vpop.permute.xlu0 %6039
        %6041 = vrot.lane.b32.xlu0 %v6019, 120
        %v6042 = vpop.permute.xlu0 %6041
        %6043 = vrot.lane.b32.xlu0 %v6020, 120
        %v6044 = vpop.permute.xlu0 %6043
        %vm6053 = vcmask 1032128
        %6054 = vst.msk [vmem:[#allocation3] sm:$0xff] %vm6053, %v6030
        %6055 = vst.msk [vmem:[#allocation3 + $0x10] sm:$0xff] %vm6053, %v6032
        %6056 = vst.msk [vmem:[#allocation3 + $0x20] sm:$0xff] %vm6053, %v6034
        %6057 = vst.msk [vmem:[#allocation3 + $0x30] sm:$0xff] %vm6053, %v6036
        %6058 = vst.msk [vmem:[#allocation3 + $0x40] sm:$0xff] %vm6053, %v6038
        %6059 = vst.msk [vmem:[#allocation3 + $0x50] sm:$0xff] %vm6053, %v6040
        %6060 = vst.msk [vmem:[#allocation3 + $0x60] sm:$0xff] %vm6053, %v6042
        %6061 = vst.msk [vmem:[#allocation3 + $0x70] sm:$0xff] %vm6053, %v6044
        %v6062 = vld [vmem:[%s6012 + $0x1] sm:$0xff]
        %v6063 = vld [vmem:[%s6012 + $0x11] sm:$0xff]
        %v6064 = vld [vmem:[%s6012 + $0x21] sm:$0xff]
        %v6065 = vld [vmem:[%s6012 + $0x31] sm:$0xff]
        %v6066 = vld [vmem:[%s6012 + $0x41] sm:$0xff]
        %v6067 = vld [vmem:[%s6012 + $0x51] sm:$0xff]
        %v6068 = vld [vmem:[%s6012 + $0x61] sm:$0xff]
        %v6069 = vld [vmem:[%s6012 + $0x71] sm:$0xff]
        %6078 = vrot.lane.b32.xlu0 %v6062, 126
        %v6079 = vpop.permute.xlu0 %6078
        %6080 = vrot.lane.b32.xlu0 %v6063, 126
        %v6081 = vpop.permute.xlu0 %6080
        %6082 = vrot.lane.b32.xlu0 %v6064, 126
        %v6083 = vpop.permute.xlu0 %6082
        %6084 = vrot.lane.b32.xlu0 %v6065, 126
        %v6085 = vpop.permute.xlu0 %6084
        %6086 = vrot.lane.b32.xlu0 %v6066, 126
        %v6087 = vpop.permute.xlu0 %6086
        %6088 = vrot.lane.b32.xlu0 %v6067, 126
        %v6089 = vpop.permute.xlu0 %6088
        %6090 = vrot.lane.b32.xlu0 %v6068, 126
        %v6091 = vpop.permute.xlu0 %6090
        %6092 = vrot.lane.b32.xlu0 %v6069, 126
        %v6093 = vpop.permute.xlu0 %6092
        %vm6102 = vcmask 1048560
        %6103 = vst.msk [vmem:[#allocation3] sm:$0xff] %vm6102, %v6079
        %6104 = vst.msk [vmem:[#allocation3 + $0x8] sm:$0xff] %vm669, %v6079
        %6105 = vst.msk [vmem:[#allocation3 + $0x10] sm:$0xff] %vm6102, %v6081
        %6106 = vst.msk [vmem:[#allocation3 + $0x18] sm:$0xff] %vm669, %v6081
        %6107 = vst.msk [vmem:[#allocation3 + $0x20] sm:$0xff] %vm6102, %v6083
        %6108 = vst.msk [vmem:[#allocation3 + $0x28] sm:$0xff] %vm669, %v6083
        %6109 = vst.msk [vmem:[#allocation3 + $0x30] sm:$0xff] %vm6102, %v6085
        %6110 = vst.msk [vmem:[#allocation3 + $0x38] sm:$0xff] %vm669, %v6085
        %6111 = vst.msk [vmem:[#allocation3 + $0x40] sm:$0xff] %vm6102, %v6087
        %6112 = vst.msk [vmem:[#allocation3 + $0x48] sm:$0xff] %vm669, %v6087
        %6113 = vst.msk [vmem:[#allocation3 + $0x50] sm:$0xff] %vm6102, %v6089
        %6114 = vst.msk [vmem:[#allocation3 + $0x58] sm:$0xff] %vm669, %v6089
        %6115 = vst.msk [vmem:[#allocation3 + $0x60] sm:$0xff] %vm6102, %v6091
        %6116 = vst.msk [vmem:[#allocation3 + $0x68] sm:$0xff] %vm669, %v6091
        %6117 = vst.msk [vmem:[#allocation3 + $0x70] sm:$0xff] %vm6102, %v6093
        %6118 = vst.msk [vmem:[#allocation3 + $0x78] sm:$0xff] %vm669, %v6093
        %v6119 = vld [vmem:[%s6012 + $0x2] sm:$0xff]
        %v6120 = vld [vmem:[%s6012 + $0x12] sm:$0xff]
        %v6121 = vld [vmem:[%s6012 + $0x22] sm:$0xff]
        %v6122 = vld [vmem:[%s6012 + $0x32] sm:$0xff]
        %v6123 = vld [vmem:[%s6012 + $0x42] sm:$0xff]
        %v6124 = vld [vmem:[%s6012 + $0x52] sm:$0xff]
        %v6125 = vld [vmem:[%s6012 + $0x62] sm:$0xff]
        %v6126 = vld [vmem:[%s6012 + $0x72] sm:$0xff]
        %6135 = vrot.lane.b32.xlu0 %v6119, 4
        %v6136 = vpop.permute.xlu0 %6135
        %6137 = vrot.lane.b32.xlu0 %v6120, 4
        %v6138 = vpop.permute.xlu0 %6137
        %6139 = vrot.lane.b32.xlu0 %v6121, 4
        %v6140 = vpop.permute.xlu0 %6139
        %6141 = vrot.lane.b32.xlu0 %v6122, 4
        %v6142 = vpop.permute.xlu0 %6141
        %6143 = vrot.lane.b32.xlu0 %v6123, 4
        %v6144 = vpop.permute.xlu0 %6143
        %6145 = vrot.lane.b32.xlu0 %v6124, 4
        %v6146 = vpop.permute.xlu0 %6145
        %6147 = vrot.lane.b32.xlu0 %v6125, 4
        %v6148 = vpop.permute.xlu0 %6147
        %6149 = vrot.lane.b32.xlu0 %v6126, 4
        %v6150 = vpop.permute.xlu0 %6149
        %vm6159 = vcmask 80928
        %6160 = vst.msk [vmem:[#allocation3 + $0x8] sm:$0xff] %vm6159, %v6136
        %6161 = vst.msk [vmem:[#allocation3 + $0x18] sm:$0xff] %vm6159, %v6138
        %6162 = vst.msk [vmem:[#allocation3 + $0x28] sm:$0xff] %vm6159, %v6140
        %6163 = vst.msk [vmem:[#allocation3 + $0x38] sm:$0xff] %vm6159, %v6142
        %6164 = vst.msk [vmem:[#allocation3 + $0x48] sm:$0xff] %vm6159, %v6144
        %6165 = vst.msk [vmem:[#allocation3 + $0x58] sm:$0xff] %vm6159, %v6146
        %6166 = vst.msk [vmem:[#allocation3 + $0x68] sm:$0xff] %vm6159, %v6148
        %6167 = vst.msk [vmem:[#allocation3 + $0x78] sm:$0xff] %vm6159, %v6150
        %v6168 = vld [vmem:[%s6012 + $0x3] sm:$0xff]
        %v6169 = vld [vmem:[%s6012 + $0x13] sm:$0xff]
        %v6170 = vld [vmem:[%s6012 + $0x23] sm:$0xff]
        %v6171 = vld [vmem:[%s6012 + $0x33] sm:$0xff]
        %v6172 = vld [vmem:[%s6012 + $0x43] sm:$0xff]
        %v6173 = vld [vmem:[%s6012 + $0x53] sm:$0xff]
        %v6174 = vld [vmem:[%s6012 + $0x63] sm:$0xff]
        %v6175 = vld [vmem:[%s6012 + $0x73] sm:$0xff]
        %6184 = vrot.lane.b32.xlu0 %v6168, 10
        %v6185 = vpop.permute.xlu0 %6184
        %6186 = vrot.lane.b32.xlu0 %v6169, 10
        %v6187 = vpop.permute.xlu0 %6186
        %6188 = vrot.lane.b32.xlu0 %v6170, 10
        %v6189 = vpop.permute.xlu0 %6188
        %6190 = vrot.lane.b32.xlu0 %v6171, 10
        %v6191 = vpop.permute.xlu0 %6190
        %6192 = vrot.lane.b32.xlu0 %v6172, 10
        %v6193 = vpop.permute.xlu0 %6192
        %6194 = vrot.lane.b32.xlu0 %v6173, 10
        %v6195 = vpop.permute.xlu0 %6194
        %6196 = vrot.lane.b32.xlu0 %v6174, 10
        %v6197 = vpop.permute.xlu0 %6196
        %6198 = vrot.lane.b32.xlu0 %v6175, 10
        %v6199 = vpop.permute.xlu0 %6198
        %vm6208 = vcmask 130128
        %6209 = vst.msk [vmem:[#allocation3 + $0x8] sm:$0xff] %vm6208, %v6185
        %6210 = vst.msk [vmem:[#allocation3 + $0x18] sm:$0xff] %vm6208, %v6187
        %6211 = vst.msk [vmem:[#allocation3 + $0x28] sm:$0xff] %vm6208, %v6189
        %6212 = vst.msk [vmem:[#allocation3 + $0x38] sm:$0xff] %vm6208, %v6191
        %6213 = vst.msk [vmem:[#allocation3 + $0x48] sm:$0xff] %vm6208, %v6193
        %6214 = vst.msk [vmem:[#allocation3 + $0x58] sm:$0xff] %vm6208, %v6195
        %6215 = vst.msk [vmem:[#allocation3 + $0x68] sm:$0xff] %vm6208, %v6197
        %6216 = vst.msk [vmem:[#allocation3 + $0x78] sm:$0xff] %vm6208, %v6199
        %v6217 = vld [vmem:[%s6012 + $0x4] sm:$0xff]
        %v6218 = vld [vmem:[%s6012 + $0x14] sm:$0xff]
        %v6219 = vld [vmem:[%s6012 + $0x24] sm:$0xff]
        %v6220 = vld [vmem:[%s6012 + $0x34] sm:$0xff]
        %v6221 = vld [vmem:[%s6012 + $0x44] sm:$0xff]
        %v6222 = vld [vmem:[%s6012 + $0x54] sm:$0xff]
        %v6223 = vld [vmem:[%s6012 + $0x64] sm:$0xff]
        %v6224 = vld [vmem:[%s6012 + $0x74] sm:$0xff]
        %6233 = vrot.lane.b32.xlu0 %v6217, 16
        %v6234 = vpop.permute.xlu0 %6233
        %6235 = vrot.lane.b32.xlu0 %v6218, 16
        %v6236 = vpop.permute.xlu0 %6235
        %6237 = vrot.lane.b32.xlu0 %v6219, 16
        %v6238 = vpop.permute.xlu0 %6237
        %6239 = vrot.lane.b32.xlu0 %v6220, 16
        %v6240 = vpop.permute.xlu0 %6239
        %6241 = vrot.lane.b32.xlu0 %v6221, 16
        %v6242 = vpop.permute.xlu0 %6241
        %6243 = vrot.lane.b32.xlu0 %v6222, 16
        %v6244 = vpop.permute.xlu0 %6243
        %6245 = vrot.lane.b32.xlu0 %v6223, 16
        %v6246 = vpop.permute.xlu0 %6245
        %6247 = vrot.lane.b32.xlu0 %v6224, 16
        %v6248 = vpop.permute.xlu0 %6247
        %vm6257 = vcmask 179328
        %6258 = vst.msk [vmem:[#allocation3 + $0x8] sm:$0xff] %vm6257, %v6234
        %6259 = vst.msk [vmem:[#allocation3 + $0x18] sm:$0xff] %vm6257, %v6236
        %6260 = vst.msk [vmem:[#allocation3 + $0x28] sm:$0xff] %vm6257, %v6238
        %6261 = vst.msk [vmem:[#allocation3 + $0x38] sm:$0xff] %vm6257, %v6240
        %6262 = vst.msk [vmem:[#allocation3 + $0x48] sm:$0xff] %vm6257, %v6242
        %6263 = vst.msk [vmem:[#allocation3 + $0x58] sm:$0xff] %vm6257, %v6244
        %6264 = vst.msk [vmem:[#allocation3 + $0x68] sm:$0xff] %vm6257, %v6246
        %6265 = vst.msk [vmem:[#allocation3 + $0x78] sm:$0xff] %vm6257, %v6248
        %v6266 = vld [vmem:[#allocation3] sm:$0xff]
        %v6267 = vld [vmem:[#allocation3 + $0x8] sm:$0xff]
        %v6268 = vld [vmem:[#allocation3 + $0x10] sm:$0xff]
        %v6269 = vld [vmem:[#allocation3 + $0x18] sm:$0xff]
        %v6270 = vld [vmem:[#allocation3 + $0x20] sm:$0xff]
        %v6271 = vld [vmem:[#allocation3 + $0x28] sm:$0xff]
        %v6272 = vld [vmem:[#allocation3 + $0x30] sm:$0xff]
        %v6273 = vld [vmem:[#allocation3 + $0x38] sm:$0xff]
        %v6274 = vld [vmem:[#allocation3 + $0x40] sm:$0xff]
        %v6275 = vld [vmem:[#allocation3 + $0x48] sm:$0xff]
        %v6276 = vld [vmem:[#allocation3 + $0x50] sm:$0xff]
        %v6277 = vld [vmem:[#allocation3 + $0x58] sm:$0xff]
        %v6278 = vld [vmem:[#allocation3 + $0x60] sm:$0xff]
        %v6279 = vld [vmem:[#allocation3 + $0x68] sm:$0xff]
        %v6280 = vld [vmem:[#allocation3 + $0x70] sm:$0xff]
        %v6281 = vld [vmem:[#allocation3 + $0x78] sm:$0xff]
        %v6282 = vpack.c.bf16 %v6266, %v6266
        %v6283 = vpack.c.bf16 %v6267, %v6267
        %v6284 = vpack.c.bf16 %v6268, %v6268
        %v6285 = vpack.c.bf16 %v6269, %v6269
        %v6286 = vpack.c.bf16 %v6270, %v6270
        %v6287 = vpack.c.bf16 %v6271, %v6271
        %v6288 = vpack.c.bf16 %v6272, %v6272
        %v6289 = vpack.c.bf16 %v6273, %v6273
        %v6290 = vpack.c.bf16 %v6274, %v6274
        %v6291 = vpack.c.bf16 %v6275, %v6275
        %v6292 = vpack.c.bf16 %v6276, %v6276
        %v6293 = vpack.c.bf16 %v6277, %v6277
        %v6294 = vpack.c.bf16 %v6278, %v6278
        %v6295 = vpack.c.bf16 %v6279, %v6279
        %v6296 = vpack.c.bf16 %v6280, %v6280
        %v6297 = vpack.c.bf16 %v6281, %v6281
        %6298 = vmatprep.subr.bf16.mxu0 0
        %6299 = vmatpush1.bf16.msra.mxu0 %v5037
        %6300 = vmatprep.subr.bf16.mxu0 0
        %6301 = vmatpush1.bf16.msra.mxu0 %v5038
        %6302 = vmatprep.subr.bf16.mxu0 0
        %6303 = vmatpush1.bf16.msra.mxu0 %v5039
        %6304 = vmatprep.subr.bf16.mxu0 0
        %6305 = vmatpush1.bf16.msra.mxu0 %v5040
        %6306 = vmatprep.subr.bf16.mxu0 0
        %6307 = vmatpush1.bf16.msra.mxu0 %v5041
        %6308 = vmatprep.subr.bf16.mxu0 0
        %6309 = vmatpush1.bf16.msra.mxu0 %v5042
        %6310 = vmatprep.subr.bf16.mxu0 0
        %6311 = vmatpush1.bf16.msra.mxu0 %v5043
        %6312 = vmatprep.subr.bf16.mxu0 0
        %6313 = vmatpush1.bf16.msra.mxu0 %v5044
        %6314 = vmatprep.subr.bf16.mxu0 0
        %6315 = vmatpush1.bf16.msra.mxu0 %v5045
        %6316 = vmatprep.subr.bf16.mxu0 0
        %6317 = vmatpush1.bf16.msra.mxu0 %v5046
        %6318 = vmatprep.subr.bf16.mxu0 0
        %6319 = vmatpush1.bf16.msra.mxu0 %v5047
        %6320 = vmatprep.subr.bf16.mxu0 0
        %6321 = vmatpush1.bf16.msra.mxu0 %v5048
        %6322 = vmatprep.subr.bf16.mxu0 0
        %6323 = vmatpush1.bf16.msra.mxu0 %v5049
        %6324 = vmatprep.subr.bf16.mxu0 0
        %6325 = vmatpush1.bf16.msra.mxu0 %v5050
        %6326 = vmatprep.subr.bf16.mxu0 0
        %6327 = vmatpush1.bf16.msra.mxu0 %v5051
        %6328 = vmatprep.subr.bf16.mxu0 0
        %6329 = vmatpush1.bf16.msra.mxu0 %v5052
        %6330 = vmatprep.mubr.bf16.mxu0 %v6283
        %6331 = vmatmul.mubr.bf16.gmra.mrb[0].mxu0 %v6282
        %v6332 = vpop.f32.mrb[0].mxu0
        %v6333 = vadd.f32 0.0, %v6332
        %v6334 = vpop.f32.mrb[0].mxu0
        %v6335 = vpop.f32.mrb[0].mxu0
        %v6336 = vpop.f32.mrb[0].mxu0
        %6337 = vdwg.mxu0
        %6338 = vmatprep.subr.bf16.mxu0 0
        %6339 = vmatpush1.bf16.msra.mxu0 %v5037
        %6340 = vmatprep.subr.bf16.mxu0 0
        %6341 = vmatpush1.bf16.msra.mxu0 %v5038
        %6342 = vmatprep.subr.bf16.mxu0 0
        %6343 = vmatpush1.bf16.msra.mxu0 %v5039
        %6344 = vmatprep.subr.bf16.mxu0 0
        %6345 = vmatpush1.bf16.msra.mxu0 %v5040
        %6346 = vmatprep.subr.bf16.mxu0 0
        %6347 = vmatpush1.bf16.msra.mxu0 %v5041
        %6348 = vmatprep.subr.bf16.mxu0 0
        %6349 = vmatpush1.bf16.msra.mxu0 %v5042
        %6350 = vmatprep.subr.bf16.mxu0 0
        %6351 = vmatpush1.bf16.msra.mxu0 %v5043
        %6352 = vmatprep.subr.bf16.mxu0 0
        %6353 = vmatpush1.bf16.msra.mxu0 %v5044
        %6354 = vmatprep.subr.bf16.mxu0 0
        %6355 = vmatpush1.bf16.msra.mxu0 %v5045
        %6356 = vmatprep.subr.bf16.mxu0 0
        %6357 = vmatpush1.bf16.msra.mxu0 %v5046
        %6358 = vmatprep.subr.bf16.mxu0 0
        %6359 = vmatpush1.bf16.msra.mxu0 %v5047
        %6360 = vmatprep.subr.bf16.mxu0 0
        %6361 = vmatpush1.bf16.msra.mxu0 %v5048
        %6362 = vmatprep.subr.bf16.mxu0 0
        %6363 = vmatpush1.bf16.msra.mxu0 %v5049
        %6364 = vmatprep.subr.bf16.mxu0 0
        %6365 = vmatpush1.bf16.msra.mxu0 %v5050
        %6366 = vmatprep.subr.bf16.mxu0 0
        %6367 = vmatpush1.bf16.msra.mxu0 %v5051
        %6368 = vmatprep.subr.bf16.mxu0 0
        %6369 = vmatpush1.bf16.msra.mxu0 %v5052
        %6370 = vmatprep.mubr.bf16.mxu0 %v6285
        %6371 = vmatmul.mubr.bf16.gmra.mrb[0].mxu0 %v6284
        %v6372 = vpop.f32.mrb[0].mxu0
        %v6373 = vadd.f32 0.0, %v6372
        %v6374 = vpop.f32.mrb[0].mxu0
        %v6375 = vpop.f32.mrb[0].mxu0
        %v6376 = vpop.f32.mrb[0].mxu0
        %6377 = vdwg.mxu0
        %6378 = vmatprep.subr.bf16.mxu0 0
        %6379 = vmatpush1.bf16.msra.mxu0 %v5037
        %6380 = vmatprep.subr.bf16.mxu0 0
        %6381 = vmatpush1.bf16.msra.mxu0 %v5038
        %6382 = vmatprep.subr.bf16.mxu0 0
        %6383 = vmatpush1.bf16.msra.mxu0 %v5039
        %6384 = vmatprep.subr.bf16.mxu0 0
        %6385 = vmatpush1.bf16.msra.mxu0 %v5040
        %6386 = vmatprep.subr.bf16.mxu0 0
        %6387 = vmatpush1.bf16.msra.mxu0 %v5041
        %6388 = vmatprep.subr.bf16.mxu0 0
        %6389 = vmatpush1.bf16.msra.mxu0 %v5042
        %6390 = vmatprep.subr.bf16.mxu0 0
        %6391 = vmatpush1.bf16.msra.mxu0 %v5043
        %6392 = vmatprep.subr.bf16.mxu0 0
        %6393 = vmatpush1.bf16.msra.mxu0 %v5044
        %6394 = vmatprep.subr.bf16.mxu0 0
        %6395 = vmatpush1.bf16.msra.mxu0 %v5045
        %6396 = vmatprep.subr.bf16.mxu0 0
        %6397 = vmatpush1.bf16.msra.mxu0 %v5046
        %6398 = vmatprep.subr.bf16.mxu0 0
        %6399 = vmatpush1.bf16.msra.mxu0 %v5047
        %6400 = vmatprep.subr.bf16.mxu0 0
        %6401 = vmatpush1.bf16.msra.mxu0 %v5048
        %6402 = vmatprep.subr.bf16.mxu0 0
        %6403 = vmatpush1.bf16.msra.mxu0 %v5049
        %6404 = vmatprep.subr.bf16.mxu0 0
        %6405 = vmatpush1.bf16.msra.mxu0 %v5050
        %6406 = vmatprep.subr.bf16.mxu0 0
        %6407 = vmatpush1.bf16.msra.mxu0 %v5051
        %6408 = vmatprep.subr.bf16.mxu0 0
        %6409 = vmatpush1.bf16.msra.mxu0 %v5052
        %6410 = vmatprep.mubr.bf16.mxu0 %v6287
        %6411 = vmatmul.mubr.bf16.gmra.mrb[0].mxu0 %v6286
        %v6412 = vpop.f32.mrb[0].mxu0
        %v6413 = vadd.f32 0.0, %v6412
        %v6414 = vpop.f32.mrb[0].mxu0
        %v6415 = vpop.f32.mrb[0].mxu0
        %v6416 = vpop.f32.mrb[0].mxu0
        %6417 = vdwg.mxu0
        %6418 = vmatprep.subr.bf16.mxu0 0
        %6419 = vmatpush1.bf16.msra.mxu0 %v5037
        %6420 = vmatprep.subr.bf16.mxu0 0
        %6421 = vmatpush1.bf16.msra.mxu0 %v5038
        %6422 = vmatprep.subr.bf16.mxu0 0
        %6423 = vmatpush1.bf16.msra.mxu0 %v5039
        %6424 = vmatprep.subr.bf16.mxu0 0
        %6425 = vmatpush1.bf16.msra.mxu0 %v5040
        %6426 = vmatprep.subr.bf16.mxu0 0
        %6427 = vmatpush1.bf16.msra.mxu0 %v5041
        %6428 = vmatprep.subr.bf16.mxu0 0
        %6429 = vmatpush1.bf16.msra.mxu0 %v5042
        %6430 = vmatprep.subr.bf16.mxu0 0
        %6431 = vmatpush1.bf16.msra.mxu0 %v5043
        %6432 = vmatprep.subr.bf16.mxu0 0
        %6433 = vmatpush1.bf16.msra.mxu0 %v5044
        %6434 = vmatprep.subr.bf16.mxu0 0
        %6435 = vmatpush1.bf16.msra.mxu0 %v5045
        %6436 = vmatprep.subr.bf16.mxu0 0
        %6437 = vmatpush1.bf16.msra.mxu0 %v5046
        %6438 = vmatprep.subr.bf16.mxu0 0
        %6439 = vmatpush1.bf16.msra.mxu0 %v5047
        %6440 = vmatprep.subr.bf16.mxu0 0
        %6441 = vmatpush1.bf16.msra.mxu0 %v5048
        %6442 = vmatprep.subr.bf16.mxu0 0
        %6443 = vmatpush1.bf16.msra.mxu0 %v5049
        %6444 = vmatprep.subr.bf16.mxu0 0
        %6445 = vmatpush1.bf16.msra.mxu0 %v5050
        %6446 = vmatprep.subr.bf16.mxu0 0
        %6447 = vmatpush1.bf16.msra.mxu0 %v5051
        %6448 = vmatprep.subr.bf16.mxu0 0
        %6449 = vmatpush1.bf16.msra.mxu0 %v5052
        %6450 = vmatprep.mubr.bf16.mxu0 %v6289
        %6451 = vmatmul.mubr.bf16.gmra.mrb[0].mxu0 %v6288
        %v6452 = vpop.f32.mrb[0].mxu0
        %v6453 = vadd.f32 0.0, %v6452
        %v6454 = vpop.f32.mrb[0].mxu0
        %v6455 = vpop.f32.mrb[0].mxu0
        %v6456 = vpop.f32.mrb[0].mxu0
        %6457 = vdwg.mxu0
        %6458 = vmatprep.subr.bf16.mxu0 0
        %6459 = vmatpush1.bf16.msra.mxu0 %v5037
        %6460 = vmatprep.subr.bf16.mxu0 0
        %6461 = vmatpush1.bf16.msra.mxu0 %v5038
        %6462 = vmatprep.subr.bf16.mxu0 0
        %6463 = vmatpush1.bf16.msra.mxu0 %v5039
        %6464 = vmatprep.subr.bf16.mxu0 0
        %6465 = vmatpush1.bf16.msra.mxu0 %v5040
        %6466 = vmatprep.subr.bf16.mxu0 0
        %6467 = vmatpush1.bf16.msra.mxu0 %v5041
        %6468 = vmatprep.subr.bf16.mxu0 0
        %6469 = vmatpush1.bf16.msra.mxu0 %v5042
        %6470 = vmatprep.subr.bf16.mxu0 0
        %6471 = vmatpush1.bf16.msra.mxu0 %v5043
        %6472 = vmatprep.subr.bf16.mxu0 0
        %6473 = vmatpush1.bf16.msra.mxu0 %v5044
        %6474 = vmatprep.subr.bf16.mxu0 0
        %6475 = vmatpush1.bf16.msra.mxu0 %v5045
        %6476 = vmatprep.subr.bf16.mxu0 0
        %6477 = vmatpush1.bf16.msra.mxu0 %v5046
        %6478 = vmatprep.subr.bf16.mxu0 0
        %6479 = vmatpush1.bf16.msra.mxu0 %v5047
        %6480 = vmatprep.subr.bf16.mxu0 0
        %6481 = vmatpush1.bf16.msra.mxu0 %v5048
        %6482 = vmatprep.subr.bf16.mxu0 0
        %6483 = vmatpush1.bf16.msra.mxu0 %v5049
        %6484 = vmatprep.subr.bf16.mxu0 0
        %6485 = vmatpush1.bf16.msra.mxu0 %v5050
        %6486 = vmatprep.subr.bf16.mxu0 0
        %6487 = vmatpush1.bf16.msra.mxu0 %v5051
        %6488 = vmatprep.subr.bf16.mxu0 0
        %6489 = vmatpush1.bf16.msra.mxu0 %v5052
        %6490 = vmatprep.mubr.bf16.mxu0 %v6291
        %6491 = vmatmul.mubr.bf16.gmra.mrb[0].mxu0 %v6290
        %v6492 = vpop.f32.mrb[0].mxu0
        %v6493 = vadd.f32 0.0, %v6492
        %v6494 = vpop.f32.mrb[0].mxu0
        %v6495 = vpop.f32.mrb[0].mxu0
        %v6496 = vpop.f32.mrb[0].mxu0
        %6497 = vdwg.mxu0
        %6498 = vmatprep.subr.bf16.mxu0 0
        %6499 = vmatpush1.bf16.msra.mxu0 %v5037
        %6500 = vmatprep.subr.bf16.mxu0 0
        %6501 = vmatpush1.bf16.msra.mxu0 %v5038
        %6502 = vmatprep.subr.bf16.mxu0 0
        %6503 = vmatpush1.bf16.msra.mxu0 %v5039
        %6504 = vmatprep.subr.bf16.mxu0 0
        %6505 = vmatpush1.bf16.msra.mxu0 %v5040
        %6506 = vmatprep.subr.bf16.mxu0 0
        %6507 = vmatpush1.bf16.msra.mxu0 %v5041
        %6508 = vmatprep.subr.bf16.mxu0 0
        %6509 = vmatpush1.bf16.msra.mxu0 %v5042
        %6510 = vmatprep.subr.bf16.mxu0 0
        %6511 = vmatpush1.bf16.msra.mxu0 %v5043
        %6512 = vmatprep.subr.bf16.mxu0 0
        %6513 = vmatpush1.bf16.msra.mxu0 %v5044
        %6514 = vmatprep.subr.bf16.mxu0 0
        %6515 = vmatpush1.bf16.msra.mxu0 %v5045
        %6516 = vmatprep.subr.bf16.mxu0 0
        %6517 = vmatpush1.bf16.msra.mxu0 %v5046
        %6518 = vmatprep.subr.bf16.mxu0 0
        %6519 = vmatpush1.bf16.msra.mxu0 %v5047
        %6520 = vmatprep.subr.bf16.mxu0 0
        %6521 = vmatpush1.bf16.msra.mxu0 %v5048
        %6522 = vmatprep.subr.bf16.mxu0 0
        %6523 = vmatpush1.bf16.msra.mxu0 %v5049
        %6524 = vmatprep.subr.bf16.mxu0 0
        %6525 = vmatpush1.bf16.msra.mxu0 %v5050
        %6526 = vmatprep.subr.bf16.mxu0 0
        %6527 = vmatpush1.bf16.msra.mxu0 %v5051
        %6528 = vmatprep.subr.bf16.mxu0 0
        %6529 = vmatpush1.bf16.msra.mxu0 %v5052
        %6530 = vmatprep.mubr.bf16.mxu0 %v6293
        %6531 = vmatmul.mubr.bf16.gmra.mrb[0].mxu0 %v6292
        %v6532 = vpop.f32.mrb[0].mxu0
        %v6533 = vadd.f32 0.0, %v6532
        %v6534 = vpop.f32.mrb[0].mxu0
        %v6535 = vpop.f32.mrb[0].mxu0
        %v6536 = vpop.f32.mrb[0].mxu0
        %6537 = vdwg.mxu0
        %6538 = vmatprep.subr.bf16.mxu0 0
        %6539 = vmatpush1.bf16.msra.mxu0 %v5037
        %6540 = vmatprep.subr.bf16.mxu0 0
        %6541 = vmatpush1.bf16.msra.mxu0 %v5038
        %6542 = vmatprep.subr.bf16.mxu0 0
        %6543 = vmatpush1.bf16.msra.mxu0 %v5039
        %6544 = vmatprep.subr.bf16.mxu0 0
        %6545 = vmatpush1.bf16.msra.mxu0 %v5040
        %6546 = vmatprep.subr.bf16.mxu0 0
        %6547 = vmatpush1.bf16.msra.mxu0 %v5041
        %6548 = vmatprep.subr.bf16.mxu0 0
        %6549 = vmatpush1.bf16.msra.mxu0 %v5042
        %6550 = vmatprep.subr.bf16.mxu0 0
        %6551 = vmatpush1.bf16.msra.mxu0 %v5043
        %6552 = vmatprep.subr.bf16.mxu0 0
        %6553 = vmatpush1.bf16.msra.mxu0 %v5044
        %6554 = vmatprep.subr.bf16.mxu0 0
        %6555 = vmatpush1.bf16.msra.mxu0 %v5045
        %6556 = vmatprep.subr.bf16.mxu0 0
        %6557 = vmatpush1.bf16.msra.mxu0 %v5046
        %6558 = vmatprep.subr.bf16.mxu0 0
        %6559 = vmatpush1.bf16.msra.mxu0 %v5047
        %6560 = vmatprep.subr.bf16.mxu0 0
        %6561 = vmatpush1.bf16.msra.mxu0 %v5048
        %6562 = vmatprep.subr.bf16.mxu0 0
        %6563 = vmatpush1.bf16.msra.mxu0 %v5049
        %6564 = vmatprep.subr.bf16.mxu0 0
        %6565 = vmatpush1.bf16.msra.mxu0 %v5050
        %6566 = vmatprep.subr.bf16.mxu0 0
        %6567 = vmatpush1.bf16.msra.mxu0 %v5051
        %6568 = vmatprep.subr.bf16.mxu0 0
        %6569 = vmatpush1.bf16.msra.mxu0 %v5052
        %6570 = vmatprep.mubr.bf16.mxu0 %v6295
        %6571 = vmatmul.mubr.bf16.gmra.mrb[0].mxu0 %v6294
        %v6572 = vpop.f32.mrb[0].mxu0
        %v6573 = vadd.f32 0.0, %v6572
        %v6574 = vpop.f32.mrb[0].mxu0
        %v6575 = vpop.f32.mrb[0].mxu0
        %v6576 = vpop.f32.mrb[0].mxu0
        %6577 = vdwg.mxu0
        %6578 = vmatprep.subr.bf16.mxu0 0
        %6579 = vmatpush1.bf16.msra.mxu0 %v5037
        %6580 = vmatprep.subr.bf16.mxu0 0
        %6581 = vmatpush1.bf16.msra.mxu0 %v5038
        %6582 = vmatprep.subr.bf16.mxu0 0
        %6583 = vmatpush1.bf16.msra.mxu0 %v5039
        %6584 = vmatprep.subr.bf16.mxu0 0
        %6585 = vmatpush1.bf16.msra.mxu0 %v5040
        %6586 = vmatprep.subr.bf16.mxu0 0
        %6587 = vmatpush1.bf16.msra.mxu0 %v5041
        %6588 = vmatprep.subr.bf16.mxu0 0
        %6589 = vmatpush1.bf16.msra.mxu0 %v5042
        %6590 = vmatprep.subr.bf16.mxu0 0
        %6591 = vmatpush1.bf16.msra.mxu0 %v5043
        %6592 = vmatprep.subr.bf16.mxu0 0
        %6593 = vmatpush1.bf16.msra.mxu0 %v5044
        %6594 = vmatprep.subr.bf16.mxu0 0
        %6595 = vmatpush1.bf16.msra.mxu0 %v5045
        %6596 = vmatprep.subr.bf16.mxu0 0
        %6597 = vmatpush1.bf16.msra.mxu0 %v5046
        %6598 = vmatprep.subr.bf16.mxu0 0
        %6599 = vmatpush1.bf16.msra.mxu0 %v5047
        %6600 = vmatprep.subr.bf16.mxu0 0
        %6601 = vmatpush1.bf16.msra.mxu0 %v5048
        %6602 = vmatprep.subr.bf16.mxu0 0
        %6603 = vmatpush1.bf16.msra.mxu0 %v5049
        %6604 = vmatprep.subr.bf16.mxu0 0
        %6605 = vmatpush1.bf16.msra.mxu0 %v5050
        %6606 = vmatprep.subr.bf16.mxu0 0
        %6607 = vmatpush1.bf16.msra.mxu0 %v5051
        %6608 = vmatprep.subr.bf16.mxu0 0
        %6609 = vmatpush1.bf16.msra.mxu0 %v5052
        %6610 = vmatprep.mubr.bf16.mxu0 %v6297
        %6611 = vmatmul.mubr.bf16.gmra.mrb[0].mxu0 %v6296
        %v6612 = vpop.f32.mrb[0].mxu0
        %v6613 = vadd.f32 0.0, %v6612
        %v6614 = vpop.f32.mrb[0].mxu0
        %v6615 = vpop.f32.mrb[0].mxu0
        %v6616 = vpop.f32.mrb[0].mxu0
        %6617 = vdwg.mxu0
        %v6618 = vmax.f32 %v6333, 0.0
        %v6619 = vmax.f32 %v6373, 0.0
        %v6620 = vmax.f32 %v6413, 0.0
        %v6621 = vmax.f32 %v6453, 0.0
        %v6622 = vmax.f32 %v6493, 0.0
        %v6623 = vmax.f32 %v6533, 0.0
        %v6624 = vmax.f32 %v6573, 0.0
        %v6625 = vmax.f32 %v6613, 0.0
        %v6626 = vlaneseq
        %vm6627 = vcmp.ge.s32.totalorder %v6626, 0
        %vm6628 = vcmp.lt.s32.totalorder %v6626, 8
        %vm6629 = vmand %vm6627, %vm6628
        %6630 = vst.msk [vmem:[#allocation5] sm:$0x1] %vm6629, %v6618
        %v6633 = vunpack.c.l.s4 1966171168
        %v6634 = vunpack.c.0.s8 %v6633
        %v6635 = vlaneseq
        %v6636 = vshrl.u32 %v6635, 7
        %v6637 = vsub.s32 %v6634, %v6636
        %v6638 = vrot.slane %v6618, %v6637
        %v6639 = vcombine.high %v6638, %v6638
        %v6641 = vunpack.c.l.s4 1966171168
        %v6642 = vunpack.c.0.s8 %v6641
        %v6643 = vlaneseq
        %v6644 = vshrl.u32 %v6643, 7
        %v6645 = vsub.s32 %v6642, %v6644
        %v6646 = vrot.slane %v6638, %v6645
        %v6648 = vunpack.c.l.s4 1966171168
        %v6649 = vunpack.c.0.s8 %v6648
        %v6650 = vlaneseq
        %v6651 = vshrl.u32 %v6650, 7
        %v6652 = vsub.s32 %v6649, %v6651
        %v6653 = vrot.slane %v6639, %v6652
        %6654 = vrot.lane.b32.xlu0 %v6653, 8
        %v6655 = vpop.permute.xlu0 %6654
        %vm6657 = vcmp.ge.s32.totalorder %v6626, 8
        %vm6658 = vcmp.lt.s32.totalorder %v6626, 16
        %vm6659 = vmand %vm6657, %vm6658
        %6660 = vst.msk [vmem:[#allocation5] sm:$0x1] %vm6659, %v6655
        %v6661 = vcombine.high %v6646, %v6646
        %6662 = vrot.lane.b32.xlu0 %v6661, 16
        %v6663 = vpop.permute.xlu0 %6662
        %vm6665 = vcmp.ge.s32.totalorder %v6626, 16
        %vm6666 = vcmp.lt.s32.totalorder %v6626, 24
        %vm6667 = vmand %vm6665, %vm6666
        %6668 = vst.msk [vmem:[#allocation5] sm:$0x1] %vm6667, %v6663
        %v6669 = vcombine.high %v6653, %v6653
        %6670 = vrot.lane.b32.xlu0 %v6669, 24
        %v6671 = vpop.permute.xlu0 %6670
        %vm6673 = vcmp.ge.s32.totalorder %v6626, 24
        %vm6674 = vcmp.lt.s32.totalorder %v6626, 32
        %vm6675 = vmand %vm6673, %vm6674
        %6676 = vst.msk [vmem:[#allocation5] sm:$0x1] %vm6675, %v6671
        %v6677 = vcombine.high %v6618, %v6618
        %v6679 = vunpack.c.l.s4 1966171168
        %v6680 = vunpack.c.0.s8 %v6679
        %v6681 = vlaneseq
        %v6682 = vshrl.u32 %v6681, 7
        %v6683 = vsub.s32 %v6680, %v6682
        %v6684 = vrot.slane %v6677, %v6683
        %v6686 = vunpack.c.l.s4 1966171168
        %v6687 = vunpack.c.0.s8 %v6686
        %v6688 = vlaneseq
        %v6689 = vshrl.u32 %v6688, 7
        %v6690 = vsub.s32 %v6687, %v6689
        %v6691 = vrot.slane %v6684, %v6690
        %6692 = vrot.lane.b32.xlu0 %v6691, 32
        %v6693 = vpop.permute.xlu0 %6692
        %vm6695 = vcmp.ge.s32.totalorder %v6626, 32
        %vm6696 = vcmp.lt.s32.totalorder %v6626, 40
        %vm6697 = vmand %vm6695, %vm6696
        %6698 = vst.msk [vmem:[#allocation5] sm:$0x1] %vm6697, %v6693
        %v6699 = vcombine.high %v6684, %v6684
        %v6701 = vunpack.c.l.s4 1966171168
        %v6702 = vunpack.c.0.s8 %v6701
        %v6703 = vlaneseq
        %v6704 = vshrl.u32 %v6703, 7
        %v6705 = vsub.s32 %v6702, %v6704
        %v6706 = vrot.slane %v6699, %v6705
        %6707 = vrot.lane.b32.xlu0 %v6706, 40
        %v6708 = vpop.permute.xlu0 %6707
        %vm6710 = vcmp.ge.s32.totalorder %v6626, 40
        %vm6711 = vcmp.lt.s32.totalorder %v6626, 48
        %vm6712 = vmand %vm6710, %vm6711
        %6713 = vst.msk [vmem:[#allocation5] sm:$0x1] %vm6712, %v6708
        %v6714 = vcombine.high %v6691, %v6691
        %6715 = vrot.lane.b32.xlu0 %v6714, 48
        %v6716 = vpop.permute.xlu0 %6715
        %vm6718 = vcmp.ge.s32.totalorder %v6626, 48
        %vm6719 = vcmp.lt.s32.totalorder %v6626, 56
        %vm6720 = vmand %vm6718, %vm6719
        %6721 = vst.msk [vmem:[#allocation5] sm:$0x1] %vm6720, %v6716
        %v6722 = vcombine.high %v6706, %v6706
        %6723 = vrot.lane.b32.xlu0 %v6722, 56
        %v6724 = vpop.permute.xlu0 %6723
        %vm6726 = vcmp.ge.s32.totalorder %v6626, 56
        %vm6727 = vcmp.lt.s32.totalorder %v6626, 64
        %vm6728 = vmand %vm6726, %vm6727
        %6729 = vst.msk [vmem:[#allocation5] sm:$0x1] %vm6728, %v6724
        %v6732 = vunpack.c.l.s4 1966171168
        %v6733 = vunpack.c.0.s8 %v6732
        %v6734 = vlaneseq
        %v6735 = vshrl.u32 %v6734, 7
        %v6736 = vsub.s32 %v6733, %v6735
        %v6737 = vrot.slane %v6619, %v6736
        %v6739 = vunpack.c.l.s4 1966171168
        %v6740 = vunpack.c.0.s8 %v6739
        %v6741 = vlaneseq
        %v6742 = vshrl.u32 %v6741, 7
        %v6743 = vsub.s32 %v6740, %v6742
        %v6744 = vrot.slane %v6737, %v6743
        %6745 = vrot.lane.b32.xlu0 %v6744, 64
        %v6746 = vpop.permute.xlu0 %6745
        %vm6748 = vcmp.ge.s32.totalorder %v6626, 64
        %vm6749 = vcmp.lt.s32.totalorder %v6626, 72
        %vm6750 = vmand %vm6748, %vm6749
        %6751 = vst.msk [vmem:[#allocation5] sm:$0x1] %vm6750, %v6746
        %v6752 = vcombine.high %v6737, %v6737
        %v6754 = vunpack.c.l.s4 1966171168
        %v6755 = vunpack.c.0.s8 %v6754
        %v6756 = vlaneseq
        %v6757 = vshrl.u32 %v6756, 7
        %v6758 = vsub.s32 %v6755, %v6757
        %v6759 = vrot.slane %v6752, %v6758
        %6760 = vrot.lane.b32.xlu0 %v6759, 72
        %v6761 = vpop.permute.xlu0 %6760
        %vm6763 = vcmp.ge.s32.totalorder %v6626, 72
        %vm6764 = vcmp.lt.s32.totalorder %v6626, 80
        %vm6765 = vmand %vm6763, %vm6764
        %6766 = vst.msk [vmem:[#allocation5] sm:$0x1] %vm6765, %v6761
        %v6767 = vcombine.high %v6744, %v6744
        %6768 = vrot.lane.b32.xlu0 %v6767, 80
        %v6769 = vpop.permute.xlu0 %6768
        %vm6771 = vcmp.ge.s32.totalorder %v6626, 80
        %vm6772 = vcmp.lt.s32.totalorder %v6626, 88
        %vm6773 = vmand %vm6771, %vm6772
        %6774 = vst.msk [vmem:[#allocation5] sm:$0x1] %vm6773, %v6769
        %v6775 = vcombine.high %v6759, %v6759
        %6776 = vrot.lane.b32.xlu0 %v6775, 88
        %v6777 = vpop.permute.xlu0 %6776
        %vm6779 = vcmp.ge.s32.totalorder %v6626, 88
        %vm6780 = vcmp.lt.s32.totalorder %v6626, 96
        %vm6781 = vmand %vm6779, %vm6780
        %6782 = vst.msk [vmem:[#allocation5] sm:$0x1] %vm6781, %v6777
        %v6783 = vcombine.high %v6619, %v6619
        %v6785 = vunpack.c.l.s4 1966171168
        %v6786 = vunpack.c.0.s8 %v6785
        %v6787 = vlaneseq
        %v6788 = vshrl.u32 %v6787, 7
        %v6789 = vsub.s32 %v6786, %v6788
        %v6790 = vrot.slane %v6783, %v6789
        %v6792 = vunpack.c.l.s4 1966171168
        %v6793 = vunpack.c.0.s8 %v6792
        %v6794 = vlaneseq
        %v6795 = vshrl.u32 %v6794, 7
        %v6796 = vsub.s32 %v6793, %v6795
        %v6797 = vrot.slane %v6790, %v6796
        %6798 = vrot.lane.b32.xlu0 %v6797, 96
        %v6799 = vpop.permute.xlu0 %6798
        %vm6801 = vcmp.ge.s32.totalorder %v6626, 96
        %vm6802 = vcmp.lt.s32.totalorder %v6626, 104
        %vm6803 = vmand %vm6801, %vm6802
        %6804 = vst.msk [vmem:[#allocation5] sm:$0x1] %vm6803, %v6799
        %v6805 = vcombine.high %v6790, %v6790
        %v6807 = vunpack.c.l.s4 1966171168
        %v6808 = vunpack.c.0.s8 %v6807
        %v6809 = vlaneseq
        %v6810 = vshrl.u32 %v6809, 7
        %v6811 = vsub.s32 %v6808, %v6810
        %v6812 = vrot.slane %v6805, %v6811
        %6813 = vrot.lane.b32.xlu0 %v6812, 104
        %v6814 = vpop.permute.xlu0 %6813
        %vm6816 = vcmp.ge.s32.totalorder %v6626, 104
        %vm6817 = vcmp.lt.s32.totalorder %v6626, 112
        %vm6818 = vmand %vm6816, %vm6817
        %6819 = vst.msk [vmem:[#allocation5] sm:$0x1] %vm6818, %v6814
        %v6820 = vcombine.high %v6797, %v6797
        %6821 = vrot.lane.b32.xlu0 %v6820, 112
        %v6822 = vpop.permute.xlu0 %6821
        %vm6824 = vcmp.ge.s32.totalorder %v6626, 112
        %vm6825 = vcmp.lt.s32.totalorder %v6626, 120
        %vm6826 = vmand %vm6824, %vm6825
        %6827 = vst.msk [vmem:[#allocation5] sm:$0x1] %vm6826, %v6822
        %v6828 = vcombine.high %v6812, %v6812
        %6829 = vrot.lane.b32.xlu0 %v6828, 120
        %v6830 = vpop.permute.xlu0 %6829
        %vm6832 = vcmp.ge.s32.totalorder %v6626, 120
        %vm6833 = vcmp.lt.s32.totalorder %v6626, 128
        %vm6834 = vmand %vm6832, %vm6833
        %6835 = vst.msk [vmem:[#allocation5] sm:$0x1] %vm6834, %v6830
        %6836 = vst.msk [vmem:[#allocation5 + $0x1] sm:$0x1] %vm6629, %v6620
        %v6839 = vunpack.c.l.s4 1966171168
        %v6840 = vunpack.c.0.s8 %v6839
        %v6841 = vlaneseq
        %v6842 = vshrl.u32 %v6841, 7
        %v6843 = vsub.s32 %v6840, %v6842
        %v6844 = vrot.slane %v6620, %v6843
        %v6845 = vcombine.high %v6844, %v6844
        %v6847 = vunpack.c.l.s4 1966171168
        %v6848 = vunpack.c.0.s8 %v6847
        %v6849 = vlaneseq
        %v6850 = vshrl.u32 %v6849, 7
        %v6851 = vsub.s32 %v6848, %v6850
        %v6852 = vrot.slane %v6844, %v6851
        %v6854 = vunpack.c.l.s4 1966171168
        %v6855 = vunpack.c.0.s8 %v6854
        %v6856 = vlaneseq
        %v6857 = vshrl.u32 %v6856, 7
        %v6858 = vsub.s32 %v6855, %v6857
        %v6859 = vrot.slane %v6845, %v6858
        %6860 = vrot.lane.b32.xlu0 %v6859, 8
        %v6861 = vpop.permute.xlu0 %6860
        %6863 = vst.msk [vmem:[#allocation5 + $0x1] sm:$0x1] %vm6659, %v6861
        %v6864 = vcombine.high %v6852, %v6852
        %6865 = vrot.lane.b32.xlu0 %v6864, 16
        %v6866 = vpop.permute.xlu0 %6865
        %6868 = vst.msk [vmem:[#allocation5 + $0x1] sm:$0x1] %vm6667, %v6866
        %v6869 = vcombine.high %v6859, %v6859
        %6870 = vrot.lane.b32.xlu0 %v6869, 24
        %v6871 = vpop.permute.xlu0 %6870
        %6873 = vst.msk [vmem:[#allocation5 + $0x1] sm:$0x1] %vm6675, %v6871
        %v6874 = vcombine.high %v6620, %v6620
        %v6876 = vunpack.c.l.s4 1966171168
        %v6877 = vunpack.c.0.s8 %v6876
        %v6878 = vlaneseq
        %v6879 = vshrl.u32 %v6878, 7
        %v6880 = vsub.s32 %v6877, %v6879
        %v6881 = vrot.slane %v6874, %v6880
        %v6883 = vunpack.c.l.s4 1966171168
        %v6884 = vunpack.c.0.s8 %v6883
        %v6885 = vlaneseq
        %v6886 = vshrl.u32 %v6885, 7
        %v6887 = vsub.s32 %v6884, %v6886
        %v6888 = vrot.slane %v6881, %v6887
        %6889 = vrot.lane.b32.xlu0 %v6888, 32
        %v6890 = vpop.permute.xlu0 %6889
        %6892 = vst.msk [vmem:[#allocation5 + $0x1] sm:$0x1] %vm6697, %v6890
        %v6893 = vcombine.high %v6881, %v6881
        %v6895 = vunpack.c.l.s4 1966171168
        %v6896 = vunpack.c.0.s8 %v6895
        %v6897 = vlaneseq
        %v6898 = vshrl.u32 %v6897, 7
        %v6899 = vsub.s32 %v6896, %v6898
        %v6900 = vrot.slane %v6893, %v6899
        %6901 = vrot.lane.b32.xlu0 %v6900, 40
        %v6902 = vpop.permute.xlu0 %6901
        %6904 = vst.msk [vmem:[#allocation5 + $0x1] sm:$0x1] %vm6712, %v6902
        %v6905 = vcombine.high %v6888, %v6888
        %6906 = vrot.lane.b32.xlu0 %v6905, 48
        %v6907 = vpop.permute.xlu0 %6906
        %6909 = vst.msk [vmem:[#allocation5 + $0x1] sm:$0x1] %vm6720, %v6907
        %v6910 = vcombine.high %v6900, %v6900
        %6911 = vrot.lane.b32.xlu0 %v6910, 56
        %v6912 = vpop.permute.xlu0 %6911
        %6914 = vst.msk [vmem:[#allocation5 + $0x1] sm:$0x1] %vm6728, %v6912
        %v6917 = vunpack.c.l.s4 1966171168
        %v6918 = vunpack.c.0.s8 %v6917
        %v6919 = vlaneseq
        %v6920 = vshrl.u32 %v6919, 7
        %v6921 = vsub.s32 %v6918, %v6920
        %v6922 = vrot.slane %v6621, %v6921
        %v6924 = vunpack.c.l.s4 1966171168
        %v6925 = vunpack.c.0.s8 %v6924
        %v6926 = vlaneseq
        %v6927 = vshrl.u32 %v6926, 7
        %v6928 = vsub.s32 %v6925, %v6927
        %v6929 = vrot.slane %v6922, %v6928
        %6930 = vrot.lane.b32.xlu0 %v6929, 64
        %v6931 = vpop.permute.xlu0 %6930
        %6933 = vst.msk [vmem:[#allocation5 + $0x1] sm:$0x1] %vm6750, %v6931
        %v6934 = vcombine.high %v6922, %v6922
        %v6936 = vunpack.c.l.s4 1966171168
        %v6937 = vunpack.c.0.s8 %v6936
        %v6938 = vlaneseq
        %v6939 = vshrl.u32 %v6938, 7
        %v6940 = vsub.s32 %v6937, %v6939
        %v6941 = vrot.slane %v6934, %v6940
        %6942 = vrot.lane.b32.xlu0 %v6941, 72
        %v6943 = vpop.permute.xlu0 %6942
        %6945 = vst.msk [vmem:[#allocation5 + $0x1] sm:$0x1] %vm6765, %v6943
        %v6946 = vcombine.high %v6929, %v6929
        %6947 = vrot.lane.b32.xlu0 %v6946, 80
        %v6948 = vpop.permute.xlu0 %6947
        %6950 = vst.msk [vmem:[#allocation5 + $0x1] sm:$0x1] %vm6773, %v6948
        %v6951 = vcombine.high %v6941, %v6941
        %6952 = vrot.lane.b32.xlu0 %v6951, 88
        %v6953 = vpop.permute.xlu0 %6952
        %6955 = vst.msk [vmem:[#allocation5 + $0x1] sm:$0x1] %vm6781, %v6953
        %v6956 = vcombine.high %v6621, %v6621
        %v6958 = vunpack.c.l.s4 1966171168
        %v6959 = vunpack.c.0.s8 %v6958
        %v6960 = vlaneseq
        %v6961 = vshrl.u32 %v6960, 7
        %v6962 = vsub.s32 %v6959, %v6961
        %v6963 = vrot.slane %v6956, %v6962
        %v6965 = vunpack.c.l.s4 1966171168
        %v6966 = vunpack.c.0.s8 %v6965
        %v6967 = vlaneseq
        %v6968 = vshrl.u32 %v6967, 7
        %v6969 = vsub.s32 %v6966, %v6968
        %v6970 = vrot.slane %v6963, %v6969
        %6971 = vrot.lane.b32.xlu0 %v6970, 96
        %v6972 = vpop.permute.xlu0 %6971
        %6974 = vst.msk [vmem:[#allocation5 + $0x1] sm:$0x1] %vm6803, %v6972
        %v6975 = vcombine.high %v6963, %v6963
        %v6977 = vunpack.c.l.s4 1966171168
        %v6978 = vunpack.c.0.s8 %v6977
        %v6979 = vlaneseq
        %v6980 = vshrl.u32 %v6979, 7
        %v6981 = vsub.s32 %v6978, %v6980
        %v6982 = vrot.slane %v6975, %v6981
        %6983 = vrot.lane.b32.xlu0 %v6982, 104
        %v6984 = vpop.permute.xlu0 %6983
        %6986 = vst.msk [vmem:[#allocation5 + $0x1] sm:$0x1] %vm6818, %v6984
        %v6987 = vcombine.high %v6970, %v6970
        %6988 = vrot.lane.b32.xlu0 %v6987, 112
        %v6989 = vpop.permute.xlu0 %6988
        %6991 = vst.msk [vmem:[#allocation5 + $0x1] sm:$0x1] %vm6826, %v6989
        %v6992 = vcombine.high %v6982, %v6982
        %6993 = vrot.lane.b32.xlu0 %v6992, 120
        %v6994 = vpop.permute.xlu0 %6993
        %6996 = vst.msk [vmem:[#allocation5 + $0x1] sm:$0x1] %vm6834, %v6994
        %6997 = vst.msk [vmem:[#allocation5 + $0x2] sm:$0x1] %vm6629, %v6622
        %v7000 = vunpack.c.l.s4 1966171168
        %v7001 = vunpack.c.0.s8 %v7000
        %v7002 = vlaneseq
        %v7003 = vshrl.u32 %v7002, 7
        %v7004 = vsub.s32 %v7001, %v7003
        %v7005 = vrot.slane %v6622, %v7004
        %v7006 = vcombine.high %v7005, %v7005
        %v7008 = vunpack.c.l.s4 1966171168
        %v7009 = vunpack.c.0.s8 %v7008
        %v7010 = vlaneseq
        %v7011 = vshrl.u32 %v7010, 7
        %v7012 = vsub.s32 %v7009, %v7011
        %v7013 = vrot.slane %v7005, %v7012
        %v7015 = vunpack.c.l.s4 1966171168
        %v7016 = vunpack.c.0.s8 %v7015
        %v7017 = vlaneseq
        %v7018 = vshrl.u32 %v7017, 7
        %v7019 = vsub.s32 %v7016, %v7018
        %v7020 = vrot.slane %v7006, %v7019
        %7021 = vrot.lane.b32.xlu0 %v7020, 8
        %v7022 = vpop.permute.xlu0 %7021
        %7024 = vst.msk [vmem:[#allocation5 + $0x2] sm:$0x1] %vm6659, %v7022
        %v7025 = vcombine.high %v7013, %v7013
        %7026 = vrot.lane.b32.xlu0 %v7025, 16
        %v7027 = vpop.permute.xlu0 %7026
        %7029 = vst.msk [vmem:[#allocation5 + $0x2] sm:$0x1] %vm6667, %v7027
        %v7030 = vcombine.high %v7020, %v7020
        %7031 = vrot.lane.b32.xlu0 %v7030, 24
        %v7032 = vpop.permute.xlu0 %7031
        %7034 = vst.msk [vmem:[#allocation5 + $0x2] sm:$0x1] %vm6675, %v7032
        %v7035 = vcombine.high %v6622, %v6622
        %v7037 = vunpack.c.l.s4 1966171168
        %v7038 = vunpack.c.0.s8 %v7037
        %v7039 = vlaneseq
        %v7040 = vshrl.u32 %v7039, 7
        %v7041 = vsub.s32 %v7038, %v7040
        %v7042 = vrot.slane %v7035, %v7041
        %v7044 = vunpack.c.l.s4 1966171168
        %v7045 = vunpack.c.0.s8 %v7044
        %v7046 = vlaneseq
        %v7047 = vshrl.u32 %v7046, 7
        %v7048 = vsub.s32 %v7045, %v7047
        %v7049 = vrot.slane %v7042, %v7048
        %7050 = vrot.lane.b32.xlu0 %v7049, 32
        %v7051 = vpop.permute.xlu0 %7050
        %7053 = vst.msk [vmem:[#allocation5 + $0x2] sm:$0x1] %vm6697, %v7051
        %v7054 = vcombine.high %v7042, %v7042
        %v7056 = vunpack.c.l.s4 1966171168
        %v7057 = vunpack.c.0.s8 %v7056
        %v7058 = vlaneseq
        %v7059 = vshrl.u32 %v7058, 7
        %v7060 = vsub.s32 %v7057, %v7059
        %v7061 = vrot.slane %v7054, %v7060
        %7062 = vrot.lane.b32.xlu0 %v7061, 40
        %v7063 = vpop.permute.xlu0 %7062
        %7065 = vst.msk [vmem:[#allocation5 + $0x2] sm:$0x1] %vm6712, %v7063
        %v7066 = vcombine.high %v7049, %v7049
        %7067 = vrot.lane.b32.xlu0 %v7066, 48
        %v7068 = vpop.permute.xlu0 %7067
        %7070 = vst.msk [vmem:[#allocation5 + $0x2] sm:$0x1] %vm6720, %v7068
        %v7071 = vcombine.high %v7061, %v7061
        %7072 = vrot.lane.b32.xlu0 %v7071, 56
        %v7073 = vpop.permute.xlu0 %7072
        %7075 = vst.msk [vmem:[#allocation5 + $0x2] sm:$0x1] %vm6728, %v7073
        %v7078 = vunpack.c.l.s4 1966171168
        %v7079 = vunpack.c.0.s8 %v7078
        %v7080 = vlaneseq
        %v7081 = vshrl.u32 %v7080, 7
        %v7082 = vsub.s32 %v7079, %v7081
        %v7083 = vrot.slane %v6623, %v7082
        %v7085 = vunpack.c.l.s4 1966171168
        %v7086 = vunpack.c.0.s8 %v7085
        %v7087 = vlaneseq
        %v7088 = vshrl.u32 %v7087, 7
        %v7089 = vsub.s32 %v7086, %v7088
        %v7090 = vrot.slane %v7083, %v7089
        %7091 = vrot.lane.b32.xlu0 %v7090, 64
        %v7092 = vpop.permute.xlu0 %7091
        %7094 = vst.msk [vmem:[#allocation5 + $0x2] sm:$0x1] %vm6750, %v7092
        %v7095 = vcombine.high %v7083, %v7083
        %v7097 = vunpack.c.l.s4 1966171168
        %v7098 = vunpack.c.0.s8 %v7097
        %v7099 = vlaneseq
        %v7100 = vshrl.u32 %v7099, 7
        %v7101 = vsub.s32 %v7098, %v7100
        %v7102 = vrot.slane %v7095, %v7101
        %7103 = vrot.lane.b32.xlu0 %v7102, 72
        %v7104 = vpop.permute.xlu0 %7103
        %7106 = vst.msk [vmem:[#allocation5 + $0x2] sm:$0x1] %vm6765, %v7104
        %v7107 = vcombine.high %v7090, %v7090
        %7108 = vrot.lane.b32.xlu0 %v7107, 80
        %v7109 = vpop.permute.xlu0 %7108
        %7111 = vst.msk [vmem:[#allocation5 + $0x2] sm:$0x1] %vm6773, %v7109
        %v7112 = vcombine.high %v7102, %v7102
        %7113 = vrot.lane.b32.xlu0 %v7112, 88
        %v7114 = vpop.permute.xlu0 %7113
        %7116 = vst.msk [vmem:[#allocation5 + $0x2] sm:$0x1] %vm6781, %v7114
        %v7117 = vcombine.high %v6623, %v6623
        %v7119 = vunpack.c.l.s4 1966171168
        %v7120 = vunpack.c.0.s8 %v7119
        %v7121 = vlaneseq
        %v7122 = vshrl.u32 %v7121, 7
        %v7123 = vsub.s32 %v7120, %v7122
        %v7124 = vrot.slane %v7117, %v7123
        %v7126 = vunpack.c.l.s4 1966171168
        %v7127 = vunpack.c.0.s8 %v7126
        %v7128 = vlaneseq
        %v7129 = vshrl.u32 %v7128, 7
        %v7130 = vsub.s32 %v7127, %v7129
        %v7131 = vrot.slane %v7124, %v7130
        %7132 = vrot.lane.b32.xlu0 %v7131, 96
        %v7133 = vpop.permute.xlu0 %7132
        %7135 = vst.msk [vmem:[#allocation5 + $0x2] sm:$0x1] %vm6803, %v7133
        %v7136 = vcombine.high %v7124, %v7124
        %v7138 = vunpack.c.l.s4 1966171168
        %v7139 = vunpack.c.0.s8 %v7138
        %v7140 = vlaneseq
        %v7141 = vshrl.u32 %v7140, 7
        %v7142 = vsub.s32 %v7139, %v7141
        %v7143 = vrot.slane %v7136, %v7142
        %7144 = vrot.lane.b32.xlu0 %v7143, 104
        %v7145 = vpop.permute.xlu0 %7144
        %7147 = vst.msk [vmem:[#allocation5 + $0x2] sm:$0x1] %vm6818, %v7145
        %v7148 = vcombine.high %v7131, %v7131
        %7149 = vrot.lane.b32.xlu0 %v7148, 112
        %v7150 = vpop.permute.xlu0 %7149
        %7152 = vst.msk [vmem:[#allocation5 + $0x2] sm:$0x1] %vm6826, %v7150
        %v7153 = vcombine.high %v7143, %v7143
        %7154 = vrot.lane.b32.xlu0 %v7153, 120
        %v7155 = vpop.permute.xlu0 %7154
        %7157 = vst.msk [vmem:[#allocation5 + $0x2] sm:$0x1] %vm6834, %v7155
        %7158 = vst.msk [vmem:[#allocation5 + $0x3] sm:$0x1] %vm6629, %v6624
        %v7161 = vunpack.c.l.s4 1966171168
        %v7162 = vunpack.c.0.s8 %v7161
        %v7163 = vlaneseq
        %v7164 = vshrl.u32 %v7163, 7
        %v7165 = vsub.s32 %v7162, %v7164
        %v7166 = vrot.slane %v6624, %v7165
        %v7167 = vcombine.high %v7166, %v7166
        %v7169 = vunpack.c.l.s4 1966171168
        %v7170 = vunpack.c.0.s8 %v7169
        %v7171 = vlaneseq
        %v7172 = vshrl.u32 %v7171, 7
        %v7173 = vsub.s32 %v7170, %v7172
        %v7174 = vrot.slane %v7166, %v7173
        %v7176 = vunpack.c.l.s4 1966171168
        %v7177 = vunpack.c.0.s8 %v7176
        %v7178 = vlaneseq
        %v7179 = vshrl.u32 %v7178, 7
        %v7180 = vsub.s32 %v7177, %v7179
        %v7181 = vrot.slane %v7167, %v7180
        %7182 = vrot.lane.b32.xlu0 %v7181, 8
        %v7183 = vpop.permute.xlu0 %7182
        %7185 = vst.msk [vmem:[#allocation5 + $0x3] sm:$0x1] %vm6659, %v7183
        %v7186 = vcombine.high %v7174, %v7174
        %7187 = vrot.lane.b32.xlu0 %v7186, 16
        %v7188 = vpop.permute.xlu0 %7187
        %7190 = vst.msk [vmem:[#allocation5 + $0x3] sm:$0x1] %vm6667, %v7188
        %v7191 = vcombine.high %v7181, %v7181
        %7192 = vrot.lane.b32.xlu0 %v7191, 24
        %v7193 = vpop.permute.xlu0 %7192
        %7195 = vst.msk [vmem:[#allocation5 + $0x3] sm:$0x1] %vm6675, %v7193
        %v7196 = vcombine.high %v6624, %v6624
        %v7198 = vunpack.c.l.s4 1966171168
        %v7199 = vunpack.c.0.s8 %v7198
        %v7200 = vlaneseq
        %v7201 = vshrl.u32 %v7200, 7
        %v7202 = vsub.s32 %v7199, %v7201
        %v7203 = vrot.slane %v7196, %v7202
        %v7205 = vunpack.c.l.s4 1966171168
        %v7206 = vunpack.c.0.s8 %v7205
        %v7207 = vlaneseq
        %v7208 = vshrl.u32 %v7207, 7
        %v7209 = vsub.s32 %v7206, %v7208
        %v7210 = vrot.slane %v7203, %v7209
        %7211 = vrot.lane.b32.xlu0 %v7210, 32
        %v7212 = vpop.permute.xlu0 %7211
        %7214 = vst.msk [vmem:[#allocation5 + $0x3] sm:$0x1] %vm6697, %v7212
        %v7215 = vcombine.high %v7203, %v7203
        %v7217 = vunpack.c.l.s4 1966171168
        %v7218 = vunpack.c.0.s8 %v7217
        %v7219 = vlaneseq
        %v7220 = vshrl.u32 %v7219, 7
        %v7221 = vsub.s32 %v7218, %v7220
        %v7222 = vrot.slane %v7215, %v7221
        %7223 = vrot.lane.b32.xlu0 %v7222, 40
        %v7224 = vpop.permute.xlu0 %7223
        %7226 = vst.msk [vmem:[#allocation5 + $0x3] sm:$0x1] %vm6712, %v7224
        %v7227 = vcombine.high %v7210, %v7210
        %7228 = vrot.lane.b32.xlu0 %v7227, 48
        %v7229 = vpop.permute.xlu0 %7228
        %7231 = vst.msk [vmem:[#allocation5 + $0x3] sm:$0x1] %vm6720, %v7229
        %v7232 = vcombine.high %v7222, %v7222
        %7233 = vrot.lane.b32.xlu0 %v7232, 56
        %v7234 = vpop.permute.xlu0 %7233
        %7236 = vst.msk [vmem:[#allocation5 + $0x3] sm:$0x1] %vm6728, %v7234
        %v7239 = vunpack.c.l.s4 1966171168
        %v7240 = vunpack.c.0.s8 %v7239
        %v7241 = vlaneseq
        %v7242 = vshrl.u32 %v7241, 7
        %v7243 = vsub.s32 %v7240, %v7242
        %v7244 = vrot.slane %v6625, %v7243
        %v7246 = vunpack.c.l.s4 1966171168
        %v7247 = vunpack.c.0.s8 %v7246
        %v7248 = vlaneseq
        %v7249 = vshrl.u32 %v7248, 7
        %v7250 = vsub.s32 %v7247, %v7249
        %v7251 = vrot.slane %v7244, %v7250
        %7252 = vrot.lane.b32.xlu0 %v7251, 64
        %v7253 = vpop.permute.xlu0 %7252
        %7255 = vst.msk [vmem:[#allocation5 + $0x3] sm:$0x1] %vm6750, %v7253
        %v7256 = vcombine.high %v7244, %v7244
        %v7258 = vunpack.c.l.s4 1966171168
        %v7259 = vunpack.c.0.s8 %v7258
        %v7260 = vlaneseq
        %v7261 = vshrl.u32 %v7260, 7
        %v7262 = vsub.s32 %v7259, %v7261
        %v7263 = vrot.slane %v7256, %v7262
        %7264 = vrot.lane.b32.xlu0 %v7263, 72
        %v7265 = vpop.permute.xlu0 %7264
        %7267 = vst.msk [vmem:[#allocation5 + $0x3] sm:$0x1] %vm6765, %v7265
        %v7268 = vcombine.high %v7251, %v7251
        %7269 = vrot.lane.b32.xlu0 %v7268, 80
        %v7270 = vpop.permute.xlu0 %7269
        %7272 = vst.msk [vmem:[#allocation5 + $0x3] sm:$0x1] %vm6773, %v7270
        %v7273 = vcombine.high %v7263, %v7263
        %7274 = vrot.lane.b32.xlu0 %v7273, 88
        %v7275 = vpop.permute.xlu0 %7274
        %7277 = vst.msk [vmem:[#allocation5 + $0x3] sm:$0x1] %vm6781, %v7275
        %v7278 = vcombine.high %v6625, %v6625
        %v7280 = vunpack.c.l.s4 1966171168
        %v7281 = vunpack.c.0.s8 %v7280
        %v7282 = vlaneseq
        %v7283 = vshrl.u32 %v7282, 7
        %v7284 = vsub.s32 %v7281, %v7283
        %v7285 = vrot.slane %v7278, %v7284
        %v7287 = vunpack.c.l.s4 1966171168
        %v7288 = vunpack.c.0.s8 %v7287
        %v7289 = vlaneseq
        %v7290 = vshrl.u32 %v7289, 7
        %v7291 = vsub.s32 %v7288, %v7290
        %v7292 = vrot.slane %v7285, %v7291
        %7293 = vrot.lane.b32.xlu0 %v7292, 96
        %v7294 = vpop.permute.xlu0 %7293
        %7296 = vst.msk [vmem:[#allocation5 + $0x3] sm:$0x1] %vm6803, %v7294
        %v7297 = vcombine.high %v7285, %v7285
        %v7299 = vunpack.c.l.s4 1966171168
        %v7300 = vunpack.c.0.s8 %v7299
        %v7301 = vlaneseq
        %v7302 = vshrl.u32 %v7301, 7
        %v7303 = vsub.s32 %v7300, %v7302
        %v7304 = vrot.slane %v7297, %v7303
        %7305 = vrot.lane.b32.xlu0 %v7304, 104
        %v7306 = vpop.permute.xlu0 %7305
        %7308 = vst.msk [vmem:[#allocation5 + $0x3] sm:$0x1] %vm6818, %v7306
        %v7309 = vcombine.high %v7292, %v7292
        %7310 = vrot.lane.b32.xlu0 %v7309, 112
        %v7311 = vpop.permute.xlu0 %7310
        %7313 = vst.msk [vmem:[#allocation5 + $0x3] sm:$0x1] %vm6826, %v7311
        %v7314 = vcombine.high %v7304, %v7304
        %7315 = vrot.lane.b32.xlu0 %v7314, 120
        %v7316 = vpop.permute.xlu0 %7315
        %7318 = vst.msk [vmem:[#allocation5 + $0x3] sm:$0x1] %vm6834, %v7316
        %v7319 = vld [vmem:[#allocation5] sm:$0xf]
        %v7320 = vld [vmem:[%s7] sm:$0xff]
        %v7321 = vld [vmem:[%s7 + $0x8] sm:$0xff]
        %v7322 = vld [vmem:[%s7 + $0x10] sm:$0xff]
        %v7323 = vld [vmem:[%s7 + $0x18] sm:$0xff]
        %v7324 = vld [vmem:[%s7 + $0x20] sm:$0xff]
        %v7325 = vld [vmem:[%s7 + $0x28] sm:$0xff]
        %v7326 = vld [vmem:[%s7 + $0x30] sm:$0xff]
        %v7327 = vld [vmem:[%s7 + $0x38] sm:$0xff]
        %v7328 = vld [vmem:[%s7 + $0x40] sm:$0xff]
        %v7329 = vld [vmem:[%s7 + $0x48] sm:$0xff]
        %v7330 = vld [vmem:[%s7 + $0x50] sm:$0xff]
        %v7331 = vld [vmem:[%s7 + $0x58] sm:$0xff]
        %v7332 = vld [vmem:[%s7 + $0x60] sm:$0xff]
        %v7333 = vld [vmem:[%s7 + $0x68] sm:$0xff]
        %v7334 = vld [vmem:[%s7 + $0x70] sm:$0xff]
        %v7335 = vld [vmem:[%s7 + $0x78] sm:$0xff]
        %v7336 = vld [vmem:[%s7 + $0x80] sm:$0xff]
        %v7337 = vld [vmem:[%s7 + $0x88] sm:$0xff]
        %v7338 = vld [vmem:[%s7 + $0x90] sm:$0xff]
        %v7339 = vld [vmem:[%s7 + $0x98] sm:$0xff]
        %v7340 = vld [vmem:[%s7 + $0xa0] sm:$0xff]
        %v7341 = vld [vmem:[%s7 + $0xa8] sm:$0xff]
        %v7342 = vld [vmem:[%s7 + $0xb0] sm:$0xff]
        %v7343 = vld [vmem:[%s7 + $0xb8] sm:$0xff]
        %v7344 = vld [vmem:[%s7 + $0xc0] sm:$0xff]
        %v7345 = vld [vmem:[%s7 + $0xc8] sm:$0xff]
        %v7346 = vld [vmem:[%s7 + $0xd0] sm:$0xff]
        %v7347 = vld [vmem:[%s7 + $0xd8] sm:$0xff]
        %v7348 = vld [vmem:[%s7 + $0xe0] sm:$0xff]
        %v7349 = vld [vmem:[%s7 + $0xe8] sm:$0xff]
        %v7350 = vld [vmem:[%s7 + $0xf0] sm:$0xff]
        %v7351 = vld [vmem:[%s7 + $0xf8] sm:$0xff]
        %v7352 = vld [vmem:[%s7 + $0x100] sm:$0xff]
        %v7353 = vld [vmem:[%s7 + $0x108] sm:$0xff]
        %v7354 = vld [vmem:[%s7 + $0x110] sm:$0xff]
        %v7355 = vld [vmem:[%s7 + $0x118] sm:$0xff]
        %v7356 = vld [vmem:[%s7 + $0x120] sm:$0xff]
        %v7357 = vld [vmem:[%s7 + $0x128] sm:$0xff]
        %v7358 = vld [vmem:[%s7 + $0x130] sm:$0xff]
        %v7359 = vld [vmem:[%s7 + $0x138] sm:$0xff]
        %v7360 = vld [vmem:[%s7 + $0x140] sm:$0xff]
        %v7361 = vld [vmem:[%s7 + $0x148] sm:$0xff]
        %v7362 = vld [vmem:[%s7 + $0x150] sm:$0xff]
        %v7363 = vld [vmem:[%s7 + $0x158] sm:$0xff]
        %v7364 = vld [vmem:[%s7 + $0x160] sm:$0xff]
        %v7365 = vld [vmem:[%s7 + $0x168] sm:$0xff]
        %v7366 = vld [vmem:[%s7 + $0x170] sm:$0xff]
        %v7367 = vld [vmem:[%s7 + $0x178] sm:$0xff]
        %v7368 = vld [vmem:[%s7 + $0x180] sm:$0xff]
        %v7369 = vld [vmem:[%s7 + $0x188] sm:$0xff]
        %v7370 = vld [vmem:[%s7 + $0x190] sm:$0xff]
        %v7371 = vld [vmem:[%s7 + $0x198] sm:$0xff]
        %v7372 = vld [vmem:[%s7 + $0x1a0] sm:$0xff]
        %v7373 = vld [vmem:[%s7 + $0x1a8] sm:$0xff]
        %v7374 = vld [vmem:[%s7 + $0x1b0] sm:$0xff]
        %v7375 = vld [vmem:[%s7 + $0x1b8] sm:$0xff]
        %v7376 = vld [vmem:[%s7 + $0x1c0] sm:$0xff]
        %v7377 = vld [vmem:[%s7 + $0x1c8] sm:$0xff]
        %v7378 = vld [vmem:[%s7 + $0x1d0] sm:$0xff]
        %v7379 = vld [vmem:[%s7 + $0x1d8] sm:$0xff]
        %v7380 = vld [vmem:[%s7 + $0x1e0] sm:$0xff]
        %v7381 = vld [vmem:[%s7 + $0x1e8] sm:$0xff]
        %v7382 = vld [vmem:[%s7 + $0x1f0] sm:$0xff]
        %v7383 = vld [vmem:[%s7 + $0x1f8] sm:$0xff]
        %v7384 = vld [vmem:[%s9] sm:$0xff]
        %v7385 = vld [vmem:[%s9 + $0x8] sm:$0xff]
        %v7386 = vld [vmem:[%s9 + $0x10] sm:$0xff]
        %v7387 = vld [vmem:[%s9 + $0x18] sm:$0xff]
        %v7388 = vld [vmem:[%s9 + $0x20] sm:$0xff]
        %v7389 = vld [vmem:[%s9 + $0x28] sm:$0xff]
        %v7390 = vld [vmem:[%s9 + $0x30] sm:$0xff]
        %v7391 = vld [vmem:[%s9 + $0x38] sm:$0xff]
        %v7392 = vld [vmem:[%s9 + $0x40] sm:$0xff]
        %v7393 = vld [vmem:[%s9 + $0x48] sm:$0xff]
        %v7394 = vld [vmem:[%s9 + $0x50] sm:$0xff]
        %v7395 = vld [vmem:[%s9 + $0x58] sm:$0xff]
        %v7396 = vld [vmem:[%s9 + $0x60] sm:$0xff]
        %v7397 = vld [vmem:[%s9 + $0x68] sm:$0xff]
        %v7398 = vld [vmem:[%s9 + $0x70] sm:$0xff]
        %v7399 = vld [vmem:[%s9 + $0x78] sm:$0xff]
        %v7400 = vld [vmem:[%s9 + $0x80] sm:$0xff]
        %v7401 = vld [vmem:[%s9 + $0x88] sm:$0xff]
        %v7402 = vld [vmem:[%s9 + $0x90] sm:$0xff]
        %v7403 = vld [vmem:[%s9 + $0x98] sm:$0xff]
        %v7404 = vld [vmem:[%s9 + $0xa0] sm:$0xff]
        %v7405 = vld [vmem:[%s9 + $0xa8] sm:$0xff]
        %v7406 = vld [vmem:[%s9 + $0xb0] sm:$0xff]
        %v7407 = vld [vmem:[%s9 + $0xb8] sm:$0xff]
        %v7408 = vld [vmem:[%s9 + $0xc0] sm:$0xff]
        %v7409 = vld [vmem:[%s9 + $0xc8] sm:$0xff]
        %v7410 = vld [vmem:[%s9 + $0xd0] sm:$0xff]
        %v7411 = vld [vmem:[%s9 + $0xd8] sm:$0xff]
        %v7412 = vld [vmem:[%s9 + $0xe0] sm:$0xff]
        %v7413 = vld [vmem:[%s9 + $0xe8] sm:$0xff]
        %v7414 = vld [vmem:[%s9 + $0xf0] sm:$0xff]
        %v7415 = vld [vmem:[%s9 + $0xf8] sm:$0xff]
        %v7416 = vld [vmem:[%s9 + $0x100] sm:$0xff]
        %v7417 = vld [vmem:[%s9 + $0x108] sm:$0xff]
        %v7418 = vld [vmem:[%s9 + $0x110] sm:$0xff]
        %v7419 = vld [vmem:[%s9 + $0x118] sm:$0xff]
        %v7420 = vld [vmem:[%s9 + $0x120] sm:$0xff]
        %v7421 = vld [vmem:[%s9 + $0x128] sm:$0xff]
        %v7422 = vld [vmem:[%s9 + $0x130] sm:$0xff]
        %v7423 = vld [vmem:[%s9 + $0x138] sm:$0xff]
        %v7424 = vld [vmem:[%s9 + $0x140] sm:$0xff]
        %v7425 = vld [vmem:[%s9 + $0x148] sm:$0xff]
        %v7426 = vld [vmem:[%s9 + $0x150] sm:$0xff]
        %v7427 = vld [vmem:[%s9 + $0x158] sm:$0xff]
        %v7428 = vld [vmem:[%s9 + $0x160] sm:$0xff]
        %v7429 = vld [vmem:[%s9 + $0x168] sm:$0xff]
        %v7430 = vld [vmem:[%s9 + $0x170] sm:$0xff]
        %v7431 = vld [vmem:[%s9 + $0x178] sm:$0xff]
        %v7432 = vld [vmem:[%s9 + $0x180] sm:$0xff]
        %v7433 = vld [vmem:[%s9 + $0x188] sm:$0xff]
        %v7434 = vld [vmem:[%s9 + $0x190] sm:$0xff]
        %v7435 = vld [vmem:[%s9 + $0x198] sm:$0xff]
        %v7436 = vld [vmem:[%s9 + $0x1a0] sm:$0xff]
        %v7437 = vld [vmem:[%s9 + $0x1a8] sm:$0xff]
        %v7438 = vld [vmem:[%s9 + $0x1b0] sm:$0xff]
        %v7439 = vld [vmem:[%s9 + $0x1b8] sm:$0xff]
        %v7440 = vld [vmem:[%s9 + $0x1c0] sm:$0xff]
        %v7441 = vld [vmem:[%s9 + $0x1c8] sm:$0xff]
        %v7442 = vld [vmem:[%s9 + $0x1d0] sm:$0xff]
        %v7443 = vld [vmem:[%s9 + $0x1d8] sm:$0xff]
        %v7444 = vld [vmem:[%s9 + $0x1e0] sm:$0xff]
        %v7445 = vld [vmem:[%s9 + $0x1e8] sm:$0xff]
        %v7446 = vld [vmem:[%s9 + $0x1f0] sm:$0xff]
        %v7447 = vld [vmem:[%s9 + $0x1f8] sm:$0xff]
        %v7448 = vld [vmem:[%s8] sm:$0xff]
        %v7449 = vld [vmem:[%s8 + $0x8] sm:$0xff]
        %v7450 = vld [vmem:[%s8 + $0x10] sm:$0xff]
        %v7451 = vld [vmem:[%s8 + $0x18] sm:$0xff]
        %v7452 = vld [vmem:[%s8 + $0x20] sm:$0xff]
        %v7453 = vld [vmem:[%s8 + $0x28] sm:$0xff]
        %v7454 = vld [vmem:[%s8 + $0x30] sm:$0xff]
        %v7455 = vld [vmem:[%s8 + $0x38] sm:$0xff]
        %v7456 = vld [vmem:[%s8 + $0x40] sm:$0xff]
        %v7457 = vld [vmem:[%s8 + $0x48] sm:$0xff]
        %v7458 = vld [vmem:[%s8 + $0x50] sm:$0xff]
        %v7459 = vld [vmem:[%s8 + $0x58] sm:$0xff]
        %v7460 = vld [vmem:[%s8 + $0x60] sm:$0xff]
        %v7461 = vld [vmem:[%s8 + $0x68] sm:$0xff]
        %v7462 = vld [vmem:[%s8 + $0x70] sm:$0xff]
        %v7463 = vld [vmem:[%s8 + $0x78] sm:$0xff]
        %v7464 = vld [vmem:[%s8 + $0x80] sm:$0xff]
        %v7465 = vld [vmem:[%s8 + $0x88] sm:$0xff]
        %v7466 = vld [vmem:[%s8 + $0x90] sm:$0xff]
        %v7467 = vld [vmem:[%s8 + $0x98] sm:$0xff]
        %v7468 = vld [vmem:[%s8 + $0xa0] sm:$0xff]
        %v7469 = vld [vmem:[%s8 + $0xa8] sm:$0xff]
        %v7470 = vld [vmem:[%s8 + $0xb0] sm:$0xff]
        %v7471 = vld [vmem:[%s8 + $0xb8] sm:$0xff]
        %v7472 = vld [vmem:[%s8 + $0xc0] sm:$0xff]
        %v7473 = vld [vmem:[%s8 + $0xc8] sm:$0xff]
        %v7474 = vld [vmem:[%s8 + $0xd0] sm:$0xff]
        %v7475 = vld [vmem:[%s8 + $0xd8] sm:$0xff]
        %v7476 = vld [vmem:[%s8 + $0xe0] sm:$0xff]
        %v7477 = vld [vmem:[%s8 + $0xe8] sm:$0xff]
        %v7478 = vld [vmem:[%s8 + $0xf0] sm:$0xff]
        %v7479 = vld [vmem:[%s8 + $0xf8] sm:$0xff]
        %v7480 = vld [vmem:[%s8 + $0x100] sm:$0xff]
        %v7481 = vld [vmem:[%s8 + $0x108] sm:$0xff]
        %v7482 = vld [vmem:[%s8 + $0x110] sm:$0xff]
        %v7483 = vld [vmem:[%s8 + $0x118] sm:$0xff]
        %v7484 = vld [vmem:[%s8 + $0x120] sm:$0xff]
        %v7485 = vld [vmem:[%s8 + $0x128] sm:$0xff]
        %v7486 = vld [vmem:[%s8 + $0x130] sm:$0xff]
        %v7487 = vld [vmem:[%s8 + $0x138] sm:$0xff]
        %v7488 = vld [vmem:[%s8 + $0x140] sm:$0xff]
        %v7489 = vld [vmem:[%s8 + $0x148] sm:$0xff]
        %v7490 = vld [vmem:[%s8 + $0x150] sm:$0xff]
        %v7491 = vld [vmem:[%s8 + $0x158] sm:$0xff]
        %v7492 = vld [vmem:[%s8 + $0x160] sm:$0xff]
        %v7493 = vld [vmem:[%s8 + $0x168] sm:$0xff]
        %v7494 = vld [vmem:[%s8 + $0x170] sm:$0xff]
        %v7495 = vld [vmem:[%s8 + $0x178] sm:$0xff]
        %v7496 = vld [vmem:[%s8 + $0x180] sm:$0xff]
        %v7497 = vld [vmem:[%s8 + $0x188] sm:$0xff]
        %v7498 = vld [vmem:[%s8 + $0x190] sm:$0xff]
        %v7499 = vld [vmem:[%s8 + $0x198] sm:$0xff]
        %v7500 = vld [vmem:[%s8 + $0x1a0] sm:$0xff]
        %v7501 = vld [vmem:[%s8 + $0x1a8] sm:$0xff]
        %v7502 = vld [vmem:[%s8 + $0x1b0] sm:$0xff]
        %v7503 = vld [vmem:[%s8 + $0x1b8] sm:$0xff]
        %v7504 = vld [vmem:[%s8 + $0x1c0] sm:$0xff]
        %v7505 = vld [vmem:[%s8 + $0x1c8] sm:$0xff]
        %v7506 = vld [vmem:[%s8 + $0x1d0] sm:$0xff]
        %v7507 = vld [vmem:[%s8 + $0x1d8] sm:$0xff]
        %v7508 = vld [vmem:[%s8 + $0x1e0] sm:$0xff]
        %v7509 = vld [vmem:[%s8 + $0x1e8] sm:$0xff]
        %v7510 = vld [vmem:[%s8 + $0x1f0] sm:$0xff]
        %v7511 = vld [vmem:[%s8 + $0x1f8] sm:$0xff]
        %v7512 = vmul.f32 %v7448, 0.5
        %v7513 = vmul.f32 %v7449, 0.5
        %v7514 = vmul.f32 %v7450, 0.5
        %v7515 = vmul.f32 %v7451, 0.5
        %v7516 = vmul.f32 %v7452, 0.5
        %v7517 = vmul.f32 %v7453, 0.5
        %v7518 = vmul.f32 %v7454, 0.5
        %v7519 = vmul.f32 %v7455, 0.5
        %v7520 = vmul.f32 %v7456, 0.5
        %v7521 = vmul.f32 %v7457, 0.5
        %v7522 = vmul.f32 %v7458, 0.5
        %v7523 = vmul.f32 %v7459, 0.5
        %v7524 = vmul.f32 %v7460, 0.5
        %v7525 = vmul.f32 %v7461, 0.5
        %v7526 = vmul.f32 %v7462, 0.5
        %v7527 = vmul.f32 %v7463, 0.5
        %v7528 = vmul.f32 %v7464, 0.5
        %v7529 = vmul.f32 %v7465, 0.5
        %v7530 = vmul.f32 %v7466, 0.5
        %v7531 = vmul.f32 %v7467, 0.5
        %v7532 = vmul.f32 %v7468, 0.5
        %v7533 = vmul.f32 %v7469, 0.5
        %v7534 = vmul.f32 %v7470, 0.5
        %v7535 = vmul.f32 %v7471, 0.5
        %v7536 = vmul.f32 %v7472, 0.5
        %v7537 = vmul.f32 %v7473, 0.5
        %v7538 = vmul.f32 %v7474, 0.5
        %v7539 = vmul.f32 %v7475, 0.5
        %v7540 = vmul.f32 %v7476, 0.5
        %v7541 = vmul.f32 %v7477, 0.5
        %v7542 = vmul.f32 %v7478, 0.5
        %v7543 = vmul.f32 %v7479, 0.5
        %v7544 = vmul.f32 %v7480, 0.5
        %v7545 = vmul.f32 %v7481, 0.5
        %v7546 = vmul.f32 %v7482, 0.5
        %v7547 = vmul.f32 %v7483, 0.5
        %v7548 = vmul.f32 %v7484, 0.5
        %v7549 = vmul.f32 %v7485, 0.5
        %v7550 = vmul.f32 %v7486, 0.5
        %v7551 = vmul.f32 %v7487, 0.5
        %v7552 = vmul.f32 %v7488, 0.5
        %v7553 = vmul.f32 %v7489, 0.5
        %v7554 = vmul.f32 %v7490, 0.5
        %v7555 = vmul.f32 %v7491, 0.5
        %v7556 = vmul.f32 %v7492, 0.5
        %v7557 = vmul.f32 %v7493, 0.5
        %v7558 = vmul.f32 %v7494, 0.5
        %v7559 = vmul.f32 %v7495, 0.5
        %v7560 = vmul.f32 %v7496, 0.5
        %v7561 = vmul.f32 %v7497, 0.5
        %v7562 = vmul.f32 %v7498, 0.5
        %v7563 = vmul.f32 %v7499, 0.5
        %v7564 = vmul.f32 %v7500, 0.5
        %v7565 = vmul.f32 %v7501, 0.5
        %v7566 = vmul.f32 %v7502, 0.5
        %v7567 = vmul.f32 %v7503, 0.5
        %v7568 = vmul.f32 %v7504, 0.5
        %v7569 = vmul.f32 %v7505, 0.5
        %v7570 = vmul.f32 %v7506, 0.5
        %v7571 = vmul.f32 %v7507, 0.5
        %v7572 = vmul.f32 %v7508, 0.5
        %v7573 = vmul.f32 %v7509, 0.5
        %v7574 = vmul.f32 %v7510, 0.5
        %v7575 = vmul.f32 %v7511, 0.5
        %v7576 = vmul.f32 %v7512, 1.442695
        %v7577 = vpow.pop %v7576
        %v7578 = vmul.f32 %v7513, 1.442695
        %v7579 = vpow.pop %v7578
        %v7580 = vmul.f32 %v7514, 1.442695
        %v7581 = vpow.pop %v7580
        %v7582 = vmul.f32 %v7515, 1.442695
        %v7583 = vpow.pop %v7582
        %v7584 = vmul.f32 %v7516, 1.442695
        %v7585 = vpow.pop %v7584
        %v7586 = vmul.f32 %v7517, 1.442695
        %v7587 = vpow.pop %v7586
        %v7588 = vmul.f32 %v7518, 1.442695
        %v7589 = vpow.pop %v7588
        %v7590 = vmul.f32 %v7519, 1.442695
        %v7591 = vpow.pop %v7590
        %v7592 = vmul.f32 %v7520, 1.442695
        %v7593 = vpow.pop %v7592
        %v7594 = vmul.f32 %v7521, 1.442695
        %v7595 = vpow.pop %v7594
        %v7596 = vmul.f32 %v7522, 1.442695
        %v7597 = vpow.pop %v7596
        %v7598 = vmul.f32 %v7523, 1.442695
        %v7599 = vpow.pop %v7598
        %v7600 = vmul.f32 %v7524, 1.442695
        %v7601 = vpow.pop %v7600
        %v7602 = vmul.f32 %v7525, 1.442695
        %v7603 = vpow.pop %v7602
        %v7604 = vmul.f32 %v7526, 1.442695
        %v7605 = vpow.pop %v7604
        %v7606 = vmul.f32 %v7527, 1.442695
        %v7607 = vpow.pop %v7606
        %v7608 = vmul.f32 %v7528, 1.442695
        %v7609 = vpow.pop %v7608
        %v7610 = vmul.f32 %v7529, 1.442695
        %v7611 = vpow.pop %v7610
        %v7612 = vmul.f32 %v7530, 1.442695
        %v7613 = vpow.pop %v7612
        %v7614 = vmul.f32 %v7531, 1.442695
        %v7615 = vpow.pop %v7614
        %v7616 = vmul.f32 %v7532, 1.442695
        %v7617 = vpow.pop %v7616
        %v7618 = vmul.f32 %v7533, 1.442695
        %v7619 = vpow.pop %v7618
        %v7620 = vmul.f32 %v7534, 1.442695
        %v7621 = vpow.pop %v7620
        %v7622 = vmul.f32 %v7535, 1.442695
        %v7623 = vpow.pop %v7622
        %v7624 = vmul.f32 %v7536, 1.442695
        %v7625 = vpow.pop %v7624
        %v7626 = vmul.f32 %v7537, 1.442695
        %v7627 = vpow.pop %v7626
        %v7628 = vmul.f32 %v7538, 1.442695
        %v7629 = vpow.pop %v7628
        %v7630 = vmul.f32 %v7539, 1.442695
        %v7631 = vpow.pop %v7630
        %v7632 = vmul.f32 %v7540, 1.442695
        %v7633 = vpow.pop %v7632
        %v7634 = vmul.f32 %v7541, 1.442695
        %v7635 = vpow.pop %v7634
        %v7636 = vmul.f32 %v7542, 1.442695
        %v7637 = vpow.pop %v7636
        %v7638 = vmul.f32 %v7543, 1.442695
        %v7639 = vpow.pop %v7638
        %v7640 = vmul.f32 %v7544, 1.442695
        %v7641 = vpow.pop %v7640
        %v7642 = vmul.f32 %v7545, 1.442695
        %v7643 = vpow.pop %v7642
        %v7644 = vmul.f32 %v7546, 1.442695
        %v7645 = vpow.pop %v7644
        %v7646 = vmul.f32 %v7547, 1.442695
        %v7647 = vpow.pop %v7646
        %v7648 = vmul.f32 %v7548, 1.442695
        %v7649 = vpow.pop %v7648
        %v7650 = vmul.f32 %v7549, 1.442695
        %v7651 = vpow.pop %v7650
        %v7652 = vmul.f32 %v7550, 1.442695
        %v7653 = vpow.pop %v7652
        %v7654 = vmul.f32 %v7551, 1.442695
        %v7655 = vpow.pop %v7654
        %v7656 = vmul.f32 %v7552, 1.442695
        %v7657 = vpow.pop %v7656
        %v7658 = vmul.f32 %v7553, 1.442695
        %v7659 = vpow.pop %v7658
        %v7660 = vmul.f32 %v7554, 1.442695
        %v7661 = vpow.pop %v7660
        %v7662 = vmul.f32 %v7555, 1.442695
        %v7663 = vpow.pop %v7662
        %v7664 = vmul.f32 %v7556, 1.442695
        %v7665 = vpow.pop %v7664
        %v7666 = vmul.f32 %v7557, 1.442695
        %v7667 = vpow.pop %v7666
        %v7668 = vmul.f32 %v7558, 1.442695
        %v7669 = vpow.pop %v7668
        %v7670 = vmul.f32 %v7559, 1.442695
        %v7671 = vpow.pop %v7670
        %v7672 = vmul.f32 %v7560, 1.442695
        %v7673 = vpow.pop %v7672
        %v7674 = vmul.f32 %v7561, 1.442695
        %v7675 = vpow.pop %v7674
        %v7676 = vmul.f32 %v7562, 1.442695
        %v7677 = vpow.pop %v7676
        %v7678 = vmul.f32 %v7563, 1.442695
        %v7679 = vpow.pop %v7678
        %v7680 = vmul.f32 %v7564, 1.442695
        %v7681 = vpow.pop %v7680
        %v7682 = vmul.f32 %v7565, 1.442695
        %v7683 = vpow.pop %v7682
        %v7684 = vmul.f32 %v7566, 1.442695
        %v7685 = vpow.pop %v7684
        %v7686 = vmul.f32 %v7567, 1.442695
        %v7687 = vpow.pop %v7686
        %v7688 = vmul.f32 %v7568, 1.442695
        %v7689 = vpow.pop %v7688
        %v7690 = vmul.f32 %v7569, 1.442695
        %v7691 = vpow.pop %v7690
        %v7692 = vmul.f32 %v7570, 1.442695
        %v7693 = vpow.pop %v7692
        %v7694 = vmul.f32 %v7571, 1.442695
        %v7695 = vpow.pop %v7694
        %v7696 = vmul.f32 %v7572, 1.442695
        %v7697 = vpow.pop %v7696
        %v7698 = vmul.f32 %v7573, 1.442695
        %v7699 = vpow.pop %v7698
        %v7700 = vmul.f32 %v7574, 1.442695
        %v7701 = vpow.pop %v7700
        %v7702 = vmul.f32 %v7575, 1.442695
        %v7703 = vpow.pop %v7702
        %v7704 = vmul.f32 %v7384, %v7577
        %v7705 = vmul.f32 %v7385, %v7579
        %v7706 = vmul.f32 %v7386, %v7581
        %v7707 = vmul.f32 %v7387, %v7583
        %v7708 = vmul.f32 %v7388, %v7585
        %v7709 = vmul.f32 %v7389, %v7587
        %v7710 = vmul.f32 %v7390, %v7589
        %v7711 = vmul.f32 %v7391, %v7591
        %v7712 = vmul.f32 %v7392, %v7593
        %v7713 = vmul.f32 %v7393, %v7595
        %v7714 = vmul.f32 %v7394, %v7597
        %v7715 = vmul.f32 %v7395, %v7599
        %v7716 = vmul.f32 %v7396, %v7601
        %v7717 = vmul.f32 %v7397, %v7603
        %v7718 = vmul.f32 %v7398, %v7605
        %v7719 = vmul.f32 %v7399, %v7607
        %v7720 = vmul.f32 %v7400, %v7609
        %v7721 = vmul.f32 %v7401, %v7611
        %v7722 = vmul.f32 %v7402, %v7613
        %v7723 = vmul.f32 %v7403, %v7615
        %v7724 = vmul.f32 %v7404, %v7617
        %v7725 = vmul.f32 %v7405, %v7619
        %v7726 = vmul.f32 %v7406, %v7621
        %v7727 = vmul.f32 %v7407, %v7623
        %v7728 = vmul.f32 %v7408, %v7625
        %v7729 = vmul.f32 %v7409, %v7627
        %v7730 = vmul.f32 %v7410, %v7629
        %v7731 = vmul.f32 %v7411, %v7631
        %v7732 = vmul.f32 %v7412, %v7633
        %v7733 = vmul.f32 %v7413, %v7635
        %v7734 = vmul.f32 %v7414, %v7637
        %v7735 = vmul.f32 %v7415, %v7639
        %v7736 = vmul.f32 %v7416, %v7641
        %v7737 = vmul.f32 %v7417, %v7643
        %v7738 = vmul.f32 %v7418, %v7645
        %v7739 = vmul.f32 %v7419, %v7647
        %v7740 = vmul.f32 %v7420, %v7649
        %v7741 = vmul.f32 %v7421, %v7651
        %v7742 = vmul.f32 %v7422, %v7653
        %v7743 = vmul.f32 %v7423, %v7655
        %v7744 = vmul.f32 %v7424, %v7657
        %v7745 = vmul.f32 %v7425, %v7659
        %v7746 = vmul.f32 %v7426, %v7661
        %v7747 = vmul.f32 %v7427, %v7663
        %v7748 = vmul.f32 %v7428, %v7665
        %v7749 = vmul.f32 %v7429, %v7667
        %v7750 = vmul.f32 %v7430, %v7669
        %v7751 = vmul.f32 %v7431, %v7671
        %v7752 = vmul.f32 %v7432, %v7673
        %v7753 = vmul.f32 %v7433, %v7675
        %v7754 = vmul.f32 %v7434, %v7677
        %v7755 = vmul.f32 %v7435, %v7679
        %v7756 = vmul.f32 %v7436, %v7681
        %v7757 = vmul.f32 %v7437, %v7683
        %v7758 = vmul.f32 %v7438, %v7685
        %v7759 = vmul.f32 %v7439, %v7687
        %v7760 = vmul.f32 %v7440, %v7689
        %v7761 = vmul.f32 %v7441, %v7691
        %v7762 = vmul.f32 %v7442, %v7693
        %v7763 = vmul.f32 %v7443, %v7695
        %v7764 = vmul.f32 %v7444, %v7697
        %v7765 = vmul.f32 %v7445, %v7699
        %v7766 = vmul.f32 %v7446, %v7701
        %v7767 = vmul.f32 %v7447, %v7703
        %v7768 = vadd.f32 %v7320, %v7704
        %v7769 = vadd.f32 %v7321, %v7705
        %v7770 = vadd.f32 %v7322, %v7706
        %v7771 = vadd.f32 %v7323, %v7707
        %v7772 = vadd.f32 %v7324, %v7708
        %v7773 = vadd.f32 %v7325, %v7709
        %v7774 = vadd.f32 %v7326, %v7710
        %v7775 = vadd.f32 %v7327, %v7711
        %v7776 = vadd.f32 %v7328, %v7712
        %v7777 = vadd.f32 %v7329, %v7713
        %v7778 = vadd.f32 %v7330, %v7714
        %v7779 = vadd.f32 %v7331, %v7715
        %v7780 = vadd.f32 %v7332, %v7716
        %v7781 = vadd.f32 %v7333, %v7717
        %v7782 = vadd.f32 %v7334, %v7718
        %v7783 = vadd.f32 %v7335, %v7719
        %v7784 = vadd.f32 %v7336, %v7720
        %v7785 = vadd.f32 %v7337, %v7721
        %v7786 = vadd.f32 %v7338, %v7722
        %v7787 = vadd.f32 %v7339, %v7723
        %v7788 = vadd.f32 %v7340, %v7724
        %v7789 = vadd.f32 %v7341, %v7725
        %v7790 = vadd.f32 %v7342, %v7726
        %v7791 = vadd.f32 %v7343, %v7727
        %v7792 = vadd.f32 %v7344, %v7728
        %v7793 = vadd.f32 %v7345, %v7729
        %v7794 = vadd.f32 %v7346, %v7730
        %v7795 = vadd.f32 %v7347, %v7731
        %v7796 = vadd.f32 %v7348, %v7732
        %v7797 = vadd.f32 %v7349, %v7733
        %v7798 = vadd.f32 %v7350, %v7734
        %v7799 = vadd.f32 %v7351, %v7735
        %v7800 = vadd.f32 %v7352, %v7736
        %v7801 = vadd.f32 %v7353, %v7737
        %v7802 = vadd.f32 %v7354, %v7738
        %v7803 = vadd.f32 %v7355, %v7739
        %v7804 = vadd.f32 %v7356, %v7740
        %v7805 = vadd.f32 %v7357, %v7741
        %v7806 = vadd.f32 %v7358, %v7742
        %v7807 = vadd.f32 %v7359, %v7743
        %v7808 = vadd.f32 %v7360, %v7744
        %v7809 = vadd.f32 %v7361, %v7745
        %v7810 = vadd.f32 %v7362, %v7746
        %v7811 = vadd.f32 %v7363, %v7747
        %v7812 = vadd.f32 %v7364, %v7748
        %v7813 = vadd.f32 %v7365, %v7749
        %v7814 = vadd.f32 %v7366, %v7750
        %v7815 = vadd.f32 %v7367, %v7751
        %v7816 = vadd.f32 %v7368, %v7752
        %v7817 = vadd.f32 %v7369, %v7753
        %v7818 = vadd.f32 %v7370, %v7754
        %v7819 = vadd.f32 %v7371, %v7755
        %v7820 = vadd.f32 %v7372, %v7756
        %v7821 = vadd.f32 %v7373, %v7757
        %v7822 = vadd.f32 %v7374, %v7758
        %v7823 = vadd.f32 %v7375, %v7759
        %v7824 = vadd.f32 %v7376, %v7760
        %v7825 = vadd.f32 %v7377, %v7761
        %v7826 = vadd.f32 %v7378, %v7762
        %v7827 = vadd.f32 %v7379, %v7763
        %v7828 = vadd.f32 %v7380, %v7764
        %v7829 = vadd.f32 %v7381, %v7765
        %v7830 = vadd.f32 %v7382, %v7766
        %v7831 = vadd.f32 %v7383, %v7767
        %v7832 = vld [vmem:[%s481] sm:$0xf]
        %vm7833 = vcmp.ge.f32.partialorder %v7832, 0.5
        %v7834 = vmul.f32 %v7319, 2.0
        %v7835 = vsel %vm7833, %v7834, 0.0
        %v7837 = vlaneseq
        %v7838 = vshrl.u32 %v7837, 7
        %v7839 = vsub.s32 0, %v7838
        %v7840 = vrot.slane %v7835, %v7839
        %v7841 = vlaneseq
        %v7842 = vshrl.u32 %v7841, 7
        %v7843 = vsub.s32 1, %v7842
        %v7844 = vrot.slane %v7835, %v7843
        %v7845 = vlaneseq
        %v7846 = vshrl.u32 %v7845, 7
        %v7847 = vsub.s32 2, %v7846
        %v7848 = vrot.slane %v7835, %v7847
        %v7849 = vlaneseq
        %v7850 = vshrl.u32 %v7849, 7
        %v7851 = vsub.s32 3, %v7850
        %v7852 = vrot.slane %v7835, %v7851
        %v7857 = vpack.c.bf16 %v7840, %v7840
        %v7858 = vpack.c.bf16 %v7844, %v7844
        %v7859 = vpack.c.bf16 %v7848, %v7848
        %v7860 = vpack.c.bf16 %v7852, %v7852
        %v7861 = vpack.c.bf16 %v7769, %v7768
        %v7862 = vpack.c.bf16 %v7771, %v7770
        %v7863 = vpack.c.bf16 %v7773, %v7772
        %v7864 = vpack.c.bf16 %v7775, %v7774
        %v7865 = vpack.c.bf16 %v7777, %v7776
        %v7866 = vpack.c.bf16 %v7779, %v7778
        %v7867 = vpack.c.bf16 %v7781, %v7780
        %v7868 = vpack.c.bf16 %v7783, %v7782
        %v7869 = vpack.c.bf16 %v7785, %v7784
        %v7870 = vpack.c.bf16 %v7787, %v7786
        %v7871 = vpack.c.bf16 %v7789, %v7788
        %v7872 = vpack.c.bf16 %v7791, %v7790
        %v7873 = vpack.c.bf16 %v7793, %v7792
        %v7874 = vpack.c.bf16 %v7795, %v7794
        %v7875 = vpack.c.bf16 %v7797, %v7796
        %v7876 = vpack.c.bf16 %v7799, %v7798
        %v7877 = vpack.c.bf16 %v7801, %v7800
        %v7878 = vpack.c.bf16 %v7803, %v7802
        %v7879 = vpack.c.bf16 %v7805, %v7804
        %v7880 = vpack.c.bf16 %v7807, %v7806
        %v7881 = vpack.c.bf16 %v7809, %v7808
        %v7882 = vpack.c.bf16 %v7811, %v7810
        %v7883 = vpack.c.bf16 %v7813, %v7812
        %v7884 = vpack.c.bf16 %v7815, %v7814
        %v7885 = vpack.c.bf16 %v7817, %v7816
        %v7886 = vpack.c.bf16 %v7819, %v7818
        %v7887 = vpack.c.bf16 %v7821, %v7820
        %v7888 = vpack.c.bf16 %v7823, %v7822
        %v7889 = vpack.c.bf16 %v7825, %v7824
        %v7890 = vpack.c.bf16 %v7827, %v7826
        %v7891 = vpack.c.bf16 %v7829, %v7828
        %v7892 = vpack.c.bf16 %v7831, %v7830
        %7893 = vmatprep.subr.bf16.mxu0 0
        %7894 = vmatpush1.bf16.msra.mxu0 %v7861
        %7895 = vmatprep.subr.bf16.mxu0 0
        %7896 = vmatpush1.bf16.msra.mxu0 %v7862
        %7897 = vmatprep.subr.bf16.mxu0 0
        %7898 = vmatpush1.bf16.msra.mxu0 %v7863
        %7899 = vmatprep.subr.bf16.mxu0 0
        %7900 = vmatpush1.bf16.msra.mxu0 %v7864
        %7901 = vmatprep.subr.bf16.mxu0 0
        %7902 = vmatpush1.bf16.msra.mxu0 %v7865
        %7903 = vmatprep.subr.bf16.mxu0 0
        %7904 = vmatpush1.bf16.msra.mxu0 %v7866
        %7905 = vmatprep.subr.bf16.mxu0 0
        %7906 = vmatpush1.bf16.msra.mxu0 %v7867
        %7907 = vmatprep.subr.bf16.mxu0 0
        %7908 = vmatpush1.bf16.msra.mxu0 %v7868
        %7909 = vmatprep.subr.bf16.mxu0 0
        %7910 = vmatpush1.bf16.msra.mxu0 %v7869
        %7911 = vmatprep.subr.bf16.mxu0 0
        %7912 = vmatpush1.bf16.msra.mxu0 %v7870
        %7913 = vmatprep.subr.bf16.mxu0 0
        %7914 = vmatpush1.bf16.msra.mxu0 %v7871
        %7915 = vmatprep.subr.bf16.mxu0 0
        %7916 = vmatpush1.bf16.msra.mxu0 %v7872
        %7917 = vmatprep.subr.bf16.mxu0 0
        %7918 = vmatpush1.bf16.msra.mxu0 %v7873
        %7919 = vmatprep.subr.bf16.mxu0 0
        %7920 = vmatpush1.bf16.msra.mxu0 %v7874
        %7921 = vmatprep.subr.bf16.mxu0 0
        %7922 = vmatpush1.bf16.msra.mxu0 %v7875
        %7923 = vmatprep.subr.bf16.mxu0 0
        %7924 = vmatpush1.bf16.msra.mxu0 %v7876
        %7925 = vmatprep.mubr.bf16.mxu0 %v7858
        %7926 = vmatmul.mubr.bf16.gmra.mrb[0].mxu0 %v7857
        %v7927 = vpop.f32.mrb[0].mxu0
        %v7928 = vadd.f32 0.0, %v7927
        %v7929 = vpop.f32.mrb[0].mxu0
        %v7930 = vpop.f32.mrb[0].mxu0
        %v7931 = vpop.f32.mrb[0].mxu0
        %7932 = vdwg.mxu0
        %7933 = vmatprep.subr.bf16.mxu0 0
        %7934 = vmatpush1.bf16.msra.mxu0 %v7877
        %7935 = vmatprep.subr.bf16.mxu0 0
        %7936 = vmatpush1.bf16.msra.mxu0 %v7878
        %7937 = vmatprep.subr.bf16.mxu0 0
        %7938 = vmatpush1.bf16.msra.mxu0 %v7879
        %7939 = vmatprep.subr.bf16.mxu0 0
        %7940 = vmatpush1.bf16.msra.mxu0 %v7880
        %7941 = vmatprep.subr.bf16.mxu0 0
        %7942 = vmatpush1.bf16.msra.mxu0 %v7881
        %7943 = vmatprep.subr.bf16.mxu0 0
        %7944 = vmatpush1.bf16.msra.mxu0 %v7882
        %7945 = vmatprep.subr.bf16.mxu0 0
        %7946 = vmatpush1.bf16.msra.mxu0 %v7883
        %7947 = vmatprep.subr.bf16.mxu0 0
        %7948 = vmatpush1.bf16.msra.mxu0 %v7884
        %7949 = vmatprep.subr.bf16.mxu0 0
        %7950 = vmatpush1.bf16.msra.mxu0 %v7885
        %7951 = vmatprep.subr.bf16.mxu0 0
        %7952 = vmatpush1.bf16.msra.mxu0 %v7886
        %7953 = vmatprep.subr.bf16.mxu0 0
        %7954 = vmatpush1.bf16.msra.mxu0 %v7887
        %7955 = vmatprep.subr.bf16.mxu0 0
        %7956 = vmatpush1.bf16.msra.mxu0 %v7888
        %7957 = vmatprep.subr.bf16.mxu0 0
        %7958 = vmatpush1.bf16.msra.mxu0 %v7889
        %7959 = vmatprep.subr.bf16.mxu0 0
        %7960 = vmatpush1.bf16.msra.mxu0 %v7890
        %7961 = vmatprep.subr.bf16.mxu0 0
        %7962 = vmatpush1.bf16.msra.mxu0 %v7891
        %7963 = vmatprep.subr.bf16.mxu0 0
        %7964 = vmatpush1.bf16.msra.mxu0 %v7892
        %7965 = vmatprep.mubr.bf16.mxu0 %v7860
        %7966 = vmatmul.mubr.bf16.gmra.mrb[0].mxu0 %v7859
        %v7967 = vpop.f32.mrb[0].mxu0
        %v7968 = vadd.f32 %v7928, %v7967
        %v7969 = vpop.f32.mrb[0].mxu0
        %v7970 = vpop.f32.mrb[0].mxu0
        %v7971 = vpop.f32.mrb[0].mxu0
        %7972 = vdwg.mxu0
        %v7973 = vld [vmem:[%s10] sm:$0xff]
        %v7974 = vld [vmem:[%s10 + $0x8] sm:$0xff]
        %v7975 = vld [vmem:[%s10 + $0x10] sm:$0xff]
        %v7976 = vld [vmem:[%s10 + $0x18] sm:$0xff]
        %v7977 = vld [vmem:[%s12] sm:$0xff]
        %v7978 = vld [vmem:[%s12 + $0x8] sm:$0xff]
        %v7979 = vld [vmem:[%s12 + $0x10] sm:$0xff]
        %v7980 = vld [vmem:[%s12 + $0x18] sm:$0xff]
        %v7981 = vld [vmem:[%s11] sm:$0xff]
        %v7982 = vld [vmem:[%s11 + $0x8] sm:$0xff]
        %v7983 = vld [vmem:[%s11 + $0x10] sm:$0xff]
        %v7984 = vld [vmem:[%s11 + $0x18] sm:$0xff]
        %v7985 = vmul.f32 %v7981, 0.5
        %v7986 = vmul.f32 %v7982, 0.5
        %v7987 = vmul.f32 %v7983, 0.5
        %v7988 = vmul.f32 %v7984, 0.5
        %v7989 = vmul.f32 %v7985, 1.442695
        %v7990 = vpow.pop %v7989
        %v7991 = vmul.f32 %v7986, 1.442695
        %v7992 = vpow.pop %v7991
        %v7993 = vmul.f32 %v7987, 1.442695
        %v7994 = vpow.pop %v7993
        %v7995 = vmul.f32 %v7988, 1.442695
        %v7996 = vpow.pop %v7995
        %v7997 = vmul.f32 %v7977, %v7990
        %v7998 = vmul.f32 %v7978, %v7992
        %v7999 = vmul.f32 %v7979, %v7994
        %v8000 = vmul.f32 %v7980, %v7996
        %v8001 = vadd.f32 %v7973, %v7997
        %v8002 = vadd.f32 %v7974, %v7998
        %v8003 = vadd.f32 %v7975, %v7999
        %v8004 = vadd.f32 %v7976, %v8000
        %v8005 = vld [vmem:[%s481 + $0x4] sm:$0x1]
        %vm8006 = vcmp.ge.f32.partialorder %v8005, 0.5
        %v8007 = vmul.f32 %v7968, 2.0
        %v8008 = vsel %vm8006, %v8007, 0.0
        %v8009 = vpack.c.bf16 %v8008, %v8008
        %v8010 = vpack.c.bf16 %v8002, %v8001
        %v8011 = vpack.c.bf16 %v8004, %v8003
        %vm8012 = vcmask 261120
        %v8014 = vsel %vm8012, %v8009, 0
        %8016 = vmatprep.subr.bf16.mxu0 0
        %8017 = vmatpush1.bf16.msra.mxu0 %v8010
        %8018 = vmatprep.subr.bf16.mxu0 0
        %8019 = vmatpush1.bf16.msra.mxu0 %v8011
        %8020 = vmatprep.subr.bf16.mxu0 0
        %8021 = vmatpush1.bf16.msra.mxu0 0
        %8022 = vmatprep.subr.bf16.mxu0 0
        %8023 = vmatpush1.bf16.msra.mxu0 0
        %8024 = vmatprep.subr.bf16.mxu0 0
        %8025 = vmatpush1.bf16.msra.mxu0 0
        %8026 = vmatprep.subr.bf16.mxu0 0
        %8027 = vmatpush1.bf16.msra.mxu0 0
        %8028 = vmatprep.subr.bf16.mxu0 0
        %8029 = vmatpush1.bf16.msra.mxu0 0
        %8030 = vmatprep.subr.bf16.mxu0 0
        %8031 = vmatpush1.bf16.msra.mxu0 0
        %8032 = vmatprep.subr.bf16.mxu0 0
        %8033 = vmatpush1.bf16.msra.mxu0 0
        %8034 = vmatprep.subr.bf16.mxu0 0
        %8035 = vmatpush1.bf16.msra.mxu0 0
        %8036 = vmatprep.subr.bf16.mxu0 0
        %8037 = vmatpush1.bf16.msra.mxu0 0
        %8038 = vmatprep.subr.bf16.mxu0 0
        %8039 = vmatpush1.bf16.msra.mxu0 0
        %8040 = vmatprep.subr.bf16.mxu0 0
        %8041 = vmatpush1.bf16.msra.mxu0 0
        %8042 = vmatprep.subr.bf16.mxu0 0
        %8043 = vmatpush1.bf16.msra.mxu0 0
        %8044 = vmatprep.subr.bf16.mxu0 0
        %8045 = vmatpush1.bf16.msra.mxu0 0
        %8046 = vmatprep.subr.bf16.mxu0 0
        %8047 = vmatpush1.bf16.msra.mxu0 0
        %8048 = vmatprep.mubr.bf16.mxu0 0
        %8049 = vmatmul.mubr.bf16.gmra.mrb[0].mxu0 %v8014
        %v8050 = vpop.f32.mrb[0].mxu0
        %v8051 = vadd.f32 0.0, %v8050
        %v8052 = vpop.f32.mrb[0].mxu0
        %v8053 = vpop.f32.mrb[0].mxu0
        %v8054 = vpop.f32.mrb[0].mxu0
        %8055 = vdwg.mxu0
        %vm8056 = vcmask 73728
        %8057 = vst.msk [vmem:[%s472] sm:$0x1] %vm8056, %v8051
        %s8058 = sand.u32 %s340, 1
        %s8059 = scalar_lea.sflag [#allocation7], %s8058
        %s8060 = sand.u32 %s340, 1
        %s8061 = scalar_lea.vmem [#allocation6], %s8060
        // Predicated region
        $region77: #{forward.1} parent=75 // pred_check
          %p8062 = pneg %p350
        $region78: #{forward.1} parent=75 // pred_check_branch
          %8064 = sbr.rel (%p8062) target = $region80
        $region79: #{forward.1} parent=75 // pred_region
          %s8066 = ssub.s32 16, 16
          %8067 = vsyncadd %s8059, %s8066
          %s8068 = smul.addr %s28, 16
          %s8069 = scalar_lea.hbm %s14, %s8068
          %s8071 = sshll.u32 %s8061, 4
          %s8072 = int_to_ptr.vmem [resolvable:$true] %s8071
          %8074 = dma.vmem_to_hbm [thread:$0]  %s8072, 16, %s8069, %s8059
        $region80: #{forward.1} parent=75 // pred_fallthru
          _
      $region76: #{forward.1} parent=5 // pred_fallthru
        _
      %p8075 = scmp.le.s32.totalorder 2, %s23
      // Predicated region
      $region81: #{forward.1} parent=5 // pred_check
        %p8076 = pneg %p8075
      $region82: #{forward.1} parent=5 // pred_check_branch
        %8078 = sbr.rel (%p8076) target = $region84
      $region83: #{forward.1} parent=5 // pred_region
        %s8079 = ssub.s32 %s23, 2
        // Predicated region
        $region85: #{forward.1} parent=83 // pred_check
          %p8080 = pneg %p356
        $region86: #{forward.1} parent=83 // pred_check_branch
          %8082 = sbr.rel (%p8080) target = $region88
        $region87: #{forward.1} parent=83 // pred_region
          %s8083 = sand.u32 %s341, 1
          %s8084 = scalar_lea.sflag [#allocation7], %s8083
          %s8085 = sand.u32 %s341, 1
          %s8086 = scalar_lea.vmem [#allocation6], %s8085
          %8087 = dma.done %s8084, 16
        $region88: #{forward.1} parent=83 // pred_fallthru
          _
      $region84: #{forward.1} parent=5 // pred_fallthru
        _
    $region6: #{forward.1} parent=1 // loop_footer
      %s27 = sadd.s32 1, %s23
    $region7: #{forward.1} parent=1 // loop_footer_branch
      %22 = sbr.rel target = $region3
    $region8: #{forward.1} parent=1 // loop_exit
      _
    %8088 = vsyncpa [#allocation7], 1
    %s8089 = scalar_lea.sflag [#allocation7], 1
    %8090 = vsyncpa %s8089, 1

</llo_original>
